<compile_context>
chip_gen: v6e
topology: v6e:2x2x1
jax: 0.10.0
libtpu: 0.0.40
codegen_flags: <defaults>
</compile_context>

<pallas_src>
import jax
import jax.numpy as jnp
from jax.experimental import pallas as pl
from jax.experimental.pallas import tpu as pltpu


# ----------------------------------------------------------------------------
# In-kernel helpers (all operate on traced values; shapes are static)
# ----------------------------------------------------------------------------
def _pad_hw1(x):
    """Zero-pad a (H, W, C) activation by 1 on each side of H and W
    (Conv2d padding=1 semantics), built with concatenations only."""
    h, w, c = x.shape
    zr = jnp.zeros((1, w, c), x.dtype)
    x = jnp.concatenate([zr, x, zr], axis=0)
    zc = jnp.zeros((h + 2, 1, c), x.dtype)
    return jnp.concatenate([zc, x, zc], axis=1)


def _maxpool2d(x, k):
    """MaxPool2d(k, k) on (H, W, C) with k | H and k | W.
    W direction: reshape + one vector max reduce; H direction: leading-dim
    split (no relayout) + a k-term jnp.maximum chain.         [review #3]"""
    h, w, c = x.shape
    x = jnp.max(x.reshape(h, w // k, k, c), axis=2)           # (H, W/k, C)
    x = x.reshape(h // k, k, w // k, c)                       # leading split only
    out = x[:, 0]
    for i in range(1, k):
        out = jnp.maximum(out, x[:, i])
    return out                                                # (H/k, W/k, C)


def _upsample_nearest(x, s):
    """nn.Upsample(scale_factor=s, mode='nearest') on a (H, W, C) activation."""
    h, w, c = x.shape
    # rows: repeat-interleave via a leading-dim broadcast + merge (no relayout)
    x = jnp.broadcast_to(x[:, None, :, :], (h, s, w, c)).reshape(h * s, w, c)
    # cols: per-source-column sublane broadcast + concat (w <= 4 in this model)
    cols = [jnp.broadcast_to(x[:, j:j + 1, :], (h * s, s, c)) for j in range(w)]
    return jnp.concatenate(cols, axis=1)                      # (H*s, W*s, C)


def _conv3x3_mxu_relu(x, w_ref, b_ref):
    """3x3 'same' conv + bias + ReLU via in-register im2col + ONE MXU matmul.
    x: (H, W, Cin); w_ref: (9*Cin, Cout); b_ref: (1, Cout)."""
    h, w, cin = x.shape
    xp = _pad_hw1(x)
    taps = [xp[dy:dy + h, dx:dx + w, :] for dy in range(3) for dx in range(3)]
    a = jnp.concatenate(taps, axis=-1).reshape(h * w, 9 * cin)
    acc = jnp.dot(a, w_ref[...], preferred_element_type=jnp.float32)
    acc = jnp.maximum(acc + b_ref[...], 0.0)
    return acc.reshape(h, w, -1)


def _conv3x3_vpu_cin1_relu(x, w_ref, b_ref):
    """cin=1 3x3 conv + bias + ReLU as a 9-tap VPU broadcast-MAC (no near-empty
    MXU im2col; review #4).  x: (H, W, 1); w_ref: (9, Cout); b_ref: (1, Cout).
    Output lands directly channels-last: (H, W, Cout)."""
    h, w, _ = x.shape
    xp = _pad_hw1(x)                                          # (H+2, W+2, 1)
    acc = None
    t = 0
    for dy in range(3):
        for dx in range(3):
            win = xp[dy:dy + h, dx:dx + w, :]                 # (H, W, 1)
            term = win * w_ref[t, :]                          # lane bcast -> (H, W, Cout)
            acc = term if acc is None else acc + term
            t += 1
    return jnp.maximum(acc + b_ref[0, :], 0.0)                # (H, W, Cout)


def _conv3x3_vpu_cout1_sigmoid(x, w_ref, b_ref):
    """Cout=1 3x3 conv + bias + Sigmoid on the VPU, keeping spatial W on the
    lane axis (review #5).  x: (H, W, Cin); w_ref: (9, Cin); b_ref: (1, 1)."""
    h, w, cin = x.shape
    xp = _pad_hw1(x)
    acc = jnp.zeros((h, w), jnp.float32)
    t = 0
    for dy in range(3):
        for dx in range(3):
            win = xp[dy:dy + h, dx:dx + w, :]                 # (H, W, Cin)
            acc = acc + jnp.sum(win * w_ref[t, :], axis=-1)   # lane reduce (XLU)
            t += 1
    return jax.nn.sigmoid(acc + b_ref[...])                   # (H, W), f32 (EUP)


# ----------------------------------------------------------------------------
# Fused forward kernel: one grid step == full autoencoder forward for 1 image
# ----------------------------------------------------------------------------
def _autoencoder_kernel(x_ref, w1, b1, w2, b2, w3, b3, w4, b4, w5, b5, o_ref):
    x = x_ref[0]                                              # (H, W, 1) f32

    # --- Encoder ---
    a = _conv3x3_vpu_cin1_relu(x, w1, b1)                     # (H,   W,   32)
    a = _maxpool2d(a, 5)                                      # (H/5, W/5, 32)
    a = _conv3x3_mxu_relu(a, w2, b2)                          # (H/5, W/5, 16)
    a = _maxpool2d(a, 2)                                      # (H/10,W/10,16)

    # --- Decoder ---
    a = _conv3x3_mxu_relu(a, w3, b3)                          # (H/10,W/10,16)
    a = _upsample_nearest(a, 2)                               # (H/5, W/5, 16)
    a = _conv3x3_mxu_relu(a, w4, b4)                          # (H/5, W/5, 32)
    a = _upsample_nearest(a, 5)                               # (H,   W,   32)
    y = _conv3x3_vpu_cout1_sigmoid(a, w5, b5)                 # (H,   W)

    o_ref[0] = y


# ----------------------------------------------------------------------------
# Host-side wrapper
# ----------------------------------------------------------------------------
def _torch_conv_weight(w):
    """PyTorch (Cout, Cin, 3, 3) -> (9*Cin, Cout) matching the in-kernel tap
    order (row index = (ky*3 + kx)*Cin + cin)."""
    cout, cin = int(w.shape[0]), int(w.shape[1])
    return jnp.transpose(w, (2, 3, 1, 0)).reshape(9 * cin, cout).astype(jnp.float32)


def autoencoder_forward(x_nchw, params):
    """x_nchw: (N, 1, H, W) float32 with H % 10 == 0 and W % 10 == 0
    (MaxPool 5 then 2 must divide the spatial dims, as in the PyTorch model)."""
    n, c, h, w = x_nchw.shape
    assert c == 1 and h % 10 == 0 and w % 10 == 0, (n, c, h, w)
    (w1, b1), (w2, b2), (w3, b3), (w4, b4), (w5, b5) = params

    x = jnp.transpose(x_nchw, (0, 2, 3, 1)).astype(jnp.float32)   # (N, H, W, 1)

    wk1 = _torch_conv_weight(w1)                                   # (9,   32)
    wk2 = _torch_conv_weight(w2)                                   # (288, 16)
    wk3 = _torch_conv_weight(w3)                                   # (144, 16)
    wk4 = _torch_conv_weight(w4)                                   # (144, 32)
    # final Cout=1 layer: (1, 32, 3, 3) -> (9, 32) with rows = tap, cols = cin
    wk5 = jnp.transpose(w5, (2, 3, 1, 0)).reshape(9, 32).astype(jnp.float32)
    bk1 = b1.reshape(1, -1).astype(jnp.float32)
    bk2 = b2.reshape(1, -1).astype(jnp.float32)
    bk3 = b3.reshape(1, -1).astype(jnp.float32)
    bk4 = b4.reshape(1, -1).astype(jnp.float32)
    bk5 = b5.reshape(1, 1).astype(jnp.float32)

    const = lambda i: (0, 0)   # weights/bias: VMEM-resident across the grid
    out = pl.pallas_call(
        _autoencoder_kernel,
        out_shape=jax.ShapeDtypeStruct((n, h, w), jnp.float32),
        grid=(n,),
        in_specs=[
            pl.BlockSpec((1, h, w, 1), lambda i: (i, 0, 0, 0)),
            pl.BlockSpec(wk1.shape, const), pl.BlockSpec(bk1.shape, const),
            pl.BlockSpec(wk2.shape, const), pl.BlockSpec(bk2.shape, const),
            pl.BlockSpec(wk3.shape, const), pl.BlockSpec(bk3.shape, const),
            pl.BlockSpec(wk4.shape, const), pl.BlockSpec(bk4.shape, const),
            pl.BlockSpec(wk5.shape, const), pl.BlockSpec(bk5.shape, const),
        ],
        out_specs=pl.BlockSpec((1, h, w), lambda i: (i, 0, 0)),
        compiler_params=pltpu.CompilerParams(
            # batch axis parallel -> one image per TensorCore on v7x (review #6)
            dimension_semantics=("parallel",),
            # actual residency is < 1 MiB; 32 MiB is safe on v5e/v6e (128 MiB)
            # and v7x (64 MiB physical).                           (review #7)
            vmem_limit_bytes=32 << 20,
        ),
    )(x, wk1, bk1, wk2, bk2, wk3, bk3, wk4, bk4, wk5, bk5)
    return out[:, None, :, :]                                  # (N, 1, H, W)


# ----------------------------------------------------------------------------
# Parameter init (matches PyTorch Conv2d default U(-1/sqrt(fan_in), +...))
# ----------------------------------------------------------------------------
def init_conv_params(key, cout, cin, k=3):
    wkey, bkey = jax.random.split(key)
    bound = 1.0 / float((cin * k * k) ** 0.5)
    w = jax.random.uniform(wkey, (cout, cin, k, k), jnp.float32, -bound, bound)
    b = jax.random.uniform(bkey, (cout,), jnp.float32, -bound, bound)
    return w, b


def init_autoencoder_params(key):
    keys = jax.random.split(key, 5)
    return (
        init_conv_params(keys[0], 32, 1),   # encoder conv1: 1  -> 32
        init_conv_params(keys[1], 16, 32),  # encoder conv2: 32 -> 16
        init_conv_params(keys[2], 16, 16),  # decoder conv1: 16 -> 16
        init_conv_params(keys[3], 32, 16),  # decoder conv2: 16 -> 32
        init_conv_params(keys[4], 1, 32),   # decoder conv3: 32 -> 1
    )


# ----------------------------------------------------------------------------
# Pure-XLA reference (PyTorch semantics) for a numerical self-check
# ----------------------------------------------------------------------------
def _ref_forward(x_nchw, params):
    (w1, b1), (w2, b2), (w3, b3), (w4, b4), (w5, b5) = params

    def conv(x, w, b):
        y = jax.lax.conv_general_dilated(
            x, w, window_strides=(1, 1), padding=((1, 1), (1, 1)),
            dimension_numbers=("NCHW", "OIHW", "NCHW"),
            precision=jax.lax.Precision.HIGHEST)
        return y + b[None, :, None, None]

    def pool(x, k):
        return jax.lax.reduce_window(x, -jnp.inf, jax.lax.max,
                                     (1, 1, k, k), (1, 1, k, k), "VALID")

    def up(x, s):
        return jnp.repeat(jnp.repeat(x, s, axis=2), s, axis=3)

    a = pool(jax.nn.relu(conv(x_nchw, w1, b1)), 5)
    a = pool(jax.nn.relu(conv(a, w2, b2)), 2)
    a = jax.nn.relu(conv(a, w3, b3))
    a = jax.nn.relu(conv(up(a, 2), w4, b4))
    return jax.nn.sigmoid(conv(up(a, 5), w5, b5))


# ----------------------------------------------------------------------------
if __name__ == "__main__":
    key = jax.random.PRNGKey(0)
    pkey, xkey = jax.random.split(key)

    params = init_autoencoder_params(pkey)
    # N=2, C=1, spatial 20x20 (divisible by 5*2 so the decoder restores it).
    x = jax.random.uniform(xkey, (2, 1, 20, 20), jnp.float32)

    fwd = jax.jit(autoencoder_forward)
    y = fwd(x, params)
    jax.block_until_ready(y)

    assert y.shape == (2, 1, 20, 20), y.shape
    assert y.dtype == jnp.float32
    assert bool(jnp.all(jnp.isfinite(y)))
    assert bool(jnp.all((y >= 0.0) & (y <= 1.0)))  # sigmoid range

    # f32 end-to-end in the kernel -> tight agreement with the XLA reference.
    y_ref = _ref_forward(x, params)
    err = float(jnp.max(jnp.abs(y - y_ref)))
    assert err < 1e-2, f"max abs error vs reference: {err}"

    print("KERNEL_OK")
</pallas_src>

<mosaic_0001>
module attributes {stable_mosaic.version = 11 : i64} {
  func.func @_autoencoder_kernel(%arg0: i32, %arg1: memref<1x20x20x1xf32, #tpu.memory_space<vmem>>, %arg2: memref<9x32xf32, #tpu.memory_space<vmem>>, %arg3: memref<1x32xf32, #tpu.memory_space<vmem>>, %arg4: memref<288x16xf32, #tpu.memory_space<vmem>>, %arg5: memref<1x16xf32, #tpu.memory_space<vmem>>, %arg6: memref<144x16xf32, #tpu.memory_space<vmem>>, %arg7: memref<1x16xf32, #tpu.memory_space<vmem>>, %arg8: memref<144x32xf32, #tpu.memory_space<vmem>>, %arg9: memref<1x32xf32, #tpu.memory_space<vmem>>, %arg10: memref<9x32xf32, #tpu.memory_space<vmem>>, %arg11: memref<1x1xf32, #tpu.memory_space<vmem>>, %arg12: memref<1x20x20xf32, #tpu.memory_space<vmem>>) attributes {dimension_semantics = [#tpu.dimension_semantics<parallel>], iteration_bounds = array<i64: 2>, scalar_prefetch = 0 : i64, scratch_operands = 0 : i64, tpu.core_type = #tpu.core_type<tc>, window_params = [{transform_indices = @transform_0, window_bounds = array<i64: 1, 20, 20, 1>}, {pipeline_mode = #tpu.pipeline_mode<synchronous>, transform_indices = @transform_1, window_bounds = array<i64: 9, 32>}, {pipeline_mode = #tpu.pipeline_mode<synchronous>, transform_indices = @transform_2, window_bounds = array<i64: 1, 32>}, {pipeline_mode = #tpu.pipeline_mode<synchronous>, transform_indices = @transform_3, window_bounds = array<i64: 288, 16>}, {pipeline_mode = #tpu.pipeline_mode<synchronous>, transform_indices = @transform_4, window_bounds = array<i64: 1, 16>}, {pipeline_mode = #tpu.pipeline_mode<synchronous>, transform_indices = @transform_5, window_bounds = array<i64: 144, 16>}, {pipeline_mode = #tpu.pipeline_mode<synchronous>, transform_indices = @transform_6, window_bounds = array<i64: 1, 16>}, {pipeline_mode = #tpu.pipeline_mode<synchronous>, transform_indices = @transform_7, window_bounds = array<i64: 144, 32>}, {pipeline_mode = #tpu.pipeline_mode<synchronous>, transform_indices = @transform_8, window_bounds = array<i64: 1, 32>}, {pipeline_mode = #tpu.pipeline_mode<synchronous>, transform_indices = @transform_9, window_bounds = array<i64: 9, 32>}, {pipeline_mode = #tpu.pipeline_mode<synchronous>, transform_indices = @transform_10, window_bounds = array<i64: 1, 1>}, {transform_indices = @transform_11, window_bounds = array<i64: 1, 20, 20>}]} {
    %c0 = arith.constant 0 : index
    %c0_0 = arith.constant 0 : index
    %c0_1 = arith.constant 0 : index
    %c0_2 = arith.constant 0 : index
    %0 = vector.load %arg1[%c0, %c0_0, %c0_1, %c0_2] : memref<1x20x20x1xf32, #tpu.memory_space<vmem>>, vector<1x20x20x1xf32>
    %1 = vector.shape_cast %0 : vector<1x20x20x1xf32> to vector<20x20x1xf32>
    %cst = arith.constant 0.000000e+00 : f32
    %2 = vector.broadcast %cst : f32 to vector<1x20x1xf32>
    %3 = tpu.concatenate %2, %1, %2 in 0 : vector<1x20x1xf32>, vector<20x20x1xf32>, vector<1x20x1xf32> -> vector<22x20x1xf32>
    %cst_3 = arith.constant 0.000000e+00 : f32
    %4 = vector.broadcast %cst_3 : f32 to vector<22x1x1xf32>
    %5 = tpu.concatenate %4, %3, %4 in 1 : vector<22x1x1xf32>, vector<22x20x1xf32>, vector<22x1x1xf32> -> vector<22x22x1xf32>
    %6 = vector.extract_strided_slice %5 {offsets = [0, 0, 0], sizes = [20, 20, 1], strides = [1, 1, 1]} : vector<22x22x1xf32> to vector<20x20x1xf32>
    %c0_4 = arith.constant 0 : index
    %c0_5 = arith.constant 0 : index
    %7 = vector.load %arg2[%c0_4, %c0_5] : memref<9x32xf32, #tpu.memory_space<vmem>>, vector<1x32xf32>
    %8 = vector.shape_cast %7 : vector<1x32xf32> to vector<32xf32>
    %9 = vector.shape_cast %8 : vector<32xf32> to vector<1x1x32xf32>
    %10 = vector.broadcast %6 : vector<20x20x1xf32> to vector<20x20x32xf32>
    %11 = vector.broadcast %9 : vector<1x1x32xf32> to vector<20x20x32xf32>
    %12 = arith.mulf %10, %11 : vector<20x20x32xf32>
    %13 = vector.extract_strided_slice %5 {offsets = [0, 1, 0], sizes = [20, 20, 1], strides = [1, 1, 1]} : vector<22x22x1xf32> to vector<20x20x1xf32>
    %c1 = arith.constant 1 : index
    %c0_6 = arith.constant 0 : index
    %14 = vector.load %arg2[%c1, %c0_6] : memref<9x32xf32, #tpu.memory_space<vmem>>, vector<1x32xf32>
    %15 = vector.shape_cast %14 : vector<1x32xf32> to vector<32xf32>
    %16 = vector.shape_cast %15 : vector<32xf32> to vector<1x1x32xf32>
    %17 = vector.broadcast %13 : vector<20x20x1xf32> to vector<20x20x32xf32>
    %18 = vector.broadcast %16 : vector<1x1x32xf32> to vector<20x20x32xf32>
    %19 = arith.mulf %17, %18 : vector<20x20x32xf32>
    %20 = arith.addf %12, %19 : vector<20x20x32xf32>
    %21 = vector.extract_strided_slice %5 {offsets = [0, 2, 0], sizes = [20, 20, 1], strides = [1, 1, 1]} : vector<22x22x1xf32> to vector<20x20x1xf32>
    %c2 = arith.constant 2 : index
    %c0_7 = arith.constant 0 : index
    %22 = vector.load %arg2[%c2, %c0_7] : memref<9x32xf32, #tpu.memory_space<vmem>>, vector<1x32xf32>
    %23 = vector.shape_cast %22 : vector<1x32xf32> to vector<32xf32>
    %24 = vector.shape_cast %23 : vector<32xf32> to vector<1x1x32xf32>
    %25 = vector.broadcast %21 : vector<20x20x1xf32> to vector<20x20x32xf32>
    %26 = vector.broadcast %24 : vector<1x1x32xf32> to vector<20x20x32xf32>
    %27 = arith.mulf %25, %26 : vector<20x20x32xf32>
    %28 = arith.addf %20, %27 : vector<20x20x32xf32>
    %29 = vector.extract_strided_slice %5 {offsets = [1, 0, 0], sizes = [20, 20, 1], strides = [1, 1, 1]} : vector<22x22x1xf32> to vector<20x20x1xf32>
    %c3 = arith.constant 3 : index
    %c0_8 = arith.constant 0 : index
    %30 = vector.load %arg2[%c3, %c0_8] : memref<9x32xf32, #tpu.memory_space<vmem>>, vector<1x32xf32>
    %31 = vector.shape_cast %30 : vector<1x32xf32> to vector<32xf32>
    %32 = vector.shape_cast %31 : vector<32xf32> to vector<1x1x32xf32>
    %33 = vector.broadcast %29 : vector<20x20x1xf32> to vector<20x20x32xf32>
    %34 = vector.broadcast %32 : vector<1x1x32xf32> to vector<20x20x32xf32>
    %35 = arith.mulf %33, %34 : vector<20x20x32xf32>
    %36 = arith.addf %28, %35 : vector<20x20x32xf32>
    %37 = vector.extract_strided_slice %5 {offsets = [1, 1, 0], sizes = [20, 20, 1], strides = [1, 1, 1]} : vector<22x22x1xf32> to vector<20x20x1xf32>
    %c4 = arith.constant 4 : index
    %c0_9 = arith.constant 0 : index
    %38 = vector.load %arg2[%c4, %c0_9] : memref<9x32xf32, #tpu.memory_space<vmem>>, vector<1x32xf32>
    %39 = vector.shape_cast %38 : vector<1x32xf32> to vector<32xf32>
    %40 = vector.shape_cast %39 : vector<32xf32> to vector<1x1x32xf32>
    %41 = vector.broadcast %37 : vector<20x20x1xf32> to vector<20x20x32xf32>
    %42 = vector.broadcast %40 : vector<1x1x32xf32> to vector<20x20x32xf32>
    %43 = arith.mulf %41, %42 : vector<20x20x32xf32>
    %44 = arith.addf %36, %43 : vector<20x20x32xf32>
    %45 = vector.extract_strided_slice %5 {offsets = [1, 2, 0], sizes = [20, 20, 1], strides = [1, 1, 1]} : vector<22x22x1xf32> to vector<20x20x1xf32>
    %c5 = arith.constant 5 : index
    %c0_10 = arith.constant 0 : index
    %46 = vector.load %arg2[%c5, %c0_10] : memref<9x32xf32, #tpu.memory_space<vmem>>, vector<1x32xf32>
    %47 = vector.shape_cast %46 : vector<1x32xf32> to vector<32xf32>
    %48 = vector.shape_cast %47 : vector<32xf32> to vector<1x1x32xf32>
    %49 = vector.broadcast %45 : vector<20x20x1xf32> to vector<20x20x32xf32>
    %50 = vector.broadcast %48 : vector<1x1x32xf32> to vector<20x20x32xf32>
    %51 = arith.mulf %49, %50 : vector<20x20x32xf32>
    %52 = arith.addf %44, %51 : vector<20x20x32xf32>
    %53 = vector.extract_strided_slice %5 {offsets = [2, 0, 0], sizes = [20, 20, 1], strides = [1, 1, 1]} : vector<22x22x1xf32> to vector<20x20x1xf32>
    %c6 = arith.constant 6 : index
    %c0_11 = arith.constant 0 : index
    %54 = vector.load %arg2[%c6, %c0_11] : memref<9x32xf32, #tpu.memory_space<vmem>>, vector<1x32xf32>
    %55 = vector.shape_cast %54 : vector<1x32xf32> to vector<32xf32>
    %56 = vector.shape_cast %55 : vector<32xf32> to vector<1x1x32xf32>
    %57 = vector.broadcast %53 : vector<20x20x1xf32> to vector<20x20x32xf32>
    %58 = vector.broadcast %56 : vector<1x1x32xf32> to vector<20x20x32xf32>
    %59 = arith.mulf %57, %58 : vector<20x20x32xf32>
    %60 = arith.addf %52, %59 : vector<20x20x32xf32>
    %61 = vector.extract_strided_slice %5 {offsets = [2, 1, 0], sizes = [20, 20, 1], strides = [1, 1, 1]} : vector<22x22x1xf32> to vector<20x20x1xf32>
    %c7 = arith.constant 7 : index
    %c0_12 = arith.constant 0 : index
    %62 = vector.load %arg2[%c7, %c0_12] : memref<9x32xf32, #tpu.memory_space<vmem>>, vector<1x32xf32>
    %63 = vector.shape_cast %62 : vector<1x32xf32> to vector<32xf32>
    %64 = vector.shape_cast %63 : vector<32xf32> to vector<1x1x32xf32>
    %65 = vector.broadcast %61 : vector<20x20x1xf32> to vector<20x20x32xf32>
    %66 = vector.broadcast %64 : vector<1x1x32xf32> to vector<20x20x32xf32>
    %67 = arith.mulf %65, %66 : vector<20x20x32xf32>
    %68 = arith.addf %60, %67 : vector<20x20x32xf32>
    %69 = vector.extract_strided_slice %5 {offsets = [2, 2, 0], sizes = [20, 20, 1], strides = [1, 1, 1]} : vector<22x22x1xf32> to vector<20x20x1xf32>
    %c8 = arith.constant 8 : index
    %c0_13 = arith.constant 0 : index
    %70 = vector.load %arg2[%c8, %c0_13] : memref<9x32xf32, #tpu.memory_space<vmem>>, vector<1x32xf32>
    %71 = vector.shape_cast %70 : vector<1x32xf32> to vector<32xf32>
    %72 = vector.shape_cast %71 : vector<32xf32> to vector<1x1x32xf32>
    %73 = vector.broadcast %69 : vector<20x20x1xf32> to vector<20x20x32xf32>
    %74 = vector.broadcast %72 : vector<1x1x32xf32> to vector<20x20x32xf32>
    %75 = arith.mulf %73, %74 : vector<20x20x32xf32>
    %76 = arith.addf %68, %75 : vector<20x20x32xf32>
    %c0_14 = arith.constant 0 : index
    %c0_15 = arith.constant 0 : index
    %77 = vector.load %arg3[%c0_14, %c0_15] : memref<1x32xf32, #tpu.memory_space<vmem>>, vector<1x32xf32>
    %78 = vector.shape_cast %77 : vector<1x32xf32> to vector<32xf32>
    %79 = vector.shape_cast %78 : vector<32xf32> to vector<1x1x32xf32>
    %80 = vector.broadcast %79 : vector<1x1x32xf32> to vector<20x20x32xf32>
    %81 = arith.addf %76, %80 : vector<20x20x32xf32>
    %cst_16 = arith.constant 0.000000e+00 : f32
    %82 = vector.broadcast %cst_16 : f32 to vector<20x20x32xf32>
    %83 = arith.maximumf %81, %82 : vector<20x20x32xf32>
    %84 = vector.shape_cast %83 : vector<20x20x32xf32> to vector<20x4x5x32xf32>
    %cst_17 = arith.constant dense<0xFF800000> : vector<20x4x32xf32>
    %85 = vector.multi_reduction <maximumf>, %84, %cst_17 [2] : vector<20x4x5x32xf32> to vector<20x4x32xf32>
    %86 = vector.shape_cast %85 : vector<20x4x32xf32> to vector<4x5x4x32xf32>
    %87 = vector.extract_strided_slice %86 {offsets = [0, 0, 0, 0], sizes = [4, 1, 4, 32], strides = [1, 1, 1, 1]} : vector<4x5x4x32xf32> to vector<4x1x4x32xf32>
    %88 = vector.shape_cast %87 : vector<4x1x4x32xf32> to vector<4x4x32xf32>
    %89 = vector.extract_strided_slice %86 {offsets = [0, 1, 0, 0], sizes = [4, 1, 4, 32], strides = [1, 1, 1, 1]} : vector<4x5x4x32xf32> to vector<4x1x4x32xf32>
    %90 = vector.shape_cast %89 : vector<4x1x4x32xf32> to vector<4x4x32xf32>
    %91 = arith.maximumf %88, %90 : vector<4x4x32xf32>
    %92 = vector.extract_strided_slice %86 {offsets = [0, 2, 0, 0], sizes = [4, 1, 4, 32], strides = [1, 1, 1, 1]} : vector<4x5x4x32xf32> to vector<4x1x4x32xf32>
    %93 = vector.shape_cast %92 : vector<4x1x4x32xf32> to vector<4x4x32xf32>
    %94 = arith.maximumf %91, %93 : vector<4x4x32xf32>
    %95 = vector.extract_strided_slice %86 {offsets = [0, 3, 0, 0], sizes = [4, 1, 4, 32], strides = [1, 1, 1, 1]} : vector<4x5x4x32xf32> to vector<4x1x4x32xf32>
    %96 = vector.shape_cast %95 : vector<4x1x4x32xf32> to vector<4x4x32xf32>
    %97 = arith.maximumf %94, %96 : vector<4x4x32xf32>
    %98 = vector.extract_strided_slice %86 {offsets = [0, 4, 0, 0], sizes = [4, 1, 4, 32], strides = [1, 1, 1, 1]} : vector<4x5x4x32xf32> to vector<4x1x4x32xf32>
    %99 = vector.shape_cast %98 : vector<4x1x4x32xf32> to vector<4x4x32xf32>
    %100 = arith.maximumf %97, %99 : vector<4x4x32xf32>
    %cst_18 = arith.constant 0.000000e+00 : f32
    %101 = vector.broadcast %cst_18 : f32 to vector<1x4x32xf32>
    %102 = tpu.concatenate %101, %100, %101 in 0 : vector<1x4x32xf32>, vector<4x4x32xf32>, vector<1x4x32xf32> -> vector<6x4x32xf32>
    %cst_19 = arith.constant 0.000000e+00 : f32
    %103 = vector.broadcast %cst_19 : f32 to vector<6x1x32xf32>
    %104 = tpu.concatenate %103, %102, %103 in 1 : vector<6x1x32xf32>, vector<6x4x32xf32>, vector<6x1x32xf32> -> vector<6x6x32xf32>
    %105 = vector.extract_strided_slice %104 {offsets = [0, 0, 0], sizes = [4, 4, 32], strides = [1, 1, 1]} : vector<6x6x32xf32> to vector<4x4x32xf32>
    %106 = vector.extract_strided_slice %104 {offsets = [0, 1, 0], sizes = [4, 4, 32], strides = [1, 1, 1]} : vector<6x6x32xf32> to vector<4x4x32xf32>
    %107 = vector.extract_strided_slice %104 {offsets = [0, 2, 0], sizes = [4, 4, 32], strides = [1, 1, 1]} : vector<6x6x32xf32> to vector<4x4x32xf32>
    %108 = vector.extract_strided_slice %104 {offsets = [1, 0, 0], sizes = [4, 4, 32], strides = [1, 1, 1]} : vector<6x6x32xf32> to vector<4x4x32xf32>
    %109 = vector.extract_strided_slice %104 {offsets = [1, 1, 0], sizes = [4, 4, 32], strides = [1, 1, 1]} : vector<6x6x32xf32> to vector<4x4x32xf32>
    %110 = vector.extract_strided_slice %104 {offsets = [1, 2, 0], sizes = [4, 4, 32], strides = [1, 1, 1]} : vector<6x6x32xf32> to vector<4x4x32xf32>
    %111 = vector.extract_strided_slice %104 {offsets = [2, 0, 0], sizes = [4, 4, 32], strides = [1, 1, 1]} : vector<6x6x32xf32> to vector<4x4x32xf32>
    %112 = vector.extract_strided_slice %104 {offsets = [2, 1, 0], sizes = [4, 4, 32], strides = [1, 1, 1]} : vector<6x6x32xf32> to vector<4x4x32xf32>
    %113 = vector.extract_strided_slice %104 {offsets = [2, 2, 0], sizes = [4, 4, 32], strides = [1, 1, 1]} : vector<6x6x32xf32> to vector<4x4x32xf32>
    %114 = tpu.concatenate %105, %106, %107, %108, %109, %110, %111, %112, %113 in 2 : vector<4x4x32xf32>, vector<4x4x32xf32>, vector<4x4x32xf32>, vector<4x4x32xf32>, vector<4x4x32xf32>, vector<4x4x32xf32>, vector<4x4x32xf32>, vector<4x4x32xf32>, vector<4x4x32xf32> -> vector<4x4x288xf32>
    %115 = vector.shape_cast %114 : vector<4x4x288xf32> to vector<16x288xf32>
    %c0_20 = arith.constant 0 : index
    %c0_21 = arith.constant 0 : index
    %116 = vector.load %arg4[%c0_20, %c0_21] : memref<288x16xf32, #tpu.memory_space<vmem>>, vector<288x16xf32>
    %cst_22 = arith.constant dense<0.000000e+00> : vector<16x16xf32>
    %117 = tpu.matmul %115, %116, %cst_22 {dimension_numbers = #tpu.dot_dimension_numbers<[1], [0], [0], [1], [0, 0, 1, 1], [], []>} : vector<16x288xf32>, vector<288x16xf32>, vector<16x16xf32> -> vector<16x16xf32>
    %c0_23 = arith.constant 0 : index
    %c0_24 = arith.constant 0 : index
    %118 = vector.load %arg5[%c0_23, %c0_24] : memref<1x16xf32, #tpu.memory_space<vmem>>, vector<1x16xf32>
    %119 = vector.broadcast %118 : vector<1x16xf32> to vector<16x16xf32>
    %120 = arith.addf %117, %119 : vector<16x16xf32>
    %cst_25 = arith.constant 0.000000e+00 : f32
    %121 = vector.broadcast %cst_25 : f32 to vector<16x16xf32>
    %122 = arith.maximumf %120, %121 : vector<16x16xf32>
    %123 = vector.shape_cast %122 : vector<16x16xf32> to vector<4x4x16xf32>
    %124 = vector.shape_cast %123 : vector<4x4x16xf32> to vector<4x2x2x16xf32>
    %cst_26 = arith.constant dense<0xFF800000> : vector<4x2x16xf32>
    %125 = vector.multi_reduction <maximumf>, %124, %cst_26 [2] : vector<4x2x2x16xf32> to vector<4x2x16xf32>
    %126 = vector.shape_cast %125 : vector<4x2x16xf32> to vector<2x2x2x16xf32>
    %127 = vector.extract_strided_slice %126 {offsets = [0, 0, 0, 0], sizes = [2, 1, 2, 16], strides = [1, 1, 1, 1]} : vector<2x2x2x16xf32> to vector<2x1x2x16xf32>
    %128 = vector.shape_cast %127 : vector<2x1x2x16xf32> to vector<2x2x16xf32>
    %129 = vector.extract_strided_slice %126 {offsets = [0, 1, 0, 0], sizes = [2, 1, 2, 16], strides = [1, 1, 1, 1]} : vector<2x2x2x16xf32> to vector<2x1x2x16xf32>
    %130 = vector.shape_cast %129 : vector<2x1x2x16xf32> to vector<2x2x16xf32>
    %131 = arith.maximumf %128, %130 : vector<2x2x16xf32>
    %cst_27 = arith.constant 0.000000e+00 : f32
    %132 = vector.broadcast %cst_27 : f32 to vector<1x2x16xf32>
    %133 = tpu.concatenate %132, %131, %132 in 0 : vector<1x2x16xf32>, vector<2x2x16xf32>, vector<1x2x16xf32> -> vector<4x2x16xf32>
    %cst_28 = arith.constant 0.000000e+00 : f32
    %134 = vector.broadcast %cst_28 : f32 to vector<4x1x16xf32>
    %135 = tpu.concatenate %134, %133, %134 in 1 : vector<4x1x16xf32>, vector<4x2x16xf32>, vector<4x1x16xf32> -> vector<4x4x16xf32>
    %136 = vector.extract_strided_slice %135 {offsets = [0, 0, 0], sizes = [2, 2, 16], strides = [1, 1, 1]} : vector<4x4x16xf32> to vector<2x2x16xf32>
    %137 = vector.extract_strided_slice %135 {offsets = [0, 1, 0], sizes = [2, 2, 16], strides = [1, 1, 1]} : vector<4x4x16xf32> to vector<2x2x16xf32>
    %138 = vector.extract_strided_slice %135 {offsets = [0, 2, 0], sizes = [2, 2, 16], strides = [1, 1, 1]} : vector<4x4x16xf32> to vector<2x2x16xf32>
    %139 = vector.extract_strided_slice %135 {offsets = [1, 0, 0], sizes = [2, 2, 16], strides = [1, 1, 1]} : vector<4x4x16xf32> to vector<2x2x16xf32>
    %140 = vector.extract_strided_slice %135 {offsets = [1, 1, 0], sizes = [2, 2, 16], strides = [1, 1, 1]} : vector<4x4x16xf32> to vector<2x2x16xf32>
    %141 = vector.extract_strided_slice %135 {offsets = [1, 2, 0], sizes = [2, 2, 16], strides = [1, 1, 1]} : vector<4x4x16xf32> to vector<2x2x16xf32>
    %142 = vector.extract_strided_slice %135 {offsets = [2, 0, 0], sizes = [2, 2, 16], strides = [1, 1, 1]} : vector<4x4x16xf32> to vector<2x2x16xf32>
    %143 = vector.extract_strided_slice %135 {offsets = [2, 1, 0], sizes = [2, 2, 16], strides = [1, 1, 1]} : vector<4x4x16xf32> to vector<2x2x16xf32>
    %144 = vector.extract_strided_slice %135 {offsets = [2, 2, 0], sizes = [2, 2, 16], strides = [1, 1, 1]} : vector<4x4x16xf32> to vector<2x2x16xf32>
    %145 = tpu.concatenate %136, %137, %138, %139, %140, %141, %142, %143, %144 in 2 : vector<2x2x16xf32>, vector<2x2x16xf32>, vector<2x2x16xf32>, vector<2x2x16xf32>, vector<2x2x16xf32>, vector<2x2x16xf32>, vector<2x2x16xf32>, vector<2x2x16xf32>, vector<2x2x16xf32> -> vector<2x2x144xf32>
    %146 = vector.shape_cast %145 : vector<2x2x144xf32> to vector<4x144xf32>
    %c0_29 = arith.constant 0 : index
    %c0_30 = arith.constant 0 : index
    %147 = vector.load %arg6[%c0_29, %c0_30] : memref<144x16xf32, #tpu.memory_space<vmem>>, vector<144x16xf32>
    %cst_31 = arith.constant dense<0.000000e+00> : vector<4x16xf32>
    %148 = tpu.matmul %146, %147, %cst_31 {dimension_numbers = #tpu.dot_dimension_numbers<[1], [0], [0], [1], [0, 0, 1, 1], [], []>} : vector<4x144xf32>, vector<144x16xf32>, vector<4x16xf32> -> vector<4x16xf32>
    %c0_32 = arith.constant 0 : index
    %c0_33 = arith.constant 0 : index
    %149 = vector.load %arg7[%c0_32, %c0_33] : memref<1x16xf32, #tpu.memory_space<vmem>>, vector<1x16xf32>
    %150 = vector.broadcast %149 : vector<1x16xf32> to vector<4x16xf32>
    %151 = arith.addf %148, %150 : vector<4x16xf32>
    %cst_34 = arith.constant 0.000000e+00 : f32
    %152 = vector.broadcast %cst_34 : f32 to vector<4x16xf32>
    %153 = arith.maximumf %151, %152 : vector<4x16xf32>
    %154 = vector.shape_cast %153 : vector<4x16xf32> to vector<2x2x16xf32>
    %155 = vector.shape_cast %154 : vector<2x2x16xf32> to vector<2x1x2x16xf32>
    %156 = vector.shape_cast %155 : vector<2x1x2x16xf32> to vector<2x1x2x16xf32>
    %157 = vector.broadcast %156 : vector<2x1x2x16xf32> to vector<2x2x2x16xf32>
    %158 = vector.shape_cast %157 : vector<2x2x2x16xf32> to vector<4x2x16xf32>
    %159 = vector.extract_strided_slice %158 {offsets = [0, 0, 0], sizes = [4, 1, 16], strides = [1, 1, 1]} : vector<4x2x16xf32> to vector<4x1x16xf32>
    %160 = vector.shape_cast %159 : vector<4x1x16xf32> to vector<4x1x16xf32>
    %161 = vector.broadcast %160 : vector<4x1x16xf32> to vector<4x2x16xf32>
    %162 = vector.extract_strided_slice %158 {offsets = [0, 1, 0], sizes = [4, 1, 16], strides = [1, 1, 1]} : vector<4x2x16xf32> to vector<4x1x16xf32>
    %163 = vector.shape_cast %162 : vector<4x1x16xf32> to vector<4x1x16xf32>
    %164 = vector.broadcast %163 : vector<4x1x16xf32> to vector<4x2x16xf32>
    %165 = tpu.concatenate %161, %164 in 1 : vector<4x2x16xf32>, vector<4x2x16xf32> -> vector<4x4x16xf32>
    %cst_35 = arith.constant 0.000000e+00 : f32
    %166 = vector.broadcast %cst_35 : f32 to vector<1x4x16xf32>
    %167 = tpu.concatenate %166, %165, %166 in 0 : vector<1x4x16xf32>, vector<4x4x16xf32>, vector<1x4x16xf32> -> vector<6x4x16xf32>
    %cst_36 = arith.constant 0.000000e+00 : f32
    %168 = vector.broadcast %cst_36 : f32 to vector<6x1x16xf32>
    %169 = tpu.concatenate %168, %167, %168 in 1 : vector<6x1x16xf32>, vector<6x4x16xf32>, vector<6x1x16xf32> -> vector<6x6x16xf32>
    %170 = vector.extract_strided_slice %169 {offsets = [0, 0, 0], sizes = [4, 4, 16], strides = [1, 1, 1]} : vector<6x6x16xf32> to vector<4x4x16xf32>
    %171 = vector.extract_strided_slice %169 {offsets = [0, 1, 0], sizes = [4, 4, 16], strides = [1, 1, 1]} : vector<6x6x16xf32> to vector<4x4x16xf32>
    %172 = vector.extract_strided_slice %169 {offsets = [0, 2, 0], sizes = [4, 4, 16], strides = [1, 1, 1]} : vector<6x6x16xf32> to vector<4x4x16xf32>
    %173 = vector.extract_strided_slice %169 {offsets = [1, 0, 0], sizes = [4, 4, 16], strides = [1, 1, 1]} : vector<6x6x16xf32> to vector<4x4x16xf32>
    %174 = vector.extract_strided_slice %169 {offsets = [1, 1, 0], sizes = [4, 4, 16], strides = [1, 1, 1]} : vector<6x6x16xf32> to vector<4x4x16xf32>
    %175 = vector.extract_strided_slice %169 {offsets = [1, 2, 0], sizes = [4, 4, 16], strides = [1, 1, 1]} : vector<6x6x16xf32> to vector<4x4x16xf32>
    %176 = vector.extract_strided_slice %169 {offsets = [2, 0, 0], sizes = [4, 4, 16], strides = [1, 1, 1]} : vector<6x6x16xf32> to vector<4x4x16xf32>
    %177 = vector.extract_strided_slice %169 {offsets = [2, 1, 0], sizes = [4, 4, 16], strides = [1, 1, 1]} : vector<6x6x16xf32> to vector<4x4x16xf32>
    %178 = vector.extract_strided_slice %169 {offsets = [2, 2, 0], sizes = [4, 4, 16], strides = [1, 1, 1]} : vector<6x6x16xf32> to vector<4x4x16xf32>
    %179 = tpu.concatenate %170, %171, %172, %173, %174, %175, %176, %177, %178 in 2 : vector<4x4x16xf32>, vector<4x4x16xf32>, vector<4x4x16xf32>, vector<4x4x16xf32>, vector<4x4x16xf32>, vector<4x4x16xf32>, vector<4x4x16xf32>, vector<4x4x16xf32>, vector<4x4x16xf32> -> vector<4x4x144xf32>
    %180 = vector.shape_cast %179 : vector<4x4x144xf32> to vector<16x144xf32>
    %c0_37 = arith.constant 0 : index
    %c0_38 = arith.constant 0 : index
    %181 = vector.load %arg8[%c0_37, %c0_38] : memref<144x32xf32, #tpu.memory_space<vmem>>, vector<144x32xf32>
    %cst_39 = arith.constant dense<0.000000e+00> : vector<16x32xf32>
    %182 = tpu.matmul %180, %181, %cst_39 {dimension_numbers = #tpu.dot_dimension_numbers<[1], [0], [0], [1], [0, 0, 1, 1], [], []>} : vector<16x144xf32>, vector<144x32xf32>, vector<16x32xf32> -> vector<16x32xf32>
    %c0_40 = arith.constant 0 : index
    %c0_41 = arith.constant 0 : index
    %183 = vector.load %arg9[%c0_40, %c0_41] : memref<1x32xf32, #tpu.memory_space<vmem>>, vector<1x32xf32>
    %184 = vector.broadcast %183 : vector<1x32xf32> to vector<16x32xf32>
    %185 = arith.addf %182, %184 : vector<16x32xf32>
    %cst_42 = arith.constant 0.000000e+00 : f32
    %186 = vector.broadcast %cst_42 : f32 to vector<16x32xf32>
    %187 = arith.maximumf %185, %186 : vector<16x32xf32>
    %188 = vector.shape_cast %187 : vector<16x32xf32> to vector<4x4x32xf32>
    %189 = vector.shape_cast %188 : vector<4x4x32xf32> to vector<4x1x4x32xf32>
    %190 = vector.shape_cast %189 : vector<4x1x4x32xf32> to vector<4x1x4x32xf32>
    %191 = vector.broadcast %190 : vector<4x1x4x32xf32> to vector<4x5x4x32xf32>
    %192 = vector.shape_cast %191 : vector<4x5x4x32xf32> to vector<20x4x32xf32>
    %193 = vector.extract_strided_slice %192 {offsets = [0, 0, 0], sizes = [20, 1, 32], strides = [1, 1, 1]} : vector<20x4x32xf32> to vector<20x1x32xf32>
    %194 = vector.shape_cast %193 : vector<20x1x32xf32> to vector<20x1x32xf32>
    %195 = vector.broadcast %194 : vector<20x1x32xf32> to vector<20x5x32xf32>
    %196 = vector.extract_strided_slice %192 {offsets = [0, 1, 0], sizes = [20, 1, 32], strides = [1, 1, 1]} : vector<20x4x32xf32> to vector<20x1x32xf32>
    %197 = vector.shape_cast %196 : vector<20x1x32xf32> to vector<20x1x32xf32>
    %198 = vector.broadcast %197 : vector<20x1x32xf32> to vector<20x5x32xf32>
    %199 = vector.extract_strided_slice %192 {offsets = [0, 2, 0], sizes = [20, 1, 32], strides = [1, 1, 1]} : vector<20x4x32xf32> to vector<20x1x32xf32>
    %200 = vector.shape_cast %199 : vector<20x1x32xf32> to vector<20x1x32xf32>
    %201 = vector.broadcast %200 : vector<20x1x32xf32> to vector<20x5x32xf32>
    %202 = vector.extract_strided_slice %192 {offsets = [0, 3, 0], sizes = [20, 1, 32], strides = [1, 1, 1]} : vector<20x4x32xf32> to vector<20x1x32xf32>
    %203 = vector.shape_cast %202 : vector<20x1x32xf32> to vector<20x1x32xf32>
    %204 = vector.broadcast %203 : vector<20x1x32xf32> to vector<20x5x32xf32>
    %205 = tpu.concatenate %195, %198, %201, %204 in 1 : vector<20x5x32xf32>, vector<20x5x32xf32>, vector<20x5x32xf32>, vector<20x5x32xf32> -> vector<20x20x32xf32>
    %cst_43 = arith.constant 0.000000e+00 : f32
    %206 = vector.broadcast %cst_43 : f32 to vector<1x20x32xf32>
    %207 = tpu.concatenate %206, %205, %206 in 0 : vector<1x20x32xf32>, vector<20x20x32xf32>, vector<1x20x32xf32> -> vector<22x20x32xf32>
    %cst_44 = arith.constant 0.000000e+00 : f32
    %208 = vector.broadcast %cst_44 : f32 to vector<22x1x32xf32>
    %209 = tpu.concatenate %208, %207, %208 in 1 : vector<22x1x32xf32>, vector<22x20x32xf32>, vector<22x1x32xf32> -> vector<22x22x32xf32>
    %cst_45 = arith.constant 0.000000e+00 : f32
    %210 = vector.broadcast %cst_45 : f32 to vector<20x20xf32>
    %211 = vector.extract_strided_slice %209 {offsets = [0, 0, 0], sizes = [20, 20, 32], strides = [1, 1, 1]} : vector<22x22x32xf32> to vector<20x20x32xf32>
    %c0_46 = arith.constant 0 : index
    %c0_47 = arith.constant 0 : index
    %212 = vector.load %arg10[%c0_46, %c0_47] : memref<9x32xf32, #tpu.memory_space<vmem>>, vector<1x32xf32>
    %213 = vector.shape_cast %212 : vector<1x32xf32> to vector<32xf32>
    %214 = vector.shape_cast %213 : vector<32xf32> to vector<1x1x32xf32>
    %215 = vector.broadcast %214 : vector<1x1x32xf32> to vector<20x20x32xf32>
    %216 = arith.mulf %211, %215 : vector<20x20x32xf32>
    %cst_48 = arith.constant dense<0.000000e+00> : vector<20x20xf32>
    %217 = vector.multi_reduction <add>, %216, %cst_48 [2] : vector<20x20x32xf32> to vector<20x20xf32>
    %218 = arith.addf %210, %217 : vector<20x20xf32>
    %219 = vector.extract_strided_slice %209 {offsets = [0, 1, 0], sizes = [20, 20, 32], strides = [1, 1, 1]} : vector<22x22x32xf32> to vector<20x20x32xf32>
    %c1_49 = arith.constant 1 : index
    %c0_50 = arith.constant 0 : index
    %220 = vector.load %arg10[%c1_49, %c0_50] : memref<9x32xf32, #tpu.memory_space<vmem>>, vector<1x32xf32>
    %221 = vector.shape_cast %220 : vector<1x32xf32> to vector<32xf32>
    %222 = vector.shape_cast %221 : vector<32xf32> to vector<1x1x32xf32>
    %223 = vector.broadcast %222 : vector<1x1x32xf32> to vector<20x20x32xf32>
    %224 = arith.mulf %219, %223 : vector<20x20x32xf32>
    %cst_51 = arith.constant dense<0.000000e+00> : vector<20x20xf32>
    %225 = vector.multi_reduction <add>, %224, %cst_51 [2] : vector<20x20x32xf32> to vector<20x20xf32>
    %226 = arith.addf %218, %225 : vector<20x20xf32>
    %227 = vector.extract_strided_slice %209 {offsets = [0, 2, 0], sizes = [20, 20, 32], strides = [1, 1, 1]} : vector<22x22x32xf32> to vector<20x20x32xf32>
    %c2_52 = arith.constant 2 : index
    %c0_53 = arith.constant 0 : index
    %228 = vector.load %arg10[%c2_52, %c0_53] : memref<9x32xf32, #tpu.memory_space<vmem>>, vector<1x32xf32>
    %229 = vector.shape_cast %228 : vector<1x32xf32> to vector<32xf32>
    %230 = vector.shape_cast %229 : vector<32xf32> to vector<1x1x32xf32>
    %231 = vector.broadcast %230 : vector<1x1x32xf32> to vector<20x20x32xf32>
    %232 = arith.mulf %227, %231 : vector<20x20x32xf32>
    %cst_54 = arith.constant dense<0.000000e+00> : vector<20x20xf32>
    %233 = vector.multi_reduction <add>, %232, %cst_54 [2] : vector<20x20x32xf32> to vector<20x20xf32>
    %234 = arith.addf %226, %233 : vector<20x20xf32>
    %235 = vector.extract_strided_slice %209 {offsets = [1, 0, 0], sizes = [20, 20, 32], strides = [1, 1, 1]} : vector<22x22x32xf32> to vector<20x20x32xf32>
    %c3_55 = arith.constant 3 : index
    %c0_56 = arith.constant 0 : index
    %236 = vector.load %arg10[%c3_55, %c0_56] : memref<9x32xf32, #tpu.memory_space<vmem>>, vector<1x32xf32>
    %237 = vector.shape_cast %236 : vector<1x32xf32> to vector<32xf32>
    %238 = vector.shape_cast %237 : vector<32xf32> to vector<1x1x32xf32>
    %239 = vector.broadcast %238 : vector<1x1x32xf32> to vector<20x20x32xf32>
    %240 = arith.mulf %235, %239 : vector<20x20x32xf32>
    %cst_57 = arith.constant dense<0.000000e+00> : vector<20x20xf32>
    %241 = vector.multi_reduction <add>, %240, %cst_57 [2] : vector<20x20x32xf32> to vector<20x20xf32>
    %242 = arith.addf %234, %241 : vector<20x20xf32>
    %243 = vector.extract_strided_slice %209 {offsets = [1, 1, 0], sizes = [20, 20, 32], strides = [1, 1, 1]} : vector<22x22x32xf32> to vector<20x20x32xf32>
    %c4_58 = arith.constant 4 : index
    %c0_59 = arith.constant 0 : index
    %244 = vector.load %arg10[%c4_58, %c0_59] : memref<9x32xf32, #tpu.memory_space<vmem>>, vector<1x32xf32>
    %245 = vector.shape_cast %244 : vector<1x32xf32> to vector<32xf32>
    %246 = vector.shape_cast %245 : vector<32xf32> to vector<1x1x32xf32>
    %247 = vector.broadcast %246 : vector<1x1x32xf32> to vector<20x20x32xf32>
    %248 = arith.mulf %243, %247 : vector<20x20x32xf32>
    %cst_60 = arith.constant dense<0.000000e+00> : vector<20x20xf32>
    %249 = vector.multi_reduction <add>, %248, %cst_60 [2] : vector<20x20x32xf32> to vector<20x20xf32>
    %250 = arith.addf %242, %249 : vector<20x20xf32>
    %251 = vector.extract_strided_slice %209 {offsets = [1, 2, 0], sizes = [20, 20, 32], strides = [1, 1, 1]} : vector<22x22x32xf32> to vector<20x20x32xf32>
    %c5_61 = arith.constant 5 : index
    %c0_62 = arith.constant 0 : index
    %252 = vector.load %arg10[%c5_61, %c0_62] : memref<9x32xf32, #tpu.memory_space<vmem>>, vector<1x32xf32>
    %253 = vector.shape_cast %252 : vector<1x32xf32> to vector<32xf32>
    %254 = vector.shape_cast %253 : vector<32xf32> to vector<1x1x32xf32>
    %255 = vector.broadcast %254 : vector<1x1x32xf32> to vector<20x20x32xf32>
    %256 = arith.mulf %251, %255 : vector<20x20x32xf32>
    %cst_63 = arith.constant dense<0.000000e+00> : vector<20x20xf32>
    %257 = vector.multi_reduction <add>, %256, %cst_63 [2] : vector<20x20x32xf32> to vector<20x20xf32>
    %258 = arith.addf %250, %257 : vector<20x20xf32>
    %259 = vector.extract_strided_slice %209 {offsets = [2, 0, 0], sizes = [20, 20, 32], strides = [1, 1, 1]} : vector<22x22x32xf32> to vector<20x20x32xf32>
    %c6_64 = arith.constant 6 : index
    %c0_65 = arith.constant 0 : index
    %260 = vector.load %arg10[%c6_64, %c0_65] : memref<9x32xf32, #tpu.memory_space<vmem>>, vector<1x32xf32>
    %261 = vector.shape_cast %260 : vector<1x32xf32> to vector<32xf32>
    %262 = vector.shape_cast %261 : vector<32xf32> to vector<1x1x32xf32>
    %263 = vector.broadcast %262 : vector<1x1x32xf32> to vector<20x20x32xf32>
    %264 = arith.mulf %259, %263 : vector<20x20x32xf32>
    %cst_66 = arith.constant dense<0.000000e+00> : vector<20x20xf32>
    %265 = vector.multi_reduction <add>, %264, %cst_66 [2] : vector<20x20x32xf32> to vector<20x20xf32>
    %266 = arith.addf %258, %265 : vector<20x20xf32>
    %267 = vector.extract_strided_slice %209 {offsets = [2, 1, 0], sizes = [20, 20, 32], strides = [1, 1, 1]} : vector<22x22x32xf32> to vector<20x20x32xf32>
    %c7_67 = arith.constant 7 : index
    %c0_68 = arith.constant 0 : index
    %268 = vector.load %arg10[%c7_67, %c0_68] : memref<9x32xf32, #tpu.memory_space<vmem>>, vector<1x32xf32>
    %269 = vector.shape_cast %268 : vector<1x32xf32> to vector<32xf32>
    %270 = vector.shape_cast %269 : vector<32xf32> to vector<1x1x32xf32>
    %271 = vector.broadcast %270 : vector<1x1x32xf32> to vector<20x20x32xf32>
    %272 = arith.mulf %267, %271 : vector<20x20x32xf32>
    %cst_69 = arith.constant dense<0.000000e+00> : vector<20x20xf32>
    %273 = vector.multi_reduction <add>, %272, %cst_69 [2] : vector<20x20x32xf32> to vector<20x20xf32>
    %274 = arith.addf %266, %273 : vector<20x20xf32>
    %275 = vector.extract_strided_slice %209 {offsets = [2, 2, 0], sizes = [20, 20, 32], strides = [1, 1, 1]} : vector<22x22x32xf32> to vector<20x20x32xf32>
    %c8_70 = arith.constant 8 : index
    %c0_71 = arith.constant 0 : index
    %276 = vector.load %arg10[%c8_70, %c0_71] : memref<9x32xf32, #tpu.memory_space<vmem>>, vector<1x32xf32>
    %277 = vector.shape_cast %276 : vector<1x32xf32> to vector<32xf32>
    %278 = vector.shape_cast %277 : vector<32xf32> to vector<1x1x32xf32>
    %279 = vector.broadcast %278 : vector<1x1x32xf32> to vector<20x20x32xf32>
    %280 = arith.mulf %275, %279 : vector<20x20x32xf32>
    %cst_72 = arith.constant dense<0.000000e+00> : vector<20x20xf32>
    %281 = vector.multi_reduction <add>, %280, %cst_72 [2] : vector<20x20x32xf32> to vector<20x20xf32>
    %282 = arith.addf %274, %281 : vector<20x20xf32>
    %c0_73 = arith.constant 0 : index
    %c0_74 = arith.constant 0 : index
    %283 = vector.load %arg11[%c0_73, %c0_74] : memref<1x1xf32, #tpu.memory_space<vmem>>, vector<1x1xf32>
    %284 = vector.broadcast %283 : vector<1x1xf32> to vector<20x20xf32>
    %285 = arith.addf %282, %284 : vector<20x20xf32>
    %286 = arith.negf %285 : vector<20x20xf32>
    %287 = math.exp %286 : vector<20x20xf32>
    %cst_75 = arith.constant 1.000000e+00 : f32
    %288 = vector.broadcast %cst_75 : f32 to vector<20x20xf32>
    %289 = arith.addf %288, %287 : vector<20x20xf32>
    %290 = arith.divf %288, %289 : vector<20x20xf32>
    %c0_76 = arith.constant 0 : index
    %c0_77 = arith.constant 0 : index
    %c0_78 = arith.constant 0 : index
    %291 = vector.load %arg12[%c0_76, %c0_77, %c0_78] : memref<1x20x20xf32, #tpu.memory_space<vmem>>, vector<1x20x20xf32>
    %292 = vector.shape_cast %291 : vector<1x20x20xf32> to vector<20x20xf32>
    %293 = vector.shape_cast %290 : vector<20x20xf32> to vector<1x20x20xf32>
    tpu.vector_store %arg12[%c0_76, %c0_77, %c0_78], %293 {strides = array<i32>} : memref<1x20x20xf32, #tpu.memory_space<vmem>>, vector<1x20x20xf32>,
    return
  }
  func.func @transform_0(%arg0: i32) -> (i32, i32, i32, i32) {
    %c0_i32 = arith.constant 0 : i32
    %c0_i32_0 = arith.constant 0 : i32
    %c0_i32_1 = arith.constant 0 : i32
    %c0_i32_2 = arith.constant 0 : i32
    return %arg0, %c0_i32, %c0_i32_0, %c0_i32_1 : i32, i32, i32, i32
  }
  func.func @transform_1(%arg0: i32) -> (i32, i32) {
    %c0_i32 = arith.constant 0 : i32
    %c0_i32_0 = arith.constant 0 : i32
    %c0_i32_1 = arith.constant 0 : i32
    return %c0_i32, %c0_i32_0 : i32, i32
  }
  func.func @transform_2(%arg0: i32) -> (i32, i32) {
    %c0_i32 = arith.constant 0 : i32
    %c0_i32_0 = arith.constant 0 : i32
    %c0_i32_1 = arith.constant 0 : i32
    return %c0_i32, %c0_i32_0 : i32, i32
  }
  func.func @transform_3(%arg0: i32) -> (i32, i32) {
    %c0_i32 = arith.constant 0 : i32
    %c0_i32_0 = arith.constant 0 : i32
    %c0_i32_1 = arith.constant 0 : i32
    return %c0_i32, %c0_i32_0 : i32, i32
  }
  func.func @transform_4(%arg0: i32) -> (i32, i32) {
    %c0_i32 = arith.constant 0 : i32
    %c0_i32_0 = arith.constant 0 : i32
    %c0_i32_1 = arith.constant 0 : i32
    return %c0_i32, %c0_i32_0 : i32, i32
  }
  func.func @transform_5(%arg0: i32) -> (i32, i32) {
    %c0_i32 = arith.constant 0 : i32
    %c0_i32_0 = arith.constant 0 : i32
    %c0_i32_1 = arith.constant 0 : i32
    return %c0_i32, %c0_i32_0 : i32, i32
  }
  func.func @transform_6(%arg0: i32) -> (i32, i32) {
    %c0_i32 = arith.constant 0 : i32
    %c0_i32_0 = arith.constant 0 : i32
    %c0_i32_1 = arith.constant 0 : i32
    return %c0_i32, %c0_i32_0 : i32, i32
  }
  func.func @transform_7(%arg0: i32) -> (i32, i32) {
    %c0_i32 = arith.constant 0 : i32
    %c0_i32_0 = arith.constant 0 : i32
    %c0_i32_1 = arith.constant 0 : i32
    return %c0_i32, %c0_i32_0 : i32, i32
  }
  func.func @transform_8(%arg0: i32) -> (i32, i32) {
    %c0_i32 = arith.constant 0 : i32
    %c0_i32_0 = arith.constant 0 : i32
    %c0_i32_1 = arith.constant 0 : i32
    return %c0_i32, %c0_i32_0 : i32, i32
  }
  func.func @transform_9(%arg0: i32) -> (i32, i32) {
    %c0_i32 = arith.constant 0 : i32
    %c0_i32_0 = arith.constant 0 : i32
    %c0_i32_1 = arith.constant 0 : i32
    return %c0_i32, %c0_i32_0 : i32, i32
  }
  func.func @transform_10(%arg0: i32) -> (i32, i32) {
    %c0_i32 = arith.constant 0 : i32
    %c0_i32_0 = arith.constant 0 : i32
    %c0_i32_1 = arith.constant 0 : i32
    return %c0_i32, %c0_i32_0 : i32, i32
  }
  func.func @transform_11(%arg0: i32) -> (i32, i32, i32) {
    %c0_i32 = arith.constant 0 : i32
    %c0_i32_0 = arith.constant 0 : i32
    %c0_i32_1 = arith.constant 0 : i32
    return %arg0, %c0_i32, %c0_i32_0 : i32, i32, i32
  }
}

</mosaic_0001>

<llo_original>
// kernel: autoencoder_forward.1
$region0: #{autoencoder_forward.1}
  #allocation0 [shape = 'u32[]', space=smem, size = 0x4, offset = 0x4, fixed_abs, tag = 'smem constant byte address 0x4 - core index']
  #allocation1 [shape = 'u32[144,128]{1,0:T(1,128)}', space=vmem, size = 0x12000, scoped, tag = 'internal scratch']
  #allocation2 [shape = 'f32[1,1]{1,0:T(1,128)S(1)}', space=vmem, size = 0x200, scoped, tag = 'scoped memory for autoencoder_forward.1']
  %s0 = inlined_call_operand.vmem [shape: f32[2,20,20,1], index: 0, kind: input, shape index: {}]
  %s1 = inlined_call_operand.vmem [shape: f32[9,32], index: 1, kind: input, shape index: {}]
  %s2 = inlined_call_operand.vmem [shape: f32[1,32], index: 2, kind: input, shape index: {}]
  %s3 = inlined_call_operand.vmem [shape: f32[288,16], index: 3, kind: input, shape index: {}]
  %s4 = inlined_call_operand.vmem [shape: f32[1,16], index: 4, kind: input, shape index: {}]
  %s5 = inlined_call_operand.vmem [shape: f32[144,16], index: 5, kind: input, shape index: {}]
  %s6 = inlined_call_operand.vmem [shape: f32[1,16], index: 6, kind: input, shape index: {}]
  %s7 = inlined_call_operand.vmem [shape: f32[144,32], index: 7, kind: input, shape index: {}]
  %s8 = inlined_call_operand.vmem [shape: f32[1,32], index: 8, kind: input, shape index: {}]
  %s9 = inlined_call_operand.vmem [shape: f32[9,32], index: 9, kind: input, shape index: {}]
  %s10 = inlined_call_operand.<no memory space> [shape: f32[1,1], index: 10, kind: input, shape index: {}]
  %s11 = inlined_call_operand.vmem [shape: f32[2,20,20], index: 11, kind: output, shape index: {}]
  %s12 = sld [smem:[#allocation0]]
  $region77: #{autoencoder_forward.1} parent=0
    _
  %s14 = ssub.s32 1, %s12
  %s15 = scalar_select 0, %s14, %s12
  %v16 = vstv %s10
  %17 = vst [vmem:[#allocation2] sm:$0x1] %v16
  loop: start=0, step=1, limit=4
  $region2: #{autoencoder_forward.1} parent=0 // loop_pre_header
    _
  $region3: #{autoencoder_forward.1} parent=0 // loop_header
    %s19 = sphi 0, %s23
    %p20 = scmp.ge.s32.totalorder %s19, 4
    %s29 = sphi 0, %s31
    %s32 = sphi 0, %s29
    %s33 = sphi 0, %s32
    %s49 = sphi 0, %s33
    %s53 = sphi 0, %s53
    %s55 = sphi 0, %s53
    %s56 = sphi 0, %s55
    %s70 = sphi 0, %s56
    %s74 = sphi 0, %s74
    %s76 = sphi 0, %s74
    %s77 = sphi 0, %s76
    %s91 = sphi 0, %s77
    %s95 = sphi 0, %s95
    %s97 = sphi 0, %s95
    %s98 = sphi 0, %s97
    %s112 = sphi 0, %s98
    %s116 = sphi 0, %s116
    %s118 = sphi 0, %s116
    %s119 = sphi 0, %s118
    %s133 = sphi 0, %s119
    %s137 = sphi 0, %s137
    %s139 = sphi 0, %s137
    %s140 = sphi 0, %s139
    %s154 = sphi 0, %s140
    %s158 = sphi 0, %s158
    %s160 = sphi 0, %s158
    %s161 = sphi 0, %s160
    %s175 = sphi 0, %s161
    %s179 = sphi 0, %s179
    %s181 = sphi 0, %s179
    %s182 = sphi 0, %s181
    %s196 = sphi 0, %s182
    %s200 = sphi 0, %s200
    %s202 = sphi 0, %s200
    %s203 = sphi 0, %s202
    %s217 = sphi 0, %s203
    %s221 = sphi 0, %s221
    %s223 = sphi 0, %s221
    %s224 = sphi 0, %s223
    %s238 = sphi 0, %s224
    %s242 = sphi 0, %s242
    %s244 = sphi 0, %s242
    %s245 = sphi 0, %s244
    %s259 = sphi 0, %s245
    %s265 = sphi 0, %s267
    %s268 = sphi 0, %s265
    %s269 = sphi 0, %s268
    %s285 = sphi 0, %s269
  $region4: #{autoencoder_forward.1} parent=0 // loop_header_branch
    %22 = sbr.rel (%p20) target = $region8
  $region5: #{autoencoder_forward.1} parent=0 // loop_body
    %s24 = ssub.s32 %s19, 1
    %s25 = ssub.s32 %s19, 2
    %s26 = sadd.s32 %s19, 1
    %s27 = ssub.s32 %s19, %s26
    %p28 = scmp.eq.s32.totalorder %s27, 0
    %s30 = sadd.s32 %s29, 1
    %s31 = scalar_select %p28, %s29, %s30
    %p34 = pneg %p28
    %p35 = scmp.eq.s32.totalorder %s19, 1
    %p36 = por %p34, %p35
    %p37 = scmp.ne.s32.totalorder %s29, %s32
    %p38 = scmp.eq.s32.totalorder %s19, 0
    %p39 = por %p37, %p38
    %p40 = scmp.ne.s32.totalorder %s29, %s32
    %p41 = scmp.eq.s32.totalorder %s24, 1
    %p42 = por %p40, %p41
    %p43 = scmp.ne.s32.totalorder %s32, %s33
    %p44 = scmp.eq.s32.totalorder %s24, 0
    %p45 = por %p43, %p44
    %p46 = scmp.ne.s32.totalorder %s32, %s33
    %p47 = scmp.eq.s32.totalorder %s25, 1
    %p48 = por %p46, %p47
    %p50 = scmp.ne.s32.totalorder %s33, %s49
    %p51 = scmp.eq.s32.totalorder %s25, 0
    %p52 = por %p50, %p51
    %s54 = sadd.s32 %s53, 1
    %p57 = scmp.eq.s32.totalorder %s19, 1
    %p58 = scmp.ne.s32.totalorder %s53, %s55
    %p59 = scmp.eq.s32.totalorder %s19, 0
    %p60 = por %p58, %p59
    %p61 = scmp.ne.s32.totalorder %s53, %s55
    %p62 = scmp.eq.s32.totalorder %s24, 1
    %p63 = por %p61, %p62
    %p64 = scmp.ne.s32.totalorder %s55, %s56
    %p65 = scmp.eq.s32.totalorder %s24, 0
    %p66 = por %p64, %p65
    %p67 = scmp.ne.s32.totalorder %s55, %s56
    %p68 = scmp.eq.s32.totalorder %s25, 1
    %p69 = por %p67, %p68
    %p71 = scmp.ne.s32.totalorder %s56, %s70
    %p72 = scmp.eq.s32.totalorder %s25, 0
    %p73 = por %p71, %p72
    %s75 = sadd.s32 %s74, 1
    %p78 = scmp.eq.s32.totalorder %s19, 1
    %p79 = scmp.ne.s32.totalorder %s74, %s76
    %p80 = scmp.eq.s32.totalorder %s19, 0
    %p81 = por %p79, %p80
    %p82 = scmp.ne.s32.totalorder %s74, %s76
    %p83 = scmp.eq.s32.totalorder %s24, 1
    %p84 = por %p82, %p83
    %p85 = scmp.ne.s32.totalorder %s76, %s77
    %p86 = scmp.eq.s32.totalorder %s24, 0
    %p87 = por %p85, %p86
    %p88 = scmp.ne.s32.totalorder %s76, %s77
    %p89 = scmp.eq.s32.totalorder %s25, 1
    %p90 = por %p88, %p89
    %p92 = scmp.ne.s32.totalorder %s77, %s91
    %p93 = scmp.eq.s32.totalorder %s25, 0
    %p94 = por %p92, %p93
    %s96 = sadd.s32 %s95, 1
    %p99 = scmp.eq.s32.totalorder %s19, 1
    %p100 = scmp.ne.s32.totalorder %s95, %s97
    %p101 = scmp.eq.s32.totalorder %s19, 0
    %p102 = por %p100, %p101
    %p103 = scmp.ne.s32.totalorder %s95, %s97
    %p104 = scmp.eq.s32.totalorder %s24, 1
    %p105 = por %p103, %p104
    %p106 = scmp.ne.s32.totalorder %s97, %s98
    %p107 = scmp.eq.s32.totalorder %s24, 0
    %p108 = por %p106, %p107
    %p109 = scmp.ne.s32.totalorder %s97, %s98
    %p110 = scmp.eq.s32.totalorder %s25, 1
    %p111 = por %p109, %p110
    %p113 = scmp.ne.s32.totalorder %s98, %s112
    %p114 = scmp.eq.s32.totalorder %s25, 0
    %p115 = por %p113, %p114
    %s117 = sadd.s32 %s116, 1
    %p120 = scmp.eq.s32.totalorder %s19, 1
    %p121 = scmp.ne.s32.totalorder %s116, %s118
    %p122 = scmp.eq.s32.totalorder %s19, 0
    %p123 = por %p121, %p122
    %p124 = scmp.ne.s32.totalorder %s116, %s118
    %p125 = scmp.eq.s32.totalorder %s24, 1
    %p126 = por %p124, %p125
    %p127 = scmp.ne.s32.totalorder %s118, %s119
    %p128 = scmp.eq.s32.totalorder %s24, 0
    %p129 = por %p127, %p128
    %p130 = scmp.ne.s32.totalorder %s118, %s119
    %p131 = scmp.eq.s32.totalorder %s25, 1
    %p132 = por %p130, %p131
    %p134 = scmp.ne.s32.totalorder %s119, %s133
    %p135 = scmp.eq.s32.totalorder %s25, 0
    %p136 = por %p134, %p135
    %s138 = sadd.s32 %s137, 1
    %p141 = scmp.eq.s32.totalorder %s19, 1
    %p142 = scmp.ne.s32.totalorder %s137, %s139
    %p143 = scmp.eq.s32.totalorder %s19, 0
    %p144 = por %p142, %p143
    %p145 = scmp.ne.s32.totalorder %s137, %s139
    %p146 = scmp.eq.s32.totalorder %s24, 1
    %p147 = por %p145, %p146
    %p148 = scmp.ne.s32.totalorder %s139, %s140
    %p149 = scmp.eq.s32.totalorder %s24, 0
    %p150 = por %p148, %p149
    %p151 = scmp.ne.s32.totalorder %s139, %s140
    %p152 = scmp.eq.s32.totalorder %s25, 1
    %p153 = por %p151, %p152
    %p155 = scmp.ne.s32.totalorder %s140, %s154
    %p156 = scmp.eq.s32.totalorder %s25, 0
    %p157 = por %p155, %p156
    %s159 = sadd.s32 %s158, 1
    %p162 = scmp.eq.s32.totalorder %s19, 1
    %p163 = scmp.ne.s32.totalorder %s158, %s160
    %p164 = scmp.eq.s32.totalorder %s19, 0
    %p165 = por %p163, %p164
    %p166 = scmp.ne.s32.totalorder %s158, %s160
    %p167 = scmp.eq.s32.totalorder %s24, 1
    %p168 = por %p166, %p167
    %p169 = scmp.ne.s32.totalorder %s160, %s161
    %p170 = scmp.eq.s32.totalorder %s24, 0
    %p171 = por %p169, %p170
    %p172 = scmp.ne.s32.totalorder %s160, %s161
    %p173 = scmp.eq.s32.totalorder %s25, 1
    %p174 = por %p172, %p173
    %p176 = scmp.ne.s32.totalorder %s161, %s175
    %p177 = scmp.eq.s32.totalorder %s25, 0
    %p178 = por %p176, %p177
    %s180 = sadd.s32 %s179, 1
    %p183 = scmp.eq.s32.totalorder %s19, 1
    %p184 = scmp.ne.s32.totalorder %s179, %s181
    %p185 = scmp.eq.s32.totalorder %s19, 0
    %p186 = por %p184, %p185
    %p187 = scmp.ne.s32.totalorder %s179, %s181
    %p188 = scmp.eq.s32.totalorder %s24, 1
    %p189 = por %p187, %p188
    %p190 = scmp.ne.s32.totalorder %s181, %s182
    %p191 = scmp.eq.s32.totalorder %s24, 0
    %p192 = por %p190, %p191
    %p193 = scmp.ne.s32.totalorder %s181, %s182
    %p194 = scmp.eq.s32.totalorder %s25, 1
    %p195 = por %p193, %p194
    %p197 = scmp.ne.s32.totalorder %s182, %s196
    %p198 = scmp.eq.s32.totalorder %s25, 0
    %p199 = por %p197, %p198
    %s201 = sadd.s32 %s200, 1
    %p204 = scmp.eq.s32.totalorder %s19, 1
    %p205 = scmp.ne.s32.totalorder %s200, %s202
    %p206 = scmp.eq.s32.totalorder %s19, 0
    %p207 = por %p205, %p206
    %p208 = scmp.ne.s32.totalorder %s200, %s202
    %p209 = scmp.eq.s32.totalorder %s24, 1
    %p210 = por %p208, %p209
    %p211 = scmp.ne.s32.totalorder %s202, %s203
    %p212 = scmp.eq.s32.totalorder %s24, 0
    %p213 = por %p211, %p212
    %p214 = scmp.ne.s32.totalorder %s202, %s203
    %p215 = scmp.eq.s32.totalorder %s25, 1
    %p216 = por %p214, %p215
    %p218 = scmp.ne.s32.totalorder %s203, %s217
    %p219 = scmp.eq.s32.totalorder %s25, 0
    %p220 = por %p218, %p219
    %s222 = sadd.s32 %s221, 1
    %p225 = scmp.eq.s32.totalorder %s19, 1
    %p226 = scmp.ne.s32.totalorder %s221, %s223
    %p227 = scmp.eq.s32.totalorder %s19, 0
    %p228 = por %p226, %p227
    %p229 = scmp.ne.s32.totalorder %s221, %s223
    %p230 = scmp.eq.s32.totalorder %s24, 1
    %p231 = por %p229, %p230
    %p232 = scmp.ne.s32.totalorder %s223, %s224
    %p233 = scmp.eq.s32.totalorder %s24, 0
    %p234 = por %p232, %p233
    %p235 = scmp.ne.s32.totalorder %s223, %s224
    %p236 = scmp.eq.s32.totalorder %s25, 1
    %p237 = por %p235, %p236
    %p239 = scmp.ne.s32.totalorder %s224, %s238
    %p240 = scmp.eq.s32.totalorder %s25, 0
    %p241 = por %p239, %p240
    %s243 = sadd.s32 %s242, 1
    %p246 = scmp.eq.s32.totalorder %s19, 1
    %p247 = scmp.ne.s32.totalorder %s242, %s244
    %p248 = scmp.eq.s32.totalorder %s19, 0
    %p249 = por %p247, %p248
    %p250 = scmp.ne.s32.totalorder %s242, %s244
    %p251 = scmp.eq.s32.totalorder %s24, 1
    %p252 = por %p250, %p251
    %p253 = scmp.ne.s32.totalorder %s244, %s245
    %p254 = scmp.eq.s32.totalorder %s24, 0
    %p255 = por %p253, %p254
    %p256 = scmp.ne.s32.totalorder %s244, %s245
    %p257 = scmp.eq.s32.totalorder %s25, 1
    %p258 = por %p256, %p257
    %p260 = scmp.ne.s32.totalorder %s245, %s259
    %p261 = scmp.eq.s32.totalorder %s25, 0
    %p262 = por %p260, %p261
    %s263 = ssub.s32 %s19, %s26
    %p264 = scmp.eq.s32.totalorder %s263, 0
    %s266 = sadd.s32 %s265, 1
    %s267 = scalar_select %p264, %s265, %s266
    %p270 = pneg %p264
    %p271 = scmp.eq.s32.totalorder %s19, 1
    %p272 = por %p270, %p271
    %p273 = scmp.ne.s32.totalorder %s265, %s268
    %p274 = scmp.eq.s32.totalorder %s19, 0
    %p275 = por %p273, %p274
    %p276 = scmp.ne.s32.totalorder %s265, %s268
    %p277 = scmp.eq.s32.totalorder %s24, 1
    %p278 = por %p276, %p277
    %p279 = scmp.ne.s32.totalorder %s268, %s269
    %p280 = scmp.eq.s32.totalorder %s24, 0
    %p281 = por %p279, %p280
    %p282 = scmp.ne.s32.totalorder %s268, %s269
    %p283 = scmp.eq.s32.totalorder %s25, 1
    %p284 = por %p282, %p283
    %p286 = scmp.ne.s32.totalorder %s269, %s285
    %p287 = scmp.eq.s32.totalorder %s25, 0
    %p288 = por %p286, %p287
    %p289 = scmp.le.s32.totalorder 1, %s19
    %p290 = scmp.lt.s32.totalorder %s19, 3
    %p291 = pnand %p289, %p290
    %p292 = pneg %p291
    // Predicated region
    $region9: #{autoencoder_forward.1} parent=5 // pred_check
      _
    $region10: #{autoencoder_forward.1} parent=5 // pred_check_branch
      %294 = sbr.rel (%p291) target = $region12
    $region11: #{autoencoder_forward.1} parent=5 // pred_region
      %s295 = ssub.s32 %s19, 1
      // Predicated region
      $region13: #{autoencoder_forward.1} parent=11 // pred_check
        %p296 = pneg %p66
      $region14: #{autoencoder_forward.1} parent=11 // pred_check_branch
        %298 = sbr.rel (%p296) target = $region16
      $region15: #{autoencoder_forward.1} parent=11 // pred_region
        _
      $region16: #{autoencoder_forward.1} parent=11 // pred_fallthru
        _
      // Predicated region
      $region17: #{autoencoder_forward.1} parent=11 // pred_check
        %p299 = pneg %p87
      $region18: #{autoencoder_forward.1} parent=11 // pred_check_branch
        %301 = sbr.rel (%p299) target = $region20
      $region19: #{autoencoder_forward.1} parent=11 // pred_region
        _
      $region20: #{autoencoder_forward.1} parent=11 // pred_fallthru
        _
      // Predicated region
      $region21: #{autoencoder_forward.1} parent=11 // pred_check
        %p302 = pneg %p108
      $region22: #{autoencoder_forward.1} parent=11 // pred_check_branch
        %304 = sbr.rel (%p302) target = $region24
      $region23: #{autoencoder_forward.1} parent=11 // pred_region
        _
      $region24: #{autoencoder_forward.1} parent=11 // pred_fallthru
        _
      // Predicated region
      $region25: #{autoencoder_forward.1} parent=11 // pred_check
        %p305 = pneg %p129
      $region26: #{autoencoder_forward.1} parent=11 // pred_check_branch
        %307 = sbr.rel (%p305) target = $region28
      $region27: #{autoencoder_forward.1} parent=11 // pred_region
        _
      $region28: #{autoencoder_forward.1} parent=11 // pred_fallthru
        _
      // Predicated region
      $region29: #{autoencoder_forward.1} parent=11 // pred_check
        %p308 = pneg %p150
      $region30: #{autoencoder_forward.1} parent=11 // pred_check_branch
        %310 = sbr.rel (%p308) target = $region32
      $region31: #{autoencoder_forward.1} parent=11 // pred_region
        _
      $region32: #{autoencoder_forward.1} parent=11 // pred_fallthru
        _
      // Predicated region
      $region33: #{autoencoder_forward.1} parent=11 // pred_check
        %p311 = pneg %p171
      $region34: #{autoencoder_forward.1} parent=11 // pred_check_branch
        %313 = sbr.rel (%p311) target = $region36
      $region35: #{autoencoder_forward.1} parent=11 // pred_region
        _
      $region36: #{autoencoder_forward.1} parent=11 // pred_fallthru
        _
      // Predicated region
      $region37: #{autoencoder_forward.1} parent=11 // pred_check
        %p314 = pneg %p192
      $region38: #{autoencoder_forward.1} parent=11 // pred_check_branch
        %316 = sbr.rel (%p314) target = $region40
      $region39: #{autoencoder_forward.1} parent=11 // pred_region
        _
      $region40: #{autoencoder_forward.1} parent=11 // pred_fallthru
        _
      // Predicated region
      $region41: #{autoencoder_forward.1} parent=11 // pred_check
        %p317 = pneg %p213
      $region42: #{autoencoder_forward.1} parent=11 // pred_check_branch
        %319 = sbr.rel (%p317) target = $region44
      $region43: #{autoencoder_forward.1} parent=11 // pred_region
        _
      $region44: #{autoencoder_forward.1} parent=11 // pred_fallthru
        _
      // Predicated region
      $region45: #{autoencoder_forward.1} parent=11 // pred_check
        %p320 = pneg %p234
      $region46: #{autoencoder_forward.1} parent=11 // pred_check_branch
        %322 = sbr.rel (%p320) target = $region48
      $region47: #{autoencoder_forward.1} parent=11 // pred_region
        _
      $region48: #{autoencoder_forward.1} parent=11 // pred_fallthru
        _
      // Predicated region
      $region49: #{autoencoder_forward.1} parent=11 // pred_check
        %p323 = pneg %p255
      $region50: #{autoencoder_forward.1} parent=11 // pred_check_branch
        %325 = sbr.rel (%p323) target = $region52
      $region51: #{autoencoder_forward.1} parent=11 // pred_region
        _
      $region52: #{autoencoder_forward.1} parent=11 // pred_fallthru
        _
    $region12: #{autoencoder_forward.1} parent=5 // pred_fallthru
      _
    %p326 = scmp.lt.s32.totalorder %s19, 2
    // Predicated region
    $region53: #{autoencoder_forward.1} parent=5 // pred_check
      %p327 = pneg %p326
    $region54: #{autoencoder_forward.1} parent=5 // pred_check_branch
      %329 = sbr.rel (%p327) target = $region56
    $region55: #{autoencoder_forward.1} parent=5 // pred_region
      // Predicated region
      $region57: #{autoencoder_forward.1} parent=55 // pred_check
        %p330 = pneg %p39
      $region58: #{autoencoder_forward.1} parent=55 // pred_check_branch
        %332 = sbr.rel (%p330) target = $region60
      $region59: #{autoencoder_forward.1} parent=55 // pred_region
        %p333 = scmp.lt.s32.totalorder %s19, 1
        %s334 = scalar_select %p333, %s19, 1
        %s335 = smul.addr %s334, 60
        %s336 = smul.addr %s335, 8
        %s337 = scalar_lea.vmem %s0, %s336
      $region60: #{autoencoder_forward.1} parent=55 // pred_fallthru
        _
    $region56: #{autoencoder_forward.1} parent=5 // pred_fallthru
      _
    %p338 = scmp.le.s32.totalorder 1, %s19
    %p339 = scmp.lt.s32.totalorder %s19, 3
    %p340 = pnand %p338, %p339
    %p341 = pneg %p340
    // Predicated region
    $region61: #{autoencoder_forward.1} parent=5 // pred_check
      _
    $region62: #{autoencoder_forward.1} parent=5 // pred_check_branch
      %343 = sbr.rel (%p340) target = $region64
    $region63: #{autoencoder_forward.1} parent=5 // pred_region
      %s344 = ssub.s32 %s19, 1
      %p345 = scmp.lt.s32.totalorder %s24, 1
      %s346 = scalar_select %p345, %s24, 1
      %s347 = smul.addr %s346, 60
      %s348 = smul.addr %s347, 8
      %s349 = scalar_lea.vmem %s0, %s348
      %p350 = pneg %p45
      %p351 = pneg %p42
      %p352 = pneg %p66
      %p353 = pneg %p63
      %p354 = pneg %p87
      %p355 = pneg %p84
      %p356 = pneg %p108
      %p357 = pneg %p105
      %p358 = pneg %p129
      %p359 = pneg %p126
      %p360 = pneg %p150
      %p361 = pneg %p147
      %p362 = pneg %p171
      %p363 = pneg %p168
      %p364 = pneg %p192
      %p365 = pneg %p189
      %p366 = pneg %p213
      %p367 = pneg %p210
      %p368 = pneg %p234
      %p369 = pneg %p231
      %p370 = pneg %p255
      %p371 = pneg %p252
      %p372 = pneg %p281
      %p373 = pneg %p278
      %p374 = scmp.lt.s32.totalorder %s24, 1
      %s375 = scalar_select %p374, %s24, 1
      %s376 = smul.addr %s375, 3
      %s377 = smul.addr %s376, 8
      %s378 = scalar_lea.vmem %s11, %s377
      %p379 = scmp.lt.s32.totalorder %s24, 1
      %s380 = scalar_select %p379, %s24, 1
      %s381 = smul.addr %s380, 60
      %s382 = smul.addr %s381, 8
      %s383 = scalar_lea.vmem %s0, %s382
      %p384 = scmp.lt.s32.totalorder %s24, 1
      %s385 = scalar_select %p384, %s24, 1
      %s386 = smul.addr %s385, 3
      %s387 = smul.addr %s386, 8
      %s388 = scalar_lea.vmem %s11, %s387
      %v389 = vld [vmem:[%s383] sm:$0xff]
      %v390 = vld [vmem:[%s383 + $0x8] sm:$0xff]
      %v391 = vld [vmem:[%s383 + $0x10] sm:$0xf]
      %v392 = vld [vmem:[%s383 + $0x18] sm:$0xff]
      %v393 = vld [vmem:[%s383 + $0x20] sm:$0xff]
      %v394 = vld [vmem:[%s383 + $0x28] sm:$0xf]
      %v395 = vld [vmem:[%s383 + $0x30] sm:$0xff]
      %v396 = vld [vmem:[%s383 + $0x38] sm:$0xff]
      %v397 = vld [vmem:[%s383 + $0x40] sm:$0xf]
      %v398 = vld [vmem:[%s383 + $0x48] sm:$0xff]
      %v399 = vld [vmem:[%s383 + $0x50] sm:$0xff]
      %v400 = vld [vmem:[%s383 + $0x58] sm:$0xf]
      %v401 = vld [vmem:[%s383 + $0x60] sm:$0xff]
      %v402 = vld [vmem:[%s383 + $0x68] sm:$0xff]
      %v403 = vld [vmem:[%s383 + $0x70] sm:$0xf]
      %v404 = vld [vmem:[%s383 + $0x78] sm:$0xff]
      %v405 = vld [vmem:[%s383 + $0x80] sm:$0xff]
      %v406 = vld [vmem:[%s383 + $0x88] sm:$0xf]
      %v407 = vld [vmem:[%s383 + $0x90] sm:$0xff]
      %v408 = vld [vmem:[%s383 + $0x98] sm:$0xff]
      %v409 = vld [vmem:[%s383 + $0xa0] sm:$0xf]
      %v410 = vld [vmem:[%s383 + $0xa8] sm:$0xff]
      %v411 = vld [vmem:[%s383 + $0xb0] sm:$0xff]
      %v412 = vld [vmem:[%s383 + $0xb8] sm:$0xf]
      %v413 = vld [vmem:[%s383 + $0xc0] sm:$0xff]
      %v414 = vld [vmem:[%s383 + $0xc8] sm:$0xff]
      %v415 = vld [vmem:[%s383 + $0xd0] sm:$0xf]
      %v416 = vld [vmem:[%s383 + $0xd8] sm:$0xff]
      %v417 = vld [vmem:[%s383 + $0xe0] sm:$0xff]
      %v418 = vld [vmem:[%s383 + $0xe8] sm:$0xf]
      %v419 = vld [vmem:[%s383 + $0xf0] sm:$0xff]
      %v420 = vld [vmem:[%s383 + $0xf8] sm:$0xff]
      %v421 = vld [vmem:[%s383 + $0x100] sm:$0xf]
      %v422 = vld [vmem:[%s383 + $0x108] sm:$0xff]
      %v423 = vld [vmem:[%s383 + $0x110] sm:$0xff]
      %v424 = vld [vmem:[%s383 + $0x118] sm:$0xf]
      %v425 = vld [vmem:[%s383 + $0x120] sm:$0xff]
      %v426 = vld [vmem:[%s383 + $0x128] sm:$0xff]
      %v427 = vld [vmem:[%s383 + $0x130] sm:$0xf]
      %v428 = vld [vmem:[%s383 + $0x138] sm:$0xff]
      %v429 = vld [vmem:[%s383 + $0x140] sm:$0xff]
      %v430 = vld [vmem:[%s383 + $0x148] sm:$0xf]
      %v431 = vld [vmem:[%s383 + $0x150] sm:$0xff]
      %v432 = vld [vmem:[%s383 + $0x158] sm:$0xff]
      %v433 = vld [vmem:[%s383 + $0x160] sm:$0xf]
      %v434 = vld [vmem:[%s383 + $0x168] sm:$0xff]
      %v435 = vld [vmem:[%s383 + $0x170] sm:$0xff]
      %v436 = vld [vmem:[%s383 + $0x178] sm:$0xf]
      %v437 = vld [vmem:[%s383 + $0x180] sm:$0xff]
      %v438 = vld [vmem:[%s383 + $0x188] sm:$0xff]
      %v439 = vld [vmem:[%s383 + $0x190] sm:$0xf]
      %v440 = vld [vmem:[%s383 + $0x198] sm:$0xff]
      %v441 = vld [vmem:[%s383 + $0x1a0] sm:$0xff]
      %v442 = vld [vmem:[%s383 + $0x1a8] sm:$0xf]
      %v443 = vld [vmem:[%s383 + $0x1b0] sm:$0xff]
      %v444 = vld [vmem:[%s383 + $0x1b8] sm:$0xff]
      %v445 = vld [vmem:[%s383 + $0x1c0] sm:$0xf]
      %v446 = vld [vmem:[%s383 + $0x1c8] sm:$0xff]
      %v447 = vld [vmem:[%s383 + $0x1d0] sm:$0xff]
      %v448 = vld [vmem:[%s383 + $0x1d8] sm:$0xf]
      %vm510 = vcmask 1040384
      %v511 = vrot.slane 0.0, 7
      %v512 = vsel %vm510, %v511, %v511
      %v513 = vrot.slane %v389, 7
      %v514 = vrot.slane %v390, 7
      %v515 = vsel %vm510, %v513, %v514
      %v516 = vrot.slane %v391, 7
      %v517 = vsel %vm510, %v514, %v516
      %v518 = vrot.slane %v392, 7
      %v519 = vrot.slane %v393, 7
      %v520 = vsel %vm510, %v518, %v519
      %v521 = vrot.slane %v394, 7
      %v522 = vsel %vm510, %v519, %v521
      %v523 = vrot.slane %v395, 7
      %v524 = vrot.slane %v396, 7
      %v525 = vsel %vm510, %v523, %v524
      %v526 = vrot.slane %v397, 7
      %v527 = vsel %vm510, %v524, %v526
      %v528 = vrot.slane %v398, 7
      %v529 = vrot.slane %v399, 7
      %v530 = vsel %vm510, %v528, %v529
      %v531 = vrot.slane %v400, 7
      %v532 = vsel %vm510, %v529, %v531
      %v533 = vrot.slane %v401, 7
      %v534 = vrot.slane %v402, 7
      %v535 = vsel %vm510, %v533, %v534
      %v536 = vrot.slane %v403, 7
      %v537 = vsel %vm510, %v534, %v536
      %v538 = vrot.slane %v404, 7
      %v539 = vrot.slane %v405, 7
      %v540 = vsel %vm510, %v538, %v539
      %v541 = vrot.slane %v406, 7
      %v542 = vsel %vm510, %v539, %v541
      %v543 = vrot.slane %v407, 7
      %v544 = vrot.slane %v408, 7
      %v545 = vsel %vm510, %v543, %v544
      %v546 = vrot.slane %v409, 7
      %v547 = vsel %vm510, %v544, %v546
      %v548 = vrot.slane %v410, 7
      %v549 = vrot.slane %v411, 7
      %v550 = vsel %vm510, %v548, %v549
      %v551 = vrot.slane %v412, 7
      %v552 = vsel %vm510, %v549, %v551
      %v553 = vrot.slane %v413, 7
      %v554 = vrot.slane %v414, 7
      %v555 = vsel %vm510, %v553, %v554
      %v556 = vrot.slane %v415, 7
      %v557 = vsel %vm510, %v554, %v556
      %v558 = vrot.slane %v416, 7
      %v559 = vrot.slane %v417, 7
      %v560 = vsel %vm510, %v558, %v559
      %v561 = vrot.slane %v418, 7
      %v562 = vsel %vm510, %v559, %v561
      %v563 = vrot.slane %v419, 7
      %v564 = vrot.slane %v420, 7
      %v565 = vsel %vm510, %v563, %v564
      %v566 = vrot.slane %v421, 7
      %v567 = vsel %vm510, %v564, %v566
      %v568 = vrot.slane %v422, 7
      %v569 = vrot.slane %v423, 7
      %v570 = vsel %vm510, %v568, %v569
      %v571 = vrot.slane %v424, 7
      %v572 = vsel %vm510, %v569, %v571
      %v573 = vrot.slane %v425, 7
      %v574 = vrot.slane %v426, 7
      %v575 = vsel %vm510, %v573, %v574
      %v576 = vrot.slane %v427, 7
      %v577 = vsel %vm510, %v574, %v576
      %v578 = vrot.slane %v428, 7
      %v579 = vrot.slane %v429, 7
      %v580 = vsel %vm510, %v578, %v579
      %v581 = vrot.slane %v430, 7
      %v582 = vsel %vm510, %v579, %v581
      %v583 = vrot.slane %v431, 7
      %v584 = vrot.slane %v432, 7
      %v585 = vsel %vm510, %v583, %v584
      %v586 = vrot.slane %v433, 7
      %v587 = vsel %vm510, %v584, %v586
      %v588 = vrot.slane %v434, 7
      %v589 = vrot.slane %v435, 7
      %v590 = vsel %vm510, %v588, %v589
      %v591 = vrot.slane %v436, 7
      %v592 = vsel %vm510, %v589, %v591
      %v593 = vrot.slane %v437, 7
      %v594 = vrot.slane %v438, 7
      %v595 = vsel %vm510, %v593, %v594
      %v596 = vrot.slane %v439, 7
      %v597 = vsel %vm510, %v594, %v596
      %v598 = vrot.slane %v440, 7
      %v599 = vrot.slane %v441, 7
      %v600 = vsel %vm510, %v598, %v599
      %v601 = vrot.slane %v442, 7
      %v602 = vsel %vm510, %v599, %v601
      %v603 = vrot.slane %v443, 7
      %v604 = vrot.slane %v444, 7
      %v605 = vsel %vm510, %v603, %v604
      %v606 = vrot.slane %v445, 7
      %v607 = vsel %vm510, %v604, %v606
      %v608 = vrot.slane %v446, 7
      %v609 = vrot.slane %v447, 7
      %v610 = vsel %vm510, %v608, %v609
      %v611 = vrot.slane %v448, 7
      %v612 = vsel %vm510, %v609, %v611
      %v655 = vsel %vm510, 0.0, %v511
      %v656 = vsel %vm510, 0.0, %v513
      %v657 = vsel %vm510, 0.0, %v518
      %v658 = vsel %vm510, 0.0, %v523
      %v659 = vsel %vm510, 0.0, %v528
      %v660 = vsel %vm510, 0.0, %v533
      %v661 = vsel %vm510, 0.0, %v538
      %v662 = vsel %vm510, 0.0, %v543
      %v663 = vsel %vm510, 0.0, %v548
      %v664 = vsel %vm510, 0.0, %v553
      %v665 = vsel %vm510, 0.0, %v558
      %v666 = vsel %vm510, 0.0, %v563
      %v667 = vsel %vm510, 0.0, %v568
      %v668 = vsel %vm510, 0.0, %v573
      %v669 = vsel %vm510, 0.0, %v578
      %v670 = vsel %vm510, 0.0, %v583
      %v671 = vsel %vm510, 0.0, %v588
      %v672 = vsel %vm510, 0.0, %v593
      %v673 = vsel %vm510, 0.0, %v598
      %v674 = vsel %vm510, 0.0, %v603
      %v675 = vsel %vm510, 0.0, %v608
      %vm676 = vcmask 1044480
      %v677 = vsel %vm676, %v512, 0.0
      %v678 = vsel %vm676, %v517, 0.0
      %v679 = vsel %vm676, %v522, 0.0
      %v680 = vsel %vm676, %v527, 0.0
      %v681 = vsel %vm676, %v532, 0.0
      %v682 = vsel %vm676, %v537, 0.0
      %v683 = vsel %vm676, %v542, 0.0
      %v684 = vsel %vm676, %v547, 0.0
      %v685 = vsel %vm676, %v552, 0.0
      %v686 = vsel %vm676, %v557, 0.0
      %v687 = vsel %vm676, %v562, 0.0
      %v688 = vsel %vm676, %v567, 0.0
      %v689 = vsel %vm676, %v572, 0.0
      %v690 = vsel %vm676, %v577, 0.0
      %v691 = vsel %vm676, %v582, 0.0
      %v692 = vsel %vm676, %v587, 0.0
      %v693 = vsel %vm676, %v592, 0.0
      %v694 = vsel %vm676, %v597, 0.0
      %v695 = vsel %vm676, %v602, 0.0
      %v696 = vsel %vm676, %v607, 0.0
      %v697 = vsel %vm676, %v612, 0.0
      %v698 = vld [vmem:[%s1] sm:$0x1]
      %700 = vset.pattern.permute.xlu0 0
      %701 = vperm.xlu0 %700, %v655
      %v702 = vpop.permute.xlu0 %701
      %704 = vset.pattern.permute.xlu0 0
      %705 = vperm.xlu0 %704, %v512
      %v706 = vpop.permute.xlu0 %705
      %709 = vset.pattern.permute.xlu0 0
      %710 = vperm.xlu0 %709, %v677
      %v711 = vpop.permute.xlu0 %710
      %714 = vset.pattern.permute.xlu0 0
      %715 = vperm.xlu0 %714, %v656
      %v716 = vpop.permute.xlu0 %715
      %718 = vset.pattern.permute.xlu0 0
      %719 = vperm.xlu0 %718, %v515
      %v720 = vpop.permute.xlu0 %719
      %723 = vset.pattern.permute.xlu0 0
      %724 = vperm.xlu0 %723, %v678
      %v725 = vpop.permute.xlu0 %724
      %728 = vset.pattern.permute.xlu0 0
      %729 = vperm.xlu0 %728, %v657
      %v730 = vpop.permute.xlu0 %729
      %732 = vset.pattern.permute.xlu0 0
      %733 = vperm.xlu0 %732, %v520
      %v734 = vpop.permute.xlu0 %733
      %737 = vset.pattern.permute.xlu0 0
      %738 = vperm.xlu0 %737, %v679
      %v739 = vpop.permute.xlu0 %738
      %742 = vset.pattern.permute.xlu0 0
      %743 = vperm.xlu0 %742, %v658
      %v744 = vpop.permute.xlu0 %743
      %746 = vset.pattern.permute.xlu0 0
      %747 = vperm.xlu0 %746, %v525
      %v748 = vpop.permute.xlu0 %747
      %751 = vset.pattern.permute.xlu0 0
      %752 = vperm.xlu0 %751, %v680
      %v753 = vpop.permute.xlu0 %752
      %756 = vset.pattern.permute.xlu0 0
      %757 = vperm.xlu0 %756, %v659
      %v758 = vpop.permute.xlu0 %757
      %760 = vset.pattern.permute.xlu0 0
      %761 = vperm.xlu0 %760, %v530
      %v762 = vpop.permute.xlu0 %761
      %765 = vset.pattern.permute.xlu0 0
      %766 = vperm.xlu0 %765, %v681
      %v767 = vpop.permute.xlu0 %766
      %770 = vset.pattern.permute.xlu0 0
      %771 = vperm.xlu0 %770, %v660
      %v772 = vpop.permute.xlu0 %771
      %774 = vset.pattern.permute.xlu0 0
      %775 = vperm.xlu0 %774, %v535
      %v776 = vpop.permute.xlu0 %775
      %779 = vset.pattern.permute.xlu0 0
      %780 = vperm.xlu0 %779, %v682
      %v781 = vpop.permute.xlu0 %780
      %784 = vset.pattern.permute.xlu0 0
      %785 = vperm.xlu0 %784, %v661
      %v786 = vpop.permute.xlu0 %785
      %788 = vset.pattern.permute.xlu0 0
      %789 = vperm.xlu0 %788, %v540
      %v790 = vpop.permute.xlu0 %789
      %793 = vset.pattern.permute.xlu0 0
      %794 = vperm.xlu0 %793, %v683
      %v795 = vpop.permute.xlu0 %794
      %798 = vset.pattern.permute.xlu0 0
      %799 = vperm.xlu0 %798, %v662
      %v800 = vpop.permute.xlu0 %799
      %802 = vset.pattern.permute.xlu0 0
      %803 = vperm.xlu0 %802, %v545
      %v804 = vpop.permute.xlu0 %803
      %807 = vset.pattern.permute.xlu0 0
      %808 = vperm.xlu0 %807, %v684
      %v809 = vpop.permute.xlu0 %808
      %812 = vset.pattern.permute.xlu0 0
      %813 = vperm.xlu0 %812, %v663
      %v814 = vpop.permute.xlu0 %813
      %816 = vset.pattern.permute.xlu0 0
      %817 = vperm.xlu0 %816, %v550
      %v818 = vpop.permute.xlu0 %817
      %821 = vset.pattern.permute.xlu0 0
      %822 = vperm.xlu0 %821, %v685
      %v823 = vpop.permute.xlu0 %822
      %826 = vset.pattern.permute.xlu0 0
      %827 = vperm.xlu0 %826, %v664
      %v828 = vpop.permute.xlu0 %827
      %830 = vset.pattern.permute.xlu0 0
      %831 = vperm.xlu0 %830, %v555
      %v832 = vpop.permute.xlu0 %831
      %835 = vset.pattern.permute.xlu0 0
      %836 = vperm.xlu0 %835, %v686
      %v837 = vpop.permute.xlu0 %836
      %840 = vset.pattern.permute.xlu0 0
      %841 = vperm.xlu0 %840, %v665
      %v842 = vpop.permute.xlu0 %841
      %844 = vset.pattern.permute.xlu0 0
      %845 = vperm.xlu0 %844, %v560
      %v846 = vpop.permute.xlu0 %845
      %849 = vset.pattern.permute.xlu0 0
      %850 = vperm.xlu0 %849, %v687
      %v851 = vpop.permute.xlu0 %850
      %854 = vset.pattern.permute.xlu0 0
      %855 = vperm.xlu0 %854, %v666
      %v856 = vpop.permute.xlu0 %855
      %858 = vset.pattern.permute.xlu0 0
      %859 = vperm.xlu0 %858, %v565
      %v860 = vpop.permute.xlu0 %859
      %863 = vset.pattern.permute.xlu0 0
      %864 = vperm.xlu0 %863, %v688
      %v865 = vpop.permute.xlu0 %864
      %868 = vset.pattern.permute.xlu0 0
      %869 = vperm.xlu0 %868, %v667
      %v870 = vpop.permute.xlu0 %869
      %872 = vset.pattern.permute.xlu0 0
      %873 = vperm.xlu0 %872, %v570
      %v874 = vpop.permute.xlu0 %873
      %877 = vset.pattern.permute.xlu0 0
      %878 = vperm.xlu0 %877, %v689
      %v879 = vpop.permute.xlu0 %878
      %882 = vset.pattern.permute.xlu0 0
      %883 = vperm.xlu0 %882, %v668
      %v884 = vpop.permute.xlu0 %883
      %886 = vset.pattern.permute.xlu0 0
      %887 = vperm.xlu0 %886, %v575
      %v888 = vpop.permute.xlu0 %887
      %891 = vset.pattern.permute.xlu0 0
      %892 = vperm.xlu0 %891, %v690
      %v893 = vpop.permute.xlu0 %892
      %896 = vset.pattern.permute.xlu0 0
      %897 = vperm.xlu0 %896, %v669
      %v898 = vpop.permute.xlu0 %897
      %900 = vset.pattern.permute.xlu0 0
      %901 = vperm.xlu0 %900, %v580
      %v902 = vpop.permute.xlu0 %901
      %905 = vset.pattern.permute.xlu0 0
      %906 = vperm.xlu0 %905, %v691
      %v907 = vpop.permute.xlu0 %906
      %910 = vset.pattern.permute.xlu0 0
      %911 = vperm.xlu0 %910, %v670
      %v912 = vpop.permute.xlu0 %911
      %914 = vset.pattern.permute.xlu0 0
      %915 = vperm.xlu0 %914, %v585
      %v916 = vpop.permute.xlu0 %915
      %919 = vset.pattern.permute.xlu0 0
      %920 = vperm.xlu0 %919, %v692
      %v921 = vpop.permute.xlu0 %920
      %924 = vset.pattern.permute.xlu0 0
      %925 = vperm.xlu0 %924, %v671
      %v926 = vpop.permute.xlu0 %925
      %928 = vset.pattern.permute.xlu0 0
      %929 = vperm.xlu0 %928, %v590
      %v930 = vpop.permute.xlu0 %929
      %933 = vset.pattern.permute.xlu0 0
      %934 = vperm.xlu0 %933, %v693
      %v935 = vpop.permute.xlu0 %934
      %938 = vset.pattern.permute.xlu0 0
      %939 = vperm.xlu0 %938, %v672
      %v940 = vpop.permute.xlu0 %939
      %942 = vset.pattern.permute.xlu0 0
      %943 = vperm.xlu0 %942, %v595
      %v944 = vpop.permute.xlu0 %943
      %947 = vset.pattern.permute.xlu0 0
      %948 = vperm.xlu0 %947, %v694
      %v949 = vpop.permute.xlu0 %948
      %952 = vset.pattern.permute.xlu0 0
      %953 = vperm.xlu0 %952, %v673
      %v954 = vpop.permute.xlu0 %953
      %956 = vset.pattern.permute.xlu0 0
      %957 = vperm.xlu0 %956, %v600
      %v958 = vpop.permute.xlu0 %957
      %961 = vset.pattern.permute.xlu0 0
      %962 = vperm.xlu0 %961, %v695
      %v963 = vpop.permute.xlu0 %962
      %966 = vset.pattern.permute.xlu0 0
      %967 = vperm.xlu0 %966, %v674
      %v968 = vpop.permute.xlu0 %967
      %970 = vset.pattern.permute.xlu0 0
      %971 = vperm.xlu0 %970, %v605
      %v972 = vpop.permute.xlu0 %971
      %975 = vset.pattern.permute.xlu0 0
      %976 = vperm.xlu0 %975, %v696
      %v977 = vpop.permute.xlu0 %976
      %v979 = vlaneseq
      %v980 = vshrl.u32 %v979, 7
      %v981 = vsub.s32 0, %v980
      %v982 = vrot.slane %v698, %v981
      %v983 = vmul.f32 %v702, %v982
      %v984 = vmul.f32 %v706, %v982
      %v985 = vmul.f32 %v711, %v982
      %v986 = vmul.f32 %v716, %v982
      %v987 = vmul.f32 %v720, %v982
      %v988 = vmul.f32 %v725, %v982
      %v989 = vmul.f32 %v730, %v982
      %v990 = vmul.f32 %v734, %v982
      %v991 = vmul.f32 %v739, %v982
      %v992 = vmul.f32 %v744, %v982
      %v993 = vmul.f32 %v748, %v982
      %v994 = vmul.f32 %v753, %v982
      %v995 = vmul.f32 %v758, %v982
      %v996 = vmul.f32 %v762, %v982
      %v997 = vmul.f32 %v767, %v982
      %v998 = vmul.f32 %v772, %v982
      %v999 = vmul.f32 %v776, %v982
      %v1000 = vmul.f32 %v781, %v982
      %v1001 = vmul.f32 %v786, %v982
      %v1002 = vmul.f32 %v790, %v982
      %v1003 = vmul.f32 %v795, %v982
      %v1004 = vmul.f32 %v800, %v982
      %v1005 = vmul.f32 %v804, %v982
      %v1006 = vmul.f32 %v809, %v982
      %v1007 = vmul.f32 %v814, %v982
      %v1008 = vmul.f32 %v818, %v982
      %v1009 = vmul.f32 %v823, %v982
      %v1010 = vmul.f32 %v828, %v982
      %v1011 = vmul.f32 %v832, %v982
      %v1012 = vmul.f32 %v837, %v982
      %v1013 = vmul.f32 %v842, %v982
      %v1014 = vmul.f32 %v846, %v982
      %v1015 = vmul.f32 %v851, %v982
      %v1016 = vmul.f32 %v856, %v982
      %v1017 = vmul.f32 %v860, %v982
      %v1018 = vmul.f32 %v865, %v982
      %v1019 = vmul.f32 %v870, %v982
      %v1020 = vmul.f32 %v874, %v982
      %v1021 = vmul.f32 %v879, %v982
      %v1022 = vmul.f32 %v884, %v982
      %v1023 = vmul.f32 %v888, %v982
      %v1024 = vmul.f32 %v893, %v982
      %v1025 = vmul.f32 %v898, %v982
      %v1026 = vmul.f32 %v902, %v982
      %v1027 = vmul.f32 %v907, %v982
      %v1028 = vmul.f32 %v912, %v982
      %v1029 = vmul.f32 %v916, %v982
      %v1030 = vmul.f32 %v921, %v982
      %v1031 = vmul.f32 %v926, %v982
      %v1032 = vmul.f32 %v930, %v982
      %v1033 = vmul.f32 %v935, %v982
      %v1034 = vmul.f32 %v940, %v982
      %v1035 = vmul.f32 %v944, %v982
      %v1036 = vmul.f32 %v949, %v982
      %v1037 = vmul.f32 %v954, %v982
      %v1038 = vmul.f32 %v958, %v982
      %v1039 = vmul.f32 %v963, %v982
      %v1040 = vmul.f32 %v968, %v982
      %v1041 = vmul.f32 %v972, %v982
      %v1042 = vmul.f32 %v977, %v982
      %v1043 = vld [vmem:[%s1 + $0x1] sm:$0x1]
      %v1044 = vlaneseq
      %v1045 = vshrl.u32 %v1044, 7
      %v1046 = vsub.s32 0, %v1045
      %v1047 = vrot.slane %v1043, %v1046
      %v1048 = vmul.f32 %v702, %v1047
      %v1049 = vmul.f32 %v706, %v1047
      %v1050 = vmul.f32 %v711, %v1047
      %v1051 = vmul.f32 %v716, %v1047
      %v1052 = vmul.f32 %v720, %v1047
      %v1053 = vmul.f32 %v725, %v1047
      %v1054 = vmul.f32 %v730, %v1047
      %v1055 = vmul.f32 %v734, %v1047
      %v1056 = vmul.f32 %v739, %v1047
      %v1057 = vmul.f32 %v744, %v1047
      %v1058 = vmul.f32 %v748, %v1047
      %v1059 = vmul.f32 %v753, %v1047
      %v1060 = vmul.f32 %v758, %v1047
      %v1061 = vmul.f32 %v762, %v1047
      %v1062 = vmul.f32 %v767, %v1047
      %v1063 = vmul.f32 %v772, %v1047
      %v1064 = vmul.f32 %v776, %v1047
      %v1065 = vmul.f32 %v781, %v1047
      %v1066 = vmul.f32 %v786, %v1047
      %v1067 = vmul.f32 %v790, %v1047
      %v1068 = vmul.f32 %v795, %v1047
      %v1069 = vmul.f32 %v800, %v1047
      %v1070 = vmul.f32 %v804, %v1047
      %v1071 = vmul.f32 %v809, %v1047
      %v1072 = vmul.f32 %v814, %v1047
      %v1073 = vmul.f32 %v818, %v1047
      %v1074 = vmul.f32 %v823, %v1047
      %v1075 = vmul.f32 %v828, %v1047
      %v1076 = vmul.f32 %v832, %v1047
      %v1077 = vmul.f32 %v837, %v1047
      %v1078 = vmul.f32 %v842, %v1047
      %v1079 = vmul.f32 %v846, %v1047
      %v1080 = vmul.f32 %v851, %v1047
      %v1081 = vmul.f32 %v856, %v1047
      %v1082 = vmul.f32 %v860, %v1047
      %v1083 = vmul.f32 %v865, %v1047
      %v1084 = vmul.f32 %v870, %v1047
      %v1085 = vmul.f32 %v874, %v1047
      %v1086 = vmul.f32 %v879, %v1047
      %v1087 = vmul.f32 %v884, %v1047
      %v1088 = vmul.f32 %v888, %v1047
      %v1089 = vmul.f32 %v893, %v1047
      %v1090 = vmul.f32 %v898, %v1047
      %v1091 = vmul.f32 %v902, %v1047
      %v1092 = vmul.f32 %v907, %v1047
      %v1093 = vmul.f32 %v912, %v1047
      %v1094 = vmul.f32 %v916, %v1047
      %v1095 = vmul.f32 %v921, %v1047
      %v1096 = vmul.f32 %v926, %v1047
      %v1097 = vmul.f32 %v930, %v1047
      %v1098 = vmul.f32 %v935, %v1047
      %v1099 = vmul.f32 %v940, %v1047
      %v1100 = vmul.f32 %v944, %v1047
      %v1101 = vmul.f32 %v949, %v1047
      %v1102 = vmul.f32 %v954, %v1047
      %v1103 = vmul.f32 %v958, %v1047
      %v1104 = vmul.f32 %v963, %v1047
      %v1105 = vmul.f32 %v968, %v1047
      %v1106 = vmul.f32 %v972, %v1047
      %v1107 = vmul.f32 %v977, %v1047
      %vm1168 = vcmask 1046528
      %v1169 = vrot.slane %v1048, 1
      %v1170 = vrot.slane %v1049, 1
      %v1171 = vsel %vm1168, %v1169, %v1170
      %v1172 = vrot.slane %v1050, 1
      %v1173 = vsel %vm1168, %v1170, %v1172
      %v1174 = vrot.slane %v1051, 1
      %v1175 = vrot.slane %v1052, 1
      %v1176 = vsel %vm1168, %v1174, %v1175
      %v1177 = vrot.slane %v1053, 1
      %v1178 = vsel %vm1168, %v1175, %v1177
      %v1179 = vrot.slane %v1054, 1
      %v1180 = vrot.slane %v1055, 1
      %v1181 = vsel %vm1168, %v1179, %v1180
      %v1182 = vrot.slane %v1056, 1
      %v1183 = vsel %vm1168, %v1180, %v1182
      %v1184 = vrot.slane %v1057, 1
      %v1185 = vrot.slane %v1058, 1
      %v1186 = vsel %vm1168, %v1184, %v1185
      %v1187 = vrot.slane %v1059, 1
      %v1188 = vsel %vm1168, %v1185, %v1187
      %v1189 = vrot.slane %v1060, 1
      %v1190 = vrot.slane %v1061, 1
      %v1191 = vsel %vm1168, %v1189, %v1190
      %v1192 = vrot.slane %v1062, 1
      %v1193 = vsel %vm1168, %v1190, %v1192
      %v1194 = vrot.slane %v1063, 1
      %v1195 = vrot.slane %v1064, 1
      %v1196 = vsel %vm1168, %v1194, %v1195
      %v1197 = vrot.slane %v1065, 1
      %v1198 = vsel %vm1168, %v1195, %v1197
      %v1199 = vrot.slane %v1066, 1
      %v1200 = vrot.slane %v1067, 1
      %v1201 = vsel %vm1168, %v1199, %v1200
      %v1202 = vrot.slane %v1068, 1
      %v1203 = vsel %vm1168, %v1200, %v1202
      %v1204 = vrot.slane %v1069, 1
      %v1205 = vrot.slane %v1070, 1
      %v1206 = vsel %vm1168, %v1204, %v1205
      %v1207 = vrot.slane %v1071, 1
      %v1208 = vsel %vm1168, %v1205, %v1207
      %v1209 = vrot.slane %v1072, 1
      %v1210 = vrot.slane %v1073, 1
      %v1211 = vsel %vm1168, %v1209, %v1210
      %v1212 = vrot.slane %v1074, 1
      %v1213 = vsel %vm1168, %v1210, %v1212
      %v1214 = vrot.slane %v1075, 1
      %v1215 = vrot.slane %v1076, 1
      %v1216 = vsel %vm1168, %v1214, %v1215
      %v1217 = vrot.slane %v1077, 1
      %v1218 = vsel %vm1168, %v1215, %v1217
      %v1219 = vrot.slane %v1078, 1
      %v1220 = vrot.slane %v1079, 1
      %v1221 = vsel %vm1168, %v1219, %v1220
      %v1222 = vrot.slane %v1080, 1
      %v1223 = vsel %vm1168, %v1220, %v1222
      %v1224 = vrot.slane %v1081, 1
      %v1225 = vrot.slane %v1082, 1
      %v1226 = vsel %vm1168, %v1224, %v1225
      %v1227 = vrot.slane %v1083, 1
      %v1228 = vsel %vm1168, %v1225, %v1227
      %v1229 = vrot.slane %v1084, 1
      %v1230 = vrot.slane %v1085, 1
      %v1231 = vsel %vm1168, %v1229, %v1230
      %v1232 = vrot.slane %v1086, 1
      %v1233 = vsel %vm1168, %v1230, %v1232
      %v1234 = vrot.slane %v1087, 1
      %v1235 = vrot.slane %v1088, 1
      %v1236 = vsel %vm1168, %v1234, %v1235
      %v1237 = vrot.slane %v1089, 1
      %v1238 = vsel %vm1168, %v1235, %v1237
      %v1239 = vrot.slane %v1090, 1
      %v1240 = vrot.slane %v1091, 1
      %v1241 = vsel %vm1168, %v1239, %v1240
      %v1242 = vrot.slane %v1092, 1
      %v1243 = vsel %vm1168, %v1240, %v1242
      %v1244 = vrot.slane %v1093, 1
      %v1245 = vrot.slane %v1094, 1
      %v1246 = vsel %vm1168, %v1244, %v1245
      %v1247 = vrot.slane %v1095, 1
      %v1248 = vsel %vm1168, %v1245, %v1247
      %v1249 = vrot.slane %v1096, 1
      %v1250 = vrot.slane %v1097, 1
      %v1251 = vsel %vm1168, %v1249, %v1250
      %v1252 = vrot.slane %v1098, 1
      %v1253 = vsel %vm1168, %v1250, %v1252
      %v1254 = vrot.slane %v1099, 1
      %v1255 = vrot.slane %v1100, 1
      %v1256 = vsel %vm1168, %v1254, %v1255
      %v1257 = vrot.slane %v1101, 1
      %v1258 = vsel %vm1168, %v1255, %v1257
      %v1259 = vrot.slane %v1102, 1
      %v1260 = vrot.slane %v1103, 1
      %v1261 = vsel %vm1168, %v1259, %v1260
      %v1262 = vrot.slane %v1104, 1
      %v1263 = vsel %vm1168, %v1260, %v1262
      %v1264 = vrot.slane %v1105, 1
      %v1265 = vrot.slane %v1106, 1
      %v1266 = vsel %vm1168, %v1264, %v1265
      %v1267 = vrot.slane %v1107, 1
      %v1268 = vsel %vm1168, %v1265, %v1267
      %v1329 = vadd.f32 %v983, %v1171
      %v1330 = vadd.f32 %v984, %v1173
      %v1331 = vadd.f32 %v985, %v1172
      %v1332 = vadd.f32 %v986, %v1176
      %v1333 = vadd.f32 %v987, %v1178
      %v1334 = vadd.f32 %v988, %v1177
      %v1335 = vadd.f32 %v989, %v1181
      %v1336 = vadd.f32 %v990, %v1183
      %v1337 = vadd.f32 %v991, %v1182
      %v1338 = vadd.f32 %v992, %v1186
      %v1339 = vadd.f32 %v993, %v1188
      %v1340 = vadd.f32 %v994, %v1187
      %v1341 = vadd.f32 %v995, %v1191
      %v1342 = vadd.f32 %v996, %v1193
      %v1343 = vadd.f32 %v997, %v1192
      %v1344 = vadd.f32 %v998, %v1196
      %v1345 = vadd.f32 %v999, %v1198
      %v1346 = vadd.f32 %v1000, %v1197
      %v1347 = vadd.f32 %v1001, %v1201
      %v1348 = vadd.f32 %v1002, %v1203
      %v1349 = vadd.f32 %v1003, %v1202
      %v1350 = vadd.f32 %v1004, %v1206
      %v1351 = vadd.f32 %v1005, %v1208
      %v1352 = vadd.f32 %v1006, %v1207
      %v1353 = vadd.f32 %v1007, %v1211
      %v1354 = vadd.f32 %v1008, %v1213
      %v1355 = vadd.f32 %v1009, %v1212
      %v1356 = vadd.f32 %v1010, %v1216
      %v1357 = vadd.f32 %v1011, %v1218
      %v1358 = vadd.f32 %v1012, %v1217
      %v1359 = vadd.f32 %v1013, %v1221
      %v1360 = vadd.f32 %v1014, %v1223
      %v1361 = vadd.f32 %v1015, %v1222
      %v1362 = vadd.f32 %v1016, %v1226
      %v1363 = vadd.f32 %v1017, %v1228
      %v1364 = vadd.f32 %v1018, %v1227
      %v1365 = vadd.f32 %v1019, %v1231
      %v1366 = vadd.f32 %v1020, %v1233
      %v1367 = vadd.f32 %v1021, %v1232
      %v1368 = vadd.f32 %v1022, %v1236
      %v1369 = vadd.f32 %v1023, %v1238
      %v1370 = vadd.f32 %v1024, %v1237
      %v1371 = vadd.f32 %v1025, %v1241
      %v1372 = vadd.f32 %v1026, %v1243
      %v1373 = vadd.f32 %v1027, %v1242
      %v1374 = vadd.f32 %v1028, %v1246
      %v1375 = vadd.f32 %v1029, %v1248
      %v1376 = vadd.f32 %v1030, %v1247
      %v1377 = vadd.f32 %v1031, %v1251
      %v1378 = vadd.f32 %v1032, %v1253
      %v1379 = vadd.f32 %v1033, %v1252
      %v1380 = vadd.f32 %v1034, %v1256
      %v1381 = vadd.f32 %v1035, %v1258
      %v1382 = vadd.f32 %v1036, %v1257
      %v1383 = vadd.f32 %v1037, %v1261
      %v1384 = vadd.f32 %v1038, %v1263
      %v1385 = vadd.f32 %v1039, %v1262
      %v1386 = vadd.f32 %v1040, %v1266
      %v1387 = vadd.f32 %v1041, %v1268
      %v1388 = vadd.f32 %v1042, %v1267
      %v1389 = vld [vmem:[%s1 + $0x2] sm:$0x1]
      %v1390 = vlaneseq
      %v1391 = vshrl.u32 %v1390, 7
      %v1392 = vsub.s32 0, %v1391
      %v1393 = vrot.slane %v1389, %v1392
      %v1394 = vmul.f32 %v702, %v1393
      %v1395 = vmul.f32 %v706, %v1393
      %v1396 = vmul.f32 %v711, %v1393
      %v1397 = vmul.f32 %v716, %v1393
      %v1398 = vmul.f32 %v720, %v1393
      %v1399 = vmul.f32 %v725, %v1393
      %v1400 = vmul.f32 %v730, %v1393
      %v1401 = vmul.f32 %v734, %v1393
      %v1402 = vmul.f32 %v739, %v1393
      %v1403 = vmul.f32 %v744, %v1393
      %v1404 = vmul.f32 %v748, %v1393
      %v1405 = vmul.f32 %v753, %v1393
      %v1406 = vmul.f32 %v758, %v1393
      %v1407 = vmul.f32 %v762, %v1393
      %v1408 = vmul.f32 %v767, %v1393
      %v1409 = vmul.f32 %v772, %v1393
      %v1410 = vmul.f32 %v776, %v1393
      %v1411 = vmul.f32 %v781, %v1393
      %v1412 = vmul.f32 %v786, %v1393
      %v1413 = vmul.f32 %v790, %v1393
      %v1414 = vmul.f32 %v795, %v1393
      %v1415 = vmul.f32 %v800, %v1393
      %v1416 = vmul.f32 %v804, %v1393
      %v1417 = vmul.f32 %v809, %v1393
      %v1418 = vmul.f32 %v814, %v1393
      %v1419 = vmul.f32 %v818, %v1393
      %v1420 = vmul.f32 %v823, %v1393
      %v1421 = vmul.f32 %v828, %v1393
      %v1422 = vmul.f32 %v832, %v1393
      %v1423 = vmul.f32 %v837, %v1393
      %v1424 = vmul.f32 %v842, %v1393
      %v1425 = vmul.f32 %v846, %v1393
      %v1426 = vmul.f32 %v851, %v1393
      %v1427 = vmul.f32 %v856, %v1393
      %v1428 = vmul.f32 %v860, %v1393
      %v1429 = vmul.f32 %v865, %v1393
      %v1430 = vmul.f32 %v870, %v1393
      %v1431 = vmul.f32 %v874, %v1393
      %v1432 = vmul.f32 %v879, %v1393
      %v1433 = vmul.f32 %v884, %v1393
      %v1434 = vmul.f32 %v888, %v1393
      %v1435 = vmul.f32 %v893, %v1393
      %v1436 = vmul.f32 %v898, %v1393
      %v1437 = vmul.f32 %v902, %v1393
      %v1438 = vmul.f32 %v907, %v1393
      %v1439 = vmul.f32 %v912, %v1393
      %v1440 = vmul.f32 %v916, %v1393
      %v1441 = vmul.f32 %v921, %v1393
      %v1442 = vmul.f32 %v926, %v1393
      %v1443 = vmul.f32 %v930, %v1393
      %v1444 = vmul.f32 %v935, %v1393
      %v1445 = vmul.f32 %v940, %v1393
      %v1446 = vmul.f32 %v944, %v1393
      %v1447 = vmul.f32 %v949, %v1393
      %v1448 = vmul.f32 %v954, %v1393
      %v1449 = vmul.f32 %v958, %v1393
      %v1450 = vmul.f32 %v963, %v1393
      %v1451 = vmul.f32 %v968, %v1393
      %v1452 = vmul.f32 %v972, %v1393
      %v1453 = vmul.f32 %v977, %v1393
      %vm1514 = vcmask 1045504
      %v1515 = vrot.slane %v1394, 2
      %v1516 = vrot.slane %v1395, 2
      %v1517 = vsel %vm1514, %v1515, %v1516
      %v1518 = vrot.slane %v1396, 2
      %v1519 = vsel %vm1514, %v1516, %v1518
      %v1520 = vrot.slane %v1397, 2
      %v1521 = vrot.slane %v1398, 2
      %v1522 = vsel %vm1514, %v1520, %v1521
      %v1523 = vrot.slane %v1399, 2
      %v1524 = vsel %vm1514, %v1521, %v1523
      %v1525 = vrot.slane %v1400, 2
      %v1526 = vrot.slane %v1401, 2
      %v1527 = vsel %vm1514, %v1525, %v1526
      %v1528 = vrot.slane %v1402, 2
      %v1529 = vsel %vm1514, %v1526, %v1528
      %v1530 = vrot.slane %v1403, 2
      %v1531 = vrot.slane %v1404, 2
      %v1532 = vsel %vm1514, %v1530, %v1531
      %v1533 = vrot.slane %v1405, 2
      %v1534 = vsel %vm1514, %v1531, %v1533
      %v1535 = vrot.slane %v1406, 2
      %v1536 = vrot.slane %v1407, 2
      %v1537 = vsel %vm1514, %v1535, %v1536
      %v1538 = vrot.slane %v1408, 2
      %v1539 = vsel %vm1514, %v1536, %v1538
      %v1540 = vrot.slane %v1409, 2
      %v1541 = vrot.slane %v1410, 2
      %v1542 = vsel %vm1514, %v1540, %v1541
      %v1543 = vrot.slane %v1411, 2
      %v1544 = vsel %vm1514, %v1541, %v1543
      %v1545 = vrot.slane %v1412, 2
      %v1546 = vrot.slane %v1413, 2
      %v1547 = vsel %vm1514, %v1545, %v1546
      %v1548 = vrot.slane %v1414, 2
      %v1549 = vsel %vm1514, %v1546, %v1548
      %v1550 = vrot.slane %v1415, 2
      %v1551 = vrot.slane %v1416, 2
      %v1552 = vsel %vm1514, %v1550, %v1551
      %v1553 = vrot.slane %v1417, 2
      %v1554 = vsel %vm1514, %v1551, %v1553
      %v1555 = vrot.slane %v1418, 2
      %v1556 = vrot.slane %v1419, 2
      %v1557 = vsel %vm1514, %v1555, %v1556
      %v1558 = vrot.slane %v1420, 2
      %v1559 = vsel %vm1514, %v1556, %v1558
      %v1560 = vrot.slane %v1421, 2
      %v1561 = vrot.slane %v1422, 2
      %v1562 = vsel %vm1514, %v1560, %v1561
      %v1563 = vrot.slane %v1423, 2
      %v1564 = vsel %vm1514, %v1561, %v1563
      %v1565 = vrot.slane %v1424, 2
      %v1566 = vrot.slane %v1425, 2
      %v1567 = vsel %vm1514, %v1565, %v1566
      %v1568 = vrot.slane %v1426, 2
      %v1569 = vsel %vm1514, %v1566, %v1568
      %v1570 = vrot.slane %v1427, 2
      %v1571 = vrot.slane %v1428, 2
      %v1572 = vsel %vm1514, %v1570, %v1571
      %v1573 = vrot.slane %v1429, 2
      %v1574 = vsel %vm1514, %v1571, %v1573
      %v1575 = vrot.slane %v1430, 2
      %v1576 = vrot.slane %v1431, 2
      %v1577 = vsel %vm1514, %v1575, %v1576
      %v1578 = vrot.slane %v1432, 2
      %v1579 = vsel %vm1514, %v1576, %v1578
      %v1580 = vrot.slane %v1433, 2
      %v1581 = vrot.slane %v1434, 2
      %v1582 = vsel %vm1514, %v1580, %v1581
      %v1583 = vrot.slane %v1435, 2
      %v1584 = vsel %vm1514, %v1581, %v1583
      %v1585 = vrot.slane %v1436, 2
      %v1586 = vrot.slane %v1437, 2
      %v1587 = vsel %vm1514, %v1585, %v1586
      %v1588 = vrot.slane %v1438, 2
      %v1589 = vsel %vm1514, %v1586, %v1588
      %v1590 = vrot.slane %v1439, 2
      %v1591 = vrot.slane %v1440, 2
      %v1592 = vsel %vm1514, %v1590, %v1591
      %v1593 = vrot.slane %v1441, 2
      %v1594 = vsel %vm1514, %v1591, %v1593
      %v1595 = vrot.slane %v1442, 2
      %v1596 = vrot.slane %v1443, 2
      %v1597 = vsel %vm1514, %v1595, %v1596
      %v1598 = vrot.slane %v1444, 2
      %v1599 = vsel %vm1514, %v1596, %v1598
      %v1600 = vrot.slane %v1445, 2
      %v1601 = vrot.slane %v1446, 2
      %v1602 = vsel %vm1514, %v1600, %v1601
      %v1603 = vrot.slane %v1447, 2
      %v1604 = vsel %vm1514, %v1601, %v1603
      %v1605 = vrot.slane %v1448, 2
      %v1606 = vrot.slane %v1449, 2
      %v1607 = vsel %vm1514, %v1605, %v1606
      %v1608 = vrot.slane %v1450, 2
      %v1609 = vsel %vm1514, %v1606, %v1608
      %v1610 = vrot.slane %v1451, 2
      %v1611 = vrot.slane %v1452, 2
      %v1612 = vsel %vm1514, %v1610, %v1611
      %v1613 = vrot.slane %v1453, 2
      %v1614 = vsel %vm1514, %v1611, %v1613
      %v1675 = vadd.f32 %v1329, %v1517
      %v1676 = vadd.f32 %v1330, %v1519
      %v1677 = vadd.f32 %v1331, %v1518
      %v1678 = vadd.f32 %v1332, %v1522
      %v1679 = vadd.f32 %v1333, %v1524
      %v1680 = vadd.f32 %v1334, %v1523
      %v1681 = vadd.f32 %v1335, %v1527
      %v1682 = vadd.f32 %v1336, %v1529
      %v1683 = vadd.f32 %v1337, %v1528
      %v1684 = vadd.f32 %v1338, %v1532
      %v1685 = vadd.f32 %v1339, %v1534
      %v1686 = vadd.f32 %v1340, %v1533
      %v1687 = vadd.f32 %v1341, %v1537
      %v1688 = vadd.f32 %v1342, %v1539
      %v1689 = vadd.f32 %v1343, %v1538
      %v1690 = vadd.f32 %v1344, %v1542
      %v1691 = vadd.f32 %v1345, %v1544
      %v1692 = vadd.f32 %v1346, %v1543
      %v1693 = vadd.f32 %v1347, %v1547
      %v1694 = vadd.f32 %v1348, %v1549
      %v1695 = vadd.f32 %v1349, %v1548
      %v1696 = vadd.f32 %v1350, %v1552
      %v1697 = vadd.f32 %v1351, %v1554
      %v1698 = vadd.f32 %v1352, %v1553
      %v1699 = vadd.f32 %v1353, %v1557
      %v1700 = vadd.f32 %v1354, %v1559
      %v1701 = vadd.f32 %v1355, %v1558
      %v1702 = vadd.f32 %v1356, %v1562
      %v1703 = vadd.f32 %v1357, %v1564
      %v1704 = vadd.f32 %v1358, %v1563
      %v1705 = vadd.f32 %v1359, %v1567
      %v1706 = vadd.f32 %v1360, %v1569
      %v1707 = vadd.f32 %v1361, %v1568
      %v1708 = vadd.f32 %v1362, %v1572
      %v1709 = vadd.f32 %v1363, %v1574
      %v1710 = vadd.f32 %v1364, %v1573
      %v1711 = vadd.f32 %v1365, %v1577
      %v1712 = vadd.f32 %v1366, %v1579
      %v1713 = vadd.f32 %v1367, %v1578
      %v1714 = vadd.f32 %v1368, %v1582
      %v1715 = vadd.f32 %v1369, %v1584
      %v1716 = vadd.f32 %v1370, %v1583
      %v1717 = vadd.f32 %v1371, %v1587
      %v1718 = vadd.f32 %v1372, %v1589
      %v1719 = vadd.f32 %v1373, %v1588
      %v1720 = vadd.f32 %v1374, %v1592
      %v1721 = vadd.f32 %v1375, %v1594
      %v1722 = vadd.f32 %v1376, %v1593
      %v1723 = vadd.f32 %v1377, %v1597
      %v1724 = vadd.f32 %v1378, %v1599
      %v1725 = vadd.f32 %v1379, %v1598
      %v1726 = vadd.f32 %v1380, %v1602
      %v1727 = vadd.f32 %v1381, %v1604
      %v1728 = vadd.f32 %v1382, %v1603
      %v1729 = vadd.f32 %v1383, %v1607
      %v1730 = vadd.f32 %v1384, %v1609
      %v1731 = vadd.f32 %v1385, %v1608
      %v1732 = vadd.f32 %v1386, %v1612
      %v1733 = vadd.f32 %v1387, %v1614
      %v1734 = vadd.f32 %v1388, %v1613
      %v1735 = vld [vmem:[%s1 + $0x3] sm:$0x1]
      %1737 = vset.pattern.permute.xlu0 0
      %1738 = vperm.xlu0 %1737, %v675
      %v1739 = vpop.permute.xlu0 %1738
      %1741 = vset.pattern.permute.xlu0 0
      %1742 = vperm.xlu0 %1741, %v610
      %v1743 = vpop.permute.xlu0 %1742
      %1746 = vset.pattern.permute.xlu0 0
      %1747 = vperm.xlu0 %1746, %v697
      %v1748 = vpop.permute.xlu0 %1747
      %v1750 = vlaneseq
      %v1751 = vshrl.u32 %v1750, 7
      %v1752 = vsub.s32 0, %v1751
      %v1753 = vrot.slane %v1735, %v1752
      %v1754 = vmul.f32 %v716, %v1753
      %v1755 = vmul.f32 %v720, %v1753
      %v1756 = vmul.f32 %v725, %v1753
      %v1757 = vmul.f32 %v730, %v1753
      %v1758 = vmul.f32 %v734, %v1753
      %v1759 = vmul.f32 %v739, %v1753
      %v1760 = vmul.f32 %v744, %v1753
      %v1761 = vmul.f32 %v748, %v1753
      %v1762 = vmul.f32 %v753, %v1753
      %v1763 = vmul.f32 %v758, %v1753
      %v1764 = vmul.f32 %v762, %v1753
      %v1765 = vmul.f32 %v767, %v1753
      %v1766 = vmul.f32 %v772, %v1753
      %v1767 = vmul.f32 %v776, %v1753
      %v1768 = vmul.f32 %v781, %v1753
      %v1769 = vmul.f32 %v786, %v1753
      %v1770 = vmul.f32 %v790, %v1753
      %v1771 = vmul.f32 %v795, %v1753
      %v1772 = vmul.f32 %v800, %v1753
      %v1773 = vmul.f32 %v804, %v1753
      %v1774 = vmul.f32 %v809, %v1753
      %v1775 = vmul.f32 %v814, %v1753
      %v1776 = vmul.f32 %v818, %v1753
      %v1777 = vmul.f32 %v823, %v1753
      %v1778 = vmul.f32 %v828, %v1753
      %v1779 = vmul.f32 %v832, %v1753
      %v1780 = vmul.f32 %v837, %v1753
      %v1781 = vmul.f32 %v842, %v1753
      %v1782 = vmul.f32 %v846, %v1753
      %v1783 = vmul.f32 %v851, %v1753
      %v1784 = vmul.f32 %v856, %v1753
      %v1785 = vmul.f32 %v860, %v1753
      %v1786 = vmul.f32 %v865, %v1753
      %v1787 = vmul.f32 %v870, %v1753
      %v1788 = vmul.f32 %v874, %v1753
      %v1789 = vmul.f32 %v879, %v1753
      %v1790 = vmul.f32 %v884, %v1753
      %v1791 = vmul.f32 %v888, %v1753
      %v1792 = vmul.f32 %v893, %v1753
      %v1793 = vmul.f32 %v898, %v1753
      %v1794 = vmul.f32 %v902, %v1753
      %v1795 = vmul.f32 %v907, %v1753
      %v1796 = vmul.f32 %v912, %v1753
      %v1797 = vmul.f32 %v916, %v1753
      %v1798 = vmul.f32 %v921, %v1753
      %v1799 = vmul.f32 %v926, %v1753
      %v1800 = vmul.f32 %v930, %v1753
      %v1801 = vmul.f32 %v935, %v1753
      %v1802 = vmul.f32 %v940, %v1753
      %v1803 = vmul.f32 %v944, %v1753
      %v1804 = vmul.f32 %v949, %v1753
      %v1805 = vmul.f32 %v954, %v1753
      %v1806 = vmul.f32 %v958, %v1753
      %v1807 = vmul.f32 %v963, %v1753
      %v1808 = vmul.f32 %v968, %v1753
      %v1809 = vmul.f32 %v972, %v1753
      %v1810 = vmul.f32 %v977, %v1753
      %v1811 = vmul.f32 %v1739, %v1753
      %v1812 = vmul.f32 %v1743, %v1753
      %v1813 = vmul.f32 %v1748, %v1753
      %v1814 = vadd.f32 %v1675, %v1754
      %v1815 = vadd.f32 %v1676, %v1755
      %v1816 = vadd.f32 %v1677, %v1756
      %v1817 = vadd.f32 %v1678, %v1757
      %v1818 = vadd.f32 %v1679, %v1758
      %v1819 = vadd.f32 %v1680, %v1759
      %v1820 = vadd.f32 %v1681, %v1760
      %v1821 = vadd.f32 %v1682, %v1761
      %v1822 = vadd.f32 %v1683, %v1762
      %v1823 = vadd.f32 %v1684, %v1763
      %v1824 = vadd.f32 %v1685, %v1764
      %v1825 = vadd.f32 %v1686, %v1765
      %v1826 = vadd.f32 %v1687, %v1766
      %v1827 = vadd.f32 %v1688, %v1767
      %v1828 = vadd.f32 %v1689, %v1768
      %v1829 = vadd.f32 %v1690, %v1769
      %v1830 = vadd.f32 %v1691, %v1770
      %v1831 = vadd.f32 %v1692, %v1771
      %v1832 = vadd.f32 %v1693, %v1772
      %v1833 = vadd.f32 %v1694, %v1773
      %v1834 = vadd.f32 %v1695, %v1774
      %v1835 = vadd.f32 %v1696, %v1775
      %v1836 = vadd.f32 %v1697, %v1776
      %v1837 = vadd.f32 %v1698, %v1777
      %v1838 = vadd.f32 %v1699, %v1778
      %v1839 = vadd.f32 %v1700, %v1779
      %v1840 = vadd.f32 %v1701, %v1780
      %v1841 = vadd.f32 %v1702, %v1781
      %v1842 = vadd.f32 %v1703, %v1782
      %v1843 = vadd.f32 %v1704, %v1783
      %v1844 = vadd.f32 %v1705, %v1784
      %v1845 = vadd.f32 %v1706, %v1785
      %v1846 = vadd.f32 %v1707, %v1786
      %v1847 = vadd.f32 %v1708, %v1787
      %v1848 = vadd.f32 %v1709, %v1788
      %v1849 = vadd.f32 %v1710, %v1789
      %v1850 = vadd.f32 %v1711, %v1790
      %v1851 = vadd.f32 %v1712, %v1791
      %v1852 = vadd.f32 %v1713, %v1792
      %v1853 = vadd.f32 %v1714, %v1793
      %v1854 = vadd.f32 %v1715, %v1794
      %v1855 = vadd.f32 %v1716, %v1795
      %v1856 = vadd.f32 %v1717, %v1796
      %v1857 = vadd.f32 %v1718, %v1797
      %v1858 = vadd.f32 %v1719, %v1798
      %v1859 = vadd.f32 %v1720, %v1799
      %v1860 = vadd.f32 %v1721, %v1800
      %v1861 = vadd.f32 %v1722, %v1801
      %v1862 = vadd.f32 %v1723, %v1802
      %v1863 = vadd.f32 %v1724, %v1803
      %v1864 = vadd.f32 %v1725, %v1804
      %v1865 = vadd.f32 %v1726, %v1805
      %v1866 = vadd.f32 %v1727, %v1806
      %v1867 = vadd.f32 %v1728, %v1807
      %v1868 = vadd.f32 %v1729, %v1808
      %v1869 = vadd.f32 %v1730, %v1809
      %v1870 = vadd.f32 %v1731, %v1810
      %v1871 = vadd.f32 %v1732, %v1811
      %v1872 = vadd.f32 %v1733, %v1812
      %v1873 = vadd.f32 %v1734, %v1813
      %v1874 = vld [vmem:[%s1 + $0x4] sm:$0x1]
      %v1875 = vlaneseq
      %v1876 = vshrl.u32 %v1875, 7
      %v1877 = vsub.s32 0, %v1876
      %v1878 = vrot.slane %v1874, %v1877
      %v1879 = vmul.f32 %v716, %v1878
      %v1880 = vmul.f32 %v720, %v1878
      %v1881 = vmul.f32 %v725, %v1878
      %v1882 = vmul.f32 %v730, %v1878
      %v1883 = vmul.f32 %v734, %v1878
      %v1884 = vmul.f32 %v739, %v1878
      %v1885 = vmul.f32 %v744, %v1878
      %v1886 = vmul.f32 %v748, %v1878
      %v1887 = vmul.f32 %v753, %v1878
      %v1888 = vmul.f32 %v758, %v1878
      %v1889 = vmul.f32 %v762, %v1878
      %v1890 = vmul.f32 %v767, %v1878
      %v1891 = vmul.f32 %v772, %v1878
      %v1892 = vmul.f32 %v776, %v1878
      %v1893 = vmul.f32 %v781, %v1878
      %v1894 = vmul.f32 %v786, %v1878
      %v1895 = vmul.f32 %v790, %v1878
      %v1896 = vmul.f32 %v795, %v1878
      %v1897 = vmul.f32 %v800, %v1878
      %v1898 = vmul.f32 %v804, %v1878
      %v1899 = vmul.f32 %v809, %v1878
      %v1900 = vmul.f32 %v814, %v1878
      %v1901 = vmul.f32 %v818, %v1878
      %v1902 = vmul.f32 %v823, %v1878
      %v1903 = vmul.f32 %v828, %v1878
      %v1904 = vmul.f32 %v832, %v1878
      %v1905 = vmul.f32 %v837, %v1878
      %v1906 = vmul.f32 %v842, %v1878
      %v1907 = vmul.f32 %v846, %v1878
      %v1908 = vmul.f32 %v851, %v1878
      %v1909 = vmul.f32 %v856, %v1878
      %v1910 = vmul.f32 %v860, %v1878
      %v1911 = vmul.f32 %v865, %v1878
      %v1912 = vmul.f32 %v870, %v1878
      %v1913 = vmul.f32 %v874, %v1878
      %v1914 = vmul.f32 %v879, %v1878
      %v1915 = vmul.f32 %v884, %v1878
      %v1916 = vmul.f32 %v888, %v1878
      %v1917 = vmul.f32 %v893, %v1878
      %v1918 = vmul.f32 %v898, %v1878
      %v1919 = vmul.f32 %v902, %v1878
      %v1920 = vmul.f32 %v907, %v1878
      %v1921 = vmul.f32 %v912, %v1878
      %v1922 = vmul.f32 %v916, %v1878
      %v1923 = vmul.f32 %v921, %v1878
      %v1924 = vmul.f32 %v926, %v1878
      %v1925 = vmul.f32 %v930, %v1878
      %v1926 = vmul.f32 %v935, %v1878
      %v1927 = vmul.f32 %v940, %v1878
      %v1928 = vmul.f32 %v944, %v1878
      %v1929 = vmul.f32 %v949, %v1878
      %v1930 = vmul.f32 %v954, %v1878
      %v1931 = vmul.f32 %v958, %v1878
      %v1932 = vmul.f32 %v963, %v1878
      %v1933 = vmul.f32 %v968, %v1878
      %v1934 = vmul.f32 %v972, %v1878
      %v1935 = vmul.f32 %v977, %v1878
      %v1936 = vmul.f32 %v1739, %v1878
      %v1937 = vmul.f32 %v1743, %v1878
      %v1938 = vmul.f32 %v1748, %v1878
      %v1999 = vrot.slane %v1879, 1
      %v2000 = vrot.slane %v1880, 1
      %v2001 = vsel %vm1168, %v1999, %v2000
      %v2002 = vrot.slane %v1881, 1
      %v2003 = vsel %vm1168, %v2000, %v2002
      %v2004 = vrot.slane %v1882, 1
      %v2005 = vrot.slane %v1883, 1
      %v2006 = vsel %vm1168, %v2004, %v2005
      %v2007 = vrot.slane %v1884, 1
      %v2008 = vsel %vm1168, %v2005, %v2007
      %v2009 = vrot.slane %v1885, 1
      %v2010 = vrot.slane %v1886, 1
      %v2011 = vsel %vm1168, %v2009, %v2010
      %v2012 = vrot.slane %v1887, 1
      %v2013 = vsel %vm1168, %v2010, %v2012
      %v2014 = vrot.slane %v1888, 1
      %v2015 = vrot.slane %v1889, 1
      %v2016 = vsel %vm1168, %v2014, %v2015
      %v2017 = vrot.slane %v1890, 1
      %v2018 = vsel %vm1168, %v2015, %v2017
      %v2019 = vrot.slane %v1891, 1
      %v2020 = vrot.slane %v1892, 1
      %v2021 = vsel %vm1168, %v2019, %v2020
      %v2022 = vrot.slane %v1893, 1
      %v2023 = vsel %vm1168, %v2020, %v2022
      %v2024 = vrot.slane %v1894, 1
      %v2025 = vrot.slane %v1895, 1
      %v2026 = vsel %vm1168, %v2024, %v2025
      %v2027 = vrot.slane %v1896, 1
      %v2028 = vsel %vm1168, %v2025, %v2027
      %v2029 = vrot.slane %v1897, 1
      %v2030 = vrot.slane %v1898, 1
      %v2031 = vsel %vm1168, %v2029, %v2030
      %v2032 = vrot.slane %v1899, 1
      %v2033 = vsel %vm1168, %v2030, %v2032
      %v2034 = vrot.slane %v1900, 1
      %v2035 = vrot.slane %v1901, 1
      %v2036 = vsel %vm1168, %v2034, %v2035
      %v2037 = vrot.slane %v1902, 1
      %v2038 = vsel %vm1168, %v2035, %v2037
      %v2039 = vrot.slane %v1903, 1
      %v2040 = vrot.slane %v1904, 1
      %v2041 = vsel %vm1168, %v2039, %v2040
      %v2042 = vrot.slane %v1905, 1
      %v2043 = vsel %vm1168, %v2040, %v2042
      %v2044 = vrot.slane %v1906, 1
      %v2045 = vrot.slane %v1907, 1
      %v2046 = vsel %vm1168, %v2044, %v2045
      %v2047 = vrot.slane %v1908, 1
      %v2048 = vsel %vm1168, %v2045, %v2047
      %v2049 = vrot.slane %v1909, 1
      %v2050 = vrot.slane %v1910, 1
      %v2051 = vsel %vm1168, %v2049, %v2050
      %v2052 = vrot.slane %v1911, 1
      %v2053 = vsel %vm1168, %v2050, %v2052
      %v2054 = vrot.slane %v1912, 1
      %v2055 = vrot.slane %v1913, 1
      %v2056 = vsel %vm1168, %v2054, %v2055
      %v2057 = vrot.slane %v1914, 1
      %v2058 = vsel %vm1168, %v2055, %v2057
      %v2059 = vrot.slane %v1915, 1
      %v2060 = vrot.slane %v1916, 1
      %v2061 = vsel %vm1168, %v2059, %v2060
      %v2062 = vrot.slane %v1917, 1
      %v2063 = vsel %vm1168, %v2060, %v2062
      %v2064 = vrot.slane %v1918, 1
      %v2065 = vrot.slane %v1919, 1
      %v2066 = vsel %vm1168, %v2064, %v2065
      %v2067 = vrot.slane %v1920, 1
      %v2068 = vsel %vm1168, %v2065, %v2067
      %v2069 = vrot.slane %v1921, 1
      %v2070 = vrot.slane %v1922, 1
      %v2071 = vsel %vm1168, %v2069, %v2070
      %v2072 = vrot.slane %v1923, 1
      %v2073 = vsel %vm1168, %v2070, %v2072
      %v2074 = vrot.slane %v1924, 1
      %v2075 = vrot.slane %v1925, 1
      %v2076 = vsel %vm1168, %v2074, %v2075
      %v2077 = vrot.slane %v1926, 1
      %v2078 = vsel %vm1168, %v2075, %v2077
      %v2079 = vrot.slane %v1927, 1
      %v2080 = vrot.slane %v1928, 1
      %v2081 = vsel %vm1168, %v2079, %v2080
      %v2082 = vrot.slane %v1929, 1
      %v2083 = vsel %vm1168, %v2080, %v2082
      %v2084 = vrot.slane %v1930, 1
      %v2085 = vrot.slane %v1931, 1
      %v2086 = vsel %vm1168, %v2084, %v2085
      %v2087 = vrot.slane %v1932, 1
      %v2088 = vsel %vm1168, %v2085, %v2087
      %v2089 = vrot.slane %v1933, 1
      %v2090 = vrot.slane %v1934, 1
      %v2091 = vsel %vm1168, %v2089, %v2090
      %v2092 = vrot.slane %v1935, 1
      %v2093 = vsel %vm1168, %v2090, %v2092
      %v2094 = vrot.slane %v1936, 1
      %v2095 = vrot.slane %v1937, 1
      %v2096 = vsel %vm1168, %v2094, %v2095
      %v2097 = vrot.slane %v1938, 1
      %v2098 = vsel %vm1168, %v2095, %v2097
      %v2159 = vadd.f32 %v1814, %v2001
      %v2160 = vadd.f32 %v1815, %v2003
      %v2161 = vadd.f32 %v1816, %v2002
      %v2162 = vadd.f32 %v1817, %v2006
      %v2163 = vadd.f32 %v1818, %v2008
      %v2164 = vadd.f32 %v1819, %v2007
      %v2165 = vadd.f32 %v1820, %v2011
      %v2166 = vadd.f32 %v1821, %v2013
      %v2167 = vadd.f32 %v1822, %v2012
      %v2168 = vadd.f32 %v1823, %v2016
      %v2169 = vadd.f32 %v1824, %v2018
      %v2170 = vadd.f32 %v1825, %v2017
      %v2171 = vadd.f32 %v1826, %v2021
      %v2172 = vadd.f32 %v1827, %v2023
      %v2173 = vadd.f32 %v1828, %v2022
      %v2174 = vadd.f32 %v1829, %v2026
      %v2175 = vadd.f32 %v1830, %v2028
      %v2176 = vadd.f32 %v1831, %v2027
      %v2177 = vadd.f32 %v1832, %v2031
      %v2178 = vadd.f32 %v1833, %v2033
      %v2179 = vadd.f32 %v1834, %v2032
      %v2180 = vadd.f32 %v1835, %v2036
      %v2181 = vadd.f32 %v1836, %v2038
      %v2182 = vadd.f32 %v1837, %v2037
      %v2183 = vadd.f32 %v1838, %v2041
      %v2184 = vadd.f32 %v1839, %v2043
      %v2185 = vadd.f32 %v1840, %v2042
      %v2186 = vadd.f32 %v1841, %v2046
      %v2187 = vadd.f32 %v1842, %v2048
      %v2188 = vadd.f32 %v1843, %v2047
      %v2189 = vadd.f32 %v1844, %v2051
      %v2190 = vadd.f32 %v1845, %v2053
      %v2191 = vadd.f32 %v1846, %v2052
      %v2192 = vadd.f32 %v1847, %v2056
      %v2193 = vadd.f32 %v1848, %v2058
      %v2194 = vadd.f32 %v1849, %v2057
      %v2195 = vadd.f32 %v1850, %v2061
      %v2196 = vadd.f32 %v1851, %v2063
      %v2197 = vadd.f32 %v1852, %v2062
      %v2198 = vadd.f32 %v1853, %v2066
      %v2199 = vadd.f32 %v1854, %v2068
      %v2200 = vadd.f32 %v1855, %v2067
      %v2201 = vadd.f32 %v1856, %v2071
      %v2202 = vadd.f32 %v1857, %v2073
      %v2203 = vadd.f32 %v1858, %v2072
      %v2204 = vadd.f32 %v1859, %v2076
      %v2205 = vadd.f32 %v1860, %v2078
      %v2206 = vadd.f32 %v1861, %v2077
      %v2207 = vadd.f32 %v1862, %v2081
      %v2208 = vadd.f32 %v1863, %v2083
      %v2209 = vadd.f32 %v1864, %v2082
      %v2210 = vadd.f32 %v1865, %v2086
      %v2211 = vadd.f32 %v1866, %v2088
      %v2212 = vadd.f32 %v1867, %v2087
      %v2213 = vadd.f32 %v1868, %v2091
      %v2214 = vadd.f32 %v1869, %v2093
      %v2215 = vadd.f32 %v1870, %v2092
      %v2216 = vadd.f32 %v1871, %v2096
      %v2217 = vadd.f32 %v1872, %v2098
      %v2218 = vadd.f32 %v1873, %v2097
      %v2219 = vld [vmem:[%s1 + $0x5] sm:$0x1]
      %v2220 = vlaneseq
      %v2221 = vshrl.u32 %v2220, 7
      %v2222 = vsub.s32 0, %v2221
      %v2223 = vrot.slane %v2219, %v2222
      %v2224 = vmul.f32 %v716, %v2223
      %v2225 = vmul.f32 %v720, %v2223
      %v2226 = vmul.f32 %v725, %v2223
      %v2227 = vmul.f32 %v730, %v2223
      %v2228 = vmul.f32 %v734, %v2223
      %v2229 = vmul.f32 %v739, %v2223
      %v2230 = vmul.f32 %v744, %v2223
      %v2231 = vmul.f32 %v748, %v2223
      %v2232 = vmul.f32 %v753, %v2223
      %v2233 = vmul.f32 %v758, %v2223
      %v2234 = vmul.f32 %v762, %v2223
      %v2235 = vmul.f32 %v767, %v2223
      %v2236 = vmul.f32 %v772, %v2223
      %v2237 = vmul.f32 %v776, %v2223
      %v2238 = vmul.f32 %v781, %v2223
      %v2239 = vmul.f32 %v786, %v2223
      %v2240 = vmul.f32 %v790, %v2223
      %v2241 = vmul.f32 %v795, %v2223
      %v2242 = vmul.f32 %v800, %v2223
      %v2243 = vmul.f32 %v804, %v2223
      %v2244 = vmul.f32 %v809, %v2223
      %v2245 = vmul.f32 %v814, %v2223
      %v2246 = vmul.f32 %v818, %v2223
      %v2247 = vmul.f32 %v823, %v2223
      %v2248 = vmul.f32 %v828, %v2223
      %v2249 = vmul.f32 %v832, %v2223
      %v2250 = vmul.f32 %v837, %v2223
      %v2251 = vmul.f32 %v842, %v2223
      %v2252 = vmul.f32 %v846, %v2223
      %v2253 = vmul.f32 %v851, %v2223
      %v2254 = vmul.f32 %v856, %v2223
      %v2255 = vmul.f32 %v860, %v2223
      %v2256 = vmul.f32 %v865, %v2223
      %v2257 = vmul.f32 %v870, %v2223
      %v2258 = vmul.f32 %v874, %v2223
      %v2259 = vmul.f32 %v879, %v2223
      %v2260 = vmul.f32 %v884, %v2223
      %v2261 = vmul.f32 %v888, %v2223
      %v2262 = vmul.f32 %v893, %v2223
      %v2263 = vmul.f32 %v898, %v2223
      %v2264 = vmul.f32 %v902, %v2223
      %v2265 = vmul.f32 %v907, %v2223
      %v2266 = vmul.f32 %v912, %v2223
      %v2267 = vmul.f32 %v916, %v2223
      %v2268 = vmul.f32 %v921, %v2223
      %v2269 = vmul.f32 %v926, %v2223
      %v2270 = vmul.f32 %v930, %v2223
      %v2271 = vmul.f32 %v935, %v2223
      %v2272 = vmul.f32 %v940, %v2223
      %v2273 = vmul.f32 %v944, %v2223
      %v2274 = vmul.f32 %v949, %v2223
      %v2275 = vmul.f32 %v954, %v2223
      %v2276 = vmul.f32 %v958, %v2223
      %v2277 = vmul.f32 %v963, %v2223
      %v2278 = vmul.f32 %v968, %v2223
      %v2279 = vmul.f32 %v972, %v2223
      %v2280 = vmul.f32 %v977, %v2223
      %v2281 = vmul.f32 %v1739, %v2223
      %v2282 = vmul.f32 %v1743, %v2223
      %v2283 = vmul.f32 %v1748, %v2223
      %v2344 = vrot.slane %v2224, 2
      %v2345 = vrot.slane %v2225, 2
      %v2346 = vsel %vm1514, %v2344, %v2345
      %v2347 = vrot.slane %v2226, 2
      %v2348 = vsel %vm1514, %v2345, %v2347
      %v2349 = vrot.slane %v2227, 2
      %v2350 = vrot.slane %v2228, 2
      %v2351 = vsel %vm1514, %v2349, %v2350
      %v2352 = vrot.slane %v2229, 2
      %v2353 = vsel %vm1514, %v2350, %v2352
      %v2354 = vrot.slane %v2230, 2
      %v2355 = vrot.slane %v2231, 2
      %v2356 = vsel %vm1514, %v2354, %v2355
      %v2357 = vrot.slane %v2232, 2
      %v2358 = vsel %vm1514, %v2355, %v2357
      %v2359 = vrot.slane %v2233, 2
      %v2360 = vrot.slane %v2234, 2
      %v2361 = vsel %vm1514, %v2359, %v2360
      %v2362 = vrot.slane %v2235, 2
      %v2363 = vsel %vm1514, %v2360, %v2362
      %v2364 = vrot.slane %v2236, 2
      %v2365 = vrot.slane %v2237, 2
      %v2366 = vsel %vm1514, %v2364, %v2365
      %v2367 = vrot.slane %v2238, 2
      %v2368 = vsel %vm1514, %v2365, %v2367
      %v2369 = vrot.slane %v2239, 2
      %v2370 = vrot.slane %v2240, 2
      %v2371 = vsel %vm1514, %v2369, %v2370
      %v2372 = vrot.slane %v2241, 2
      %v2373 = vsel %vm1514, %v2370, %v2372
      %v2374 = vrot.slane %v2242, 2
      %v2375 = vrot.slane %v2243, 2
      %v2376 = vsel %vm1514, %v2374, %v2375
      %v2377 = vrot.slane %v2244, 2
      %v2378 = vsel %vm1514, %v2375, %v2377
      %v2379 = vrot.slane %v2245, 2
      %v2380 = vrot.slane %v2246, 2
      %v2381 = vsel %vm1514, %v2379, %v2380
      %v2382 = vrot.slane %v2247, 2
      %v2383 = vsel %vm1514, %v2380, %v2382
      %v2384 = vrot.slane %v2248, 2
      %v2385 = vrot.slane %v2249, 2
      %v2386 = vsel %vm1514, %v2384, %v2385
      %v2387 = vrot.slane %v2250, 2
      %v2388 = vsel %vm1514, %v2385, %v2387
      %v2389 = vrot.slane %v2251, 2
      %v2390 = vrot.slane %v2252, 2
      %v2391 = vsel %vm1514, %v2389, %v2390
      %v2392 = vrot.slane %v2253, 2
      %v2393 = vsel %vm1514, %v2390, %v2392
      %v2394 = vrot.slane %v2254, 2
      %v2395 = vrot.slane %v2255, 2
      %v2396 = vsel %vm1514, %v2394, %v2395
      %v2397 = vrot.slane %v2256, 2
      %v2398 = vsel %vm1514, %v2395, %v2397
      %v2399 = vrot.slane %v2257, 2
      %v2400 = vrot.slane %v2258, 2
      %v2401 = vsel %vm1514, %v2399, %v2400
      %v2402 = vrot.slane %v2259, 2
      %v2403 = vsel %vm1514, %v2400, %v2402
      %v2404 = vrot.slane %v2260, 2
      %v2405 = vrot.slane %v2261, 2
      %v2406 = vsel %vm1514, %v2404, %v2405
      %v2407 = vrot.slane %v2262, 2
      %v2408 = vsel %vm1514, %v2405, %v2407
      %v2409 = vrot.slane %v2263, 2
      %v2410 = vrot.slane %v2264, 2
      %v2411 = vsel %vm1514, %v2409, %v2410
      %v2412 = vrot.slane %v2265, 2
      %v2413 = vsel %vm1514, %v2410, %v2412
      %v2414 = vrot.slane %v2266, 2
      %v2415 = vrot.slane %v2267, 2
      %v2416 = vsel %vm1514, %v2414, %v2415
      %v2417 = vrot.slane %v2268, 2
      %v2418 = vsel %vm1514, %v2415, %v2417
      %v2419 = vrot.slane %v2269, 2
      %v2420 = vrot.slane %v2270, 2
      %v2421 = vsel %vm1514, %v2419, %v2420
      %v2422 = vrot.slane %v2271, 2
      %v2423 = vsel %vm1514, %v2420, %v2422
      %v2424 = vrot.slane %v2272, 2
      %v2425 = vrot.slane %v2273, 2
      %v2426 = vsel %vm1514, %v2424, %v2425
      %v2427 = vrot.slane %v2274, 2
      %v2428 = vsel %vm1514, %v2425, %v2427
      %v2429 = vrot.slane %v2275, 2
      %v2430 = vrot.slane %v2276, 2
      %v2431 = vsel %vm1514, %v2429, %v2430
      %v2432 = vrot.slane %v2277, 2
      %v2433 = vsel %vm1514, %v2430, %v2432
      %v2434 = vrot.slane %v2278, 2
      %v2435 = vrot.slane %v2279, 2
      %v2436 = vsel %vm1514, %v2434, %v2435
      %v2437 = vrot.slane %v2280, 2
      %v2438 = vsel %vm1514, %v2435, %v2437
      %v2439 = vrot.slane %v2281, 2
      %v2440 = vrot.slane %v2282, 2
      %v2441 = vsel %vm1514, %v2439, %v2440
      %v2442 = vrot.slane %v2283, 2
      %v2443 = vsel %vm1514, %v2440, %v2442
      %v2504 = vadd.f32 %v2159, %v2346
      %v2505 = vadd.f32 %v2160, %v2348
      %v2506 = vadd.f32 %v2161, %v2347
      %v2507 = vadd.f32 %v2162, %v2351
      %v2508 = vadd.f32 %v2163, %v2353
      %v2509 = vadd.f32 %v2164, %v2352
      %v2510 = vadd.f32 %v2165, %v2356
      %v2511 = vadd.f32 %v2166, %v2358
      %v2512 = vadd.f32 %v2167, %v2357
      %v2513 = vadd.f32 %v2168, %v2361
      %v2514 = vadd.f32 %v2169, %v2363
      %v2515 = vadd.f32 %v2170, %v2362
      %v2516 = vadd.f32 %v2171, %v2366
      %v2517 = vadd.f32 %v2172, %v2368
      %v2518 = vadd.f32 %v2173, %v2367
      %v2519 = vadd.f32 %v2174, %v2371
      %v2520 = vadd.f32 %v2175, %v2373
      %v2521 = vadd.f32 %v2176, %v2372
      %v2522 = vadd.f32 %v2177, %v2376
      %v2523 = vadd.f32 %v2178, %v2378
      %v2524 = vadd.f32 %v2179, %v2377
      %v2525 = vadd.f32 %v2180, %v2381
      %v2526 = vadd.f32 %v2181, %v2383
      %v2527 = vadd.f32 %v2182, %v2382
      %v2528 = vadd.f32 %v2183, %v2386
      %v2529 = vadd.f32 %v2184, %v2388
      %v2530 = vadd.f32 %v2185, %v2387
      %v2531 = vadd.f32 %v2186, %v2391
      %v2532 = vadd.f32 %v2187, %v2393
      %v2533 = vadd.f32 %v2188, %v2392
      %v2534 = vadd.f32 %v2189, %v2396
      %v2535 = vadd.f32 %v2190, %v2398
      %v2536 = vadd.f32 %v2191, %v2397
      %v2537 = vadd.f32 %v2192, %v2401
      %v2538 = vadd.f32 %v2193, %v2403
      %v2539 = vadd.f32 %v2194, %v2402
      %v2540 = vadd.f32 %v2195, %v2406
      %v2541 = vadd.f32 %v2196, %v2408
      %v2542 = vadd.f32 %v2197, %v2407
      %v2543 = vadd.f32 %v2198, %v2411
      %v2544 = vadd.f32 %v2199, %v2413
      %v2545 = vadd.f32 %v2200, %v2412
      %v2546 = vadd.f32 %v2201, %v2416
      %v2547 = vadd.f32 %v2202, %v2418
      %v2548 = vadd.f32 %v2203, %v2417
      %v2549 = vadd.f32 %v2204, %v2421
      %v2550 = vadd.f32 %v2205, %v2423
      %v2551 = vadd.f32 %v2206, %v2422
      %v2552 = vadd.f32 %v2207, %v2426
      %v2553 = vadd.f32 %v2208, %v2428
      %v2554 = vadd.f32 %v2209, %v2427
      %v2555 = vadd.f32 %v2210, %v2431
      %v2556 = vadd.f32 %v2211, %v2433
      %v2557 = vadd.f32 %v2212, %v2432
      %v2558 = vadd.f32 %v2213, %v2436
      %v2559 = vadd.f32 %v2214, %v2438
      %v2560 = vadd.f32 %v2215, %v2437
      %v2561 = vadd.f32 %v2216, %v2441
      %v2562 = vadd.f32 %v2217, %v2443
      %v2563 = vadd.f32 %v2218, %v2442
      %v2564 = vld [vmem:[%s1 + $0x6] sm:$0x1]
      %v2565 = vlaneseq
      %v2566 = vshrl.u32 %v2565, 7
      %v2567 = vsub.s32 0, %v2566
      %v2568 = vrot.slane %v2564, %v2567
      %v2569 = vmul.f32 %v730, %v2568
      %v2570 = vmul.f32 %v734, %v2568
      %v2571 = vmul.f32 %v739, %v2568
      %v2572 = vmul.f32 %v744, %v2568
      %v2573 = vmul.f32 %v748, %v2568
      %v2574 = vmul.f32 %v753, %v2568
      %v2575 = vmul.f32 %v758, %v2568
      %v2576 = vmul.f32 %v762, %v2568
      %v2577 = vmul.f32 %v767, %v2568
      %v2578 = vmul.f32 %v772, %v2568
      %v2579 = vmul.f32 %v776, %v2568
      %v2580 = vmul.f32 %v781, %v2568
      %v2581 = vmul.f32 %v786, %v2568
      %v2582 = vmul.f32 %v790, %v2568
      %v2583 = vmul.f32 %v795, %v2568
      %v2584 = vmul.f32 %v800, %v2568
      %v2585 = vmul.f32 %v804, %v2568
      %v2586 = vmul.f32 %v809, %v2568
      %v2587 = vmul.f32 %v814, %v2568
      %v2588 = vmul.f32 %v818, %v2568
      %v2589 = vmul.f32 %v823, %v2568
      %v2590 = vmul.f32 %v828, %v2568
      %v2591 = vmul.f32 %v832, %v2568
      %v2592 = vmul.f32 %v837, %v2568
      %v2593 = vmul.f32 %v842, %v2568
      %v2594 = vmul.f32 %v846, %v2568
      %v2595 = vmul.f32 %v851, %v2568
      %v2596 = vmul.f32 %v856, %v2568
      %v2597 = vmul.f32 %v860, %v2568
      %v2598 = vmul.f32 %v865, %v2568
      %v2599 = vmul.f32 %v870, %v2568
      %v2600 = vmul.f32 %v874, %v2568
      %v2601 = vmul.f32 %v879, %v2568
      %v2602 = vmul.f32 %v884, %v2568
      %v2603 = vmul.f32 %v888, %v2568
      %v2604 = vmul.f32 %v893, %v2568
      %v2605 = vmul.f32 %v898, %v2568
      %v2606 = vmul.f32 %v902, %v2568
      %v2607 = vmul.f32 %v907, %v2568
      %v2608 = vmul.f32 %v912, %v2568
      %v2609 = vmul.f32 %v916, %v2568
      %v2610 = vmul.f32 %v921, %v2568
      %v2611 = vmul.f32 %v926, %v2568
      %v2612 = vmul.f32 %v930, %v2568
      %v2613 = vmul.f32 %v935, %v2568
      %v2614 = vmul.f32 %v940, %v2568
      %v2615 = vmul.f32 %v944, %v2568
      %v2616 = vmul.f32 %v949, %v2568
      %v2617 = vmul.f32 %v954, %v2568
      %v2618 = vmul.f32 %v958, %v2568
      %v2619 = vmul.f32 %v963, %v2568
      %v2620 = vmul.f32 %v968, %v2568
      %v2621 = vmul.f32 %v972, %v2568
      %v2622 = vmul.f32 %v977, %v2568
      %v2623 = vmul.f32 %v1739, %v2568
      %v2624 = vmul.f32 %v1743, %v2568
      %v2625 = vmul.f32 %v1748, %v2568
      %v2626 = vmul.f32 %v702, %v2568
      %v2627 = vmul.f32 %v706, %v2568
      %v2628 = vmul.f32 %v711, %v2568
      %v2629 = vadd.f32 %v2504, %v2569
      %v2630 = vadd.f32 %v2505, %v2570
      %v2631 = vadd.f32 %v2506, %v2571
      %v2632 = vadd.f32 %v2507, %v2572
      %v2633 = vadd.f32 %v2508, %v2573
      %v2634 = vadd.f32 %v2509, %v2574
      %v2635 = vadd.f32 %v2510, %v2575
      %v2636 = vadd.f32 %v2511, %v2576
      %v2637 = vadd.f32 %v2512, %v2577
      %v2638 = vadd.f32 %v2513, %v2578
      %v2639 = vadd.f32 %v2514, %v2579
      %v2640 = vadd.f32 %v2515, %v2580
      %v2641 = vadd.f32 %v2516, %v2581
      %v2642 = vadd.f32 %v2517, %v2582
      %v2643 = vadd.f32 %v2518, %v2583
      %v2644 = vadd.f32 %v2519, %v2584
      %v2645 = vadd.f32 %v2520, %v2585
      %v2646 = vadd.f32 %v2521, %v2586
      %v2647 = vadd.f32 %v2522, %v2587
      %v2648 = vadd.f32 %v2523, %v2588
      %v2649 = vadd.f32 %v2524, %v2589
      %v2650 = vadd.f32 %v2525, %v2590
      %v2651 = vadd.f32 %v2526, %v2591
      %v2652 = vadd.f32 %v2527, %v2592
      %v2653 = vadd.f32 %v2528, %v2593
      %v2654 = vadd.f32 %v2529, %v2594
      %v2655 = vadd.f32 %v2530, %v2595
      %v2656 = vadd.f32 %v2531, %v2596
      %v2657 = vadd.f32 %v2532, %v2597
      %v2658 = vadd.f32 %v2533, %v2598
      %v2659 = vadd.f32 %v2534, %v2599
      %v2660 = vadd.f32 %v2535, %v2600
      %v2661 = vadd.f32 %v2536, %v2601
      %v2662 = vadd.f32 %v2537, %v2602
      %v2663 = vadd.f32 %v2538, %v2603
      %v2664 = vadd.f32 %v2539, %v2604
      %v2665 = vadd.f32 %v2540, %v2605
      %v2666 = vadd.f32 %v2541, %v2606
      %v2667 = vadd.f32 %v2542, %v2607
      %v2668 = vadd.f32 %v2543, %v2608
      %v2669 = vadd.f32 %v2544, %v2609
      %v2670 = vadd.f32 %v2545, %v2610
      %v2671 = vadd.f32 %v2546, %v2611
      %v2672 = vadd.f32 %v2547, %v2612
      %v2673 = vadd.f32 %v2548, %v2613
      %v2674 = vadd.f32 %v2549, %v2614
      %v2675 = vadd.f32 %v2550, %v2615
      %v2676 = vadd.f32 %v2551, %v2616
      %v2677 = vadd.f32 %v2552, %v2617
      %v2678 = vadd.f32 %v2553, %v2618
      %v2679 = vadd.f32 %v2554, %v2619
      %v2680 = vadd.f32 %v2555, %v2620
      %v2681 = vadd.f32 %v2556, %v2621
      %v2682 = vadd.f32 %v2557, %v2622
      %v2683 = vadd.f32 %v2558, %v2623
      %v2684 = vadd.f32 %v2559, %v2624
      %v2685 = vadd.f32 %v2560, %v2625
      %v2686 = vadd.f32 %v2561, %v2626
      %v2687 = vadd.f32 %v2562, %v2627
      %v2688 = vadd.f32 %v2563, %v2628
      %v2689 = vld [vmem:[%s1 + $0x7] sm:$0x1]
      %v2690 = vlaneseq
      %v2691 = vshrl.u32 %v2690, 7
      %v2692 = vsub.s32 0, %v2691
      %v2693 = vrot.slane %v2689, %v2692
      %v2694 = vmul.f32 %v730, %v2693
      %v2695 = vmul.f32 %v734, %v2693
      %v2696 = vmul.f32 %v739, %v2693
      %v2697 = vmul.f32 %v744, %v2693
      %v2698 = vmul.f32 %v748, %v2693
      %v2699 = vmul.f32 %v753, %v2693
      %v2700 = vmul.f32 %v758, %v2693
      %v2701 = vmul.f32 %v762, %v2693
      %v2702 = vmul.f32 %v767, %v2693
      %v2703 = vmul.f32 %v772, %v2693
      %v2704 = vmul.f32 %v776, %v2693
      %v2705 = vmul.f32 %v781, %v2693
      %v2706 = vmul.f32 %v786, %v2693
      %v2707 = vmul.f32 %v790, %v2693
      %v2708 = vmul.f32 %v795, %v2693
      %v2709 = vmul.f32 %v800, %v2693
      %v2710 = vmul.f32 %v804, %v2693
      %v2711 = vmul.f32 %v809, %v2693
      %v2712 = vmul.f32 %v814, %v2693
      %v2713 = vmul.f32 %v818, %v2693
      %v2714 = vmul.f32 %v823, %v2693
      %v2715 = vmul.f32 %v828, %v2693
      %v2716 = vmul.f32 %v832, %v2693
      %v2717 = vmul.f32 %v837, %v2693
      %v2718 = vmul.f32 %v842, %v2693
      %v2719 = vmul.f32 %v846, %v2693
      %v2720 = vmul.f32 %v851, %v2693
      %v2721 = vmul.f32 %v856, %v2693
      %v2722 = vmul.f32 %v860, %v2693
      %v2723 = vmul.f32 %v865, %v2693
      %v2724 = vmul.f32 %v870, %v2693
      %v2725 = vmul.f32 %v874, %v2693
      %v2726 = vmul.f32 %v879, %v2693
      %v2727 = vmul.f32 %v884, %v2693
      %v2728 = vmul.f32 %v888, %v2693
      %v2729 = vmul.f32 %v893, %v2693
      %v2730 = vmul.f32 %v898, %v2693
      %v2731 = vmul.f32 %v902, %v2693
      %v2732 = vmul.f32 %v907, %v2693
      %v2733 = vmul.f32 %v912, %v2693
      %v2734 = vmul.f32 %v916, %v2693
      %v2735 = vmul.f32 %v921, %v2693
      %v2736 = vmul.f32 %v926, %v2693
      %v2737 = vmul.f32 %v930, %v2693
      %v2738 = vmul.f32 %v935, %v2693
      %v2739 = vmul.f32 %v940, %v2693
      %v2740 = vmul.f32 %v944, %v2693
      %v2741 = vmul.f32 %v949, %v2693
      %v2742 = vmul.f32 %v954, %v2693
      %v2743 = vmul.f32 %v958, %v2693
      %v2744 = vmul.f32 %v963, %v2693
      %v2745 = vmul.f32 %v968, %v2693
      %v2746 = vmul.f32 %v972, %v2693
      %v2747 = vmul.f32 %v977, %v2693
      %v2748 = vmul.f32 %v1739, %v2693
      %v2749 = vmul.f32 %v1743, %v2693
      %v2750 = vmul.f32 %v1748, %v2693
      %v2751 = vmul.f32 %v702, %v2693
      %v2752 = vmul.f32 %v706, %v2693
      %v2753 = vmul.f32 %v711, %v2693
      %v2814 = vrot.slane %v2694, 1
      %v2815 = vrot.slane %v2695, 1
      %v2816 = vsel %vm1168, %v2814, %v2815
      %v2817 = vrot.slane %v2696, 1
      %v2818 = vsel %vm1168, %v2815, %v2817
      %v2819 = vrot.slane %v2697, 1
      %v2820 = vrot.slane %v2698, 1
      %v2821 = vsel %vm1168, %v2819, %v2820
      %v2822 = vrot.slane %v2699, 1
      %v2823 = vsel %vm1168, %v2820, %v2822
      %v2824 = vrot.slane %v2700, 1
      %v2825 = vrot.slane %v2701, 1
      %v2826 = vsel %vm1168, %v2824, %v2825
      %v2827 = vrot.slane %v2702, 1
      %v2828 = vsel %vm1168, %v2825, %v2827
      %v2829 = vrot.slane %v2703, 1
      %v2830 = vrot.slane %v2704, 1
      %v2831 = vsel %vm1168, %v2829, %v2830
      %v2832 = vrot.slane %v2705, 1
      %v2833 = vsel %vm1168, %v2830, %v2832
      %v2834 = vrot.slane %v2706, 1
      %v2835 = vrot.slane %v2707, 1
      %v2836 = vsel %vm1168, %v2834, %v2835
      %v2837 = vrot.slane %v2708, 1
      %v2838 = vsel %vm1168, %v2835, %v2837
      %v2839 = vrot.slane %v2709, 1
      %v2840 = vrot.slane %v2710, 1
      %v2841 = vsel %vm1168, %v2839, %v2840
      %v2842 = vrot.slane %v2711, 1
      %v2843 = vsel %vm1168, %v2840, %v2842
      %v2844 = vrot.slane %v2712, 1
      %v2845 = vrot.slane %v2713, 1
      %v2846 = vsel %vm1168, %v2844, %v2845
      %v2847 = vrot.slane %v2714, 1
      %v2848 = vsel %vm1168, %v2845, %v2847
      %v2849 = vrot.slane %v2715, 1
      %v2850 = vrot.slane %v2716, 1
      %v2851 = vsel %vm1168, %v2849, %v2850
      %v2852 = vrot.slane %v2717, 1
      %v2853 = vsel %vm1168, %v2850, %v2852
      %v2854 = vrot.slane %v2718, 1
      %v2855 = vrot.slane %v2719, 1
      %v2856 = vsel %vm1168, %v2854, %v2855
      %v2857 = vrot.slane %v2720, 1
      %v2858 = vsel %vm1168, %v2855, %v2857
      %v2859 = vrot.slane %v2721, 1
      %v2860 = vrot.slane %v2722, 1
      %v2861 = vsel %vm1168, %v2859, %v2860
      %v2862 = vrot.slane %v2723, 1
      %v2863 = vsel %vm1168, %v2860, %v2862
      %v2864 = vrot.slane %v2724, 1
      %v2865 = vrot.slane %v2725, 1
      %v2866 = vsel %vm1168, %v2864, %v2865
      %v2867 = vrot.slane %v2726, 1
      %v2868 = vsel %vm1168, %v2865, %v2867
      %v2869 = vrot.slane %v2727, 1
      %v2870 = vrot.slane %v2728, 1
      %v2871 = vsel %vm1168, %v2869, %v2870
      %v2872 = vrot.slane %v2729, 1
      %v2873 = vsel %vm1168, %v2870, %v2872
      %v2874 = vrot.slane %v2730, 1
      %v2875 = vrot.slane %v2731, 1
      %v2876 = vsel %vm1168, %v2874, %v2875
      %v2877 = vrot.slane %v2732, 1
      %v2878 = vsel %vm1168, %v2875, %v2877
      %v2879 = vrot.slane %v2733, 1
      %v2880 = vrot.slane %v2734, 1
      %v2881 = vsel %vm1168, %v2879, %v2880
      %v2882 = vrot.slane %v2735, 1
      %v2883 = vsel %vm1168, %v2880, %v2882
      %v2884 = vrot.slane %v2736, 1
      %v2885 = vrot.slane %v2737, 1
      %v2886 = vsel %vm1168, %v2884, %v2885
      %v2887 = vrot.slane %v2738, 1
      %v2888 = vsel %vm1168, %v2885, %v2887
      %v2889 = vrot.slane %v2739, 1
      %v2890 = vrot.slane %v2740, 1
      %v2891 = vsel %vm1168, %v2889, %v2890
      %v2892 = vrot.slane %v2741, 1
      %v2893 = vsel %vm1168, %v2890, %v2892
      %v2894 = vrot.slane %v2742, 1
      %v2895 = vrot.slane %v2743, 1
      %v2896 = vsel %vm1168, %v2894, %v2895
      %v2897 = vrot.slane %v2744, 1
      %v2898 = vsel %vm1168, %v2895, %v2897
      %v2899 = vrot.slane %v2745, 1
      %v2900 = vrot.slane %v2746, 1
      %v2901 = vsel %vm1168, %v2899, %v2900
      %v2902 = vrot.slane %v2747, 1
      %v2903 = vsel %vm1168, %v2900, %v2902
      %v2904 = vrot.slane %v2748, 1
      %v2905 = vrot.slane %v2749, 1
      %v2906 = vsel %vm1168, %v2904, %v2905
      %v2907 = vrot.slane %v2750, 1
      %v2908 = vsel %vm1168, %v2905, %v2907
      %v2909 = vrot.slane %v2751, 1
      %v2910 = vrot.slane %v2752, 1
      %v2911 = vsel %vm1168, %v2909, %v2910
      %v2912 = vrot.slane %v2753, 1
      %v2913 = vsel %vm1168, %v2910, %v2912
      %v2974 = vadd.f32 %v2629, %v2816
      %v2975 = vadd.f32 %v2630, %v2818
      %v2976 = vadd.f32 %v2631, %v2817
      %v2977 = vadd.f32 %v2632, %v2821
      %v2978 = vadd.f32 %v2633, %v2823
      %v2979 = vadd.f32 %v2634, %v2822
      %v2980 = vadd.f32 %v2635, %v2826
      %v2981 = vadd.f32 %v2636, %v2828
      %v2982 = vadd.f32 %v2637, %v2827
      %v2983 = vadd.f32 %v2638, %v2831
      %v2984 = vadd.f32 %v2639, %v2833
      %v2985 = vadd.f32 %v2640, %v2832
      %v2986 = vadd.f32 %v2641, %v2836
      %v2987 = vadd.f32 %v2642, %v2838
      %v2988 = vadd.f32 %v2643, %v2837
      %v2989 = vadd.f32 %v2644, %v2841
      %v2990 = vadd.f32 %v2645, %v2843
      %v2991 = vadd.f32 %v2646, %v2842
      %v2992 = vadd.f32 %v2647, %v2846
      %v2993 = vadd.f32 %v2648, %v2848
      %v2994 = vadd.f32 %v2649, %v2847
      %v2995 = vadd.f32 %v2650, %v2851
      %v2996 = vadd.f32 %v2651, %v2853
      %v2997 = vadd.f32 %v2652, %v2852
      %v2998 = vadd.f32 %v2653, %v2856
      %v2999 = vadd.f32 %v2654, %v2858
      %v3000 = vadd.f32 %v2655, %v2857
      %v3001 = vadd.f32 %v2656, %v2861
      %v3002 = vadd.f32 %v2657, %v2863
      %v3003 = vadd.f32 %v2658, %v2862
      %v3004 = vadd.f32 %v2659, %v2866
      %v3005 = vadd.f32 %v2660, %v2868
      %v3006 = vadd.f32 %v2661, %v2867
      %v3007 = vadd.f32 %v2662, %v2871
      %v3008 = vadd.f32 %v2663, %v2873
      %v3009 = vadd.f32 %v2664, %v2872
      %v3010 = vadd.f32 %v2665, %v2876
      %v3011 = vadd.f32 %v2666, %v2878
      %v3012 = vadd.f32 %v2667, %v2877
      %v3013 = vadd.f32 %v2668, %v2881
      %v3014 = vadd.f32 %v2669, %v2883
      %v3015 = vadd.f32 %v2670, %v2882
      %v3016 = vadd.f32 %v2671, %v2886
      %v3017 = vadd.f32 %v2672, %v2888
      %v3018 = vadd.f32 %v2673, %v2887
      %v3019 = vadd.f32 %v2674, %v2891
      %v3020 = vadd.f32 %v2675, %v2893
      %v3021 = vadd.f32 %v2676, %v2892
      %v3022 = vadd.f32 %v2677, %v2896
      %v3023 = vadd.f32 %v2678, %v2898
      %v3024 = vadd.f32 %v2679, %v2897
      %v3025 = vadd.f32 %v2680, %v2901
      %v3026 = vadd.f32 %v2681, %v2903
      %v3027 = vadd.f32 %v2682, %v2902
      %v3028 = vadd.f32 %v2683, %v2906
      %v3029 = vadd.f32 %v2684, %v2908
      %v3030 = vadd.f32 %v2685, %v2907
      %v3031 = vadd.f32 %v2686, %v2911
      %v3032 = vadd.f32 %v2687, %v2913
      %v3033 = vadd.f32 %v2688, %v2912
      %v3034 = vld [vmem:[%s1 + $0x8] sm:$0x1]
      %v3035 = vlaneseq
      %v3036 = vshrl.u32 %v3035, 7
      %v3037 = vsub.s32 0, %v3036
      %v3038 = vrot.slane %v3034, %v3037
      %v3039 = vmul.f32 %v730, %v3038
      %v3040 = vmul.f32 %v734, %v3038
      %v3041 = vmul.f32 %v739, %v3038
      %v3042 = vmul.f32 %v744, %v3038
      %v3043 = vmul.f32 %v748, %v3038
      %v3044 = vmul.f32 %v753, %v3038
      %v3045 = vmul.f32 %v758, %v3038
      %v3046 = vmul.f32 %v762, %v3038
      %v3047 = vmul.f32 %v767, %v3038
      %v3048 = vmul.f32 %v772, %v3038
      %v3049 = vmul.f32 %v776, %v3038
      %v3050 = vmul.f32 %v781, %v3038
      %v3051 = vmul.f32 %v786, %v3038
      %v3052 = vmul.f32 %v790, %v3038
      %v3053 = vmul.f32 %v795, %v3038
      %v3054 = vmul.f32 %v800, %v3038
      %v3055 = vmul.f32 %v804, %v3038
      %v3056 = vmul.f32 %v809, %v3038
      %v3057 = vmul.f32 %v814, %v3038
      %v3058 = vmul.f32 %v818, %v3038
      %v3059 = vmul.f32 %v823, %v3038
      %v3060 = vmul.f32 %v828, %v3038
      %v3061 = vmul.f32 %v832, %v3038
      %v3062 = vmul.f32 %v837, %v3038
      %v3063 = vmul.f32 %v842, %v3038
      %v3064 = vmul.f32 %v846, %v3038
      %v3065 = vmul.f32 %v851, %v3038
      %v3066 = vmul.f32 %v856, %v3038
      %v3067 = vmul.f32 %v860, %v3038
      %v3068 = vmul.f32 %v865, %v3038
      %v3069 = vmul.f32 %v870, %v3038
      %v3070 = vmul.f32 %v874, %v3038
      %v3071 = vmul.f32 %v879, %v3038
      %v3072 = vmul.f32 %v884, %v3038
      %v3073 = vmul.f32 %v888, %v3038
      %v3074 = vmul.f32 %v893, %v3038
      %v3075 = vmul.f32 %v898, %v3038
      %v3076 = vmul.f32 %v902, %v3038
      %v3077 = vmul.f32 %v907, %v3038
      %v3078 = vmul.f32 %v912, %v3038
      %v3079 = vmul.f32 %v916, %v3038
      %v3080 = vmul.f32 %v921, %v3038
      %v3081 = vmul.f32 %v926, %v3038
      %v3082 = vmul.f32 %v930, %v3038
      %v3083 = vmul.f32 %v935, %v3038
      %v3084 = vmul.f32 %v940, %v3038
      %v3085 = vmul.f32 %v944, %v3038
      %v3086 = vmul.f32 %v949, %v3038
      %v3087 = vmul.f32 %v954, %v3038
      %v3088 = vmul.f32 %v958, %v3038
      %v3089 = vmul.f32 %v963, %v3038
      %v3090 = vmul.f32 %v968, %v3038
      %v3091 = vmul.f32 %v972, %v3038
      %v3092 = vmul.f32 %v977, %v3038
      %v3093 = vmul.f32 %v1739, %v3038
      %v3094 = vmul.f32 %v1743, %v3038
      %v3095 = vmul.f32 %v1748, %v3038
      %v3096 = vmul.f32 %v702, %v3038
      %v3097 = vmul.f32 %v706, %v3038
      %v3098 = vmul.f32 %v711, %v3038
      %v3159 = vrot.slane %v3039, 2
      %v3160 = vrot.slane %v3040, 2
      %v3161 = vsel %vm1514, %v3159, %v3160
      %v3162 = vrot.slane %v3041, 2
      %v3163 = vsel %vm1514, %v3160, %v3162
      %v3164 = vrot.slane %v3042, 2
      %v3165 = vrot.slane %v3043, 2
      %v3166 = vsel %vm1514, %v3164, %v3165
      %v3167 = vrot.slane %v3044, 2
      %v3168 = vsel %vm1514, %v3165, %v3167
      %v3169 = vrot.slane %v3045, 2
      %v3170 = vrot.slane %v3046, 2
      %v3171 = vsel %vm1514, %v3169, %v3170
      %v3172 = vrot.slane %v3047, 2
      %v3173 = vsel %vm1514, %v3170, %v3172
      %v3174 = vrot.slane %v3048, 2
      %v3175 = vrot.slane %v3049, 2
      %v3176 = vsel %vm1514, %v3174, %v3175
      %v3177 = vrot.slane %v3050, 2
      %v3178 = vsel %vm1514, %v3175, %v3177
      %v3179 = vrot.slane %v3051, 2
      %v3180 = vrot.slane %v3052, 2
      %v3181 = vsel %vm1514, %v3179, %v3180
      %v3182 = vrot.slane %v3053, 2
      %v3183 = vsel %vm1514, %v3180, %v3182
      %v3184 = vrot.slane %v3054, 2
      %v3185 = vrot.slane %v3055, 2
      %v3186 = vsel %vm1514, %v3184, %v3185
      %v3187 = vrot.slane %v3056, 2
      %v3188 = vsel %vm1514, %v3185, %v3187
      %v3189 = vrot.slane %v3057, 2
      %v3190 = vrot.slane %v3058, 2
      %v3191 = vsel %vm1514, %v3189, %v3190
      %v3192 = vrot.slane %v3059, 2
      %v3193 = vsel %vm1514, %v3190, %v3192
      %v3194 = vrot.slane %v3060, 2
      %v3195 = vrot.slane %v3061, 2
      %v3196 = vsel %vm1514, %v3194, %v3195
      %v3197 = vrot.slane %v3062, 2
      %v3198 = vsel %vm1514, %v3195, %v3197
      %v3199 = vrot.slane %v3063, 2
      %v3200 = vrot.slane %v3064, 2
      %v3201 = vsel %vm1514, %v3199, %v3200
      %v3202 = vrot.slane %v3065, 2
      %v3203 = vsel %vm1514, %v3200, %v3202
      %v3204 = vrot.slane %v3066, 2
      %v3205 = vrot.slane %v3067, 2
      %v3206 = vsel %vm1514, %v3204, %v3205
      %v3207 = vrot.slane %v3068, 2
      %v3208 = vsel %vm1514, %v3205, %v3207
      %v3209 = vrot.slane %v3069, 2
      %v3210 = vrot.slane %v3070, 2
      %v3211 = vsel %vm1514, %v3209, %v3210
      %v3212 = vrot.slane %v3071, 2
      %v3213 = vsel %vm1514, %v3210, %v3212
      %v3214 = vrot.slane %v3072, 2
      %v3215 = vrot.slane %v3073, 2
      %v3216 = vsel %vm1514, %v3214, %v3215
      %v3217 = vrot.slane %v3074, 2
      %v3218 = vsel %vm1514, %v3215, %v3217
      %v3219 = vrot.slane %v3075, 2
      %v3220 = vrot.slane %v3076, 2
      %v3221 = vsel %vm1514, %v3219, %v3220
      %v3222 = vrot.slane %v3077, 2
      %v3223 = vsel %vm1514, %v3220, %v3222
      %v3224 = vrot.slane %v3078, 2
      %v3225 = vrot.slane %v3079, 2
      %v3226 = vsel %vm1514, %v3224, %v3225
      %v3227 = vrot.slane %v3080, 2
      %v3228 = vsel %vm1514, %v3225, %v3227
      %v3229 = vrot.slane %v3081, 2
      %v3230 = vrot.slane %v3082, 2
      %v3231 = vsel %vm1514, %v3229, %v3230
      %v3232 = vrot.slane %v3083, 2
      %v3233 = vsel %vm1514, %v3230, %v3232
      %v3234 = vrot.slane %v3084, 2
      %v3235 = vrot.slane %v3085, 2
      %v3236 = vsel %vm1514, %v3234, %v3235
      %v3237 = vrot.slane %v3086, 2
      %v3238 = vsel %vm1514, %v3235, %v3237
      %v3239 = vrot.slane %v3087, 2
      %v3240 = vrot.slane %v3088, 2
      %v3241 = vsel %vm1514, %v3239, %v3240
      %v3242 = vrot.slane %v3089, 2
      %v3243 = vsel %vm1514, %v3240, %v3242
      %v3244 = vrot.slane %v3090, 2
      %v3245 = vrot.slane %v3091, 2
      %v3246 = vsel %vm1514, %v3244, %v3245
      %v3247 = vrot.slane %v3092, 2
      %v3248 = vsel %vm1514, %v3245, %v3247
      %v3249 = vrot.slane %v3093, 2
      %v3250 = vrot.slane %v3094, 2
      %v3251 = vsel %vm1514, %v3249, %v3250
      %v3252 = vrot.slane %v3095, 2
      %v3253 = vsel %vm1514, %v3250, %v3252
      %v3254 = vrot.slane %v3096, 2
      %v3255 = vrot.slane %v3097, 2
      %v3256 = vsel %vm1514, %v3254, %v3255
      %v3257 = vrot.slane %v3098, 2
      %v3258 = vsel %vm1514, %v3255, %v3257
      %v3319 = vadd.f32 %v2974, %v3161
      %v3320 = vadd.f32 %v2975, %v3163
      %v3321 = vadd.f32 %v2976, %v3162
      %v3322 = vadd.f32 %v2977, %v3166
      %v3323 = vadd.f32 %v2978, %v3168
      %v3324 = vadd.f32 %v2979, %v3167
      %v3325 = vadd.f32 %v2980, %v3171
      %v3326 = vadd.f32 %v2981, %v3173
      %v3327 = vadd.f32 %v2982, %v3172
      %v3328 = vadd.f32 %v2983, %v3176
      %v3329 = vadd.f32 %v2984, %v3178
      %v3330 = vadd.f32 %v2985, %v3177
      %v3331 = vadd.f32 %v2986, %v3181
      %v3332 = vadd.f32 %v2987, %v3183
      %v3333 = vadd.f32 %v2988, %v3182
      %v3334 = vadd.f32 %v2989, %v3186
      %v3335 = vadd.f32 %v2990, %v3188
      %v3336 = vadd.f32 %v2991, %v3187
      %v3337 = vadd.f32 %v2992, %v3191
      %v3338 = vadd.f32 %v2993, %v3193
      %v3339 = vadd.f32 %v2994, %v3192
      %v3340 = vadd.f32 %v2995, %v3196
      %v3341 = vadd.f32 %v2996, %v3198
      %v3342 = vadd.f32 %v2997, %v3197
      %v3343 = vadd.f32 %v2998, %v3201
      %v3344 = vadd.f32 %v2999, %v3203
      %v3345 = vadd.f32 %v3000, %v3202
      %v3346 = vadd.f32 %v3001, %v3206
      %v3347 = vadd.f32 %v3002, %v3208
      %v3348 = vadd.f32 %v3003, %v3207
      %v3349 = vadd.f32 %v3004, %v3211
      %v3350 = vadd.f32 %v3005, %v3213
      %v3351 = vadd.f32 %v3006, %v3212
      %v3352 = vadd.f32 %v3007, %v3216
      %v3353 = vadd.f32 %v3008, %v3218
      %v3354 = vadd.f32 %v3009, %v3217
      %v3355 = vadd.f32 %v3010, %v3221
      %v3356 = vadd.f32 %v3011, %v3223
      %v3357 = vadd.f32 %v3012, %v3222
      %v3358 = vadd.f32 %v3013, %v3226
      %v3359 = vadd.f32 %v3014, %v3228
      %v3360 = vadd.f32 %v3015, %v3227
      %v3361 = vadd.f32 %v3016, %v3231
      %v3362 = vadd.f32 %v3017, %v3233
      %v3363 = vadd.f32 %v3018, %v3232
      %v3364 = vadd.f32 %v3019, %v3236
      %v3365 = vadd.f32 %v3020, %v3238
      %v3366 = vadd.f32 %v3021, %v3237
      %v3367 = vadd.f32 %v3022, %v3241
      %v3368 = vadd.f32 %v3023, %v3243
      %v3369 = vadd.f32 %v3024, %v3242
      %v3370 = vadd.f32 %v3025, %v3246
      %v3371 = vadd.f32 %v3026, %v3248
      %v3372 = vadd.f32 %v3027, %v3247
      %v3373 = vadd.f32 %v3028, %v3251
      %v3374 = vadd.f32 %v3029, %v3253
      %v3375 = vadd.f32 %v3030, %v3252
      %v3376 = vadd.f32 %v3031, %v3256
      %v3377 = vadd.f32 %v3032, %v3258
      %v3378 = vadd.f32 %v3033, %v3257
      %v3379 = vld [vmem:[%s2] sm:$0x1]
      %v3381 = vlaneseq
      %v3382 = vshrl.u32 %v3381, 7
      %v3383 = vsub.s32 0, %v3382
      %v3384 = vrot.slane %v3379, %v3383
      %v3386 = vadd.f32 %v3319, %v3384
      %v3387 = vadd.f32 %v3320, %v3384
      %v3388 = vadd.f32 %v3321, %v3384
      %v3389 = vadd.f32 %v3322, %v3384
      %v3390 = vadd.f32 %v3323, %v3384
      %v3391 = vadd.f32 %v3324, %v3384
      %v3392 = vadd.f32 %v3325, %v3384
      %v3393 = vadd.f32 %v3326, %v3384
      %v3394 = vadd.f32 %v3327, %v3384
      %v3395 = vadd.f32 %v3328, %v3384
      %v3396 = vadd.f32 %v3329, %v3384
      %v3397 = vadd.f32 %v3330, %v3384
      %v3398 = vadd.f32 %v3331, %v3384
      %v3399 = vadd.f32 %v3332, %v3384
      %v3400 = vadd.f32 %v3333, %v3384
      %v3401 = vadd.f32 %v3334, %v3384
      %v3402 = vadd.f32 %v3335, %v3384
      %v3403 = vadd.f32 %v3336, %v3384
      %v3404 = vadd.f32 %v3337, %v3384
      %v3405 = vadd.f32 %v3338, %v3384
      %v3406 = vadd.f32 %v3339, %v3384
      %v3407 = vadd.f32 %v3340, %v3384
      %v3408 = vadd.f32 %v3341, %v3384
      %v3409 = vadd.f32 %v3342, %v3384
      %v3410 = vadd.f32 %v3343, %v3384
      %v3411 = vadd.f32 %v3344, %v3384
      %v3412 = vadd.f32 %v3345, %v3384
      %v3413 = vadd.f32 %v3346, %v3384
      %v3414 = vadd.f32 %v3347, %v3384
      %v3415 = vadd.f32 %v3348, %v3384
      %v3416 = vadd.f32 %v3349, %v3384
      %v3417 = vadd.f32 %v3350, %v3384
      %v3418 = vadd.f32 %v3351, %v3384
      %v3419 = vadd.f32 %v3352, %v3384
      %v3420 = vadd.f32 %v3353, %v3384
      %v3421 = vadd.f32 %v3354, %v3384
      %v3422 = vadd.f32 %v3355, %v3384
      %v3423 = vadd.f32 %v3356, %v3384
      %v3424 = vadd.f32 %v3357, %v3384
      %v3425 = vadd.f32 %v3358, %v3384
      %v3426 = vadd.f32 %v3359, %v3384
      %v3427 = vadd.f32 %v3360, %v3384
      %v3428 = vadd.f32 %v3361, %v3384
      %v3429 = vadd.f32 %v3362, %v3384
      %v3430 = vadd.f32 %v3363, %v3384
      %v3431 = vadd.f32 %v3364, %v3384
      %v3432 = vadd.f32 %v3365, %v3384
      %v3433 = vadd.f32 %v3366, %v3384
      %v3434 = vadd.f32 %v3367, %v3384
      %v3435 = vadd.f32 %v3368, %v3384
      %v3436 = vadd.f32 %v3369, %v3384
      %v3437 = vadd.f32 %v3370, %v3384
      %v3438 = vadd.f32 %v3371, %v3384
      %v3439 = vadd.f32 %v3372, %v3384
      %v3440 = vadd.f32 %v3373, %v3384
      %v3441 = vadd.f32 %v3374, %v3384
      %v3442 = vadd.f32 %v3375, %v3384
      %v3443 = vadd.f32 %v3376, %v3384
      %v3444 = vadd.f32 %v3377, %v3384
      %v3445 = vadd.f32 %v3378, %v3384
      %v3446 = vmax.f32 %v3386, 0.0
      %v3447 = vmax.f32 %v3387, 0.0
      %v3448 = vmax.f32 %v3388, 0.0
      %v3449 = vmax.f32 %v3389, 0.0
      %v3450 = vmax.f32 %v3390, 0.0
      %v3451 = vmax.f32 %v3391, 0.0
      %v3452 = vmax.f32 %v3392, 0.0
      %v3453 = vmax.f32 %v3393, 0.0
      %v3454 = vmax.f32 %v3394, 0.0
      %v3455 = vmax.f32 %v3395, 0.0
      %v3456 = vmax.f32 %v3396, 0.0
      %v3457 = vmax.f32 %v3397, 0.0
      %v3458 = vmax.f32 %v3398, 0.0
      %v3459 = vmax.f32 %v3399, 0.0
      %v3460 = vmax.f32 %v3400, 0.0
      %v3461 = vmax.f32 %v3401, 0.0
      %v3462 = vmax.f32 %v3402, 0.0
      %v3463 = vmax.f32 %v3403, 0.0
      %v3464 = vmax.f32 %v3404, 0.0
      %v3465 = vmax.f32 %v3405, 0.0
      %v3466 = vmax.f32 %v3406, 0.0
      %v3467 = vmax.f32 %v3407, 0.0
      %v3468 = vmax.f32 %v3408, 0.0
      %v3469 = vmax.f32 %v3409, 0.0
      %v3470 = vmax.f32 %v3410, 0.0
      %v3471 = vmax.f32 %v3411, 0.0
      %v3472 = vmax.f32 %v3412, 0.0
      %v3473 = vmax.f32 %v3413, 0.0
      %v3474 = vmax.f32 %v3414, 0.0
      %v3475 = vmax.f32 %v3415, 0.0
      %v3476 = vmax.f32 %v3416, 0.0
      %v3477 = vmax.f32 %v3417, 0.0
      %v3478 = vmax.f32 %v3418, 0.0
      %v3479 = vmax.f32 %v3419, 0.0
      %v3480 = vmax.f32 %v3420, 0.0
      %v3481 = vmax.f32 %v3421, 0.0
      %v3482 = vmax.f32 %v3422, 0.0
      %v3483 = vmax.f32 %v3423, 0.0
      %v3484 = vmax.f32 %v3424, 0.0
      %v3485 = vmax.f32 %v3425, 0.0
      %v3486 = vmax.f32 %v3426, 0.0
      %v3487 = vmax.f32 %v3427, 0.0
      %v3488 = vmax.f32 %v3428, 0.0
      %v3489 = vmax.f32 %v3429, 0.0
      %v3490 = vmax.f32 %v3430, 0.0
      %v3491 = vmax.f32 %v3431, 0.0
      %v3492 = vmax.f32 %v3432, 0.0
      %v3493 = vmax.f32 %v3433, 0.0
      %v3494 = vmax.f32 %v3434, 0.0
      %v3495 = vmax.f32 %v3435, 0.0
      %v3496 = vmax.f32 %v3436, 0.0
      %v3497 = vmax.f32 %v3437, 0.0
      %v3498 = vmax.f32 %v3438, 0.0
      %v3499 = vmax.f32 %v3439, 0.0
      %v3500 = vmax.f32 %v3440, 0.0
      %v3501 = vmax.f32 %v3441, 0.0
      %v3502 = vmax.f32 %v3442, 0.0
      %v3503 = vmax.f32 %v3443, 0.0
      %v3504 = vmax.f32 %v3444, 0.0
      %v3505 = vmax.f32 %v3445, 0.0
      %v3566 = vcombine.high %v3446, %v3446
      %v3568 = vunpack.c.l.s4 1966171168
      %v3569 = vunpack.c.0.s8 %v3568
      %v3570 = vlaneseq
      %v3571 = vshrl.u32 %v3570, 7
      %v3572 = vsub.s32 %v3569, %v3571
      %v3573 = vrot.slane %v3446, %v3572
      %v3575 = vunpack.c.l.s4 1966171168
      %v3576 = vunpack.c.0.s8 %v3575
      %v3577 = vlaneseq
      %v3578 = vshrl.u32 %v3577, 7
      %v3579 = vsub.s32 %v3576, %v3578
      %v3580 = vrot.slane %v3566, %v3579
      %v3581 = vcombine.high %v3573, %v3573
      %v3582 = vcombine.high %v3580, %v3580
      %v3584 = vunpack.c.l.s4 1966171168
      %v3585 = vunpack.c.0.s8 %v3584
      %v3586 = vlaneseq
      %v3587 = vshrl.u32 %v3586, 7
      %v3588 = vsub.s32 %v3585, %v3587
      %v3589 = vrot.slane %v3573, %v3588
      %v3591 = vunpack.c.l.s4 1966171168
      %v3592 = vunpack.c.0.s8 %v3591
      %v3593 = vlaneseq
      %v3594 = vshrl.u32 %v3593, 7
      %v3595 = vsub.s32 %v3592, %v3594
      %v3596 = vrot.slane %v3580, %v3595
      %v3598 = vunpack.c.l.s4 1966171168
      %v3599 = vunpack.c.0.s8 %v3598
      %v3600 = vlaneseq
      %v3601 = vshrl.u32 %v3600, 7
      %v3602 = vsub.s32 %v3599, %v3601
      %v3603 = vrot.slane %v3581, %v3602
      %v3605 = vunpack.c.l.s4 1966171168
      %v3606 = vunpack.c.0.s8 %v3605
      %v3607 = vlaneseq
      %v3608 = vshrl.u32 %v3607, 7
      %v3609 = vsub.s32 %v3606, %v3608
      %v3610 = vrot.slane %v3582, %v3609
      %v3611 = vcombine.high %v3589, %v3589
      %v3612 = vcombine.high %v3596, %v3596
      %v3613 = vcombine.high %v3603, %v3603
      %v3614 = vcombine.high %v3610, %v3610
      %v3615 = vcombine.high %v3447, %v3447
      %v3617 = vunpack.c.l.s4 1966171168
      %v3618 = vunpack.c.0.s8 %v3617
      %v3619 = vlaneseq
      %v3620 = vshrl.u32 %v3619, 7
      %v3621 = vsub.s32 %v3618, %v3620
      %v3622 = vrot.slane %v3447, %v3621
      %v3624 = vunpack.c.l.s4 1966171168
      %v3625 = vunpack.c.0.s8 %v3624
      %v3626 = vlaneseq
      %v3627 = vshrl.u32 %v3626, 7
      %v3628 = vsub.s32 %v3625, %v3627
      %v3629 = vrot.slane %v3615, %v3628
      %v3630 = vcombine.high %v3622, %v3622
      %v3631 = vcombine.high %v3629, %v3629
      %v3633 = vunpack.c.l.s4 1966171168
      %v3634 = vunpack.c.0.s8 %v3633
      %v3635 = vlaneseq
      %v3636 = vshrl.u32 %v3635, 7
      %v3637 = vsub.s32 %v3634, %v3636
      %v3638 = vrot.slane %v3622, %v3637
      %v3640 = vunpack.c.l.s4 1966171168
      %v3641 = vunpack.c.0.s8 %v3640
      %v3642 = vlaneseq
      %v3643 = vshrl.u32 %v3642, 7
      %v3644 = vsub.s32 %v3641, %v3643
      %v3645 = vrot.slane %v3629, %v3644
      %v3647 = vunpack.c.l.s4 1966171168
      %v3648 = vunpack.c.0.s8 %v3647
      %v3649 = vlaneseq
      %v3650 = vshrl.u32 %v3649, 7
      %v3651 = vsub.s32 %v3648, %v3650
      %v3652 = vrot.slane %v3630, %v3651
      %v3654 = vunpack.c.l.s4 1966171168
      %v3655 = vunpack.c.0.s8 %v3654
      %v3656 = vlaneseq
      %v3657 = vshrl.u32 %v3656, 7
      %v3658 = vsub.s32 %v3655, %v3657
      %v3659 = vrot.slane %v3631, %v3658
      %v3660 = vcombine.high %v3638, %v3638
      %v3661 = vcombine.high %v3645, %v3645
      %v3662 = vcombine.high %v3652, %v3652
      %v3663 = vcombine.high %v3659, %v3659
      %v3665 = vunpack.c.l.s4 1966171168
      %v3666 = vunpack.c.0.s8 %v3665
      %v3667 = vlaneseq
      %v3668 = vshrl.u32 %v3667, 7
      %v3669 = vsub.s32 %v3666, %v3668
      %v3670 = vrot.slane %v3448, %v3669
      %v3671 = vcombine.high %v3670, %v3670
      %v3673 = vunpack.c.l.s4 1966171168
      %v3674 = vunpack.c.0.s8 %v3673
      %v3675 = vlaneseq
      %v3676 = vshrl.u32 %v3675, 7
      %v3677 = vsub.s32 %v3674, %v3676
      %v3678 = vrot.slane %v3670, %v3677
      %v3680 = vunpack.c.l.s4 1966171168
      %v3681 = vunpack.c.0.s8 %v3680
      %v3682 = vlaneseq
      %v3683 = vshrl.u32 %v3682, 7
      %v3684 = vsub.s32 %v3681, %v3683
      %v3685 = vrot.slane %v3671, %v3684
      %v3686 = vcombine.high %v3678, %v3678
      %v3687 = vcombine.high %v3685, %v3685
      %v3688 = vcombine.high %v3449, %v3449
      %v3690 = vunpack.c.l.s4 1966171168
      %v3691 = vunpack.c.0.s8 %v3690
      %v3692 = vlaneseq
      %v3693 = vshrl.u32 %v3692, 7
      %v3694 = vsub.s32 %v3691, %v3693
      %v3695 = vrot.slane %v3449, %v3694
      %v3697 = vunpack.c.l.s4 1966171168
      %v3698 = vunpack.c.0.s8 %v3697
      %v3699 = vlaneseq
      %v3700 = vshrl.u32 %v3699, 7
      %v3701 = vsub.s32 %v3698, %v3700
      %v3702 = vrot.slane %v3688, %v3701
      %v3703 = vcombine.high %v3695, %v3695
      %v3704 = vcombine.high %v3702, %v3702
      %v3706 = vunpack.c.l.s4 1966171168
      %v3707 = vunpack.c.0.s8 %v3706
      %v3708 = vlaneseq
      %v3709 = vshrl.u32 %v3708, 7
      %v3710 = vsub.s32 %v3707, %v3709
      %v3711 = vrot.slane %v3695, %v3710
      %v3713 = vunpack.c.l.s4 1966171168
      %v3714 = vunpack.c.0.s8 %v3713
      %v3715 = vlaneseq
      %v3716 = vshrl.u32 %v3715, 7
      %v3717 = vsub.s32 %v3714, %v3716
      %v3718 = vrot.slane %v3702, %v3717
      %v3720 = vunpack.c.l.s4 1966171168
      %v3721 = vunpack.c.0.s8 %v3720
      %v3722 = vlaneseq
      %v3723 = vshrl.u32 %v3722, 7
      %v3724 = vsub.s32 %v3721, %v3723
      %v3725 = vrot.slane %v3703, %v3724
      %v3727 = vunpack.c.l.s4 1966171168
      %v3728 = vunpack.c.0.s8 %v3727
      %v3729 = vlaneseq
      %v3730 = vshrl.u32 %v3729, 7
      %v3731 = vsub.s32 %v3728, %v3730
      %v3732 = vrot.slane %v3704, %v3731
      %v3733 = vcombine.high %v3711, %v3711
      %v3734 = vcombine.high %v3718, %v3718
      %v3735 = vcombine.high %v3725, %v3725
      %v3736 = vcombine.high %v3732, %v3732
      %v3737 = vcombine.high %v3450, %v3450
      %v3739 = vunpack.c.l.s4 1966171168
      %v3740 = vunpack.c.0.s8 %v3739
      %v3741 = vlaneseq
      %v3742 = vshrl.u32 %v3741, 7
      %v3743 = vsub.s32 %v3740, %v3742
      %v3744 = vrot.slane %v3450, %v3743
      %v3746 = vunpack.c.l.s4 1966171168
      %v3747 = vunpack.c.0.s8 %v3746
      %v3748 = vlaneseq
      %v3749 = vshrl.u32 %v3748, 7
      %v3750 = vsub.s32 %v3747, %v3749
      %v3751 = vrot.slane %v3737, %v3750
      %v3752 = vcombine.high %v3744, %v3744
      %v3753 = vcombine.high %v3751, %v3751
      %v3755 = vunpack.c.l.s4 1966171168
      %v3756 = vunpack.c.0.s8 %v3755
      %v3757 = vlaneseq
      %v3758 = vshrl.u32 %v3757, 7
      %v3759 = vsub.s32 %v3756, %v3758
      %v3760 = vrot.slane %v3744, %v3759
      %v3762 = vunpack.c.l.s4 1966171168
      %v3763 = vunpack.c.0.s8 %v3762
      %v3764 = vlaneseq
      %v3765 = vshrl.u32 %v3764, 7
      %v3766 = vsub.s32 %v3763, %v3765
      %v3767 = vrot.slane %v3751, %v3766
      %v3769 = vunpack.c.l.s4 1966171168
      %v3770 = vunpack.c.0.s8 %v3769
      %v3771 = vlaneseq
      %v3772 = vshrl.u32 %v3771, 7
      %v3773 = vsub.s32 %v3770, %v3772
      %v3774 = vrot.slane %v3752, %v3773
      %v3776 = vunpack.c.l.s4 1966171168
      %v3777 = vunpack.c.0.s8 %v3776
      %v3778 = vlaneseq
      %v3779 = vshrl.u32 %v3778, 7
      %v3780 = vsub.s32 %v3777, %v3779
      %v3781 = vrot.slane %v3753, %v3780
      %v3782 = vcombine.high %v3760, %v3760
      %v3783 = vcombine.high %v3767, %v3767
      %v3784 = vcombine.high %v3774, %v3774
      %v3785 = vcombine.high %v3781, %v3781
      %v3787 = vunpack.c.l.s4 1966171168
      %v3788 = vunpack.c.0.s8 %v3787
      %v3789 = vlaneseq
      %v3790 = vshrl.u32 %v3789, 7
      %v3791 = vsub.s32 %v3788, %v3790
      %v3792 = vrot.slane %v3451, %v3791
      %v3793 = vcombine.high %v3792, %v3792
      %v3795 = vunpack.c.l.s4 1966171168
      %v3796 = vunpack.c.0.s8 %v3795
      %v3797 = vlaneseq
      %v3798 = vshrl.u32 %v3797, 7
      %v3799 = vsub.s32 %v3796, %v3798
      %v3800 = vrot.slane %v3792, %v3799
      %v3802 = vunpack.c.l.s4 1966171168
      %v3803 = vunpack.c.0.s8 %v3802
      %v3804 = vlaneseq
      %v3805 = vshrl.u32 %v3804, 7
      %v3806 = vsub.s32 %v3803, %v3805
      %v3807 = vrot.slane %v3793, %v3806
      %v3808 = vcombine.high %v3800, %v3800
      %v3809 = vcombine.high %v3807, %v3807
      %v3810 = vcombine.high %v3452, %v3452
      %v3812 = vunpack.c.l.s4 1966171168
      %v3813 = vunpack.c.0.s8 %v3812
      %v3814 = vlaneseq
      %v3815 = vshrl.u32 %v3814, 7
      %v3816 = vsub.s32 %v3813, %v3815
      %v3817 = vrot.slane %v3452, %v3816
      %v3819 = vunpack.c.l.s4 1966171168
      %v3820 = vunpack.c.0.s8 %v3819
      %v3821 = vlaneseq
      %v3822 = vshrl.u32 %v3821, 7
      %v3823 = vsub.s32 %v3820, %v3822
      %v3824 = vrot.slane %v3810, %v3823
      %v3825 = vcombine.high %v3817, %v3817
      %v3826 = vcombine.high %v3824, %v3824
      %v3828 = vunpack.c.l.s4 1966171168
      %v3829 = vunpack.c.0.s8 %v3828
      %v3830 = vlaneseq
      %v3831 = vshrl.u32 %v3830, 7
      %v3832 = vsub.s32 %v3829, %v3831
      %v3833 = vrot.slane %v3817, %v3832
      %v3835 = vunpack.c.l.s4 1966171168
      %v3836 = vunpack.c.0.s8 %v3835
      %v3837 = vlaneseq
      %v3838 = vshrl.u32 %v3837, 7
      %v3839 = vsub.s32 %v3836, %v3838
      %v3840 = vrot.slane %v3824, %v3839
      %v3842 = vunpack.c.l.s4 1966171168
      %v3843 = vunpack.c.0.s8 %v3842
      %v3844 = vlaneseq
      %v3845 = vshrl.u32 %v3844, 7
      %v3846 = vsub.s32 %v3843, %v3845
      %v3847 = vrot.slane %v3825, %v3846
      %v3849 = vunpack.c.l.s4 1966171168
      %v3850 = vunpack.c.0.s8 %v3849
      %v3851 = vlaneseq
      %v3852 = vshrl.u32 %v3851, 7
      %v3853 = vsub.s32 %v3850, %v3852
      %v3854 = vrot.slane %v3826, %v3853
      %v3855 = vcombine.high %v3833, %v3833
      %v3856 = vcombine.high %v3840, %v3840
      %v3857 = vcombine.high %v3847, %v3847
      %v3858 = vcombine.high %v3854, %v3854
      %v3859 = vcombine.high %v3453, %v3453
      %v3861 = vunpack.c.l.s4 1966171168
      %v3862 = vunpack.c.0.s8 %v3861
      %v3863 = vlaneseq
      %v3864 = vshrl.u32 %v3863, 7
      %v3865 = vsub.s32 %v3862, %v3864
      %v3866 = vrot.slane %v3453, %v3865
      %v3868 = vunpack.c.l.s4 1966171168
      %v3869 = vunpack.c.0.s8 %v3868
      %v3870 = vlaneseq
      %v3871 = vshrl.u32 %v3870, 7
      %v3872 = vsub.s32 %v3869, %v3871
      %v3873 = vrot.slane %v3859, %v3872
      %v3874 = vcombine.high %v3866, %v3866
      %v3875 = vcombine.high %v3873, %v3873
      %v3877 = vunpack.c.l.s4 1966171168
      %v3878 = vunpack.c.0.s8 %v3877
      %v3879 = vlaneseq
      %v3880 = vshrl.u32 %v3879, 7
      %v3881 = vsub.s32 %v3878, %v3880
      %v3882 = vrot.slane %v3866, %v3881
      %v3884 = vunpack.c.l.s4 1966171168
      %v3885 = vunpack.c.0.s8 %v3884
      %v3886 = vlaneseq
      %v3887 = vshrl.u32 %v3886, 7
      %v3888 = vsub.s32 %v3885, %v3887
      %v3889 = vrot.slane %v3873, %v3888
      %v3891 = vunpack.c.l.s4 1966171168
      %v3892 = vunpack.c.0.s8 %v3891
      %v3893 = vlaneseq
      %v3894 = vshrl.u32 %v3893, 7
      %v3895 = vsub.s32 %v3892, %v3894
      %v3896 = vrot.slane %v3874, %v3895
      %v3898 = vunpack.c.l.s4 1966171168
      %v3899 = vunpack.c.0.s8 %v3898
      %v3900 = vlaneseq
      %v3901 = vshrl.u32 %v3900, 7
      %v3902 = vsub.s32 %v3899, %v3901
      %v3903 = vrot.slane %v3875, %v3902
      %v3904 = vcombine.high %v3882, %v3882
      %v3905 = vcombine.high %v3889, %v3889
      %v3906 = vcombine.high %v3896, %v3896
      %v3907 = vcombine.high %v3903, %v3903
      %v3909 = vunpack.c.l.s4 1966171168
      %v3910 = vunpack.c.0.s8 %v3909
      %v3911 = vlaneseq
      %v3912 = vshrl.u32 %v3911, 7
      %v3913 = vsub.s32 %v3910, %v3912
      %v3914 = vrot.slane %v3454, %v3913
      %v3915 = vcombine.high %v3914, %v3914
      %v3917 = vunpack.c.l.s4 1966171168
      %v3918 = vunpack.c.0.s8 %v3917
      %v3919 = vlaneseq
      %v3920 = vshrl.u32 %v3919, 7
      %v3921 = vsub.s32 %v3918, %v3920
      %v3922 = vrot.slane %v3914, %v3921
      %v3924 = vunpack.c.l.s4 1966171168
      %v3925 = vunpack.c.0.s8 %v3924
      %v3926 = vlaneseq
      %v3927 = vshrl.u32 %v3926, 7
      %v3928 = vsub.s32 %v3925, %v3927
      %v3929 = vrot.slane %v3915, %v3928
      %v3930 = vcombine.high %v3922, %v3922
      %v3931 = vcombine.high %v3929, %v3929
      %v3932 = vcombine.high %v3455, %v3455
      %v3934 = vunpack.c.l.s4 1966171168
      %v3935 = vunpack.c.0.s8 %v3934
      %v3936 = vlaneseq
      %v3937 = vshrl.u32 %v3936, 7
      %v3938 = vsub.s32 %v3935, %v3937
      %v3939 = vrot.slane %v3455, %v3938
      %v3941 = vunpack.c.l.s4 1966171168
      %v3942 = vunpack.c.0.s8 %v3941
      %v3943 = vlaneseq
      %v3944 = vshrl.u32 %v3943, 7
      %v3945 = vsub.s32 %v3942, %v3944
      %v3946 = vrot.slane %v3932, %v3945
      %v3947 = vcombine.high %v3939, %v3939
      %v3948 = vcombine.high %v3946, %v3946
      %v3950 = vunpack.c.l.s4 1966171168
      %v3951 = vunpack.c.0.s8 %v3950
      %v3952 = vlaneseq
      %v3953 = vshrl.u32 %v3952, 7
      %v3954 = vsub.s32 %v3951, %v3953
      %v3955 = vrot.slane %v3939, %v3954
      %v3957 = vunpack.c.l.s4 1966171168
      %v3958 = vunpack.c.0.s8 %v3957
      %v3959 = vlaneseq
      %v3960 = vshrl.u32 %v3959, 7
      %v3961 = vsub.s32 %v3958, %v3960
      %v3962 = vrot.slane %v3946, %v3961
      %v3964 = vunpack.c.l.s4 1966171168
      %v3965 = vunpack.c.0.s8 %v3964
      %v3966 = vlaneseq
      %v3967 = vshrl.u32 %v3966, 7
      %v3968 = vsub.s32 %v3965, %v3967
      %v3969 = vrot.slane %v3947, %v3968
      %v3971 = vunpack.c.l.s4 1966171168
      %v3972 = vunpack.c.0.s8 %v3971
      %v3973 = vlaneseq
      %v3974 = vshrl.u32 %v3973, 7
      %v3975 = vsub.s32 %v3972, %v3974
      %v3976 = vrot.slane %v3948, %v3975
      %v3977 = vcombine.high %v3955, %v3955
      %v3978 = vcombine.high %v3962, %v3962
      %v3979 = vcombine.high %v3969, %v3969
      %v3980 = vcombine.high %v3976, %v3976
      %v3981 = vcombine.high %v3456, %v3456
      %v3983 = vunpack.c.l.s4 1966171168
      %v3984 = vunpack.c.0.s8 %v3983
      %v3985 = vlaneseq
      %v3986 = vshrl.u32 %v3985, 7
      %v3987 = vsub.s32 %v3984, %v3986
      %v3988 = vrot.slane %v3456, %v3987
      %v3990 = vunpack.c.l.s4 1966171168
      %v3991 = vunpack.c.0.s8 %v3990
      %v3992 = vlaneseq
      %v3993 = vshrl.u32 %v3992, 7
      %v3994 = vsub.s32 %v3991, %v3993
      %v3995 = vrot.slane %v3981, %v3994
      %v3996 = vcombine.high %v3988, %v3988
      %v3997 = vcombine.high %v3995, %v3995
      %v3999 = vunpack.c.l.s4 1966171168
      %v4000 = vunpack.c.0.s8 %v3999
      %v4001 = vlaneseq
      %v4002 = vshrl.u32 %v4001, 7
      %v4003 = vsub.s32 %v4000, %v4002
      %v4004 = vrot.slane %v3988, %v4003
      %v4006 = vunpack.c.l.s4 1966171168
      %v4007 = vunpack.c.0.s8 %v4006
      %v4008 = vlaneseq
      %v4009 = vshrl.u32 %v4008, 7
      %v4010 = vsub.s32 %v4007, %v4009
      %v4011 = vrot.slane %v3995, %v4010
      %v4013 = vunpack.c.l.s4 1966171168
      %v4014 = vunpack.c.0.s8 %v4013
      %v4015 = vlaneseq
      %v4016 = vshrl.u32 %v4015, 7
      %v4017 = vsub.s32 %v4014, %v4016
      %v4018 = vrot.slane %v3996, %v4017
      %v4020 = vunpack.c.l.s4 1966171168
      %v4021 = vunpack.c.0.s8 %v4020
      %v4022 = vlaneseq
      %v4023 = vshrl.u32 %v4022, 7
      %v4024 = vsub.s32 %v4021, %v4023
      %v4025 = vrot.slane %v3997, %v4024
      %v4026 = vcombine.high %v4004, %v4004
      %v4027 = vcombine.high %v4011, %v4011
      %v4028 = vcombine.high %v4018, %v4018
      %v4029 = vcombine.high %v4025, %v4025
      %v4031 = vunpack.c.l.s4 1966171168
      %v4032 = vunpack.c.0.s8 %v4031
      %v4033 = vlaneseq
      %v4034 = vshrl.u32 %v4033, 7
      %v4035 = vsub.s32 %v4032, %v4034
      %v4036 = vrot.slane %v3457, %v4035
      %v4037 = vcombine.high %v4036, %v4036
      %v4039 = vunpack.c.l.s4 1966171168
      %v4040 = vunpack.c.0.s8 %v4039
      %v4041 = vlaneseq
      %v4042 = vshrl.u32 %v4041, 7
      %v4043 = vsub.s32 %v4040, %v4042
      %v4044 = vrot.slane %v4036, %v4043
      %v4046 = vunpack.c.l.s4 1966171168
      %v4047 = vunpack.c.0.s8 %v4046
      %v4048 = vlaneseq
      %v4049 = vshrl.u32 %v4048, 7
      %v4050 = vsub.s32 %v4047, %v4049
      %v4051 = vrot.slane %v4037, %v4050
      %v4052 = vcombine.high %v4044, %v4044
      %v4053 = vcombine.high %v4051, %v4051
      %v4054 = vcombine.high %v3458, %v3458
      %v4056 = vunpack.c.l.s4 1966171168
      %v4057 = vunpack.c.0.s8 %v4056
      %v4058 = vlaneseq
      %v4059 = vshrl.u32 %v4058, 7
      %v4060 = vsub.s32 %v4057, %v4059
      %v4061 = vrot.slane %v3458, %v4060
      %v4063 = vunpack.c.l.s4 1966171168
      %v4064 = vunpack.c.0.s8 %v4063
      %v4065 = vlaneseq
      %v4066 = vshrl.u32 %v4065, 7
      %v4067 = vsub.s32 %v4064, %v4066
      %v4068 = vrot.slane %v4054, %v4067
      %v4069 = vcombine.high %v4061, %v4061
      %v4070 = vcombine.high %v4068, %v4068
      %v4072 = vunpack.c.l.s4 1966171168
      %v4073 = vunpack.c.0.s8 %v4072
      %v4074 = vlaneseq
      %v4075 = vshrl.u32 %v4074, 7
      %v4076 = vsub.s32 %v4073, %v4075
      %v4077 = vrot.slane %v4061, %v4076
      %v4079 = vunpack.c.l.s4 1966171168
      %v4080 = vunpack.c.0.s8 %v4079
      %v4081 = vlaneseq
      %v4082 = vshrl.u32 %v4081, 7
      %v4083 = vsub.s32 %v4080, %v4082
      %v4084 = vrot.slane %v4068, %v4083
      %v4086 = vunpack.c.l.s4 1966171168
      %v4087 = vunpack.c.0.s8 %v4086
      %v4088 = vlaneseq
      %v4089 = vshrl.u32 %v4088, 7
      %v4090 = vsub.s32 %v4087, %v4089
      %v4091 = vrot.slane %v4069, %v4090
      %v4093 = vunpack.c.l.s4 1966171168
      %v4094 = vunpack.c.0.s8 %v4093
      %v4095 = vlaneseq
      %v4096 = vshrl.u32 %v4095, 7
      %v4097 = vsub.s32 %v4094, %v4096
      %v4098 = vrot.slane %v4070, %v4097
      %v4099 = vcombine.high %v4077, %v4077
      %v4100 = vcombine.high %v4084, %v4084
      %v4101 = vcombine.high %v4091, %v4091
      %v4102 = vcombine.high %v4098, %v4098
      %v4103 = vcombine.high %v3459, %v3459
      %v4105 = vunpack.c.l.s4 1966171168
      %v4106 = vunpack.c.0.s8 %v4105
      %v4107 = vlaneseq
      %v4108 = vshrl.u32 %v4107, 7
      %v4109 = vsub.s32 %v4106, %v4108
      %v4110 = vrot.slane %v3459, %v4109
      %v4112 = vunpack.c.l.s4 1966171168
      %v4113 = vunpack.c.0.s8 %v4112
      %v4114 = vlaneseq
      %v4115 = vshrl.u32 %v4114, 7
      %v4116 = vsub.s32 %v4113, %v4115
      %v4117 = vrot.slane %v4103, %v4116
      %v4118 = vcombine.high %v4110, %v4110
      %v4119 = vcombine.high %v4117, %v4117
      %v4121 = vunpack.c.l.s4 1966171168
      %v4122 = vunpack.c.0.s8 %v4121
      %v4123 = vlaneseq
      %v4124 = vshrl.u32 %v4123, 7
      %v4125 = vsub.s32 %v4122, %v4124
      %v4126 = vrot.slane %v4110, %v4125
      %v4128 = vunpack.c.l.s4 1966171168
      %v4129 = vunpack.c.0.s8 %v4128
      %v4130 = vlaneseq
      %v4131 = vshrl.u32 %v4130, 7
      %v4132 = vsub.s32 %v4129, %v4131
      %v4133 = vrot.slane %v4117, %v4132
      %v4135 = vunpack.c.l.s4 1966171168
      %v4136 = vunpack.c.0.s8 %v4135
      %v4137 = vlaneseq
      %v4138 = vshrl.u32 %v4137, 7
      %v4139 = vsub.s32 %v4136, %v4138
      %v4140 = vrot.slane %v4118, %v4139
      %v4142 = vunpack.c.l.s4 1966171168
      %v4143 = vunpack.c.0.s8 %v4142
      %v4144 = vlaneseq
      %v4145 = vshrl.u32 %v4144, 7
      %v4146 = vsub.s32 %v4143, %v4145
      %v4147 = vrot.slane %v4119, %v4146
      %v4148 = vcombine.high %v4126, %v4126
      %v4149 = vcombine.high %v4133, %v4133
      %v4150 = vcombine.high %v4140, %v4140
      %v4151 = vcombine.high %v4147, %v4147
      %v4153 = vunpack.c.l.s4 1966171168
      %v4154 = vunpack.c.0.s8 %v4153
      %v4155 = vlaneseq
      %v4156 = vshrl.u32 %v4155, 7
      %v4157 = vsub.s32 %v4154, %v4156
      %v4158 = vrot.slane %v3460, %v4157
      %v4159 = vcombine.high %v4158, %v4158
      %v4161 = vunpack.c.l.s4 1966171168
      %v4162 = vunpack.c.0.s8 %v4161
      %v4163 = vlaneseq
      %v4164 = vshrl.u32 %v4163, 7
      %v4165 = vsub.s32 %v4162, %v4164
      %v4166 = vrot.slane %v4158, %v4165
      %v4168 = vunpack.c.l.s4 1966171168
      %v4169 = vunpack.c.0.s8 %v4168
      %v4170 = vlaneseq
      %v4171 = vshrl.u32 %v4170, 7
      %v4172 = vsub.s32 %v4169, %v4171
      %v4173 = vrot.slane %v4159, %v4172
      %v4174 = vcombine.high %v4166, %v4166
      %v4175 = vcombine.high %v4173, %v4173
      %v4176 = vcombine.high %v3461, %v3461
      %v4178 = vunpack.c.l.s4 1966171168
      %v4179 = vunpack.c.0.s8 %v4178
      %v4180 = vlaneseq
      %v4181 = vshrl.u32 %v4180, 7
      %v4182 = vsub.s32 %v4179, %v4181
      %v4183 = vrot.slane %v3461, %v4182
      %v4185 = vunpack.c.l.s4 1966171168
      %v4186 = vunpack.c.0.s8 %v4185
      %v4187 = vlaneseq
      %v4188 = vshrl.u32 %v4187, 7
      %v4189 = vsub.s32 %v4186, %v4188
      %v4190 = vrot.slane %v4176, %v4189
      %v4191 = vcombine.high %v4183, %v4183
      %v4192 = vcombine.high %v4190, %v4190
      %v4194 = vunpack.c.l.s4 1966171168
      %v4195 = vunpack.c.0.s8 %v4194
      %v4196 = vlaneseq
      %v4197 = vshrl.u32 %v4196, 7
      %v4198 = vsub.s32 %v4195, %v4197
      %v4199 = vrot.slane %v4183, %v4198
      %v4201 = vunpack.c.l.s4 1966171168
      %v4202 = vunpack.c.0.s8 %v4201
      %v4203 = vlaneseq
      %v4204 = vshrl.u32 %v4203, 7
      %v4205 = vsub.s32 %v4202, %v4204
      %v4206 = vrot.slane %v4190, %v4205
      %v4208 = vunpack.c.l.s4 1966171168
      %v4209 = vunpack.c.0.s8 %v4208
      %v4210 = vlaneseq
      %v4211 = vshrl.u32 %v4210, 7
      %v4212 = vsub.s32 %v4209, %v4211
      %v4213 = vrot.slane %v4191, %v4212
      %v4215 = vunpack.c.l.s4 1966171168
      %v4216 = vunpack.c.0.s8 %v4215
      %v4217 = vlaneseq
      %v4218 = vshrl.u32 %v4217, 7
      %v4219 = vsub.s32 %v4216, %v4218
      %v4220 = vrot.slane %v4192, %v4219
      %v4221 = vcombine.high %v4199, %v4199
      %v4222 = vcombine.high %v4206, %v4206
      %v4223 = vcombine.high %v4213, %v4213
      %v4224 = vcombine.high %v4220, %v4220
      %v4225 = vcombine.high %v3462, %v3462
      %v4227 = vunpack.c.l.s4 1966171168
      %v4228 = vunpack.c.0.s8 %v4227
      %v4229 = vlaneseq
      %v4230 = vshrl.u32 %v4229, 7
      %v4231 = vsub.s32 %v4228, %v4230
      %v4232 = vrot.slane %v3462, %v4231
      %v4234 = vunpack.c.l.s4 1966171168
      %v4235 = vunpack.c.0.s8 %v4234
      %v4236 = vlaneseq
      %v4237 = vshrl.u32 %v4236, 7
      %v4238 = vsub.s32 %v4235, %v4237
      %v4239 = vrot.slane %v4225, %v4238
      %v4240 = vcombine.high %v4232, %v4232
      %v4241 = vcombine.high %v4239, %v4239
      %v4243 = vunpack.c.l.s4 1966171168
      %v4244 = vunpack.c.0.s8 %v4243
      %v4245 = vlaneseq
      %v4246 = vshrl.u32 %v4245, 7
      %v4247 = vsub.s32 %v4244, %v4246
      %v4248 = vrot.slane %v4232, %v4247
      %v4250 = vunpack.c.l.s4 1966171168
      %v4251 = vunpack.c.0.s8 %v4250
      %v4252 = vlaneseq
      %v4253 = vshrl.u32 %v4252, 7
      %v4254 = vsub.s32 %v4251, %v4253
      %v4255 = vrot.slane %v4239, %v4254
      %v4257 = vunpack.c.l.s4 1966171168
      %v4258 = vunpack.c.0.s8 %v4257
      %v4259 = vlaneseq
      %v4260 = vshrl.u32 %v4259, 7
      %v4261 = vsub.s32 %v4258, %v4260
      %v4262 = vrot.slane %v4240, %v4261
      %v4264 = vunpack.c.l.s4 1966171168
      %v4265 = vunpack.c.0.s8 %v4264
      %v4266 = vlaneseq
      %v4267 = vshrl.u32 %v4266, 7
      %v4268 = vsub.s32 %v4265, %v4267
      %v4269 = vrot.slane %v4241, %v4268
      %v4270 = vcombine.high %v4248, %v4248
      %v4271 = vcombine.high %v4255, %v4255
      %v4272 = vcombine.high %v4262, %v4262
      %v4273 = vcombine.high %v4269, %v4269
      %v4275 = vunpack.c.l.s4 1966171168
      %v4276 = vunpack.c.0.s8 %v4275
      %v4277 = vlaneseq
      %v4278 = vshrl.u32 %v4277, 7
      %v4279 = vsub.s32 %v4276, %v4278
      %v4280 = vrot.slane %v3463, %v4279
      %v4281 = vcombine.high %v4280, %v4280
      %v4283 = vunpack.c.l.s4 1966171168
      %v4284 = vunpack.c.0.s8 %v4283
      %v4285 = vlaneseq
      %v4286 = vshrl.u32 %v4285, 7
      %v4287 = vsub.s32 %v4284, %v4286
      %v4288 = vrot.slane %v4280, %v4287
      %v4290 = vunpack.c.l.s4 1966171168
      %v4291 = vunpack.c.0.s8 %v4290
      %v4292 = vlaneseq
      %v4293 = vshrl.u32 %v4292, 7
      %v4294 = vsub.s32 %v4291, %v4293
      %v4295 = vrot.slane %v4281, %v4294
      %v4296 = vcombine.high %v4288, %v4288
      %v4297 = vcombine.high %v4295, %v4295
      %v4298 = vcombine.high %v3464, %v3464
      %v4300 = vunpack.c.l.s4 1966171168
      %v4301 = vunpack.c.0.s8 %v4300
      %v4302 = vlaneseq
      %v4303 = vshrl.u32 %v4302, 7
      %v4304 = vsub.s32 %v4301, %v4303
      %v4305 = vrot.slane %v3464, %v4304
      %v4307 = vunpack.c.l.s4 1966171168
      %v4308 = vunpack.c.0.s8 %v4307
      %v4309 = vlaneseq
      %v4310 = vshrl.u32 %v4309, 7
      %v4311 = vsub.s32 %v4308, %v4310
      %v4312 = vrot.slane %v4298, %v4311
      %v4313 = vcombine.high %v4305, %v4305
      %v4314 = vcombine.high %v4312, %v4312
      %v4316 = vunpack.c.l.s4 1966171168
      %v4317 = vunpack.c.0.s8 %v4316
      %v4318 = vlaneseq
      %v4319 = vshrl.u32 %v4318, 7
      %v4320 = vsub.s32 %v4317, %v4319
      %v4321 = vrot.slane %v4305, %v4320
      %v4323 = vunpack.c.l.s4 1966171168
      %v4324 = vunpack.c.0.s8 %v4323
      %v4325 = vlaneseq
      %v4326 = vshrl.u32 %v4325, 7
      %v4327 = vsub.s32 %v4324, %v4326
      %v4328 = vrot.slane %v4312, %v4327
      %v4330 = vunpack.c.l.s4 1966171168
      %v4331 = vunpack.c.0.s8 %v4330
      %v4332 = vlaneseq
      %v4333 = vshrl.u32 %v4332, 7
      %v4334 = vsub.s32 %v4331, %v4333
      %v4335 = vrot.slane %v4313, %v4334
      %v4337 = vunpack.c.l.s4 1966171168
      %v4338 = vunpack.c.0.s8 %v4337
      %v4339 = vlaneseq
      %v4340 = vshrl.u32 %v4339, 7
      %v4341 = vsub.s32 %v4338, %v4340
      %v4342 = vrot.slane %v4314, %v4341
      %v4343 = vcombine.high %v4321, %v4321
      %v4344 = vcombine.high %v4328, %v4328
      %v4345 = vcombine.high %v4335, %v4335
      %v4346 = vcombine.high %v4342, %v4342
      %v4347 = vcombine.high %v3465, %v3465
      %v4349 = vunpack.c.l.s4 1966171168
      %v4350 = vunpack.c.0.s8 %v4349
      %v4351 = vlaneseq
      %v4352 = vshrl.u32 %v4351, 7
      %v4353 = vsub.s32 %v4350, %v4352
      %v4354 = vrot.slane %v3465, %v4353
      %v4356 = vunpack.c.l.s4 1966171168
      %v4357 = vunpack.c.0.s8 %v4356
      %v4358 = vlaneseq
      %v4359 = vshrl.u32 %v4358, 7
      %v4360 = vsub.s32 %v4357, %v4359
      %v4361 = vrot.slane %v4347, %v4360
      %v4362 = vcombine.high %v4354, %v4354
      %v4363 = vcombine.high %v4361, %v4361
      %v4365 = vunpack.c.l.s4 1966171168
      %v4366 = vunpack.c.0.s8 %v4365
      %v4367 = vlaneseq
      %v4368 = vshrl.u32 %v4367, 7
      %v4369 = vsub.s32 %v4366, %v4368
      %v4370 = vrot.slane %v4354, %v4369
      %v4372 = vunpack.c.l.s4 1966171168
      %v4373 = vunpack.c.0.s8 %v4372
      %v4374 = vlaneseq
      %v4375 = vshrl.u32 %v4374, 7
      %v4376 = vsub.s32 %v4373, %v4375
      %v4377 = vrot.slane %v4361, %v4376
      %v4379 = vunpack.c.l.s4 1966171168
      %v4380 = vunpack.c.0.s8 %v4379
      %v4381 = vlaneseq
      %v4382 = vshrl.u32 %v4381, 7
      %v4383 = vsub.s32 %v4380, %v4382
      %v4384 = vrot.slane %v4362, %v4383
      %v4386 = vunpack.c.l.s4 1966171168
      %v4387 = vunpack.c.0.s8 %v4386
      %v4388 = vlaneseq
      %v4389 = vshrl.u32 %v4388, 7
      %v4390 = vsub.s32 %v4387, %v4389
      %v4391 = vrot.slane %v4363, %v4390
      %v4392 = vcombine.high %v4370, %v4370
      %v4393 = vcombine.high %v4377, %v4377
      %v4394 = vcombine.high %v4384, %v4384
      %v4395 = vcombine.high %v4391, %v4391
      %v4397 = vunpack.c.l.s4 1966171168
      %v4398 = vunpack.c.0.s8 %v4397
      %v4399 = vlaneseq
      %v4400 = vshrl.u32 %v4399, 7
      %v4401 = vsub.s32 %v4398, %v4400
      %v4402 = vrot.slane %v3466, %v4401
      %v4403 = vcombine.high %v4402, %v4402
      %v4405 = vunpack.c.l.s4 1966171168
      %v4406 = vunpack.c.0.s8 %v4405
      %v4407 = vlaneseq
      %v4408 = vshrl.u32 %v4407, 7
      %v4409 = vsub.s32 %v4406, %v4408
      %v4410 = vrot.slane %v4402, %v4409
      %v4412 = vunpack.c.l.s4 1966171168
      %v4413 = vunpack.c.0.s8 %v4412
      %v4414 = vlaneseq
      %v4415 = vshrl.u32 %v4414, 7
      %v4416 = vsub.s32 %v4413, %v4415
      %v4417 = vrot.slane %v4403, %v4416
      %v4418 = vcombine.high %v4410, %v4410
      %v4419 = vcombine.high %v4417, %v4417
      %v4420 = vcombine.high %v3467, %v3467
      %v4422 = vunpack.c.l.s4 1966171168
      %v4423 = vunpack.c.0.s8 %v4422
      %v4424 = vlaneseq
      %v4425 = vshrl.u32 %v4424, 7
      %v4426 = vsub.s32 %v4423, %v4425
      %v4427 = vrot.slane %v3467, %v4426
      %v4429 = vunpack.c.l.s4 1966171168
      %v4430 = vunpack.c.0.s8 %v4429
      %v4431 = vlaneseq
      %v4432 = vshrl.u32 %v4431, 7
      %v4433 = vsub.s32 %v4430, %v4432
      %v4434 = vrot.slane %v4420, %v4433
      %v4435 = vcombine.high %v4427, %v4427
      %v4436 = vcombine.high %v4434, %v4434
      %v4438 = vunpack.c.l.s4 1966171168
      %v4439 = vunpack.c.0.s8 %v4438
      %v4440 = vlaneseq
      %v4441 = vshrl.u32 %v4440, 7
      %v4442 = vsub.s32 %v4439, %v4441
      %v4443 = vrot.slane %v4427, %v4442
      %v4445 = vunpack.c.l.s4 1966171168
      %v4446 = vunpack.c.0.s8 %v4445
      %v4447 = vlaneseq
      %v4448 = vshrl.u32 %v4447, 7
      %v4449 = vsub.s32 %v4446, %v4448
      %v4450 = vrot.slane %v4434, %v4449
      %v4452 = vunpack.c.l.s4 1966171168
      %v4453 = vunpack.c.0.s8 %v4452
      %v4454 = vlaneseq
      %v4455 = vshrl.u32 %v4454, 7
      %v4456 = vsub.s32 %v4453, %v4455
      %v4457 = vrot.slane %v4435, %v4456
      %v4459 = vunpack.c.l.s4 1966171168
      %v4460 = vunpack.c.0.s8 %v4459
      %v4461 = vlaneseq
      %v4462 = vshrl.u32 %v4461, 7
      %v4463 = vsub.s32 %v4460, %v4462
      %v4464 = vrot.slane %v4436, %v4463
      %v4465 = vcombine.high %v4443, %v4443
      %v4466 = vcombine.high %v4450, %v4450
      %v4467 = vcombine.high %v4457, %v4457
      %v4468 = vcombine.high %v4464, %v4464
      %v4469 = vcombine.high %v3468, %v3468
      %v4471 = vunpack.c.l.s4 1966171168
      %v4472 = vunpack.c.0.s8 %v4471
      %v4473 = vlaneseq
      %v4474 = vshrl.u32 %v4473, 7
      %v4475 = vsub.s32 %v4472, %v4474
      %v4476 = vrot.slane %v3468, %v4475
      %v4478 = vunpack.c.l.s4 1966171168
      %v4479 = vunpack.c.0.s8 %v4478
      %v4480 = vlaneseq
      %v4481 = vshrl.u32 %v4480, 7
      %v4482 = vsub.s32 %v4479, %v4481
      %v4483 = vrot.slane %v4469, %v4482
      %v4484 = vcombine.high %v4476, %v4476
      %v4485 = vcombine.high %v4483, %v4483
      %v4487 = vunpack.c.l.s4 1966171168
      %v4488 = vunpack.c.0.s8 %v4487
      %v4489 = vlaneseq
      %v4490 = vshrl.u32 %v4489, 7
      %v4491 = vsub.s32 %v4488, %v4490
      %v4492 = vrot.slane %v4476, %v4491
      %v4494 = vunpack.c.l.s4 1966171168
      %v4495 = vunpack.c.0.s8 %v4494
      %v4496 = vlaneseq
      %v4497 = vshrl.u32 %v4496, 7
      %v4498 = vsub.s32 %v4495, %v4497
      %v4499 = vrot.slane %v4483, %v4498
      %v4501 = vunpack.c.l.s4 1966171168
      %v4502 = vunpack.c.0.s8 %v4501
      %v4503 = vlaneseq
      %v4504 = vshrl.u32 %v4503, 7
      %v4505 = vsub.s32 %v4502, %v4504
      %v4506 = vrot.slane %v4484, %v4505
      %v4508 = vunpack.c.l.s4 1966171168
      %v4509 = vunpack.c.0.s8 %v4508
      %v4510 = vlaneseq
      %v4511 = vshrl.u32 %v4510, 7
      %v4512 = vsub.s32 %v4509, %v4511
      %v4513 = vrot.slane %v4485, %v4512
      %v4514 = vcombine.high %v4492, %v4492
      %v4515 = vcombine.high %v4499, %v4499
      %v4516 = vcombine.high %v4506, %v4506
      %v4517 = vcombine.high %v4513, %v4513
      %v4519 = vunpack.c.l.s4 1966171168
      %v4520 = vunpack.c.0.s8 %v4519
      %v4521 = vlaneseq
      %v4522 = vshrl.u32 %v4521, 7
      %v4523 = vsub.s32 %v4520, %v4522
      %v4524 = vrot.slane %v3469, %v4523
      %v4525 = vcombine.high %v4524, %v4524
      %v4527 = vunpack.c.l.s4 1966171168
      %v4528 = vunpack.c.0.s8 %v4527
      %v4529 = vlaneseq
      %v4530 = vshrl.u32 %v4529, 7
      %v4531 = vsub.s32 %v4528, %v4530
      %v4532 = vrot.slane %v4524, %v4531
      %v4534 = vunpack.c.l.s4 1966171168
      %v4535 = vunpack.c.0.s8 %v4534
      %v4536 = vlaneseq
      %v4537 = vshrl.u32 %v4536, 7
      %v4538 = vsub.s32 %v4535, %v4537
      %v4539 = vrot.slane %v4525, %v4538
      %v4540 = vcombine.high %v4532, %v4532
      %v4541 = vcombine.high %v4539, %v4539
      %v4542 = vcombine.high %v3470, %v3470
      %v4544 = vunpack.c.l.s4 1966171168
      %v4545 = vunpack.c.0.s8 %v4544
      %v4546 = vlaneseq
      %v4547 = vshrl.u32 %v4546, 7
      %v4548 = vsub.s32 %v4545, %v4547
      %v4549 = vrot.slane %v3470, %v4548
      %v4551 = vunpack.c.l.s4 1966171168
      %v4552 = vunpack.c.0.s8 %v4551
      %v4553 = vlaneseq
      %v4554 = vshrl.u32 %v4553, 7
      %v4555 = vsub.s32 %v4552, %v4554
      %v4556 = vrot.slane %v4542, %v4555
      %v4557 = vcombine.high %v4549, %v4549
      %v4558 = vcombine.high %v4556, %v4556
      %v4560 = vunpack.c.l.s4 1966171168
      %v4561 = vunpack.c.0.s8 %v4560
      %v4562 = vlaneseq
      %v4563 = vshrl.u32 %v4562, 7
      %v4564 = vsub.s32 %v4561, %v4563
      %v4565 = vrot.slane %v4549, %v4564
      %v4567 = vunpack.c.l.s4 1966171168
      %v4568 = vunpack.c.0.s8 %v4567
      %v4569 = vlaneseq
      %v4570 = vshrl.u32 %v4569, 7
      %v4571 = vsub.s32 %v4568, %v4570
      %v4572 = vrot.slane %v4556, %v4571
      %v4574 = vunpack.c.l.s4 1966171168
      %v4575 = vunpack.c.0.s8 %v4574
      %v4576 = vlaneseq
      %v4577 = vshrl.u32 %v4576, 7
      %v4578 = vsub.s32 %v4575, %v4577
      %v4579 = vrot.slane %v4557, %v4578
      %v4581 = vunpack.c.l.s4 1966171168
      %v4582 = vunpack.c.0.s8 %v4581
      %v4583 = vlaneseq
      %v4584 = vshrl.u32 %v4583, 7
      %v4585 = vsub.s32 %v4582, %v4584
      %v4586 = vrot.slane %v4558, %v4585
      %v4587 = vcombine.high %v4565, %v4565
      %v4588 = vcombine.high %v4572, %v4572
      %v4589 = vcombine.high %v4579, %v4579
      %v4590 = vcombine.high %v4586, %v4586
      %v4591 = vcombine.high %v3471, %v3471
      %v4593 = vunpack.c.l.s4 1966171168
      %v4594 = vunpack.c.0.s8 %v4593
      %v4595 = vlaneseq
      %v4596 = vshrl.u32 %v4595, 7
      %v4597 = vsub.s32 %v4594, %v4596
      %v4598 = vrot.slane %v3471, %v4597
      %v4600 = vunpack.c.l.s4 1966171168
      %v4601 = vunpack.c.0.s8 %v4600
      %v4602 = vlaneseq
      %v4603 = vshrl.u32 %v4602, 7
      %v4604 = vsub.s32 %v4601, %v4603
      %v4605 = vrot.slane %v4591, %v4604
      %v4606 = vcombine.high %v4598, %v4598
      %v4607 = vcombine.high %v4605, %v4605
      %v4609 = vunpack.c.l.s4 1966171168
      %v4610 = vunpack.c.0.s8 %v4609
      %v4611 = vlaneseq
      %v4612 = vshrl.u32 %v4611, 7
      %v4613 = vsub.s32 %v4610, %v4612
      %v4614 = vrot.slane %v4598, %v4613
      %v4616 = vunpack.c.l.s4 1966171168
      %v4617 = vunpack.c.0.s8 %v4616
      %v4618 = vlaneseq
      %v4619 = vshrl.u32 %v4618, 7
      %v4620 = vsub.s32 %v4617, %v4619
      %v4621 = vrot.slane %v4605, %v4620
      %v4623 = vunpack.c.l.s4 1966171168
      %v4624 = vunpack.c.0.s8 %v4623
      %v4625 = vlaneseq
      %v4626 = vshrl.u32 %v4625, 7
      %v4627 = vsub.s32 %v4624, %v4626
      %v4628 = vrot.slane %v4606, %v4627
      %v4630 = vunpack.c.l.s4 1966171168
      %v4631 = vunpack.c.0.s8 %v4630
      %v4632 = vlaneseq
      %v4633 = vshrl.u32 %v4632, 7
      %v4634 = vsub.s32 %v4631, %v4633
      %v4635 = vrot.slane %v4607, %v4634
      %v4636 = vcombine.high %v4614, %v4614
      %v4637 = vcombine.high %v4621, %v4621
      %v4638 = vcombine.high %v4628, %v4628
      %v4639 = vcombine.high %v4635, %v4635
      %v4641 = vunpack.c.l.s4 1966171168
      %v4642 = vunpack.c.0.s8 %v4641
      %v4643 = vlaneseq
      %v4644 = vshrl.u32 %v4643, 7
      %v4645 = vsub.s32 %v4642, %v4644
      %v4646 = vrot.slane %v3472, %v4645
      %v4647 = vcombine.high %v4646, %v4646
      %v4649 = vunpack.c.l.s4 1966171168
      %v4650 = vunpack.c.0.s8 %v4649
      %v4651 = vlaneseq
      %v4652 = vshrl.u32 %v4651, 7
      %v4653 = vsub.s32 %v4650, %v4652
      %v4654 = vrot.slane %v4646, %v4653
      %v4656 = vunpack.c.l.s4 1966171168
      %v4657 = vunpack.c.0.s8 %v4656
      %v4658 = vlaneseq
      %v4659 = vshrl.u32 %v4658, 7
      %v4660 = vsub.s32 %v4657, %v4659
      %v4661 = vrot.slane %v4647, %v4660
      %v4662 = vcombine.high %v4654, %v4654
      %v4663 = vcombine.high %v4661, %v4661
      %v4664 = vcombine.high %v3473, %v3473
      %v4666 = vunpack.c.l.s4 1966171168
      %v4667 = vunpack.c.0.s8 %v4666
      %v4668 = vlaneseq
      %v4669 = vshrl.u32 %v4668, 7
      %v4670 = vsub.s32 %v4667, %v4669
      %v4671 = vrot.slane %v3473, %v4670
      %v4673 = vunpack.c.l.s4 1966171168
      %v4674 = vunpack.c.0.s8 %v4673
      %v4675 = vlaneseq
      %v4676 = vshrl.u32 %v4675, 7
      %v4677 = vsub.s32 %v4674, %v4676
      %v4678 = vrot.slane %v4664, %v4677
      %v4679 = vcombine.high %v4671, %v4671
      %v4680 = vcombine.high %v4678, %v4678
      %v4682 = vunpack.c.l.s4 1966171168
      %v4683 = vunpack.c.0.s8 %v4682
      %v4684 = vlaneseq
      %v4685 = vshrl.u32 %v4684, 7
      %v4686 = vsub.s32 %v4683, %v4685
      %v4687 = vrot.slane %v4671, %v4686
      %v4689 = vunpack.c.l.s4 1966171168
      %v4690 = vunpack.c.0.s8 %v4689
      %v4691 = vlaneseq
      %v4692 = vshrl.u32 %v4691, 7
      %v4693 = vsub.s32 %v4690, %v4692
      %v4694 = vrot.slane %v4678, %v4693
      %v4696 = vunpack.c.l.s4 1966171168
      %v4697 = vunpack.c.0.s8 %v4696
      %v4698 = vlaneseq
      %v4699 = vshrl.u32 %v4698, 7
      %v4700 = vsub.s32 %v4697, %v4699
      %v4701 = vrot.slane %v4679, %v4700
      %v4703 = vunpack.c.l.s4 1966171168
      %v4704 = vunpack.c.0.s8 %v4703
      %v4705 = vlaneseq
      %v4706 = vshrl.u32 %v4705, 7
      %v4707 = vsub.s32 %v4704, %v4706
      %v4708 = vrot.slane %v4680, %v4707
      %v4709 = vcombine.high %v4687, %v4687
      %v4710 = vcombine.high %v4694, %v4694
      %v4711 = vcombine.high %v4701, %v4701
      %v4712 = vcombine.high %v4708, %v4708
      %v4713 = vcombine.high %v3474, %v3474
      %v4715 = vunpack.c.l.s4 1966171168
      %v4716 = vunpack.c.0.s8 %v4715
      %v4717 = vlaneseq
      %v4718 = vshrl.u32 %v4717, 7
      %v4719 = vsub.s32 %v4716, %v4718
      %v4720 = vrot.slane %v3474, %v4719
      %v4722 = vunpack.c.l.s4 1966171168
      %v4723 = vunpack.c.0.s8 %v4722
      %v4724 = vlaneseq
      %v4725 = vshrl.u32 %v4724, 7
      %v4726 = vsub.s32 %v4723, %v4725
      %v4727 = vrot.slane %v4713, %v4726
      %v4728 = vcombine.high %v4720, %v4720
      %v4729 = vcombine.high %v4727, %v4727
      %v4731 = vunpack.c.l.s4 1966171168
      %v4732 = vunpack.c.0.s8 %v4731
      %v4733 = vlaneseq
      %v4734 = vshrl.u32 %v4733, 7
      %v4735 = vsub.s32 %v4732, %v4734
      %v4736 = vrot.slane %v4720, %v4735
      %v4738 = vunpack.c.l.s4 1966171168
      %v4739 = vunpack.c.0.s8 %v4738
      %v4740 = vlaneseq
      %v4741 = vshrl.u32 %v4740, 7
      %v4742 = vsub.s32 %v4739, %v4741
      %v4743 = vrot.slane %v4727, %v4742
      %v4745 = vunpack.c.l.s4 1966171168
      %v4746 = vunpack.c.0.s8 %v4745
      %v4747 = vlaneseq
      %v4748 = vshrl.u32 %v4747, 7
      %v4749 = vsub.s32 %v4746, %v4748
      %v4750 = vrot.slane %v4728, %v4749
      %v4752 = vunpack.c.l.s4 1966171168
      %v4753 = vunpack.c.0.s8 %v4752
      %v4754 = vlaneseq
      %v4755 = vshrl.u32 %v4754, 7
      %v4756 = vsub.s32 %v4753, %v4755
      %v4757 = vrot.slane %v4729, %v4756
      %v4758 = vcombine.high %v4736, %v4736
      %v4759 = vcombine.high %v4743, %v4743
      %v4760 = vcombine.high %v4750, %v4750
      %v4761 = vcombine.high %v4757, %v4757
      %v4763 = vunpack.c.l.s4 1966171168
      %v4764 = vunpack.c.0.s8 %v4763
      %v4765 = vlaneseq
      %v4766 = vshrl.u32 %v4765, 7
      %v4767 = vsub.s32 %v4764, %v4766
      %v4768 = vrot.slane %v3475, %v4767
      %v4769 = vcombine.high %v4768, %v4768
      %v4771 = vunpack.c.l.s4 1966171168
      %v4772 = vunpack.c.0.s8 %v4771
      %v4773 = vlaneseq
      %v4774 = vshrl.u32 %v4773, 7
      %v4775 = vsub.s32 %v4772, %v4774
      %v4776 = vrot.slane %v4768, %v4775
      %v4778 = vunpack.c.l.s4 1966171168
      %v4779 = vunpack.c.0.s8 %v4778
      %v4780 = vlaneseq
      %v4781 = vshrl.u32 %v4780, 7
      %v4782 = vsub.s32 %v4779, %v4781
      %v4783 = vrot.slane %v4769, %v4782
      %v4784 = vcombine.high %v4776, %v4776
      %v4785 = vcombine.high %v4783, %v4783
      %v4786 = vcombine.high %v3476, %v3476
      %v4788 = vunpack.c.l.s4 1966171168
      %v4789 = vunpack.c.0.s8 %v4788
      %v4790 = vlaneseq
      %v4791 = vshrl.u32 %v4790, 7
      %v4792 = vsub.s32 %v4789, %v4791
      %v4793 = vrot.slane %v3476, %v4792
      %v4795 = vunpack.c.l.s4 1966171168
      %v4796 = vunpack.c.0.s8 %v4795
      %v4797 = vlaneseq
      %v4798 = vshrl.u32 %v4797, 7
      %v4799 = vsub.s32 %v4796, %v4798
      %v4800 = vrot.slane %v4786, %v4799
      %v4801 = vcombine.high %v4793, %v4793
      %v4802 = vcombine.high %v4800, %v4800
      %v4804 = vunpack.c.l.s4 1966171168
      %v4805 = vunpack.c.0.s8 %v4804
      %v4806 = vlaneseq
      %v4807 = vshrl.u32 %v4806, 7
      %v4808 = vsub.s32 %v4805, %v4807
      %v4809 = vrot.slane %v4793, %v4808
      %v4811 = vunpack.c.l.s4 1966171168
      %v4812 = vunpack.c.0.s8 %v4811
      %v4813 = vlaneseq
      %v4814 = vshrl.u32 %v4813, 7
      %v4815 = vsub.s32 %v4812, %v4814
      %v4816 = vrot.slane %v4800, %v4815
      %v4818 = vunpack.c.l.s4 1966171168
      %v4819 = vunpack.c.0.s8 %v4818
      %v4820 = vlaneseq
      %v4821 = vshrl.u32 %v4820, 7
      %v4822 = vsub.s32 %v4819, %v4821
      %v4823 = vrot.slane %v4801, %v4822
      %v4825 = vunpack.c.l.s4 1966171168
      %v4826 = vunpack.c.0.s8 %v4825
      %v4827 = vlaneseq
      %v4828 = vshrl.u32 %v4827, 7
      %v4829 = vsub.s32 %v4826, %v4828
      %v4830 = vrot.slane %v4802, %v4829
      %v4831 = vcombine.high %v4809, %v4809
      %v4832 = vcombine.high %v4816, %v4816
      %v4833 = vcombine.high %v4823, %v4823
      %v4834 = vcombine.high %v4830, %v4830
      %v4835 = vcombine.high %v3477, %v3477
      %v4837 = vunpack.c.l.s4 1966171168
      %v4838 = vunpack.c.0.s8 %v4837
      %v4839 = vlaneseq
      %v4840 = vshrl.u32 %v4839, 7
      %v4841 = vsub.s32 %v4838, %v4840
      %v4842 = vrot.slane %v3477, %v4841
      %v4844 = vunpack.c.l.s4 1966171168
      %v4845 = vunpack.c.0.s8 %v4844
      %v4846 = vlaneseq
      %v4847 = vshrl.u32 %v4846, 7
      %v4848 = vsub.s32 %v4845, %v4847
      %v4849 = vrot.slane %v4835, %v4848
      %v4850 = vcombine.high %v4842, %v4842
      %v4851 = vcombine.high %v4849, %v4849
      %v4853 = vunpack.c.l.s4 1966171168
      %v4854 = vunpack.c.0.s8 %v4853
      %v4855 = vlaneseq
      %v4856 = vshrl.u32 %v4855, 7
      %v4857 = vsub.s32 %v4854, %v4856
      %v4858 = vrot.slane %v4842, %v4857
      %v4860 = vunpack.c.l.s4 1966171168
      %v4861 = vunpack.c.0.s8 %v4860
      %v4862 = vlaneseq
      %v4863 = vshrl.u32 %v4862, 7
      %v4864 = vsub.s32 %v4861, %v4863
      %v4865 = vrot.slane %v4849, %v4864
      %v4867 = vunpack.c.l.s4 1966171168
      %v4868 = vunpack.c.0.s8 %v4867
      %v4869 = vlaneseq
      %v4870 = vshrl.u32 %v4869, 7
      %v4871 = vsub.s32 %v4868, %v4870
      %v4872 = vrot.slane %v4850, %v4871
      %v4874 = vunpack.c.l.s4 1966171168
      %v4875 = vunpack.c.0.s8 %v4874
      %v4876 = vlaneseq
      %v4877 = vshrl.u32 %v4876, 7
      %v4878 = vsub.s32 %v4875, %v4877
      %v4879 = vrot.slane %v4851, %v4878
      %v4880 = vcombine.high %v4858, %v4858
      %v4881 = vcombine.high %v4865, %v4865
      %v4882 = vcombine.high %v4872, %v4872
      %v4883 = vcombine.high %v4879, %v4879
      %v4885 = vunpack.c.l.s4 1966171168
      %v4886 = vunpack.c.0.s8 %v4885
      %v4887 = vlaneseq
      %v4888 = vshrl.u32 %v4887, 7
      %v4889 = vsub.s32 %v4886, %v4888
      %v4890 = vrot.slane %v3478, %v4889
      %v4891 = vcombine.high %v4890, %v4890
      %v4893 = vunpack.c.l.s4 1966171168
      %v4894 = vunpack.c.0.s8 %v4893
      %v4895 = vlaneseq
      %v4896 = vshrl.u32 %v4895, 7
      %v4897 = vsub.s32 %v4894, %v4896
      %v4898 = vrot.slane %v4890, %v4897
      %v4900 = vunpack.c.l.s4 1966171168
      %v4901 = vunpack.c.0.s8 %v4900
      %v4902 = vlaneseq
      %v4903 = vshrl.u32 %v4902, 7
      %v4904 = vsub.s32 %v4901, %v4903
      %v4905 = vrot.slane %v4891, %v4904
      %v4906 = vcombine.high %v4898, %v4898
      %v4907 = vcombine.high %v4905, %v4905
      %v4908 = vcombine.high %v3479, %v3479
      %v4910 = vunpack.c.l.s4 1966171168
      %v4911 = vunpack.c.0.s8 %v4910
      %v4912 = vlaneseq
      %v4913 = vshrl.u32 %v4912, 7
      %v4914 = vsub.s32 %v4911, %v4913
      %v4915 = vrot.slane %v3479, %v4914
      %v4917 = vunpack.c.l.s4 1966171168
      %v4918 = vunpack.c.0.s8 %v4917
      %v4919 = vlaneseq
      %v4920 = vshrl.u32 %v4919, 7
      %v4921 = vsub.s32 %v4918, %v4920
      %v4922 = vrot.slane %v4908, %v4921
      %v4923 = vcombine.high %v4915, %v4915
      %v4924 = vcombine.high %v4922, %v4922
      %v4926 = vunpack.c.l.s4 1966171168
      %v4927 = vunpack.c.0.s8 %v4926
      %v4928 = vlaneseq
      %v4929 = vshrl.u32 %v4928, 7
      %v4930 = vsub.s32 %v4927, %v4929
      %v4931 = vrot.slane %v4915, %v4930
      %v4933 = vunpack.c.l.s4 1966171168
      %v4934 = vunpack.c.0.s8 %v4933
      %v4935 = vlaneseq
      %v4936 = vshrl.u32 %v4935, 7
      %v4937 = vsub.s32 %v4934, %v4936
      %v4938 = vrot.slane %v4922, %v4937
      %v4940 = vunpack.c.l.s4 1966171168
      %v4941 = vunpack.c.0.s8 %v4940
      %v4942 = vlaneseq
      %v4943 = vshrl.u32 %v4942, 7
      %v4944 = vsub.s32 %v4941, %v4943
      %v4945 = vrot.slane %v4923, %v4944
      %v4947 = vunpack.c.l.s4 1966171168
      %v4948 = vunpack.c.0.s8 %v4947
      %v4949 = vlaneseq
      %v4950 = vshrl.u32 %v4949, 7
      %v4951 = vsub.s32 %v4948, %v4950
      %v4952 = vrot.slane %v4924, %v4951
      %v4953 = vcombine.high %v4931, %v4931
      %v4954 = vcombine.high %v4938, %v4938
      %v4955 = vcombine.high %v4945, %v4945
      %v4956 = vcombine.high %v4952, %v4952
      %v4957 = vcombine.high %v3480, %v3480
      %v4959 = vunpack.c.l.s4 1966171168
      %v4960 = vunpack.c.0.s8 %v4959
      %v4961 = vlaneseq
      %v4962 = vshrl.u32 %v4961, 7
      %v4963 = vsub.s32 %v4960, %v4962
      %v4964 = vrot.slane %v3480, %v4963
      %v4966 = vunpack.c.l.s4 1966171168
      %v4967 = vunpack.c.0.s8 %v4966
      %v4968 = vlaneseq
      %v4969 = vshrl.u32 %v4968, 7
      %v4970 = vsub.s32 %v4967, %v4969
      %v4971 = vrot.slane %v4957, %v4970
      %v4972 = vcombine.high %v4964, %v4964
      %v4973 = vcombine.high %v4971, %v4971
      %v4975 = vunpack.c.l.s4 1966171168
      %v4976 = vunpack.c.0.s8 %v4975
      %v4977 = vlaneseq
      %v4978 = vshrl.u32 %v4977, 7
      %v4979 = vsub.s32 %v4976, %v4978
      %v4980 = vrot.slane %v4964, %v4979
      %v4982 = vunpack.c.l.s4 1966171168
      %v4983 = vunpack.c.0.s8 %v4982
      %v4984 = vlaneseq
      %v4985 = vshrl.u32 %v4984, 7
      %v4986 = vsub.s32 %v4983, %v4985
      %v4987 = vrot.slane %v4971, %v4986
      %v4989 = vunpack.c.l.s4 1966171168
      %v4990 = vunpack.c.0.s8 %v4989
      %v4991 = vlaneseq
      %v4992 = vshrl.u32 %v4991, 7
      %v4993 = vsub.s32 %v4990, %v4992
      %v4994 = vrot.slane %v4972, %v4993
      %v4996 = vunpack.c.l.s4 1966171168
      %v4997 = vunpack.c.0.s8 %v4996
      %v4998 = vlaneseq
      %v4999 = vshrl.u32 %v4998, 7
      %v5000 = vsub.s32 %v4997, %v4999
      %v5001 = vrot.slane %v4973, %v5000
      %v5002 = vcombine.high %v4980, %v4980
      %v5003 = vcombine.high %v4987, %v4987
      %v5004 = vcombine.high %v4994, %v4994
      %v5005 = vcombine.high %v5001, %v5001
      %v5007 = vunpack.c.l.s4 1966171168
      %v5008 = vunpack.c.0.s8 %v5007
      %v5009 = vlaneseq
      %v5010 = vshrl.u32 %v5009, 7
      %v5011 = vsub.s32 %v5008, %v5010
      %v5012 = vrot.slane %v3481, %v5011
      %v5013 = vcombine.high %v5012, %v5012
      %v5015 = vunpack.c.l.s4 1966171168
      %v5016 = vunpack.c.0.s8 %v5015
      %v5017 = vlaneseq
      %v5018 = vshrl.u32 %v5017, 7
      %v5019 = vsub.s32 %v5016, %v5018
      %v5020 = vrot.slane %v5012, %v5019
      %v5022 = vunpack.c.l.s4 1966171168
      %v5023 = vunpack.c.0.s8 %v5022
      %v5024 = vlaneseq
      %v5025 = vshrl.u32 %v5024, 7
      %v5026 = vsub.s32 %v5023, %v5025
      %v5027 = vrot.slane %v5013, %v5026
      %v5028 = vcombine.high %v5020, %v5020
      %v5029 = vcombine.high %v5027, %v5027
      %v5030 = vcombine.high %v3482, %v3482
      %v5032 = vunpack.c.l.s4 1966171168
      %v5033 = vunpack.c.0.s8 %v5032
      %v5034 = vlaneseq
      %v5035 = vshrl.u32 %v5034, 7
      %v5036 = vsub.s32 %v5033, %v5035
      %v5037 = vrot.slane %v3482, %v5036
      %v5039 = vunpack.c.l.s4 1966171168
      %v5040 = vunpack.c.0.s8 %v5039
      %v5041 = vlaneseq
      %v5042 = vshrl.u32 %v5041, 7
      %v5043 = vsub.s32 %v5040, %v5042
      %v5044 = vrot.slane %v5030, %v5043
      %v5045 = vcombine.high %v5037, %v5037
      %v5046 = vcombine.high %v5044, %v5044
      %v5048 = vunpack.c.l.s4 1966171168
      %v5049 = vunpack.c.0.s8 %v5048
      %v5050 = vlaneseq
      %v5051 = vshrl.u32 %v5050, 7
      %v5052 = vsub.s32 %v5049, %v5051
      %v5053 = vrot.slane %v5037, %v5052
      %v5055 = vunpack.c.l.s4 1966171168
      %v5056 = vunpack.c.0.s8 %v5055
      %v5057 = vlaneseq
      %v5058 = vshrl.u32 %v5057, 7
      %v5059 = vsub.s32 %v5056, %v5058
      %v5060 = vrot.slane %v5044, %v5059
      %v5062 = vunpack.c.l.s4 1966171168
      %v5063 = vunpack.c.0.s8 %v5062
      %v5064 = vlaneseq
      %v5065 = vshrl.u32 %v5064, 7
      %v5066 = vsub.s32 %v5063, %v5065
      %v5067 = vrot.slane %v5045, %v5066
      %v5069 = vunpack.c.l.s4 1966171168
      %v5070 = vunpack.c.0.s8 %v5069
      %v5071 = vlaneseq
      %v5072 = vshrl.u32 %v5071, 7
      %v5073 = vsub.s32 %v5070, %v5072
      %v5074 = vrot.slane %v5046, %v5073
      %v5075 = vcombine.high %v5053, %v5053
      %v5076 = vcombine.high %v5060, %v5060
      %v5077 = vcombine.high %v5067, %v5067
      %v5078 = vcombine.high %v5074, %v5074
      %v5079 = vcombine.high %v3483, %v3483
      %v5081 = vunpack.c.l.s4 1966171168
      %v5082 = vunpack.c.0.s8 %v5081
      %v5083 = vlaneseq
      %v5084 = vshrl.u32 %v5083, 7
      %v5085 = vsub.s32 %v5082, %v5084
      %v5086 = vrot.slane %v3483, %v5085
      %v5088 = vunpack.c.l.s4 1966171168
      %v5089 = vunpack.c.0.s8 %v5088
      %v5090 = vlaneseq
      %v5091 = vshrl.u32 %v5090, 7
      %v5092 = vsub.s32 %v5089, %v5091
      %v5093 = vrot.slane %v5079, %v5092
      %v5094 = vcombine.high %v5086, %v5086
      %v5095 = vcombine.high %v5093, %v5093
      %v5097 = vunpack.c.l.s4 1966171168
      %v5098 = vunpack.c.0.s8 %v5097
      %v5099 = vlaneseq
      %v5100 = vshrl.u32 %v5099, 7
      %v5101 = vsub.s32 %v5098, %v5100
      %v5102 = vrot.slane %v5086, %v5101
      %v5104 = vunpack.c.l.s4 1966171168
      %v5105 = vunpack.c.0.s8 %v5104
      %v5106 = vlaneseq
      %v5107 = vshrl.u32 %v5106, 7
      %v5108 = vsub.s32 %v5105, %v5107
      %v5109 = vrot.slane %v5093, %v5108
      %v5111 = vunpack.c.l.s4 1966171168
      %v5112 = vunpack.c.0.s8 %v5111
      %v5113 = vlaneseq
      %v5114 = vshrl.u32 %v5113, 7
      %v5115 = vsub.s32 %v5112, %v5114
      %v5116 = vrot.slane %v5094, %v5115
      %v5118 = vunpack.c.l.s4 1966171168
      %v5119 = vunpack.c.0.s8 %v5118
      %v5120 = vlaneseq
      %v5121 = vshrl.u32 %v5120, 7
      %v5122 = vsub.s32 %v5119, %v5121
      %v5123 = vrot.slane %v5095, %v5122
      %v5124 = vcombine.high %v5102, %v5102
      %v5125 = vcombine.high %v5109, %v5109
      %v5126 = vcombine.high %v5116, %v5116
      %v5127 = vcombine.high %v5123, %v5123
      %v5129 = vunpack.c.l.s4 1966171168
      %v5130 = vunpack.c.0.s8 %v5129
      %v5131 = vlaneseq
      %v5132 = vshrl.u32 %v5131, 7
      %v5133 = vsub.s32 %v5130, %v5132
      %v5134 = vrot.slane %v3484, %v5133
      %v5135 = vcombine.high %v5134, %v5134
      %v5137 = vunpack.c.l.s4 1966171168
      %v5138 = vunpack.c.0.s8 %v5137
      %v5139 = vlaneseq
      %v5140 = vshrl.u32 %v5139, 7
      %v5141 = vsub.s32 %v5138, %v5140
      %v5142 = vrot.slane %v5134, %v5141
      %v5144 = vunpack.c.l.s4 1966171168
      %v5145 = vunpack.c.0.s8 %v5144
      %v5146 = vlaneseq
      %v5147 = vshrl.u32 %v5146, 7
      %v5148 = vsub.s32 %v5145, %v5147
      %v5149 = vrot.slane %v5135, %v5148
      %v5150 = vcombine.high %v5142, %v5142
      %v5151 = vcombine.high %v5149, %v5149
      %v5152 = vcombine.high %v3485, %v3485
      %v5154 = vunpack.c.l.s4 1966171168
      %v5155 = vunpack.c.0.s8 %v5154
      %v5156 = vlaneseq
      %v5157 = vshrl.u32 %v5156, 7
      %v5158 = vsub.s32 %v5155, %v5157
      %v5159 = vrot.slane %v3485, %v5158
      %v5161 = vunpack.c.l.s4 1966171168
      %v5162 = vunpack.c.0.s8 %v5161
      %v5163 = vlaneseq
      %v5164 = vshrl.u32 %v5163, 7
      %v5165 = vsub.s32 %v5162, %v5164
      %v5166 = vrot.slane %v5152, %v5165
      %v5167 = vcombine.high %v5159, %v5159
      %v5168 = vcombine.high %v5166, %v5166
      %v5170 = vunpack.c.l.s4 1966171168
      %v5171 = vunpack.c.0.s8 %v5170
      %v5172 = vlaneseq
      %v5173 = vshrl.u32 %v5172, 7
      %v5174 = vsub.s32 %v5171, %v5173
      %v5175 = vrot.slane %v5159, %v5174
      %v5177 = vunpack.c.l.s4 1966171168
      %v5178 = vunpack.c.0.s8 %v5177
      %v5179 = vlaneseq
      %v5180 = vshrl.u32 %v5179, 7
      %v5181 = vsub.s32 %v5178, %v5180
      %v5182 = vrot.slane %v5166, %v5181
      %v5184 = vunpack.c.l.s4 1966171168
      %v5185 = vunpack.c.0.s8 %v5184
      %v5186 = vlaneseq
      %v5187 = vshrl.u32 %v5186, 7
      %v5188 = vsub.s32 %v5185, %v5187
      %v5189 = vrot.slane %v5167, %v5188
      %v5191 = vunpack.c.l.s4 1966171168
      %v5192 = vunpack.c.0.s8 %v5191
      %v5193 = vlaneseq
      %v5194 = vshrl.u32 %v5193, 7
      %v5195 = vsub.s32 %v5192, %v5194
      %v5196 = vrot.slane %v5168, %v5195
      %v5197 = vcombine.high %v5175, %v5175
      %v5198 = vcombine.high %v5182, %v5182
      %v5199 = vcombine.high %v5189, %v5189
      %v5200 = vcombine.high %v5196, %v5196
      %v5201 = vcombine.high %v3486, %v3486
      %v5203 = vunpack.c.l.s4 1966171168
      %v5204 = vunpack.c.0.s8 %v5203
      %v5205 = vlaneseq
      %v5206 = vshrl.u32 %v5205, 7
      %v5207 = vsub.s32 %v5204, %v5206
      %v5208 = vrot.slane %v3486, %v5207
      %v5210 = vunpack.c.l.s4 1966171168
      %v5211 = vunpack.c.0.s8 %v5210
      %v5212 = vlaneseq
      %v5213 = vshrl.u32 %v5212, 7
      %v5214 = vsub.s32 %v5211, %v5213
      %v5215 = vrot.slane %v5201, %v5214
      %v5216 = vcombine.high %v5208, %v5208
      %v5217 = vcombine.high %v5215, %v5215
      %v5219 = vunpack.c.l.s4 1966171168
      %v5220 = vunpack.c.0.s8 %v5219
      %v5221 = vlaneseq
      %v5222 = vshrl.u32 %v5221, 7
      %v5223 = vsub.s32 %v5220, %v5222
      %v5224 = vrot.slane %v5208, %v5223
      %v5226 = vunpack.c.l.s4 1966171168
      %v5227 = vunpack.c.0.s8 %v5226
      %v5228 = vlaneseq
      %v5229 = vshrl.u32 %v5228, 7
      %v5230 = vsub.s32 %v5227, %v5229
      %v5231 = vrot.slane %v5215, %v5230
      %v5233 = vunpack.c.l.s4 1966171168
      %v5234 = vunpack.c.0.s8 %v5233
      %v5235 = vlaneseq
      %v5236 = vshrl.u32 %v5235, 7
      %v5237 = vsub.s32 %v5234, %v5236
      %v5238 = vrot.slane %v5216, %v5237
      %v5240 = vunpack.c.l.s4 1966171168
      %v5241 = vunpack.c.0.s8 %v5240
      %v5242 = vlaneseq
      %v5243 = vshrl.u32 %v5242, 7
      %v5244 = vsub.s32 %v5241, %v5243
      %v5245 = vrot.slane %v5217, %v5244
      %v5246 = vcombine.high %v5224, %v5224
      %v5247 = vcombine.high %v5231, %v5231
      %v5248 = vcombine.high %v5238, %v5238
      %v5249 = vcombine.high %v5245, %v5245
      %v5251 = vunpack.c.l.s4 1966171168
      %v5252 = vunpack.c.0.s8 %v5251
      %v5253 = vlaneseq
      %v5254 = vshrl.u32 %v5253, 7
      %v5255 = vsub.s32 %v5252, %v5254
      %v5256 = vrot.slane %v3487, %v5255
      %v5257 = vcombine.high %v5256, %v5256
      %v5259 = vunpack.c.l.s4 1966171168
      %v5260 = vunpack.c.0.s8 %v5259
      %v5261 = vlaneseq
      %v5262 = vshrl.u32 %v5261, 7
      %v5263 = vsub.s32 %v5260, %v5262
      %v5264 = vrot.slane %v5256, %v5263
      %v5266 = vunpack.c.l.s4 1966171168
      %v5267 = vunpack.c.0.s8 %v5266
      %v5268 = vlaneseq
      %v5269 = vshrl.u32 %v5268, 7
      %v5270 = vsub.s32 %v5267, %v5269
      %v5271 = vrot.slane %v5257, %v5270
      %v5272 = vcombine.high %v5264, %v5264
      %v5273 = vcombine.high %v5271, %v5271
      %v5274 = vcombine.high %v3488, %v3488
      %v5276 = vunpack.c.l.s4 1966171168
      %v5277 = vunpack.c.0.s8 %v5276
      %v5278 = vlaneseq
      %v5279 = vshrl.u32 %v5278, 7
      %v5280 = vsub.s32 %v5277, %v5279
      %v5281 = vrot.slane %v3488, %v5280
      %v5283 = vunpack.c.l.s4 1966171168
      %v5284 = vunpack.c.0.s8 %v5283
      %v5285 = vlaneseq
      %v5286 = vshrl.u32 %v5285, 7
      %v5287 = vsub.s32 %v5284, %v5286
      %v5288 = vrot.slane %v5274, %v5287
      %v5289 = vcombine.high %v5281, %v5281
      %v5290 = vcombine.high %v5288, %v5288
      %v5292 = vunpack.c.l.s4 1966171168
      %v5293 = vunpack.c.0.s8 %v5292
      %v5294 = vlaneseq
      %v5295 = vshrl.u32 %v5294, 7
      %v5296 = vsub.s32 %v5293, %v5295
      %v5297 = vrot.slane %v5281, %v5296
      %v5299 = vunpack.c.l.s4 1966171168
      %v5300 = vunpack.c.0.s8 %v5299
      %v5301 = vlaneseq
      %v5302 = vshrl.u32 %v5301, 7
      %v5303 = vsub.s32 %v5300, %v5302
      %v5304 = vrot.slane %v5288, %v5303
      %v5306 = vunpack.c.l.s4 1966171168
      %v5307 = vunpack.c.0.s8 %v5306
      %v5308 = vlaneseq
      %v5309 = vshrl.u32 %v5308, 7
      %v5310 = vsub.s32 %v5307, %v5309
      %v5311 = vrot.slane %v5289, %v5310
      %v5313 = vunpack.c.l.s4 1966171168
      %v5314 = vunpack.c.0.s8 %v5313
      %v5315 = vlaneseq
      %v5316 = vshrl.u32 %v5315, 7
      %v5317 = vsub.s32 %v5314, %v5316
      %v5318 = vrot.slane %v5290, %v5317
      %v5319 = vcombine.high %v5297, %v5297
      %v5320 = vcombine.high %v5304, %v5304
      %v5321 = vcombine.high %v5311, %v5311
      %v5322 = vcombine.high %v5318, %v5318
      %v5323 = vcombine.high %v3489, %v3489
      %v5325 = vunpack.c.l.s4 1966171168
      %v5326 = vunpack.c.0.s8 %v5325
      %v5327 = vlaneseq
      %v5328 = vshrl.u32 %v5327, 7
      %v5329 = vsub.s32 %v5326, %v5328
      %v5330 = vrot.slane %v3489, %v5329
      %v5332 = vunpack.c.l.s4 1966171168
      %v5333 = vunpack.c.0.s8 %v5332
      %v5334 = vlaneseq
      %v5335 = vshrl.u32 %v5334, 7
      %v5336 = vsub.s32 %v5333, %v5335
      %v5337 = vrot.slane %v5323, %v5336
      %v5338 = vcombine.high %v5330, %v5330
      %v5339 = vcombine.high %v5337, %v5337
      %v5341 = vunpack.c.l.s4 1966171168
      %v5342 = vunpack.c.0.s8 %v5341
      %v5343 = vlaneseq
      %v5344 = vshrl.u32 %v5343, 7
      %v5345 = vsub.s32 %v5342, %v5344
      %v5346 = vrot.slane %v5330, %v5345
      %v5348 = vunpack.c.l.s4 1966171168
      %v5349 = vunpack.c.0.s8 %v5348
      %v5350 = vlaneseq
      %v5351 = vshrl.u32 %v5350, 7
      %v5352 = vsub.s32 %v5349, %v5351
      %v5353 = vrot.slane %v5337, %v5352
      %v5355 = vunpack.c.l.s4 1966171168
      %v5356 = vunpack.c.0.s8 %v5355
      %v5357 = vlaneseq
      %v5358 = vshrl.u32 %v5357, 7
      %v5359 = vsub.s32 %v5356, %v5358
      %v5360 = vrot.slane %v5338, %v5359
      %v5362 = vunpack.c.l.s4 1966171168
      %v5363 = vunpack.c.0.s8 %v5362
      %v5364 = vlaneseq
      %v5365 = vshrl.u32 %v5364, 7
      %v5366 = vsub.s32 %v5363, %v5365
      %v5367 = vrot.slane %v5339, %v5366
      %v5368 = vcombine.high %v5346, %v5346
      %v5369 = vcombine.high %v5353, %v5353
      %v5370 = vcombine.high %v5360, %v5360
      %v5371 = vcombine.high %v5367, %v5367
      %v5373 = vunpack.c.l.s4 1966171168
      %v5374 = vunpack.c.0.s8 %v5373
      %v5375 = vlaneseq
      %v5376 = vshrl.u32 %v5375, 7
      %v5377 = vsub.s32 %v5374, %v5376
      %v5378 = vrot.slane %v3490, %v5377
      %v5379 = vcombine.high %v5378, %v5378
      %v5381 = vunpack.c.l.s4 1966171168
      %v5382 = vunpack.c.0.s8 %v5381
      %v5383 = vlaneseq
      %v5384 = vshrl.u32 %v5383, 7
      %v5385 = vsub.s32 %v5382, %v5384
      %v5386 = vrot.slane %v5378, %v5385
      %v5388 = vunpack.c.l.s4 1966171168
      %v5389 = vunpack.c.0.s8 %v5388
      %v5390 = vlaneseq
      %v5391 = vshrl.u32 %v5390, 7
      %v5392 = vsub.s32 %v5389, %v5391
      %v5393 = vrot.slane %v5379, %v5392
      %v5394 = vcombine.high %v5386, %v5386
      %v5395 = vcombine.high %v5393, %v5393
      %v5396 = vcombine.high %v3491, %v3491
      %v5398 = vunpack.c.l.s4 1966171168
      %v5399 = vunpack.c.0.s8 %v5398
      %v5400 = vlaneseq
      %v5401 = vshrl.u32 %v5400, 7
      %v5402 = vsub.s32 %v5399, %v5401
      %v5403 = vrot.slane %v3491, %v5402
      %v5405 = vunpack.c.l.s4 1966171168
      %v5406 = vunpack.c.0.s8 %v5405
      %v5407 = vlaneseq
      %v5408 = vshrl.u32 %v5407, 7
      %v5409 = vsub.s32 %v5406, %v5408
      %v5410 = vrot.slane %v5396, %v5409
      %v5411 = vcombine.high %v5403, %v5403
      %v5412 = vcombine.high %v5410, %v5410
      %v5414 = vunpack.c.l.s4 1966171168
      %v5415 = vunpack.c.0.s8 %v5414
      %v5416 = vlaneseq
      %v5417 = vshrl.u32 %v5416, 7
      %v5418 = vsub.s32 %v5415, %v5417
      %v5419 = vrot.slane %v5403, %v5418
      %v5421 = vunpack.c.l.s4 1966171168
      %v5422 = vunpack.c.0.s8 %v5421
      %v5423 = vlaneseq
      %v5424 = vshrl.u32 %v5423, 7
      %v5425 = vsub.s32 %v5422, %v5424
      %v5426 = vrot.slane %v5410, %v5425
      %v5428 = vunpack.c.l.s4 1966171168
      %v5429 = vunpack.c.0.s8 %v5428
      %v5430 = vlaneseq
      %v5431 = vshrl.u32 %v5430, 7
      %v5432 = vsub.s32 %v5429, %v5431
      %v5433 = vrot.slane %v5411, %v5432
      %v5435 = vunpack.c.l.s4 1966171168
      %v5436 = vunpack.c.0.s8 %v5435
      %v5437 = vlaneseq
      %v5438 = vshrl.u32 %v5437, 7
      %v5439 = vsub.s32 %v5436, %v5438
      %v5440 = vrot.slane %v5412, %v5439
      %v5441 = vcombine.high %v5419, %v5419
      %v5442 = vcombine.high %v5426, %v5426
      %v5443 = vcombine.high %v5433, %v5433
      %v5444 = vcombine.high %v5440, %v5440
      %v5445 = vcombine.high %v3492, %v3492
      %v5447 = vunpack.c.l.s4 1966171168
      %v5448 = vunpack.c.0.s8 %v5447
      %v5449 = vlaneseq
      %v5450 = vshrl.u32 %v5449, 7
      %v5451 = vsub.s32 %v5448, %v5450
      %v5452 = vrot.slane %v3492, %v5451
      %v5454 = vunpack.c.l.s4 1966171168
      %v5455 = vunpack.c.0.s8 %v5454
      %v5456 = vlaneseq
      %v5457 = vshrl.u32 %v5456, 7
      %v5458 = vsub.s32 %v5455, %v5457
      %v5459 = vrot.slane %v5445, %v5458
      %v5460 = vcombine.high %v5452, %v5452
      %v5461 = vcombine.high %v5459, %v5459
      %v5463 = vunpack.c.l.s4 1966171168
      %v5464 = vunpack.c.0.s8 %v5463
      %v5465 = vlaneseq
      %v5466 = vshrl.u32 %v5465, 7
      %v5467 = vsub.s32 %v5464, %v5466
      %v5468 = vrot.slane %v5452, %v5467
      %v5470 = vunpack.c.l.s4 1966171168
      %v5471 = vunpack.c.0.s8 %v5470
      %v5472 = vlaneseq
      %v5473 = vshrl.u32 %v5472, 7
      %v5474 = vsub.s32 %v5471, %v5473
      %v5475 = vrot.slane %v5459, %v5474
      %v5477 = vunpack.c.l.s4 1966171168
      %v5478 = vunpack.c.0.s8 %v5477
      %v5479 = vlaneseq
      %v5480 = vshrl.u32 %v5479, 7
      %v5481 = vsub.s32 %v5478, %v5480
      %v5482 = vrot.slane %v5460, %v5481
      %v5484 = vunpack.c.l.s4 1966171168
      %v5485 = vunpack.c.0.s8 %v5484
      %v5486 = vlaneseq
      %v5487 = vshrl.u32 %v5486, 7
      %v5488 = vsub.s32 %v5485, %v5487
      %v5489 = vrot.slane %v5461, %v5488
      %v5490 = vcombine.high %v5468, %v5468
      %v5491 = vcombine.high %v5475, %v5475
      %v5492 = vcombine.high %v5482, %v5482
      %v5493 = vcombine.high %v5489, %v5489
      %v5495 = vunpack.c.l.s4 1966171168
      %v5496 = vunpack.c.0.s8 %v5495
      %v5497 = vlaneseq
      %v5498 = vshrl.u32 %v5497, 7
      %v5499 = vsub.s32 %v5496, %v5498
      %v5500 = vrot.slane %v3493, %v5499
      %v5501 = vcombine.high %v5500, %v5500
      %v5503 = vunpack.c.l.s4 1966171168
      %v5504 = vunpack.c.0.s8 %v5503
      %v5505 = vlaneseq
      %v5506 = vshrl.u32 %v5505, 7
      %v5507 = vsub.s32 %v5504, %v5506
      %v5508 = vrot.slane %v5500, %v5507
      %v5510 = vunpack.c.l.s4 1966171168
      %v5511 = vunpack.c.0.s8 %v5510
      %v5512 = vlaneseq
      %v5513 = vshrl.u32 %v5512, 7
      %v5514 = vsub.s32 %v5511, %v5513
      %v5515 = vrot.slane %v5501, %v5514
      %v5516 = vcombine.high %v5508, %v5508
      %v5517 = vcombine.high %v5515, %v5515
      %v5518 = vcombine.high %v3494, %v3494
      %v5520 = vunpack.c.l.s4 1966171168
      %v5521 = vunpack.c.0.s8 %v5520
      %v5522 = vlaneseq
      %v5523 = vshrl.u32 %v5522, 7
      %v5524 = vsub.s32 %v5521, %v5523
      %v5525 = vrot.slane %v3494, %v5524
      %v5527 = vunpack.c.l.s4 1966171168
      %v5528 = vunpack.c.0.s8 %v5527
      %v5529 = vlaneseq
      %v5530 = vshrl.u32 %v5529, 7
      %v5531 = vsub.s32 %v5528, %v5530
      %v5532 = vrot.slane %v5518, %v5531
      %v5533 = vcombine.high %v5525, %v5525
      %v5534 = vcombine.high %v5532, %v5532
      %v5536 = vunpack.c.l.s4 1966171168
      %v5537 = vunpack.c.0.s8 %v5536
      %v5538 = vlaneseq
      %v5539 = vshrl.u32 %v5538, 7
      %v5540 = vsub.s32 %v5537, %v5539
      %v5541 = vrot.slane %v5525, %v5540
      %v5543 = vunpack.c.l.s4 1966171168
      %v5544 = vunpack.c.0.s8 %v5543
      %v5545 = vlaneseq
      %v5546 = vshrl.u32 %v5545, 7
      %v5547 = vsub.s32 %v5544, %v5546
      %v5548 = vrot.slane %v5532, %v5547
      %v5550 = vunpack.c.l.s4 1966171168
      %v5551 = vunpack.c.0.s8 %v5550
      %v5552 = vlaneseq
      %v5553 = vshrl.u32 %v5552, 7
      %v5554 = vsub.s32 %v5551, %v5553
      %v5555 = vrot.slane %v5533, %v5554
      %v5557 = vunpack.c.l.s4 1966171168
      %v5558 = vunpack.c.0.s8 %v5557
      %v5559 = vlaneseq
      %v5560 = vshrl.u32 %v5559, 7
      %v5561 = vsub.s32 %v5558, %v5560
      %v5562 = vrot.slane %v5534, %v5561
      %v5563 = vcombine.high %v5541, %v5541
      %v5564 = vcombine.high %v5548, %v5548
      %v5565 = vcombine.high %v5555, %v5555
      %v5566 = vcombine.high %v5562, %v5562
      %v5567 = vcombine.high %v3495, %v3495
      %v5569 = vunpack.c.l.s4 1966171168
      %v5570 = vunpack.c.0.s8 %v5569
      %v5571 = vlaneseq
      %v5572 = vshrl.u32 %v5571, 7
      %v5573 = vsub.s32 %v5570, %v5572
      %v5574 = vrot.slane %v3495, %v5573
      %v5576 = vunpack.c.l.s4 1966171168
      %v5577 = vunpack.c.0.s8 %v5576
      %v5578 = vlaneseq
      %v5579 = vshrl.u32 %v5578, 7
      %v5580 = vsub.s32 %v5577, %v5579
      %v5581 = vrot.slane %v5567, %v5580
      %v5582 = vcombine.high %v5574, %v5574
      %v5583 = vcombine.high %v5581, %v5581
      %v5585 = vunpack.c.l.s4 1966171168
      %v5586 = vunpack.c.0.s8 %v5585
      %v5587 = vlaneseq
      %v5588 = vshrl.u32 %v5587, 7
      %v5589 = vsub.s32 %v5586, %v5588
      %v5590 = vrot.slane %v5574, %v5589
      %v5592 = vunpack.c.l.s4 1966171168
      %v5593 = vunpack.c.0.s8 %v5592
      %v5594 = vlaneseq
      %v5595 = vshrl.u32 %v5594, 7
      %v5596 = vsub.s32 %v5593, %v5595
      %v5597 = vrot.slane %v5581, %v5596
      %v5599 = vunpack.c.l.s4 1966171168
      %v5600 = vunpack.c.0.s8 %v5599
      %v5601 = vlaneseq
      %v5602 = vshrl.u32 %v5601, 7
      %v5603 = vsub.s32 %v5600, %v5602
      %v5604 = vrot.slane %v5582, %v5603
      %v5606 = vunpack.c.l.s4 1966171168
      %v5607 = vunpack.c.0.s8 %v5606
      %v5608 = vlaneseq
      %v5609 = vshrl.u32 %v5608, 7
      %v5610 = vsub.s32 %v5607, %v5609
      %v5611 = vrot.slane %v5583, %v5610
      %v5612 = vcombine.high %v5590, %v5590
      %v5613 = vcombine.high %v5597, %v5597
      %v5614 = vcombine.high %v5604, %v5604
      %v5615 = vcombine.high %v5611, %v5611
      %v5617 = vunpack.c.l.s4 1966171168
      %v5618 = vunpack.c.0.s8 %v5617
      %v5619 = vlaneseq
      %v5620 = vshrl.u32 %v5619, 7
      %v5621 = vsub.s32 %v5618, %v5620
      %v5622 = vrot.slane %v3496, %v5621
      %v5623 = vcombine.high %v5622, %v5622
      %v5625 = vunpack.c.l.s4 1966171168
      %v5626 = vunpack.c.0.s8 %v5625
      %v5627 = vlaneseq
      %v5628 = vshrl.u32 %v5627, 7
      %v5629 = vsub.s32 %v5626, %v5628
      %v5630 = vrot.slane %v5622, %v5629
      %v5632 = vunpack.c.l.s4 1966171168
      %v5633 = vunpack.c.0.s8 %v5632
      %v5634 = vlaneseq
      %v5635 = vshrl.u32 %v5634, 7
      %v5636 = vsub.s32 %v5633, %v5635
      %v5637 = vrot.slane %v5623, %v5636
      %v5638 = vcombine.high %v5630, %v5630
      %v5639 = vcombine.high %v5637, %v5637
      %v5640 = vcombine.high %v3497, %v3497
      %v5642 = vunpack.c.l.s4 1966171168
      %v5643 = vunpack.c.0.s8 %v5642
      %v5644 = vlaneseq
      %v5645 = vshrl.u32 %v5644, 7
      %v5646 = vsub.s32 %v5643, %v5645
      %v5647 = vrot.slane %v3497, %v5646
      %v5649 = vunpack.c.l.s4 1966171168
      %v5650 = vunpack.c.0.s8 %v5649
      %v5651 = vlaneseq
      %v5652 = vshrl.u32 %v5651, 7
      %v5653 = vsub.s32 %v5650, %v5652
      %v5654 = vrot.slane %v5640, %v5653
      %v5655 = vcombine.high %v5647, %v5647
      %v5656 = vcombine.high %v5654, %v5654
      %v5658 = vunpack.c.l.s4 1966171168
      %v5659 = vunpack.c.0.s8 %v5658
      %v5660 = vlaneseq
      %v5661 = vshrl.u32 %v5660, 7
      %v5662 = vsub.s32 %v5659, %v5661
      %v5663 = vrot.slane %v5647, %v5662
      %v5665 = vunpack.c.l.s4 1966171168
      %v5666 = vunpack.c.0.s8 %v5665
      %v5667 = vlaneseq
      %v5668 = vshrl.u32 %v5667, 7
      %v5669 = vsub.s32 %v5666, %v5668
      %v5670 = vrot.slane %v5654, %v5669
      %v5672 = vunpack.c.l.s4 1966171168
      %v5673 = vunpack.c.0.s8 %v5672
      %v5674 = vlaneseq
      %v5675 = vshrl.u32 %v5674, 7
      %v5676 = vsub.s32 %v5673, %v5675
      %v5677 = vrot.slane %v5655, %v5676
      %v5679 = vunpack.c.l.s4 1966171168
      %v5680 = vunpack.c.0.s8 %v5679
      %v5681 = vlaneseq
      %v5682 = vshrl.u32 %v5681, 7
      %v5683 = vsub.s32 %v5680, %v5682
      %v5684 = vrot.slane %v5656, %v5683
      %v5685 = vcombine.high %v5663, %v5663
      %v5686 = vcombine.high %v5670, %v5670
      %v5687 = vcombine.high %v5677, %v5677
      %v5688 = vcombine.high %v5684, %v5684
      %v5689 = vcombine.high %v3498, %v3498
      %v5691 = vunpack.c.l.s4 1966171168
      %v5692 = vunpack.c.0.s8 %v5691
      %v5693 = vlaneseq
      %v5694 = vshrl.u32 %v5693, 7
      %v5695 = vsub.s32 %v5692, %v5694
      %v5696 = vrot.slane %v3498, %v5695
      %v5698 = vunpack.c.l.s4 1966171168
      %v5699 = vunpack.c.0.s8 %v5698
      %v5700 = vlaneseq
      %v5701 = vshrl.u32 %v5700, 7
      %v5702 = vsub.s32 %v5699, %v5701
      %v5703 = vrot.slane %v5689, %v5702
      %v5704 = vcombine.high %v5696, %v5696
      %v5705 = vcombine.high %v5703, %v5703
      %v5707 = vunpack.c.l.s4 1966171168
      %v5708 = vunpack.c.0.s8 %v5707
      %v5709 = vlaneseq
      %v5710 = vshrl.u32 %v5709, 7
      %v5711 = vsub.s32 %v5708, %v5710
      %v5712 = vrot.slane %v5696, %v5711
      %v5714 = vunpack.c.l.s4 1966171168
      %v5715 = vunpack.c.0.s8 %v5714
      %v5716 = vlaneseq
      %v5717 = vshrl.u32 %v5716, 7
      %v5718 = vsub.s32 %v5715, %v5717
      %v5719 = vrot.slane %v5703, %v5718
      %v5721 = vunpack.c.l.s4 1966171168
      %v5722 = vunpack.c.0.s8 %v5721
      %v5723 = vlaneseq
      %v5724 = vshrl.u32 %v5723, 7
      %v5725 = vsub.s32 %v5722, %v5724
      %v5726 = vrot.slane %v5704, %v5725
      %v5728 = vunpack.c.l.s4 1966171168
      %v5729 = vunpack.c.0.s8 %v5728
      %v5730 = vlaneseq
      %v5731 = vshrl.u32 %v5730, 7
      %v5732 = vsub.s32 %v5729, %v5731
      %v5733 = vrot.slane %v5705, %v5732
      %v5734 = vcombine.high %v5712, %v5712
      %v5735 = vcombine.high %v5719, %v5719
      %v5736 = vcombine.high %v5726, %v5726
      %v5737 = vcombine.high %v5733, %v5733
      %v5739 = vunpack.c.l.s4 1966171168
      %v5740 = vunpack.c.0.s8 %v5739
      %v5741 = vlaneseq
      %v5742 = vshrl.u32 %v5741, 7
      %v5743 = vsub.s32 %v5740, %v5742
      %v5744 = vrot.slane %v3499, %v5743
      %v5745 = vcombine.high %v5744, %v5744
      %v5747 = vunpack.c.l.s4 1966171168
      %v5748 = vunpack.c.0.s8 %v5747
      %v5749 = vlaneseq
      %v5750 = vshrl.u32 %v5749, 7
      %v5751 = vsub.s32 %v5748, %v5750
      %v5752 = vrot.slane %v5744, %v5751
      %v5754 = vunpack.c.l.s4 1966171168
      %v5755 = vunpack.c.0.s8 %v5754
      %v5756 = vlaneseq
      %v5757 = vshrl.u32 %v5756, 7
      %v5758 = vsub.s32 %v5755, %v5757
      %v5759 = vrot.slane %v5745, %v5758
      %v5760 = vcombine.high %v5752, %v5752
      %v5761 = vcombine.high %v5759, %v5759
      %v5762 = vcombine.high %v3500, %v3500
      %v5764 = vunpack.c.l.s4 1966171168
      %v5765 = vunpack.c.0.s8 %v5764
      %v5766 = vlaneseq
      %v5767 = vshrl.u32 %v5766, 7
      %v5768 = vsub.s32 %v5765, %v5767
      %v5769 = vrot.slane %v3500, %v5768
      %v5771 = vunpack.c.l.s4 1966171168
      %v5772 = vunpack.c.0.s8 %v5771
      %v5773 = vlaneseq
      %v5774 = vshrl.u32 %v5773, 7
      %v5775 = vsub.s32 %v5772, %v5774
      %v5776 = vrot.slane %v5762, %v5775
      %v5777 = vcombine.high %v5769, %v5769
      %v5778 = vcombine.high %v5776, %v5776
      %v5780 = vunpack.c.l.s4 1966171168
      %v5781 = vunpack.c.0.s8 %v5780
      %v5782 = vlaneseq
      %v5783 = vshrl.u32 %v5782, 7
      %v5784 = vsub.s32 %v5781, %v5783
      %v5785 = vrot.slane %v5769, %v5784
      %v5787 = vunpack.c.l.s4 1966171168
      %v5788 = vunpack.c.0.s8 %v5787
      %v5789 = vlaneseq
      %v5790 = vshrl.u32 %v5789, 7
      %v5791 = vsub.s32 %v5788, %v5790
      %v5792 = vrot.slane %v5776, %v5791
      %v5794 = vunpack.c.l.s4 1966171168
      %v5795 = vunpack.c.0.s8 %v5794
      %v5796 = vlaneseq
      %v5797 = vshrl.u32 %v5796, 7
      %v5798 = vsub.s32 %v5795, %v5797
      %v5799 = vrot.slane %v5777, %v5798
      %v5801 = vunpack.c.l.s4 1966171168
      %v5802 = vunpack.c.0.s8 %v5801
      %v5803 = vlaneseq
      %v5804 = vshrl.u32 %v5803, 7
      %v5805 = vsub.s32 %v5802, %v5804
      %v5806 = vrot.slane %v5778, %v5805
      %v5807 = vcombine.high %v5785, %v5785
      %v5808 = vcombine.high %v5792, %v5792
      %v5809 = vcombine.high %v5799, %v5799
      %v5810 = vcombine.high %v5806, %v5806
      %v5811 = vcombine.high %v3501, %v3501
      %v5813 = vunpack.c.l.s4 1966171168
      %v5814 = vunpack.c.0.s8 %v5813
      %v5815 = vlaneseq
      %v5816 = vshrl.u32 %v5815, 7
      %v5817 = vsub.s32 %v5814, %v5816
      %v5818 = vrot.slane %v3501, %v5817
      %v5820 = vunpack.c.l.s4 1966171168
      %v5821 = vunpack.c.0.s8 %v5820
      %v5822 = vlaneseq
      %v5823 = vshrl.u32 %v5822, 7
      %v5824 = vsub.s32 %v5821, %v5823
      %v5825 = vrot.slane %v5811, %v5824
      %v5826 = vcombine.high %v5818, %v5818
      %v5827 = vcombine.high %v5825, %v5825
      %v5829 = vunpack.c.l.s4 1966171168
      %v5830 = vunpack.c.0.s8 %v5829
      %v5831 = vlaneseq
      %v5832 = vshrl.u32 %v5831, 7
      %v5833 = vsub.s32 %v5830, %v5832
      %v5834 = vrot.slane %v5818, %v5833
      %v5836 = vunpack.c.l.s4 1966171168
      %v5837 = vunpack.c.0.s8 %v5836
      %v5838 = vlaneseq
      %v5839 = vshrl.u32 %v5838, 7
      %v5840 = vsub.s32 %v5837, %v5839
      %v5841 = vrot.slane %v5825, %v5840
      %v5843 = vunpack.c.l.s4 1966171168
      %v5844 = vunpack.c.0.s8 %v5843
      %v5845 = vlaneseq
      %v5846 = vshrl.u32 %v5845, 7
      %v5847 = vsub.s32 %v5844, %v5846
      %v5848 = vrot.slane %v5826, %v5847
      %v5850 = vunpack.c.l.s4 1966171168
      %v5851 = vunpack.c.0.s8 %v5850
      %v5852 = vlaneseq
      %v5853 = vshrl.u32 %v5852, 7
      %v5854 = vsub.s32 %v5851, %v5853
      %v5855 = vrot.slane %v5827, %v5854
      %v5856 = vcombine.high %v5834, %v5834
      %v5857 = vcombine.high %v5841, %v5841
      %v5858 = vcombine.high %v5848, %v5848
      %v5859 = vcombine.high %v5855, %v5855
      %v5861 = vunpack.c.l.s4 1966171168
      %v5862 = vunpack.c.0.s8 %v5861
      %v5863 = vlaneseq
      %v5864 = vshrl.u32 %v5863, 7
      %v5865 = vsub.s32 %v5862, %v5864
      %v5866 = vrot.slane %v3502, %v5865
      %v5867 = vcombine.high %v5866, %v5866
      %v5869 = vunpack.c.l.s4 1966171168
      %v5870 = vunpack.c.0.s8 %v5869
      %v5871 = vlaneseq
      %v5872 = vshrl.u32 %v5871, 7
      %v5873 = vsub.s32 %v5870, %v5872
      %v5874 = vrot.slane %v5866, %v5873
      %v5876 = vunpack.c.l.s4 1966171168
      %v5877 = vunpack.c.0.s8 %v5876
      %v5878 = vlaneseq
      %v5879 = vshrl.u32 %v5878, 7
      %v5880 = vsub.s32 %v5877, %v5879
      %v5881 = vrot.slane %v5867, %v5880
      %v5882 = vcombine.high %v5874, %v5874
      %v5883 = vcombine.high %v5881, %v5881
      %v5884 = vcombine.high %v3503, %v3503
      %v5886 = vunpack.c.l.s4 1966171168
      %v5887 = vunpack.c.0.s8 %v5886
      %v5888 = vlaneseq
      %v5889 = vshrl.u32 %v5888, 7
      %v5890 = vsub.s32 %v5887, %v5889
      %v5891 = vrot.slane %v3503, %v5890
      %v5893 = vunpack.c.l.s4 1966171168
      %v5894 = vunpack.c.0.s8 %v5893
      %v5895 = vlaneseq
      %v5896 = vshrl.u32 %v5895, 7
      %v5897 = vsub.s32 %v5894, %v5896
      %v5898 = vrot.slane %v5884, %v5897
      %v5899 = vcombine.high %v5891, %v5891
      %v5900 = vcombine.high %v5898, %v5898
      %v5902 = vunpack.c.l.s4 1966171168
      %v5903 = vunpack.c.0.s8 %v5902
      %v5904 = vlaneseq
      %v5905 = vshrl.u32 %v5904, 7
      %v5906 = vsub.s32 %v5903, %v5905
      %v5907 = vrot.slane %v5891, %v5906
      %v5909 = vunpack.c.l.s4 1966171168
      %v5910 = vunpack.c.0.s8 %v5909
      %v5911 = vlaneseq
      %v5912 = vshrl.u32 %v5911, 7
      %v5913 = vsub.s32 %v5910, %v5912
      %v5914 = vrot.slane %v5898, %v5913
      %v5916 = vunpack.c.l.s4 1966171168
      %v5917 = vunpack.c.0.s8 %v5916
      %v5918 = vlaneseq
      %v5919 = vshrl.u32 %v5918, 7
      %v5920 = vsub.s32 %v5917, %v5919
      %v5921 = vrot.slane %v5899, %v5920
      %v5923 = vunpack.c.l.s4 1966171168
      %v5924 = vunpack.c.0.s8 %v5923
      %v5925 = vlaneseq
      %v5926 = vshrl.u32 %v5925, 7
      %v5927 = vsub.s32 %v5924, %v5926
      %v5928 = vrot.slane %v5900, %v5927
      %v5929 = vcombine.high %v5907, %v5907
      %v5930 = vcombine.high %v5914, %v5914
      %v5931 = vcombine.high %v5921, %v5921
      %v5932 = vcombine.high %v5928, %v5928
      %v5933 = vcombine.high %v3504, %v3504
      %v5935 = vunpack.c.l.s4 1966171168
      %v5936 = vunpack.c.0.s8 %v5935
      %v5937 = vlaneseq
      %v5938 = vshrl.u32 %v5937, 7
      %v5939 = vsub.s32 %v5936, %v5938
      %v5940 = vrot.slane %v3504, %v5939
      %v5942 = vunpack.c.l.s4 1966171168
      %v5943 = vunpack.c.0.s8 %v5942
      %v5944 = vlaneseq
      %v5945 = vshrl.u32 %v5944, 7
      %v5946 = vsub.s32 %v5943, %v5945
      %v5947 = vrot.slane %v5933, %v5946
      %v5948 = vcombine.high %v5940, %v5940
      %v5949 = vcombine.high %v5947, %v5947
      %v5951 = vunpack.c.l.s4 1966171168
      %v5952 = vunpack.c.0.s8 %v5951
      %v5953 = vlaneseq
      %v5954 = vshrl.u32 %v5953, 7
      %v5955 = vsub.s32 %v5952, %v5954
      %v5956 = vrot.slane %v5940, %v5955
      %v5958 = vunpack.c.l.s4 1966171168
      %v5959 = vunpack.c.0.s8 %v5958
      %v5960 = vlaneseq
      %v5961 = vshrl.u32 %v5960, 7
      %v5962 = vsub.s32 %v5959, %v5961
      %v5963 = vrot.slane %v5947, %v5962
      %v5965 = vunpack.c.l.s4 1966171168
      %v5966 = vunpack.c.0.s8 %v5965
      %v5967 = vlaneseq
      %v5968 = vshrl.u32 %v5967, 7
      %v5969 = vsub.s32 %v5966, %v5968
      %v5970 = vrot.slane %v5948, %v5969
      %v5972 = vunpack.c.l.s4 1966171168
      %v5973 = vunpack.c.0.s8 %v5972
      %v5974 = vlaneseq
      %v5975 = vshrl.u32 %v5974, 7
      %v5976 = vsub.s32 %v5973, %v5975
      %v5977 = vrot.slane %v5949, %v5976
      %v5978 = vcombine.high %v5956, %v5956
      %v5979 = vcombine.high %v5963, %v5963
      %v5980 = vcombine.high %v5970, %v5970
      %v5981 = vcombine.high %v5977, %v5977
      %v5983 = vunpack.c.l.s4 1966171168
      %v5984 = vunpack.c.0.s8 %v5983
      %v5985 = vlaneseq
      %v5986 = vshrl.u32 %v5985, 7
      %v5987 = vsub.s32 %v5984, %v5986
      %v5988 = vrot.slane %v3505, %v5987
      %v5989 = vcombine.high %v5988, %v5988
      %v5991 = vunpack.c.l.s4 1966171168
      %v5992 = vunpack.c.0.s8 %v5991
      %v5993 = vlaneseq
      %v5994 = vshrl.u32 %v5993, 7
      %v5995 = vsub.s32 %v5992, %v5994
      %v5996 = vrot.slane %v5988, %v5995
      %v5998 = vunpack.c.l.s4 1966171168
      %v5999 = vunpack.c.0.s8 %v5998
      %v6000 = vlaneseq
      %v6001 = vshrl.u32 %v6000, 7
      %v6002 = vsub.s32 %v5999, %v6001
      %v6003 = vrot.slane %v5989, %v6002
      %v6004 = vcombine.high %v5996, %v5996
      %v6005 = vcombine.high %v6003, %v6003
      %v6006 = vcombine.low %v3589, %v3603
      %v6007 = vcombine.low %v3611, %v3613
      %v6009 = vunpack.c.l.s4 1966171168
      %v6010 = vunpack.c.0.s8 %v6009
      %v6011 = vlaneseq
      %v6012 = vshrl.u32 %v6011, 7
      %v6013 = vsub.s32 %v6010, %v6012
      %v6014 = vrot.slane %v6006, %v6013
      %v6016 = vunpack.c.l.s4 1966171168
      %v6017 = vunpack.c.0.s8 %v6016
      %v6018 = vlaneseq
      %v6019 = vshrl.u32 %v6018, 7
      %v6020 = vsub.s32 %v6017, %v6019
      %v6021 = vrot.slane %v6007, %v6020
      %v6023 = vunpack.c.l.s4 1966171168
      %v6024 = vunpack.c.0.s8 %v6023
      %v6025 = vlaneseq
      %v6026 = vshrl.u32 %v6025, 7
      %v6027 = vsub.s32 %v6024, %v6026
      %v6028 = vrot.slane %v3596, %v6027
      %v6029 = vcombine.low %v6014, %v6021
      %v6031 = vunpack.c.l.s4 1966171168
      %v6032 = vunpack.c.0.s8 %v6031
      %v6033 = vlaneseq
      %v6034 = vshrl.u32 %v6033, 7
      %v6035 = vsub.s32 %v6032, %v6034
      %v6036 = vrot.slane %v6029, %v6035
      %v6038 = vunpack.c.l.s4 1966171168
      %v6039 = vunpack.c.0.s8 %v6038
      %v6040 = vlaneseq
      %v6041 = vshrl.u32 %v6040, 7
      %v6042 = vsub.s32 %v6039, %v6041
      %v6043 = vrot.slane %v6028, %v6042
      %v6044 = vcombine.low %v6036, %v6043
      %v6045 = vcombine.low %v3610, %v3612
      %v6046 = vcombine.low %v3614, %v3638
      %v6048 = vunpack.c.l.s4 1966171168
      %v6049 = vunpack.c.0.s8 %v6048
      %v6050 = vlaneseq
      %v6051 = vshrl.u32 %v6050, 7
      %v6052 = vsub.s32 %v6049, %v6051
      %v6053 = vrot.slane %v6045, %v6052
      %v6055 = vunpack.c.l.s4 1966171168
      %v6056 = vunpack.c.0.s8 %v6055
      %v6057 = vlaneseq
      %v6058 = vshrl.u32 %v6057, 7
      %v6059 = vsub.s32 %v6056, %v6058
      %v6060 = vrot.slane %v6046, %v6059
      %v6062 = vunpack.c.l.s4 1966171168
      %v6063 = vunpack.c.0.s8 %v6062
      %v6064 = vlaneseq
      %v6065 = vshrl.u32 %v6064, 7
      %v6066 = vsub.s32 %v6063, %v6065
      %v6067 = vrot.slane %v3652, %v6066
      %v6068 = vcombine.low %v6053, %v6060
      %v6070 = vunpack.c.l.s4 1966171168
      %v6071 = vunpack.c.0.s8 %v6070
      %v6072 = vlaneseq
      %v6073 = vshrl.u32 %v6072, 7
      %v6074 = vsub.s32 %v6071, %v6073
      %v6075 = vrot.slane %v6068, %v6074
      %v6077 = vunpack.c.l.s4 1966171168
      %v6078 = vunpack.c.0.s8 %v6077
      %v6079 = vlaneseq
      %v6080 = vshrl.u32 %v6079, 7
      %v6081 = vsub.s32 %v6078, %v6080
      %v6082 = vrot.slane %v6067, %v6081
      %v6083 = vcombine.low %v6075, %v6082
      %v6084 = vcombine.low %v3660, %v3662
      %v6085 = vcombine.low %v3645, %v3659
      %v6087 = vunpack.c.l.s4 1966171168
      %v6088 = vunpack.c.0.s8 %v6087
      %v6089 = vlaneseq
      %v6090 = vshrl.u32 %v6089, 7
      %v6091 = vsub.s32 %v6088, %v6090
      %v6092 = vrot.slane %v6084, %v6091
      %v6094 = vunpack.c.l.s4 1966171168
      %v6095 = vunpack.c.0.s8 %v6094
      %v6096 = vlaneseq
      %v6097 = vshrl.u32 %v6096, 7
      %v6098 = vsub.s32 %v6095, %v6097
      %v6099 = vrot.slane %v6085, %v6098
      %v6101 = vunpack.c.l.s4 1966171168
      %v6102 = vunpack.c.0.s8 %v6101
      %v6103 = vlaneseq
      %v6104 = vshrl.u32 %v6103, 7
      %v6105 = vsub.s32 %v6102, %v6104
      %v6106 = vrot.slane %v3661, %v6105
      %v6107 = vcombine.low %v6092, %v6099
      %v6109 = vunpack.c.l.s4 1966171168
      %v6110 = vunpack.c.0.s8 %v6109
      %v6111 = vlaneseq
      %v6112 = vshrl.u32 %v6111, 7
      %v6113 = vsub.s32 %v6110, %v6112
      %v6114 = vrot.slane %v6107, %v6113
      %v6116 = vunpack.c.l.s4 1966171168
      %v6117 = vunpack.c.0.s8 %v6116
      %v6118 = vlaneseq
      %v6119 = vshrl.u32 %v6118, 7
      %v6120 = vsub.s32 %v6117, %v6119
      %v6121 = vrot.slane %v6106, %v6120
      %v6122 = vcombine.low %v6114, %v6121
      %v6123 = vcombine.low %v3663, %v3678
      %v6124 = vcombine.low %v3685, %v3686
      %v6126 = vunpack.c.l.s4 1966171168
      %v6127 = vunpack.c.0.s8 %v6126
      %v6128 = vlaneseq
      %v6129 = vshrl.u32 %v6128, 7
      %v6130 = vsub.s32 %v6127, %v6129
      %v6131 = vrot.slane %v6123, %v6130
      %v6133 = vunpack.c.l.s4 1966171168
      %v6134 = vunpack.c.0.s8 %v6133
      %v6135 = vlaneseq
      %v6136 = vshrl.u32 %v6135, 7
      %v6137 = vsub.s32 %v6134, %v6136
      %v6138 = vrot.slane %v6124, %v6137
      %v6140 = vunpack.c.l.s4 1966171168
      %v6141 = vunpack.c.0.s8 %v6140
      %v6142 = vlaneseq
      %v6143 = vshrl.u32 %v6142, 7
      %v6144 = vsub.s32 %v6141, %v6143
      %v6145 = vrot.slane %v3687, %v6144
      %v6146 = vcombine.low %v6131, %v6138
      %v6148 = vunpack.c.l.s4 1966171168
      %v6149 = vunpack.c.0.s8 %v6148
      %v6150 = vlaneseq
      %v6151 = vshrl.u32 %v6150, 7
      %v6152 = vsub.s32 %v6149, %v6151
      %v6153 = vrot.slane %v6146, %v6152
      %v6155 = vunpack.c.l.s4 1966171168
      %v6156 = vunpack.c.0.s8 %v6155
      %v6157 = vlaneseq
      %v6158 = vshrl.u32 %v6157, 7
      %v6159 = vsub.s32 %v6156, %v6158
      %v6160 = vrot.slane %v6145, %v6159
      %v6161 = vcombine.low %v6153, %v6160
      %v6162 = vcombine.low %v3711, %v3725
      %v6163 = vcombine.low %v3733, %v3735
      %v6165 = vunpack.c.l.s4 1966171168
      %v6166 = vunpack.c.0.s8 %v6165
      %v6167 = vlaneseq
      %v6168 = vshrl.u32 %v6167, 7
      %v6169 = vsub.s32 %v6166, %v6168
      %v6170 = vrot.slane %v6162, %v6169
      %v6172 = vunpack.c.l.s4 1966171168
      %v6173 = vunpack.c.0.s8 %v6172
      %v6174 = vlaneseq
      %v6175 = vshrl.u32 %v6174, 7
      %v6176 = vsub.s32 %v6173, %v6175
      %v6177 = vrot.slane %v6163, %v6176
      %v6179 = vunpack.c.l.s4 1966171168
      %v6180 = vunpack.c.0.s8 %v6179
      %v6181 = vlaneseq
      %v6182 = vshrl.u32 %v6181, 7
      %v6183 = vsub.s32 %v6180, %v6182
      %v6184 = vrot.slane %v3718, %v6183
      %v6185 = vcombine.low %v6170, %v6177
      %v6187 = vunpack.c.l.s4 1966171168
      %v6188 = vunpack.c.0.s8 %v6187
      %v6189 = vlaneseq
      %v6190 = vshrl.u32 %v6189, 7
      %v6191 = vsub.s32 %v6188, %v6190
      %v6192 = vrot.slane %v6185, %v6191
      %v6194 = vunpack.c.l.s4 1966171168
      %v6195 = vunpack.c.0.s8 %v6194
      %v6196 = vlaneseq
      %v6197 = vshrl.u32 %v6196, 7
      %v6198 = vsub.s32 %v6195, %v6197
      %v6199 = vrot.slane %v6184, %v6198
      %v6200 = vcombine.low %v6192, %v6199
      %v6201 = vcombine.low %v3732, %v3734
      %v6202 = vcombine.low %v3736, %v3760
      %v6204 = vunpack.c.l.s4 1966171168
      %v6205 = vunpack.c.0.s8 %v6204
      %v6206 = vlaneseq
      %v6207 = vshrl.u32 %v6206, 7
      %v6208 = vsub.s32 %v6205, %v6207
      %v6209 = vrot.slane %v6201, %v6208
      %v6211 = vunpack.c.l.s4 1966171168
      %v6212 = vunpack.c.0.s8 %v6211
      %v6213 = vlaneseq
      %v6214 = vshrl.u32 %v6213, 7
      %v6215 = vsub.s32 %v6212, %v6214
      %v6216 = vrot.slane %v6202, %v6215
      %v6218 = vunpack.c.l.s4 1966171168
      %v6219 = vunpack.c.0.s8 %v6218
      %v6220 = vlaneseq
      %v6221 = vshrl.u32 %v6220, 7
      %v6222 = vsub.s32 %v6219, %v6221
      %v6223 = vrot.slane %v3774, %v6222
      %v6224 = vcombine.low %v6209, %v6216
      %v6226 = vunpack.c.l.s4 1966171168
      %v6227 = vunpack.c.0.s8 %v6226
      %v6228 = vlaneseq
      %v6229 = vshrl.u32 %v6228, 7
      %v6230 = vsub.s32 %v6227, %v6229
      %v6231 = vrot.slane %v6224, %v6230
      %v6233 = vunpack.c.l.s4 1966171168
      %v6234 = vunpack.c.0.s8 %v6233
      %v6235 = vlaneseq
      %v6236 = vshrl.u32 %v6235, 7
      %v6237 = vsub.s32 %v6234, %v6236
      %v6238 = vrot.slane %v6223, %v6237
      %v6239 = vcombine.low %v6231, %v6238
      %v6240 = vcombine.low %v3782, %v3784
      %v6241 = vcombine.low %v3767, %v3781
      %v6243 = vunpack.c.l.s4 1966171168
      %v6244 = vunpack.c.0.s8 %v6243
      %v6245 = vlaneseq
      %v6246 = vshrl.u32 %v6245, 7
      %v6247 = vsub.s32 %v6244, %v6246
      %v6248 = vrot.slane %v6240, %v6247
      %v6250 = vunpack.c.l.s4 1966171168
      %v6251 = vunpack.c.0.s8 %v6250
      %v6252 = vlaneseq
      %v6253 = vshrl.u32 %v6252, 7
      %v6254 = vsub.s32 %v6251, %v6253
      %v6255 = vrot.slane %v6241, %v6254
      %v6257 = vunpack.c.l.s4 1966171168
      %v6258 = vunpack.c.0.s8 %v6257
      %v6259 = vlaneseq
      %v6260 = vshrl.u32 %v6259, 7
      %v6261 = vsub.s32 %v6258, %v6260
      %v6262 = vrot.slane %v3783, %v6261
      %v6263 = vcombine.low %v6248, %v6255
      %v6265 = vunpack.c.l.s4 1966171168
      %v6266 = vunpack.c.0.s8 %v6265
      %v6267 = vlaneseq
      %v6268 = vshrl.u32 %v6267, 7
      %v6269 = vsub.s32 %v6266, %v6268
      %v6270 = vrot.slane %v6263, %v6269
      %v6272 = vunpack.c.l.s4 1966171168
      %v6273 = vunpack.c.0.s8 %v6272
      %v6274 = vlaneseq
      %v6275 = vshrl.u32 %v6274, 7
      %v6276 = vsub.s32 %v6273, %v6275
      %v6277 = vrot.slane %v6262, %v6276
      %v6278 = vcombine.low %v6270, %v6277
      %v6279 = vcombine.low %v3785, %v3800
      %v6280 = vcombine.low %v3807, %v3808
      %v6282 = vunpack.c.l.s4 1966171168
      %v6283 = vunpack.c.0.s8 %v6282
      %v6284 = vlaneseq
      %v6285 = vshrl.u32 %v6284, 7
      %v6286 = vsub.s32 %v6283, %v6285
      %v6287 = vrot.slane %v6279, %v6286
      %v6289 = vunpack.c.l.s4 1966171168
      %v6290 = vunpack.c.0.s8 %v6289
      %v6291 = vlaneseq
      %v6292 = vshrl.u32 %v6291, 7
      %v6293 = vsub.s32 %v6290, %v6292
      %v6294 = vrot.slane %v6280, %v6293
      %v6296 = vunpack.c.l.s4 1966171168
      %v6297 = vunpack.c.0.s8 %v6296
      %v6298 = vlaneseq
      %v6299 = vshrl.u32 %v6298, 7
      %v6300 = vsub.s32 %v6297, %v6299
      %v6301 = vrot.slane %v3809, %v6300
      %v6302 = vcombine.low %v6287, %v6294
      %v6304 = vunpack.c.l.s4 1966171168
      %v6305 = vunpack.c.0.s8 %v6304
      %v6306 = vlaneseq
      %v6307 = vshrl.u32 %v6306, 7
      %v6308 = vsub.s32 %v6305, %v6307
      %v6309 = vrot.slane %v6302, %v6308
      %v6311 = vunpack.c.l.s4 1966171168
      %v6312 = vunpack.c.0.s8 %v6311
      %v6313 = vlaneseq
      %v6314 = vshrl.u32 %v6313, 7
      %v6315 = vsub.s32 %v6312, %v6314
      %v6316 = vrot.slane %v6301, %v6315
      %v6317 = vcombine.low %v6309, %v6316
      %v6318 = vcombine.low %v3833, %v3847
      %v6319 = vcombine.low %v3855, %v3857
      %v6321 = vunpack.c.l.s4 1966171168
      %v6322 = vunpack.c.0.s8 %v6321
      %v6323 = vlaneseq
      %v6324 = vshrl.u32 %v6323, 7
      %v6325 = vsub.s32 %v6322, %v6324
      %v6326 = vrot.slane %v6318, %v6325
      %v6328 = vunpack.c.l.s4 1966171168
      %v6329 = vunpack.c.0.s8 %v6328
      %v6330 = vlaneseq
      %v6331 = vshrl.u32 %v6330, 7
      %v6332 = vsub.s32 %v6329, %v6331
      %v6333 = vrot.slane %v6319, %v6332
      %v6335 = vunpack.c.l.s4 1966171168
      %v6336 = vunpack.c.0.s8 %v6335
      %v6337 = vlaneseq
      %v6338 = vshrl.u32 %v6337, 7
      %v6339 = vsub.s32 %v6336, %v6338
      %v6340 = vrot.slane %v3840, %v6339
      %v6341 = vcombine.low %v6326, %v6333
      %v6343 = vunpack.c.l.s4 1966171168
      %v6344 = vunpack.c.0.s8 %v6343
      %v6345 = vlaneseq
      %v6346 = vshrl.u32 %v6345, 7
      %v6347 = vsub.s32 %v6344, %v6346
      %v6348 = vrot.slane %v6341, %v6347
      %v6350 = vunpack.c.l.s4 1966171168
      %v6351 = vunpack.c.0.s8 %v6350
      %v6352 = vlaneseq
      %v6353 = vshrl.u32 %v6352, 7
      %v6354 = vsub.s32 %v6351, %v6353
      %v6355 = vrot.slane %v6340, %v6354
      %v6356 = vcombine.low %v6348, %v6355
      %v6357 = vcombine.low %v3854, %v3856
      %v6358 = vcombine.low %v3858, %v3882
      %v6360 = vunpack.c.l.s4 1966171168
      %v6361 = vunpack.c.0.s8 %v6360
      %v6362 = vlaneseq
      %v6363 = vshrl.u32 %v6362, 7
      %v6364 = vsub.s32 %v6361, %v6363
      %v6365 = vrot.slane %v6357, %v6364
      %v6367 = vunpack.c.l.s4 1966171168
      %v6368 = vunpack.c.0.s8 %v6367
      %v6369 = vlaneseq
      %v6370 = vshrl.u32 %v6369, 7
      %v6371 = vsub.s32 %v6368, %v6370
      %v6372 = vrot.slane %v6358, %v6371
      %v6374 = vunpack.c.l.s4 1966171168
      %v6375 = vunpack.c.0.s8 %v6374
      %v6376 = vlaneseq
      %v6377 = vshrl.u32 %v6376, 7
      %v6378 = vsub.s32 %v6375, %v6377
      %v6379 = vrot.slane %v3896, %v6378
      %v6380 = vcombine.low %v6365, %v6372
      %v6382 = vunpack.c.l.s4 1966171168
      %v6383 = vunpack.c.0.s8 %v6382
      %v6384 = vlaneseq
      %v6385 = vshrl.u32 %v6384, 7
      %v6386 = vsub.s32 %v6383, %v6385
      %v6387 = vrot.slane %v6380, %v6386
      %v6389 = vunpack.c.l.s4 1966171168
      %v6390 = vunpack.c.0.s8 %v6389
      %v6391 = vlaneseq
      %v6392 = vshrl.u32 %v6391, 7
      %v6393 = vsub.s32 %v6390, %v6392
      %v6394 = vrot.slane %v6379, %v6393
      %v6395 = vcombine.low %v6387, %v6394
      %v6396 = vcombine.low %v3904, %v3906
      %v6397 = vcombine.low %v3889, %v3903
      %v6399 = vunpack.c.l.s4 1966171168
      %v6400 = vunpack.c.0.s8 %v6399
      %v6401 = vlaneseq
      %v6402 = vshrl.u32 %v6401, 7
      %v6403 = vsub.s32 %v6400, %v6402
      %v6404 = vrot.slane %v6396, %v6403
      %v6406 = vunpack.c.l.s4 1966171168
      %v6407 = vunpack.c.0.s8 %v6406
      %v6408 = vlaneseq
      %v6409 = vshrl.u32 %v6408, 7
      %v6410 = vsub.s32 %v6407, %v6409
      %v6411 = vrot.slane %v6397, %v6410
      %v6413 = vunpack.c.l.s4 1966171168
      %v6414 = vunpack.c.0.s8 %v6413
      %v6415 = vlaneseq
      %v6416 = vshrl.u32 %v6415, 7
      %v6417 = vsub.s32 %v6414, %v6416
      %v6418 = vrot.slane %v3905, %v6417
      %v6419 = vcombine.low %v6404, %v6411
      %v6421 = vunpack.c.l.s4 1966171168
      %v6422 = vunpack.c.0.s8 %v6421
      %v6423 = vlaneseq
      %v6424 = vshrl.u32 %v6423, 7
      %v6425 = vsub.s32 %v6422, %v6424
      %v6426 = vrot.slane %v6419, %v6425
      %v6428 = vunpack.c.l.s4 1966171168
      %v6429 = vunpack.c.0.s8 %v6428
      %v6430 = vlaneseq
      %v6431 = vshrl.u32 %v6430, 7
      %v6432 = vsub.s32 %v6429, %v6431
      %v6433 = vrot.slane %v6418, %v6432
      %v6434 = vcombine.low %v6426, %v6433
      %v6435 = vcombine.low %v3907, %v3922
      %v6436 = vcombine.low %v3929, %v3930
      %v6438 = vunpack.c.l.s4 1966171168
      %v6439 = vunpack.c.0.s8 %v6438
      %v6440 = vlaneseq
      %v6441 = vshrl.u32 %v6440, 7
      %v6442 = vsub.s32 %v6439, %v6441
      %v6443 = vrot.slane %v6435, %v6442
      %v6445 = vunpack.c.l.s4 1966171168
      %v6446 = vunpack.c.0.s8 %v6445
      %v6447 = vlaneseq
      %v6448 = vshrl.u32 %v6447, 7
      %v6449 = vsub.s32 %v6446, %v6448
      %v6450 = vrot.slane %v6436, %v6449
      %v6452 = vunpack.c.l.s4 1966171168
      %v6453 = vunpack.c.0.s8 %v6452
      %v6454 = vlaneseq
      %v6455 = vshrl.u32 %v6454, 7
      %v6456 = vsub.s32 %v6453, %v6455
      %v6457 = vrot.slane %v3931, %v6456
      %v6458 = vcombine.low %v6443, %v6450
      %v6460 = vunpack.c.l.s4 1966171168
      %v6461 = vunpack.c.0.s8 %v6460
      %v6462 = vlaneseq
      %v6463 = vshrl.u32 %v6462, 7
      %v6464 = vsub.s32 %v6461, %v6463
      %v6465 = vrot.slane %v6458, %v6464
      %v6467 = vunpack.c.l.s4 1966171168
      %v6468 = vunpack.c.0.s8 %v6467
      %v6469 = vlaneseq
      %v6470 = vshrl.u32 %v6469, 7
      %v6471 = vsub.s32 %v6468, %v6470
      %v6472 = vrot.slane %v6457, %v6471
      %v6473 = vcombine.low %v6465, %v6472
      %v6474 = vcombine.low %v3955, %v3969
      %v6475 = vcombine.low %v3977, %v3979
      %v6477 = vunpack.c.l.s4 1966171168
      %v6478 = vunpack.c.0.s8 %v6477
      %v6479 = vlaneseq
      %v6480 = vshrl.u32 %v6479, 7
      %v6481 = vsub.s32 %v6478, %v6480
      %v6482 = vrot.slane %v6474, %v6481
      %v6484 = vunpack.c.l.s4 1966171168
      %v6485 = vunpack.c.0.s8 %v6484
      %v6486 = vlaneseq
      %v6487 = vshrl.u32 %v6486, 7
      %v6488 = vsub.s32 %v6485, %v6487
      %v6489 = vrot.slane %v6475, %v6488
      %v6491 = vunpack.c.l.s4 1966171168
      %v6492 = vunpack.c.0.s8 %v6491
      %v6493 = vlaneseq
      %v6494 = vshrl.u32 %v6493, 7
      %v6495 = vsub.s32 %v6492, %v6494
      %v6496 = vrot.slane %v3962, %v6495
      %v6497 = vcombine.low %v6482, %v6489
      %v6499 = vunpack.c.l.s4 1966171168
      %v6500 = vunpack.c.0.s8 %v6499
      %v6501 = vlaneseq
      %v6502 = vshrl.u32 %v6501, 7
      %v6503 = vsub.s32 %v6500, %v6502
      %v6504 = vrot.slane %v6497, %v6503
      %v6506 = vunpack.c.l.s4 1966171168
      %v6507 = vunpack.c.0.s8 %v6506
      %v6508 = vlaneseq
      %v6509 = vshrl.u32 %v6508, 7
      %v6510 = vsub.s32 %v6507, %v6509
      %v6511 = vrot.slane %v6496, %v6510
      %v6512 = vcombine.low %v6504, %v6511
      %v6513 = vcombine.low %v3976, %v3978
      %v6514 = vcombine.low %v3980, %v4004
      %v6516 = vunpack.c.l.s4 1966171168
      %v6517 = vunpack.c.0.s8 %v6516
      %v6518 = vlaneseq
      %v6519 = vshrl.u32 %v6518, 7
      %v6520 = vsub.s32 %v6517, %v6519
      %v6521 = vrot.slane %v6513, %v6520
      %v6523 = vunpack.c.l.s4 1966171168
      %v6524 = vunpack.c.0.s8 %v6523
      %v6525 = vlaneseq
      %v6526 = vshrl.u32 %v6525, 7
      %v6527 = vsub.s32 %v6524, %v6526
      %v6528 = vrot.slane %v6514, %v6527
      %v6530 = vunpack.c.l.s4 1966171168
      %v6531 = vunpack.c.0.s8 %v6530
      %v6532 = vlaneseq
      %v6533 = vshrl.u32 %v6532, 7
      %v6534 = vsub.s32 %v6531, %v6533
      %v6535 = vrot.slane %v4018, %v6534
      %v6536 = vcombine.low %v6521, %v6528
      %v6538 = vunpack.c.l.s4 1966171168
      %v6539 = vunpack.c.0.s8 %v6538
      %v6540 = vlaneseq
      %v6541 = vshrl.u32 %v6540, 7
      %v6542 = vsub.s32 %v6539, %v6541
      %v6543 = vrot.slane %v6536, %v6542
      %v6545 = vunpack.c.l.s4 1966171168
      %v6546 = vunpack.c.0.s8 %v6545
      %v6547 = vlaneseq
      %v6548 = vshrl.u32 %v6547, 7
      %v6549 = vsub.s32 %v6546, %v6548
      %v6550 = vrot.slane %v6535, %v6549
      %v6551 = vcombine.low %v6543, %v6550
      %v6552 = vcombine.low %v4026, %v4028
      %v6553 = vcombine.low %v4011, %v4025
      %v6555 = vunpack.c.l.s4 1966171168
      %v6556 = vunpack.c.0.s8 %v6555
      %v6557 = vlaneseq
      %v6558 = vshrl.u32 %v6557, 7
      %v6559 = vsub.s32 %v6556, %v6558
      %v6560 = vrot.slane %v6552, %v6559
      %v6562 = vunpack.c.l.s4 1966171168
      %v6563 = vunpack.c.0.s8 %v6562
      %v6564 = vlaneseq
      %v6565 = vshrl.u32 %v6564, 7
      %v6566 = vsub.s32 %v6563, %v6565
      %v6567 = vrot.slane %v6553, %v6566
      %v6569 = vunpack.c.l.s4 1966171168
      %v6570 = vunpack.c.0.s8 %v6569
      %v6571 = vlaneseq
      %v6572 = vshrl.u32 %v6571, 7
      %v6573 = vsub.s32 %v6570, %v6572
      %v6574 = vrot.slane %v4027, %v6573
      %v6575 = vcombine.low %v6560, %v6567
      %v6577 = vunpack.c.l.s4 1966171168
      %v6578 = vunpack.c.0.s8 %v6577
      %v6579 = vlaneseq
      %v6580 = vshrl.u32 %v6579, 7
      %v6581 = vsub.s32 %v6578, %v6580
      %v6582 = vrot.slane %v6575, %v6581
      %v6584 = vunpack.c.l.s4 1966171168
      %v6585 = vunpack.c.0.s8 %v6584
      %v6586 = vlaneseq
      %v6587 = vshrl.u32 %v6586, 7
      %v6588 = vsub.s32 %v6585, %v6587
      %v6589 = vrot.slane %v6574, %v6588
      %v6590 = vcombine.low %v6582, %v6589
      %v6591 = vcombine.low %v4029, %v4044
      %v6592 = vcombine.low %v4051, %v4052
      %v6594 = vunpack.c.l.s4 1966171168
      %v6595 = vunpack.c.0.s8 %v6594
      %v6596 = vlaneseq
      %v6597 = vshrl.u32 %v6596, 7
      %v6598 = vsub.s32 %v6595, %v6597
      %v6599 = vrot.slane %v6591, %v6598
      %v6601 = vunpack.c.l.s4 1966171168
      %v6602 = vunpack.c.0.s8 %v6601
      %v6603 = vlaneseq
      %v6604 = vshrl.u32 %v6603, 7
      %v6605 = vsub.s32 %v6602, %v6604
      %v6606 = vrot.slane %v6592, %v6605
      %v6608 = vunpack.c.l.s4 1966171168
      %v6609 = vunpack.c.0.s8 %v6608
      %v6610 = vlaneseq
      %v6611 = vshrl.u32 %v6610, 7
      %v6612 = vsub.s32 %v6609, %v6611
      %v6613 = vrot.slane %v4053, %v6612
      %v6614 = vcombine.low %v6599, %v6606
      %v6616 = vunpack.c.l.s4 1966171168
      %v6617 = vunpack.c.0.s8 %v6616
      %v6618 = vlaneseq
      %v6619 = vshrl.u32 %v6618, 7
      %v6620 = vsub.s32 %v6617, %v6619
      %v6621 = vrot.slane %v6614, %v6620
      %v6623 = vunpack.c.l.s4 1966171168
      %v6624 = vunpack.c.0.s8 %v6623
      %v6625 = vlaneseq
      %v6626 = vshrl.u32 %v6625, 7
      %v6627 = vsub.s32 %v6624, %v6626
      %v6628 = vrot.slane %v6613, %v6627
      %v6629 = vcombine.low %v6621, %v6628
      %v6630 = vcombine.low %v4077, %v4091
      %v6631 = vcombine.low %v4099, %v4101
      %v6633 = vunpack.c.l.s4 1966171168
      %v6634 = vunpack.c.0.s8 %v6633
      %v6635 = vlaneseq
      %v6636 = vshrl.u32 %v6635, 7
      %v6637 = vsub.s32 %v6634, %v6636
      %v6638 = vrot.slane %v6630, %v6637
      %v6640 = vunpack.c.l.s4 1966171168
      %v6641 = vunpack.c.0.s8 %v6640
      %v6642 = vlaneseq
      %v6643 = vshrl.u32 %v6642, 7
      %v6644 = vsub.s32 %v6641, %v6643
      %v6645 = vrot.slane %v6631, %v6644
      %v6647 = vunpack.c.l.s4 1966171168
      %v6648 = vunpack.c.0.s8 %v6647
      %v6649 = vlaneseq
      %v6650 = vshrl.u32 %v6649, 7
      %v6651 = vsub.s32 %v6648, %v6650
      %v6652 = vrot.slane %v4084, %v6651
      %v6653 = vcombine.low %v6638, %v6645
      %v6655 = vunpack.c.l.s4 1966171168
      %v6656 = vunpack.c.0.s8 %v6655
      %v6657 = vlaneseq
      %v6658 = vshrl.u32 %v6657, 7
      %v6659 = vsub.s32 %v6656, %v6658
      %v6660 = vrot.slane %v6653, %v6659
      %v6662 = vunpack.c.l.s4 1966171168
      %v6663 = vunpack.c.0.s8 %v6662
      %v6664 = vlaneseq
      %v6665 = vshrl.u32 %v6664, 7
      %v6666 = vsub.s32 %v6663, %v6665
      %v6667 = vrot.slane %v6652, %v6666
      %v6668 = vcombine.low %v6660, %v6667
      %v6669 = vcombine.low %v4098, %v4100
      %v6670 = vcombine.low %v4102, %v4126
      %v6672 = vunpack.c.l.s4 1966171168
      %v6673 = vunpack.c.0.s8 %v6672
      %v6674 = vlaneseq
      %v6675 = vshrl.u32 %v6674, 7
      %v6676 = vsub.s32 %v6673, %v6675
      %v6677 = vrot.slane %v6669, %v6676
      %v6679 = vunpack.c.l.s4 1966171168
      %v6680 = vunpack.c.0.s8 %v6679
      %v6681 = vlaneseq
      %v6682 = vshrl.u32 %v6681, 7
      %v6683 = vsub.s32 %v6680, %v6682
      %v6684 = vrot.slane %v6670, %v6683
      %v6686 = vunpack.c.l.s4 1966171168
      %v6687 = vunpack.c.0.s8 %v6686
      %v6688 = vlaneseq
      %v6689 = vshrl.u32 %v6688, 7
      %v6690 = vsub.s32 %v6687, %v6689
      %v6691 = vrot.slane %v4140, %v6690
      %v6692 = vcombine.low %v6677, %v6684
      %v6694 = vunpack.c.l.s4 1966171168
      %v6695 = vunpack.c.0.s8 %v6694
      %v6696 = vlaneseq
      %v6697 = vshrl.u32 %v6696, 7
      %v6698 = vsub.s32 %v6695, %v6697
      %v6699 = vrot.slane %v6692, %v6698
      %v6701 = vunpack.c.l.s4 1966171168
      %v6702 = vunpack.c.0.s8 %v6701
      %v6703 = vlaneseq
      %v6704 = vshrl.u32 %v6703, 7
      %v6705 = vsub.s32 %v6702, %v6704
      %v6706 = vrot.slane %v6691, %v6705
      %v6707 = vcombine.low %v6699, %v6706
      %v6708 = vcombine.low %v4148, %v4150
      %v6709 = vcombine.low %v4133, %v4147
      %v6711 = vunpack.c.l.s4 1966171168
      %v6712 = vunpack.c.0.s8 %v6711
      %v6713 = vlaneseq
      %v6714 = vshrl.u32 %v6713, 7
      %v6715 = vsub.s32 %v6712, %v6714
      %v6716 = vrot.slane %v6708, %v6715
      %v6718 = vunpack.c.l.s4 1966171168
      %v6719 = vunpack.c.0.s8 %v6718
      %v6720 = vlaneseq
      %v6721 = vshrl.u32 %v6720, 7
      %v6722 = vsub.s32 %v6719, %v6721
      %v6723 = vrot.slane %v6709, %v6722
      %v6725 = vunpack.c.l.s4 1966171168
      %v6726 = vunpack.c.0.s8 %v6725
      %v6727 = vlaneseq
      %v6728 = vshrl.u32 %v6727, 7
      %v6729 = vsub.s32 %v6726, %v6728
      %v6730 = vrot.slane %v4149, %v6729
      %v6731 = vcombine.low %v6716, %v6723
      %v6733 = vunpack.c.l.s4 1966171168
      %v6734 = vunpack.c.0.s8 %v6733
      %v6735 = vlaneseq
      %v6736 = vshrl.u32 %v6735, 7
      %v6737 = vsub.s32 %v6734, %v6736
      %v6738 = vrot.slane %v6731, %v6737
      %v6740 = vunpack.c.l.s4 1966171168
      %v6741 = vunpack.c.0.s8 %v6740
      %v6742 = vlaneseq
      %v6743 = vshrl.u32 %v6742, 7
      %v6744 = vsub.s32 %v6741, %v6743
      %v6745 = vrot.slane %v6730, %v6744
      %v6746 = vcombine.low %v6738, %v6745
      %v6747 = vcombine.low %v4151, %v4166
      %v6748 = vcombine.low %v4173, %v4174
      %v6750 = vunpack.c.l.s4 1966171168
      %v6751 = vunpack.c.0.s8 %v6750
      %v6752 = vlaneseq
      %v6753 = vshrl.u32 %v6752, 7
      %v6754 = vsub.s32 %v6751, %v6753
      %v6755 = vrot.slane %v6747, %v6754
      %v6757 = vunpack.c.l.s4 1966171168
      %v6758 = vunpack.c.0.s8 %v6757
      %v6759 = vlaneseq
      %v6760 = vshrl.u32 %v6759, 7
      %v6761 = vsub.s32 %v6758, %v6760
      %v6762 = vrot.slane %v6748, %v6761
      %v6764 = vunpack.c.l.s4 1966171168
      %v6765 = vunpack.c.0.s8 %v6764
      %v6766 = vlaneseq
      %v6767 = vshrl.u32 %v6766, 7
      %v6768 = vsub.s32 %v6765, %v6767
      %v6769 = vrot.slane %v4175, %v6768
      %v6770 = vcombine.low %v6755, %v6762
      %v6772 = vunpack.c.l.s4 1966171168
      %v6773 = vunpack.c.0.s8 %v6772
      %v6774 = vlaneseq
      %v6775 = vshrl.u32 %v6774, 7
      %v6776 = vsub.s32 %v6773, %v6775
      %v6777 = vrot.slane %v6770, %v6776
      %v6779 = vunpack.c.l.s4 1966171168
      %v6780 = vunpack.c.0.s8 %v6779
      %v6781 = vlaneseq
      %v6782 = vshrl.u32 %v6781, 7
      %v6783 = vsub.s32 %v6780, %v6782
      %v6784 = vrot.slane %v6769, %v6783
      %v6785 = vcombine.low %v6777, %v6784
      %v6786 = vcombine.low %v4199, %v4213
      %v6787 = vcombine.low %v4221, %v4223
      %v6789 = vunpack.c.l.s4 1966171168
      %v6790 = vunpack.c.0.s8 %v6789
      %v6791 = vlaneseq
      %v6792 = vshrl.u32 %v6791, 7
      %v6793 = vsub.s32 %v6790, %v6792
      %v6794 = vrot.slane %v6786, %v6793
      %v6796 = vunpack.c.l.s4 1966171168
      %v6797 = vunpack.c.0.s8 %v6796
      %v6798 = vlaneseq
      %v6799 = vshrl.u32 %v6798, 7
      %v6800 = vsub.s32 %v6797, %v6799
      %v6801 = vrot.slane %v6787, %v6800
      %v6803 = vunpack.c.l.s4 1966171168
      %v6804 = vunpack.c.0.s8 %v6803
      %v6805 = vlaneseq
      %v6806 = vshrl.u32 %v6805, 7
      %v6807 = vsub.s32 %v6804, %v6806
      %v6808 = vrot.slane %v4206, %v6807
      %v6809 = vcombine.low %v6794, %v6801
      %v6811 = vunpack.c.l.s4 1966171168
      %v6812 = vunpack.c.0.s8 %v6811
      %v6813 = vlaneseq
      %v6814 = vshrl.u32 %v6813, 7
      %v6815 = vsub.s32 %v6812, %v6814
      %v6816 = vrot.slane %v6809, %v6815
      %v6818 = vunpack.c.l.s4 1966171168
      %v6819 = vunpack.c.0.s8 %v6818
      %v6820 = vlaneseq
      %v6821 = vshrl.u32 %v6820, 7
      %v6822 = vsub.s32 %v6819, %v6821
      %v6823 = vrot.slane %v6808, %v6822
      %v6824 = vcombine.low %v6816, %v6823
      %v6825 = vcombine.low %v4220, %v4222
      %v6826 = vcombine.low %v4224, %v4248
      %v6828 = vunpack.c.l.s4 1966171168
      %v6829 = vunpack.c.0.s8 %v6828
      %v6830 = vlaneseq
      %v6831 = vshrl.u32 %v6830, 7
      %v6832 = vsub.s32 %v6829, %v6831
      %v6833 = vrot.slane %v6825, %v6832
      %v6835 = vunpack.c.l.s4 1966171168
      %v6836 = vunpack.c.0.s8 %v6835
      %v6837 = vlaneseq
      %v6838 = vshrl.u32 %v6837, 7
      %v6839 = vsub.s32 %v6836, %v6838
      %v6840 = vrot.slane %v6826, %v6839
      %v6842 = vunpack.c.l.s4 1966171168
      %v6843 = vunpack.c.0.s8 %v6842
      %v6844 = vlaneseq
      %v6845 = vshrl.u32 %v6844, 7
      %v6846 = vsub.s32 %v6843, %v6845
      %v6847 = vrot.slane %v4262, %v6846
      %v6848 = vcombine.low %v6833, %v6840
      %v6850 = vunpack.c.l.s4 1966171168
      %v6851 = vunpack.c.0.s8 %v6850
      %v6852 = vlaneseq
      %v6853 = vshrl.u32 %v6852, 7
      %v6854 = vsub.s32 %v6851, %v6853
      %v6855 = vrot.slane %v6848, %v6854
      %v6857 = vunpack.c.l.s4 1966171168
      %v6858 = vunpack.c.0.s8 %v6857
      %v6859 = vlaneseq
      %v6860 = vshrl.u32 %v6859, 7
      %v6861 = vsub.s32 %v6858, %v6860
      %v6862 = vrot.slane %v6847, %v6861
      %v6863 = vcombine.low %v6855, %v6862
      %v6864 = vcombine.low %v4270, %v4272
      %v6865 = vcombine.low %v4255, %v4269
      %v6867 = vunpack.c.l.s4 1966171168
      %v6868 = vunpack.c.0.s8 %v6867
      %v6869 = vlaneseq
      %v6870 = vshrl.u32 %v6869, 7
      %v6871 = vsub.s32 %v6868, %v6870
      %v6872 = vrot.slane %v6864, %v6871
      %v6874 = vunpack.c.l.s4 1966171168
      %v6875 = vunpack.c.0.s8 %v6874
      %v6876 = vlaneseq
      %v6877 = vshrl.u32 %v6876, 7
      %v6878 = vsub.s32 %v6875, %v6877
      %v6879 = vrot.slane %v6865, %v6878
      %v6881 = vunpack.c.l.s4 1966171168
      %v6882 = vunpack.c.0.s8 %v6881
      %v6883 = vlaneseq
      %v6884 = vshrl.u32 %v6883, 7
      %v6885 = vsub.s32 %v6882, %v6884
      %v6886 = vrot.slane %v4271, %v6885
      %v6887 = vcombine.low %v6872, %v6879
      %v6889 = vunpack.c.l.s4 1966171168
      %v6890 = vunpack.c.0.s8 %v6889
      %v6891 = vlaneseq
      %v6892 = vshrl.u32 %v6891, 7
      %v6893 = vsub.s32 %v6890, %v6892
      %v6894 = vrot.slane %v6887, %v6893
      %v6896 = vunpack.c.l.s4 1966171168
      %v6897 = vunpack.c.0.s8 %v6896
      %v6898 = vlaneseq
      %v6899 = vshrl.u32 %v6898, 7
      %v6900 = vsub.s32 %v6897, %v6899
      %v6901 = vrot.slane %v6886, %v6900
      %v6902 = vcombine.low %v6894, %v6901
      %v6903 = vcombine.low %v4273, %v4288
      %v6904 = vcombine.low %v4295, %v4296
      %v6906 = vunpack.c.l.s4 1966171168
      %v6907 = vunpack.c.0.s8 %v6906
      %v6908 = vlaneseq
      %v6909 = vshrl.u32 %v6908, 7
      %v6910 = vsub.s32 %v6907, %v6909
      %v6911 = vrot.slane %v6903, %v6910
      %v6913 = vunpack.c.l.s4 1966171168
      %v6914 = vunpack.c.0.s8 %v6913
      %v6915 = vlaneseq
      %v6916 = vshrl.u32 %v6915, 7
      %v6917 = vsub.s32 %v6914, %v6916
      %v6918 = vrot.slane %v6904, %v6917
      %v6920 = vunpack.c.l.s4 1966171168
      %v6921 = vunpack.c.0.s8 %v6920
      %v6922 = vlaneseq
      %v6923 = vshrl.u32 %v6922, 7
      %v6924 = vsub.s32 %v6921, %v6923
      %v6925 = vrot.slane %v4297, %v6924
      %v6926 = vcombine.low %v6911, %v6918
      %v6928 = vunpack.c.l.s4 1966171168
      %v6929 = vunpack.c.0.s8 %v6928
      %v6930 = vlaneseq
      %v6931 = vshrl.u32 %v6930, 7
      %v6932 = vsub.s32 %v6929, %v6931
      %v6933 = vrot.slane %v6926, %v6932
      %v6935 = vunpack.c.l.s4 1966171168
      %v6936 = vunpack.c.0.s8 %v6935
      %v6937 = vlaneseq
      %v6938 = vshrl.u32 %v6937, 7
      %v6939 = vsub.s32 %v6936, %v6938
      %v6940 = vrot.slane %v6925, %v6939
      %v6941 = vcombine.low %v6933, %v6940
      %v6942 = vcombine.low %v4321, %v4335
      %v6943 = vcombine.low %v4343, %v4345
      %v6945 = vunpack.c.l.s4 1966171168
      %v6946 = vunpack.c.0.s8 %v6945
      %v6947 = vlaneseq
      %v6948 = vshrl.u32 %v6947, 7
      %v6949 = vsub.s32 %v6946, %v6948
      %v6950 = vrot.slane %v6942, %v6949
      %v6952 = vunpack.c.l.s4 1966171168
      %v6953 = vunpack.c.0.s8 %v6952
      %v6954 = vlaneseq
      %v6955 = vshrl.u32 %v6954, 7
      %v6956 = vsub.s32 %v6953, %v6955
      %v6957 = vrot.slane %v6943, %v6956
      %v6959 = vunpack.c.l.s4 1966171168
      %v6960 = vunpack.c.0.s8 %v6959
      %v6961 = vlaneseq
      %v6962 = vshrl.u32 %v6961, 7
      %v6963 = vsub.s32 %v6960, %v6962
      %v6964 = vrot.slane %v4328, %v6963
      %v6965 = vcombine.low %v6950, %v6957
      %v6967 = vunpack.c.l.s4 1966171168
      %v6968 = vunpack.c.0.s8 %v6967
      %v6969 = vlaneseq
      %v6970 = vshrl.u32 %v6969, 7
      %v6971 = vsub.s32 %v6968, %v6970
      %v6972 = vrot.slane %v6965, %v6971
      %v6974 = vunpack.c.l.s4 1966171168
      %v6975 = vunpack.c.0.s8 %v6974
      %v6976 = vlaneseq
      %v6977 = vshrl.u32 %v6976, 7
      %v6978 = vsub.s32 %v6975, %v6977
      %v6979 = vrot.slane %v6964, %v6978
      %v6980 = vcombine.low %v6972, %v6979
      %v6981 = vcombine.low %v4342, %v4344
      %v6982 = vcombine.low %v4346, %v4370
      %v6984 = vunpack.c.l.s4 1966171168
      %v6985 = vunpack.c.0.s8 %v6984
      %v6986 = vlaneseq
      %v6987 = vshrl.u32 %v6986, 7
      %v6988 = vsub.s32 %v6985, %v6987
      %v6989 = vrot.slane %v6981, %v6988
      %v6991 = vunpack.c.l.s4 1966171168
      %v6992 = vunpack.c.0.s8 %v6991
      %v6993 = vlaneseq
      %v6994 = vshrl.u32 %v6993, 7
      %v6995 = vsub.s32 %v6992, %v6994
      %v6996 = vrot.slane %v6982, %v6995
      %v6998 = vunpack.c.l.s4 1966171168
      %v6999 = vunpack.c.0.s8 %v6998
      %v7000 = vlaneseq
      %v7001 = vshrl.u32 %v7000, 7
      %v7002 = vsub.s32 %v6999, %v7001
      %v7003 = vrot.slane %v4384, %v7002
      %v7004 = vcombine.low %v6989, %v6996
      %v7006 = vunpack.c.l.s4 1966171168
      %v7007 = vunpack.c.0.s8 %v7006
      %v7008 = vlaneseq
      %v7009 = vshrl.u32 %v7008, 7
      %v7010 = vsub.s32 %v7007, %v7009
      %v7011 = vrot.slane %v7004, %v7010
      %v7013 = vunpack.c.l.s4 1966171168
      %v7014 = vunpack.c.0.s8 %v7013
      %v7015 = vlaneseq
      %v7016 = vshrl.u32 %v7015, 7
      %v7017 = vsub.s32 %v7014, %v7016
      %v7018 = vrot.slane %v7003, %v7017
      %v7019 = vcombine.low %v7011, %v7018
      %v7020 = vcombine.low %v4392, %v4394
      %v7021 = vcombine.low %v4377, %v4391
      %v7023 = vunpack.c.l.s4 1966171168
      %v7024 = vunpack.c.0.s8 %v7023
      %v7025 = vlaneseq
      %v7026 = vshrl.u32 %v7025, 7
      %v7027 = vsub.s32 %v7024, %v7026
      %v7028 = vrot.slane %v7020, %v7027
      %v7030 = vunpack.c.l.s4 1966171168
      %v7031 = vunpack.c.0.s8 %v7030
      %v7032 = vlaneseq
      %v7033 = vshrl.u32 %v7032, 7
      %v7034 = vsub.s32 %v7031, %v7033
      %v7035 = vrot.slane %v7021, %v7034
      %v7037 = vunpack.c.l.s4 1966171168
      %v7038 = vunpack.c.0.s8 %v7037
      %v7039 = vlaneseq
      %v7040 = vshrl.u32 %v7039, 7
      %v7041 = vsub.s32 %v7038, %v7040
      %v7042 = vrot.slane %v4393, %v7041
      %v7043 = vcombine.low %v7028, %v7035
      %v7045 = vunpack.c.l.s4 1966171168
      %v7046 = vunpack.c.0.s8 %v7045
      %v7047 = vlaneseq
      %v7048 = vshrl.u32 %v7047, 7
      %v7049 = vsub.s32 %v7046, %v7048
      %v7050 = vrot.slane %v7043, %v7049
      %v7052 = vunpack.c.l.s4 1966171168
      %v7053 = vunpack.c.0.s8 %v7052
      %v7054 = vlaneseq
      %v7055 = vshrl.u32 %v7054, 7
      %v7056 = vsub.s32 %v7053, %v7055
      %v7057 = vrot.slane %v7042, %v7056
      %v7058 = vcombine.low %v7050, %v7057
      %v7059 = vcombine.low %v4395, %v4410
      %v7060 = vcombine.low %v4417, %v4418
      %v7062 = vunpack.c.l.s4 1966171168
      %v7063 = vunpack.c.0.s8 %v7062
      %v7064 = vlaneseq
      %v7065 = vshrl.u32 %v7064, 7
      %v7066 = vsub.s32 %v7063, %v7065
      %v7067 = vrot.slane %v7059, %v7066
      %v7069 = vunpack.c.l.s4 1966171168
      %v7070 = vunpack.c.0.s8 %v7069
      %v7071 = vlaneseq
      %v7072 = vshrl.u32 %v7071, 7
      %v7073 = vsub.s32 %v7070, %v7072
      %v7074 = vrot.slane %v7060, %v7073
      %v7076 = vunpack.c.l.s4 1966171168
      %v7077 = vunpack.c.0.s8 %v7076
      %v7078 = vlaneseq
      %v7079 = vshrl.u32 %v7078, 7
      %v7080 = vsub.s32 %v7077, %v7079
      %v7081 = vrot.slane %v4419, %v7080
      %v7082 = vcombine.low %v7067, %v7074
      %v7084 = vunpack.c.l.s4 1966171168
      %v7085 = vunpack.c.0.s8 %v7084
      %v7086 = vlaneseq
      %v7087 = vshrl.u32 %v7086, 7
      %v7088 = vsub.s32 %v7085, %v7087
      %v7089 = vrot.slane %v7082, %v7088
      %v7091 = vunpack.c.l.s4 1966171168
      %v7092 = vunpack.c.0.s8 %v7091
      %v7093 = vlaneseq
      %v7094 = vshrl.u32 %v7093, 7
      %v7095 = vsub.s32 %v7092, %v7094
      %v7096 = vrot.slane %v7081, %v7095
      %v7097 = vcombine.low %v7089, %v7096
      %v7098 = vcombine.low %v4443, %v4457
      %v7099 = vcombine.low %v4465, %v4467
      %v7101 = vunpack.c.l.s4 1966171168
      %v7102 = vunpack.c.0.s8 %v7101
      %v7103 = vlaneseq
      %v7104 = vshrl.u32 %v7103, 7
      %v7105 = vsub.s32 %v7102, %v7104
      %v7106 = vrot.slane %v7098, %v7105
      %v7108 = vunpack.c.l.s4 1966171168
      %v7109 = vunpack.c.0.s8 %v7108
      %v7110 = vlaneseq
      %v7111 = vshrl.u32 %v7110, 7
      %v7112 = vsub.s32 %v7109, %v7111
      %v7113 = vrot.slane %v7099, %v7112
      %v7115 = vunpack.c.l.s4 1966171168
      %v7116 = vunpack.c.0.s8 %v7115
      %v7117 = vlaneseq
      %v7118 = vshrl.u32 %v7117, 7
      %v7119 = vsub.s32 %v7116, %v7118
      %v7120 = vrot.slane %v4450, %v7119
      %v7121 = vcombine.low %v7106, %v7113
      %v7123 = vunpack.c.l.s4 1966171168
      %v7124 = vunpack.c.0.s8 %v7123
      %v7125 = vlaneseq
      %v7126 = vshrl.u32 %v7125, 7
      %v7127 = vsub.s32 %v7124, %v7126
      %v7128 = vrot.slane %v7121, %v7127
      %v7130 = vunpack.c.l.s4 1966171168
      %v7131 = vunpack.c.0.s8 %v7130
      %v7132 = vlaneseq
      %v7133 = vshrl.u32 %v7132, 7
      %v7134 = vsub.s32 %v7131, %v7133
      %v7135 = vrot.slane %v7120, %v7134
      %v7136 = vcombine.low %v7128, %v7135
      %v7137 = vcombine.low %v4464, %v4466
      %v7138 = vcombine.low %v4468, %v4492
      %v7140 = vunpack.c.l.s4 1966171168
      %v7141 = vunpack.c.0.s8 %v7140
      %v7142 = vlaneseq
      %v7143 = vshrl.u32 %v7142, 7
      %v7144 = vsub.s32 %v7141, %v7143
      %v7145 = vrot.slane %v7137, %v7144
      %v7147 = vunpack.c.l.s4 1966171168
      %v7148 = vunpack.c.0.s8 %v7147
      %v7149 = vlaneseq
      %v7150 = vshrl.u32 %v7149, 7
      %v7151 = vsub.s32 %v7148, %v7150
      %v7152 = vrot.slane %v7138, %v7151
      %v7154 = vunpack.c.l.s4 1966171168
      %v7155 = vunpack.c.0.s8 %v7154
      %v7156 = vlaneseq
      %v7157 = vshrl.u32 %v7156, 7
      %v7158 = vsub.s32 %v7155, %v7157
      %v7159 = vrot.slane %v4506, %v7158
      %v7160 = vcombine.low %v7145, %v7152
      %v7162 = vunpack.c.l.s4 1966171168
      %v7163 = vunpack.c.0.s8 %v7162
      %v7164 = vlaneseq
      %v7165 = vshrl.u32 %v7164, 7
      %v7166 = vsub.s32 %v7163, %v7165
      %v7167 = vrot.slane %v7160, %v7166
      %v7169 = vunpack.c.l.s4 1966171168
      %v7170 = vunpack.c.0.s8 %v7169
      %v7171 = vlaneseq
      %v7172 = vshrl.u32 %v7171, 7
      %v7173 = vsub.s32 %v7170, %v7172
      %v7174 = vrot.slane %v7159, %v7173
      %v7175 = vcombine.low %v7167, %v7174
      %v7176 = vcombine.low %v4514, %v4516
      %v7177 = vcombine.low %v4499, %v4513
      %v7179 = vunpack.c.l.s4 1966171168
      %v7180 = vunpack.c.0.s8 %v7179
      %v7181 = vlaneseq
      %v7182 = vshrl.u32 %v7181, 7
      %v7183 = vsub.s32 %v7180, %v7182
      %v7184 = vrot.slane %v7176, %v7183
      %v7186 = vunpack.c.l.s4 1966171168
      %v7187 = vunpack.c.0.s8 %v7186
      %v7188 = vlaneseq
      %v7189 = vshrl.u32 %v7188, 7
      %v7190 = vsub.s32 %v7187, %v7189
      %v7191 = vrot.slane %v7177, %v7190
      %v7193 = vunpack.c.l.s4 1966171168
      %v7194 = vunpack.c.0.s8 %v7193
      %v7195 = vlaneseq
      %v7196 = vshrl.u32 %v7195, 7
      %v7197 = vsub.s32 %v7194, %v7196
      %v7198 = vrot.slane %v4515, %v7197
      %v7199 = vcombine.low %v7184, %v7191
      %v7201 = vunpack.c.l.s4 1966171168
      %v7202 = vunpack.c.0.s8 %v7201
      %v7203 = vlaneseq
      %v7204 = vshrl.u32 %v7203, 7
      %v7205 = vsub.s32 %v7202, %v7204
      %v7206 = vrot.slane %v7199, %v7205
      %v7208 = vunpack.c.l.s4 1966171168
      %v7209 = vunpack.c.0.s8 %v7208
      %v7210 = vlaneseq
      %v7211 = vshrl.u32 %v7210, 7
      %v7212 = vsub.s32 %v7209, %v7211
      %v7213 = vrot.slane %v7198, %v7212
      %v7214 = vcombine.low %v7206, %v7213
      %v7215 = vcombine.low %v4517, %v4532
      %v7216 = vcombine.low %v4539, %v4540
      %v7218 = vunpack.c.l.s4 1966171168
      %v7219 = vunpack.c.0.s8 %v7218
      %v7220 = vlaneseq
      %v7221 = vshrl.u32 %v7220, 7
      %v7222 = vsub.s32 %v7219, %v7221
      %v7223 = vrot.slane %v7215, %v7222
      %v7225 = vunpack.c.l.s4 1966171168
      %v7226 = vunpack.c.0.s8 %v7225
      %v7227 = vlaneseq
      %v7228 = vshrl.u32 %v7227, 7
      %v7229 = vsub.s32 %v7226, %v7228
      %v7230 = vrot.slane %v7216, %v7229
      %v7232 = vunpack.c.l.s4 1966171168
      %v7233 = vunpack.c.0.s8 %v7232
      %v7234 = vlaneseq
      %v7235 = vshrl.u32 %v7234, 7
      %v7236 = vsub.s32 %v7233, %v7235
      %v7237 = vrot.slane %v4541, %v7236
      %v7238 = vcombine.low %v7223, %v7230
      %v7240 = vunpack.c.l.s4 1966171168
      %v7241 = vunpack.c.0.s8 %v7240
      %v7242 = vlaneseq
      %v7243 = vshrl.u32 %v7242, 7
      %v7244 = vsub.s32 %v7241, %v7243
      %v7245 = vrot.slane %v7238, %v7244
      %v7247 = vunpack.c.l.s4 1966171168
      %v7248 = vunpack.c.0.s8 %v7247
      %v7249 = vlaneseq
      %v7250 = vshrl.u32 %v7249, 7
      %v7251 = vsub.s32 %v7248, %v7250
      %v7252 = vrot.slane %v7237, %v7251
      %v7253 = vcombine.low %v7245, %v7252
      %v7254 = vcombine.low %v4565, %v4579
      %v7255 = vcombine.low %v4587, %v4589
      %v7257 = vunpack.c.l.s4 1966171168
      %v7258 = vunpack.c.0.s8 %v7257
      %v7259 = vlaneseq
      %v7260 = vshrl.u32 %v7259, 7
      %v7261 = vsub.s32 %v7258, %v7260
      %v7262 = vrot.slane %v7254, %v7261
      %v7264 = vunpack.c.l.s4 1966171168
      %v7265 = vunpack.c.0.s8 %v7264
      %v7266 = vlaneseq
      %v7267 = vshrl.u32 %v7266, 7
      %v7268 = vsub.s32 %v7265, %v7267
      %v7269 = vrot.slane %v7255, %v7268
      %v7271 = vunpack.c.l.s4 1966171168
      %v7272 = vunpack.c.0.s8 %v7271
      %v7273 = vlaneseq
      %v7274 = vshrl.u32 %v7273, 7
      %v7275 = vsub.s32 %v7272, %v7274
      %v7276 = vrot.slane %v4572, %v7275
      %v7277 = vcombine.low %v7262, %v7269
      %v7279 = vunpack.c.l.s4 1966171168
      %v7280 = vunpack.c.0.s8 %v7279
      %v7281 = vlaneseq
      %v7282 = vshrl.u32 %v7281, 7
      %v7283 = vsub.s32 %v7280, %v7282
      %v7284 = vrot.slane %v7277, %v7283
      %v7286 = vunpack.c.l.s4 1966171168
      %v7287 = vunpack.c.0.s8 %v7286
      %v7288 = vlaneseq
      %v7289 = vshrl.u32 %v7288, 7
      %v7290 = vsub.s32 %v7287, %v7289
      %v7291 = vrot.slane %v7276, %v7290
      %v7292 = vcombine.low %v7284, %v7291
      %v7293 = vcombine.low %v4586, %v4588
      %v7294 = vcombine.low %v4590, %v4614
      %v7296 = vunpack.c.l.s4 1966171168
      %v7297 = vunpack.c.0.s8 %v7296
      %v7298 = vlaneseq
      %v7299 = vshrl.u32 %v7298, 7
      %v7300 = vsub.s32 %v7297, %v7299
      %v7301 = vrot.slane %v7293, %v7300
      %v7303 = vunpack.c.l.s4 1966171168
      %v7304 = vunpack.c.0.s8 %v7303
      %v7305 = vlaneseq
      %v7306 = vshrl.u32 %v7305, 7
      %v7307 = vsub.s32 %v7304, %v7306
      %v7308 = vrot.slane %v7294, %v7307
      %v7310 = vunpack.c.l.s4 1966171168
      %v7311 = vunpack.c.0.s8 %v7310
      %v7312 = vlaneseq
      %v7313 = vshrl.u32 %v7312, 7
      %v7314 = vsub.s32 %v7311, %v7313
      %v7315 = vrot.slane %v4628, %v7314
      %v7316 = vcombine.low %v7301, %v7308
      %v7318 = vunpack.c.l.s4 1966171168
      %v7319 = vunpack.c.0.s8 %v7318
      %v7320 = vlaneseq
      %v7321 = vshrl.u32 %v7320, 7
      %v7322 = vsub.s32 %v7319, %v7321
      %v7323 = vrot.slane %v7316, %v7322
      %v7325 = vunpack.c.l.s4 1966171168
      %v7326 = vunpack.c.0.s8 %v7325
      %v7327 = vlaneseq
      %v7328 = vshrl.u32 %v7327, 7
      %v7329 = vsub.s32 %v7326, %v7328
      %v7330 = vrot.slane %v7315, %v7329
      %v7331 = vcombine.low %v7323, %v7330
      %v7332 = vcombine.low %v4636, %v4638
      %v7333 = vcombine.low %v4621, %v4635
      %v7335 = vunpack.c.l.s4 1966171168
      %v7336 = vunpack.c.0.s8 %v7335
      %v7337 = vlaneseq
      %v7338 = vshrl.u32 %v7337, 7
      %v7339 = vsub.s32 %v7336, %v7338
      %v7340 = vrot.slane %v7332, %v7339
      %v7342 = vunpack.c.l.s4 1966171168
      %v7343 = vunpack.c.0.s8 %v7342
      %v7344 = vlaneseq
      %v7345 = vshrl.u32 %v7344, 7
      %v7346 = vsub.s32 %v7343, %v7345
      %v7347 = vrot.slane %v7333, %v7346
      %v7349 = vunpack.c.l.s4 1966171168
      %v7350 = vunpack.c.0.s8 %v7349
      %v7351 = vlaneseq
      %v7352 = vshrl.u32 %v7351, 7
      %v7353 = vsub.s32 %v7350, %v7352
      %v7354 = vrot.slane %v4637, %v7353
      %v7355 = vcombine.low %v7340, %v7347
      %v7357 = vunpack.c.l.s4 1966171168
      %v7358 = vunpack.c.0.s8 %v7357
      %v7359 = vlaneseq
      %v7360 = vshrl.u32 %v7359, 7
      %v7361 = vsub.s32 %v7358, %v7360
      %v7362 = vrot.slane %v7355, %v7361
      %v7364 = vunpack.c.l.s4 1966171168
      %v7365 = vunpack.c.0.s8 %v7364
      %v7366 = vlaneseq
      %v7367 = vshrl.u32 %v7366, 7
      %v7368 = vsub.s32 %v7365, %v7367
      %v7369 = vrot.slane %v7354, %v7368
      %v7370 = vcombine.low %v7362, %v7369
      %v7371 = vcombine.low %v4639, %v4654
      %v7372 = vcombine.low %v4661, %v4662
      %v7374 = vunpack.c.l.s4 1966171168
      %v7375 = vunpack.c.0.s8 %v7374
      %v7376 = vlaneseq
      %v7377 = vshrl.u32 %v7376, 7
      %v7378 = vsub.s32 %v7375, %v7377
      %v7379 = vrot.slane %v7371, %v7378
      %v7381 = vunpack.c.l.s4 1966171168
      %v7382 = vunpack.c.0.s8 %v7381
      %v7383 = vlaneseq
      %v7384 = vshrl.u32 %v7383, 7
      %v7385 = vsub.s32 %v7382, %v7384
      %v7386 = vrot.slane %v7372, %v7385
      %v7388 = vunpack.c.l.s4 1966171168
      %v7389 = vunpack.c.0.s8 %v7388
      %v7390 = vlaneseq
      %v7391 = vshrl.u32 %v7390, 7
      %v7392 = vsub.s32 %v7389, %v7391
      %v7393 = vrot.slane %v4663, %v7392
      %v7394 = vcombine.low %v7379, %v7386
      %v7396 = vunpack.c.l.s4 1966171168
      %v7397 = vunpack.c.0.s8 %v7396
      %v7398 = vlaneseq
      %v7399 = vshrl.u32 %v7398, 7
      %v7400 = vsub.s32 %v7397, %v7399
      %v7401 = vrot.slane %v7394, %v7400
      %v7403 = vunpack.c.l.s4 1966171168
      %v7404 = vunpack.c.0.s8 %v7403
      %v7405 = vlaneseq
      %v7406 = vshrl.u32 %v7405, 7
      %v7407 = vsub.s32 %v7404, %v7406
      %v7408 = vrot.slane %v7393, %v7407
      %v7409 = vcombine.low %v7401, %v7408
      %v7410 = vcombine.low %v4687, %v4701
      %v7411 = vcombine.low %v4709, %v4711
      %v7413 = vunpack.c.l.s4 1966171168
      %v7414 = vunpack.c.0.s8 %v7413
      %v7415 = vlaneseq
      %v7416 = vshrl.u32 %v7415, 7
      %v7417 = vsub.s32 %v7414, %v7416
      %v7418 = vrot.slane %v7410, %v7417
      %v7420 = vunpack.c.l.s4 1966171168
      %v7421 = vunpack.c.0.s8 %v7420
      %v7422 = vlaneseq
      %v7423 = vshrl.u32 %v7422, 7
      %v7424 = vsub.s32 %v7421, %v7423
      %v7425 = vrot.slane %v7411, %v7424
      %v7427 = vunpack.c.l.s4 1966171168
      %v7428 = vunpack.c.0.s8 %v7427
      %v7429 = vlaneseq
      %v7430 = vshrl.u32 %v7429, 7
      %v7431 = vsub.s32 %v7428, %v7430
      %v7432 = vrot.slane %v4694, %v7431
      %v7433 = vcombine.low %v7418, %v7425
      %v7435 = vunpack.c.l.s4 1966171168
      %v7436 = vunpack.c.0.s8 %v7435
      %v7437 = vlaneseq
      %v7438 = vshrl.u32 %v7437, 7
      %v7439 = vsub.s32 %v7436, %v7438
      %v7440 = vrot.slane %v7433, %v7439
      %v7442 = vunpack.c.l.s4 1966171168
      %v7443 = vunpack.c.0.s8 %v7442
      %v7444 = vlaneseq
      %v7445 = vshrl.u32 %v7444, 7
      %v7446 = vsub.s32 %v7443, %v7445
      %v7447 = vrot.slane %v7432, %v7446
      %v7448 = vcombine.low %v7440, %v7447
      %v7449 = vcombine.low %v4708, %v4710
      %v7450 = vcombine.low %v4712, %v4736
      %v7452 = vunpack.c.l.s4 1966171168
      %v7453 = vunpack.c.0.s8 %v7452
      %v7454 = vlaneseq
      %v7455 = vshrl.u32 %v7454, 7
      %v7456 = vsub.s32 %v7453, %v7455
      %v7457 = vrot.slane %v7449, %v7456
      %v7459 = vunpack.c.l.s4 1966171168
      %v7460 = vunpack.c.0.s8 %v7459
      %v7461 = vlaneseq
      %v7462 = vshrl.u32 %v7461, 7
      %v7463 = vsub.s32 %v7460, %v7462
      %v7464 = vrot.slane %v7450, %v7463
      %v7466 = vunpack.c.l.s4 1966171168
      %v7467 = vunpack.c.0.s8 %v7466
      %v7468 = vlaneseq
      %v7469 = vshrl.u32 %v7468, 7
      %v7470 = vsub.s32 %v7467, %v7469
      %v7471 = vrot.slane %v4750, %v7470
      %v7472 = vcombine.low %v7457, %v7464
      %v7474 = vunpack.c.l.s4 1966171168
      %v7475 = vunpack.c.0.s8 %v7474
      %v7476 = vlaneseq
      %v7477 = vshrl.u32 %v7476, 7
      %v7478 = vsub.s32 %v7475, %v7477
      %v7479 = vrot.slane %v7472, %v7478
      %v7481 = vunpack.c.l.s4 1966171168
      %v7482 = vunpack.c.0.s8 %v7481
      %v7483 = vlaneseq
      %v7484 = vshrl.u32 %v7483, 7
      %v7485 = vsub.s32 %v7482, %v7484
      %v7486 = vrot.slane %v7471, %v7485
      %v7487 = vcombine.low %v7479, %v7486
      %v7488 = vcombine.low %v4758, %v4760
      %v7489 = vcombine.low %v4743, %v4757
      %v7491 = vunpack.c.l.s4 1966171168
      %v7492 = vunpack.c.0.s8 %v7491
      %v7493 = vlaneseq
      %v7494 = vshrl.u32 %v7493, 7
      %v7495 = vsub.s32 %v7492, %v7494
      %v7496 = vrot.slane %v7488, %v7495
      %v7498 = vunpack.c.l.s4 1966171168
      %v7499 = vunpack.c.0.s8 %v7498
      %v7500 = vlaneseq
      %v7501 = vshrl.u32 %v7500, 7
      %v7502 = vsub.s32 %v7499, %v7501
      %v7503 = vrot.slane %v7489, %v7502
      %v7505 = vunpack.c.l.s4 1966171168
      %v7506 = vunpack.c.0.s8 %v7505
      %v7507 = vlaneseq
      %v7508 = vshrl.u32 %v7507, 7
      %v7509 = vsub.s32 %v7506, %v7508
      %v7510 = vrot.slane %v4759, %v7509
      %v7511 = vcombine.low %v7496, %v7503
      %v7513 = vunpack.c.l.s4 1966171168
      %v7514 = vunpack.c.0.s8 %v7513
      %v7515 = vlaneseq
      %v7516 = vshrl.u32 %v7515, 7
      %v7517 = vsub.s32 %v7514, %v7516
      %v7518 = vrot.slane %v7511, %v7517
      %v7520 = vunpack.c.l.s4 1966171168
      %v7521 = vunpack.c.0.s8 %v7520
      %v7522 = vlaneseq
      %v7523 = vshrl.u32 %v7522, 7
      %v7524 = vsub.s32 %v7521, %v7523
      %v7525 = vrot.slane %v7510, %v7524
      %v7526 = vcombine.low %v7518, %v7525
      %v7527 = vcombine.low %v4761, %v4776
      %v7528 = vcombine.low %v4783, %v4784
      %v7530 = vunpack.c.l.s4 1966171168
      %v7531 = vunpack.c.0.s8 %v7530
      %v7532 = vlaneseq
      %v7533 = vshrl.u32 %v7532, 7
      %v7534 = vsub.s32 %v7531, %v7533
      %v7535 = vrot.slane %v7527, %v7534
      %v7537 = vunpack.c.l.s4 1966171168
      %v7538 = vunpack.c.0.s8 %v7537
      %v7539 = vlaneseq
      %v7540 = vshrl.u32 %v7539, 7
      %v7541 = vsub.s32 %v7538, %v7540
      %v7542 = vrot.slane %v7528, %v7541
      %v7544 = vunpack.c.l.s4 1966171168
      %v7545 = vunpack.c.0.s8 %v7544
      %v7546 = vlaneseq
      %v7547 = vshrl.u32 %v7546, 7
      %v7548 = vsub.s32 %v7545, %v7547
      %v7549 = vrot.slane %v4785, %v7548
      %v7550 = vcombine.low %v7535, %v7542
      %v7552 = vunpack.c.l.s4 1966171168
      %v7553 = vunpack.c.0.s8 %v7552
      %v7554 = vlaneseq
      %v7555 = vshrl.u32 %v7554, 7
      %v7556 = vsub.s32 %v7553, %v7555
      %v7557 = vrot.slane %v7550, %v7556
      %v7559 = vunpack.c.l.s4 1966171168
      %v7560 = vunpack.c.0.s8 %v7559
      %v7561 = vlaneseq
      %v7562 = vshrl.u32 %v7561, 7
      %v7563 = vsub.s32 %v7560, %v7562
      %v7564 = vrot.slane %v7549, %v7563
      %v7565 = vcombine.low %v7557, %v7564
      %v7566 = vcombine.low %v4809, %v4823
      %v7567 = vcombine.low %v4831, %v4833
      %v7569 = vunpack.c.l.s4 1966171168
      %v7570 = vunpack.c.0.s8 %v7569
      %v7571 = vlaneseq
      %v7572 = vshrl.u32 %v7571, 7
      %v7573 = vsub.s32 %v7570, %v7572
      %v7574 = vrot.slane %v7566, %v7573
      %v7576 = vunpack.c.l.s4 1966171168
      %v7577 = vunpack.c.0.s8 %v7576
      %v7578 = vlaneseq
      %v7579 = vshrl.u32 %v7578, 7
      %v7580 = vsub.s32 %v7577, %v7579
      %v7581 = vrot.slane %v7567, %v7580
      %v7583 = vunpack.c.l.s4 1966171168
      %v7584 = vunpack.c.0.s8 %v7583
      %v7585 = vlaneseq
      %v7586 = vshrl.u32 %v7585, 7
      %v7587 = vsub.s32 %v7584, %v7586
      %v7588 = vrot.slane %v4816, %v7587
      %v7589 = vcombine.low %v7574, %v7581
      %v7591 = vunpack.c.l.s4 1966171168
      %v7592 = vunpack.c.0.s8 %v7591
      %v7593 = vlaneseq
      %v7594 = vshrl.u32 %v7593, 7
      %v7595 = vsub.s32 %v7592, %v7594
      %v7596 = vrot.slane %v7589, %v7595
      %v7598 = vunpack.c.l.s4 1966171168
      %v7599 = vunpack.c.0.s8 %v7598
      %v7600 = vlaneseq
      %v7601 = vshrl.u32 %v7600, 7
      %v7602 = vsub.s32 %v7599, %v7601
      %v7603 = vrot.slane %v7588, %v7602
      %v7604 = vcombine.low %v7596, %v7603
      %v7605 = vcombine.low %v4830, %v4832
      %v7606 = vcombine.low %v4834, %v4858
      %v7608 = vunpack.c.l.s4 1966171168
      %v7609 = vunpack.c.0.s8 %v7608
      %v7610 = vlaneseq
      %v7611 = vshrl.u32 %v7610, 7
      %v7612 = vsub.s32 %v7609, %v7611
      %v7613 = vrot.slane %v7605, %v7612
      %v7615 = vunpack.c.l.s4 1966171168
      %v7616 = vunpack.c.0.s8 %v7615
      %v7617 = vlaneseq
      %v7618 = vshrl.u32 %v7617, 7
      %v7619 = vsub.s32 %v7616, %v7618
      %v7620 = vrot.slane %v7606, %v7619
      %v7622 = vunpack.c.l.s4 1966171168
      %v7623 = vunpack.c.0.s8 %v7622
      %v7624 = vlaneseq
      %v7625 = vshrl.u32 %v7624, 7
      %v7626 = vsub.s32 %v7623, %v7625
      %v7627 = vrot.slane %v4872, %v7626
      %v7628 = vcombine.low %v7613, %v7620
      %v7630 = vunpack.c.l.s4 1966171168
      %v7631 = vunpack.c.0.s8 %v7630
      %v7632 = vlaneseq
      %v7633 = vshrl.u32 %v7632, 7
      %v7634 = vsub.s32 %v7631, %v7633
      %v7635 = vrot.slane %v7628, %v7634
      %v7637 = vunpack.c.l.s4 1966171168
      %v7638 = vunpack.c.0.s8 %v7637
      %v7639 = vlaneseq
      %v7640 = vshrl.u32 %v7639, 7
      %v7641 = vsub.s32 %v7638, %v7640
      %v7642 = vrot.slane %v7627, %v7641
      %v7643 = vcombine.low %v7635, %v7642
      %v7644 = vcombine.low %v4880, %v4882
      %v7645 = vcombine.low %v4865, %v4879
      %v7647 = vunpack.c.l.s4 1966171168
      %v7648 = vunpack.c.0.s8 %v7647
      %v7649 = vlaneseq
      %v7650 = vshrl.u32 %v7649, 7
      %v7651 = vsub.s32 %v7648, %v7650
      %v7652 = vrot.slane %v7644, %v7651
      %v7654 = vunpack.c.l.s4 1966171168
      %v7655 = vunpack.c.0.s8 %v7654
      %v7656 = vlaneseq
      %v7657 = vshrl.u32 %v7656, 7
      %v7658 = vsub.s32 %v7655, %v7657
      %v7659 = vrot.slane %v7645, %v7658
      %v7661 = vunpack.c.l.s4 1966171168
      %v7662 = vunpack.c.0.s8 %v7661
      %v7663 = vlaneseq
      %v7664 = vshrl.u32 %v7663, 7
      %v7665 = vsub.s32 %v7662, %v7664
      %v7666 = vrot.slane %v4881, %v7665
      %v7667 = vcombine.low %v7652, %v7659
      %v7669 = vunpack.c.l.s4 1966171168
      %v7670 = vunpack.c.0.s8 %v7669
      %v7671 = vlaneseq
      %v7672 = vshrl.u32 %v7671, 7
      %v7673 = vsub.s32 %v7670, %v7672
      %v7674 = vrot.slane %v7667, %v7673
      %v7676 = vunpack.c.l.s4 1966171168
      %v7677 = vunpack.c.0.s8 %v7676
      %v7678 = vlaneseq
      %v7679 = vshrl.u32 %v7678, 7
      %v7680 = vsub.s32 %v7677, %v7679
      %v7681 = vrot.slane %v7666, %v7680
      %v7682 = vcombine.low %v7674, %v7681
      %v7683 = vcombine.low %v4883, %v4898
      %v7684 = vcombine.low %v4905, %v4906
      %v7686 = vunpack.c.l.s4 1966171168
      %v7687 = vunpack.c.0.s8 %v7686
      %v7688 = vlaneseq
      %v7689 = vshrl.u32 %v7688, 7
      %v7690 = vsub.s32 %v7687, %v7689
      %v7691 = vrot.slane %v7683, %v7690
      %v7693 = vunpack.c.l.s4 1966171168
      %v7694 = vunpack.c.0.s8 %v7693
      %v7695 = vlaneseq
      %v7696 = vshrl.u32 %v7695, 7
      %v7697 = vsub.s32 %v7694, %v7696
      %v7698 = vrot.slane %v7684, %v7697
      %v7700 = vunpack.c.l.s4 1966171168
      %v7701 = vunpack.c.0.s8 %v7700
      %v7702 = vlaneseq
      %v7703 = vshrl.u32 %v7702, 7
      %v7704 = vsub.s32 %v7701, %v7703
      %v7705 = vrot.slane %v4907, %v7704
      %v7706 = vcombine.low %v7691, %v7698
      %v7708 = vunpack.c.l.s4 1966171168
      %v7709 = vunpack.c.0.s8 %v7708
      %v7710 = vlaneseq
      %v7711 = vshrl.u32 %v7710, 7
      %v7712 = vsub.s32 %v7709, %v7711
      %v7713 = vrot.slane %v7706, %v7712
      %v7715 = vunpack.c.l.s4 1966171168
      %v7716 = vunpack.c.0.s8 %v7715
      %v7717 = vlaneseq
      %v7718 = vshrl.u32 %v7717, 7
      %v7719 = vsub.s32 %v7716, %v7718
      %v7720 = vrot.slane %v7705, %v7719
      %v7721 = vcombine.low %v7713, %v7720
      %v7722 = vcombine.low %v4931, %v4945
      %v7723 = vcombine.low %v4953, %v4955
      %v7725 = vunpack.c.l.s4 1966171168
      %v7726 = vunpack.c.0.s8 %v7725
      %v7727 = vlaneseq
      %v7728 = vshrl.u32 %v7727, 7
      %v7729 = vsub.s32 %v7726, %v7728
      %v7730 = vrot.slane %v7722, %v7729
      %v7732 = vunpack.c.l.s4 1966171168
      %v7733 = vunpack.c.0.s8 %v7732
      %v7734 = vlaneseq
      %v7735 = vshrl.u32 %v7734, 7
      %v7736 = vsub.s32 %v7733, %v7735
      %v7737 = vrot.slane %v7723, %v7736
      %v7739 = vunpack.c.l.s4 1966171168
      %v7740 = vunpack.c.0.s8 %v7739
      %v7741 = vlaneseq
      %v7742 = vshrl.u32 %v7741, 7
      %v7743 = vsub.s32 %v7740, %v7742
      %v7744 = vrot.slane %v4938, %v7743
      %v7745 = vcombine.low %v7730, %v7737
      %v7747 = vunpack.c.l.s4 1966171168
      %v7748 = vunpack.c.0.s8 %v7747
      %v7749 = vlaneseq
      %v7750 = vshrl.u32 %v7749, 7
      %v7751 = vsub.s32 %v7748, %v7750
      %v7752 = vrot.slane %v7745, %v7751
      %v7754 = vunpack.c.l.s4 1966171168
      %v7755 = vunpack.c.0.s8 %v7754
      %v7756 = vlaneseq
      %v7757 = vshrl.u32 %v7756, 7
      %v7758 = vsub.s32 %v7755, %v7757
      %v7759 = vrot.slane %v7744, %v7758
      %v7760 = vcombine.low %v7752, %v7759
      %v7761 = vcombine.low %v4952, %v4954
      %v7762 = vcombine.low %v4956, %v4980
      %v7764 = vunpack.c.l.s4 1966171168
      %v7765 = vunpack.c.0.s8 %v7764
      %v7766 = vlaneseq
      %v7767 = vshrl.u32 %v7766, 7
      %v7768 = vsub.s32 %v7765, %v7767
      %v7769 = vrot.slane %v7761, %v7768
      %v7771 = vunpack.c.l.s4 1966171168
      %v7772 = vunpack.c.0.s8 %v7771
      %v7773 = vlaneseq
      %v7774 = vshrl.u32 %v7773, 7
      %v7775 = vsub.s32 %v7772, %v7774
      %v7776 = vrot.slane %v7762, %v7775
      %v7778 = vunpack.c.l.s4 1966171168
      %v7779 = vunpack.c.0.s8 %v7778
      %v7780 = vlaneseq
      %v7781 = vshrl.u32 %v7780, 7
      %v7782 = vsub.s32 %v7779, %v7781
      %v7783 = vrot.slane %v4994, %v7782
      %v7784 = vcombine.low %v7769, %v7776
      %v7786 = vunpack.c.l.s4 1966171168
      %v7787 = vunpack.c.0.s8 %v7786
      %v7788 = vlaneseq
      %v7789 = vshrl.u32 %v7788, 7
      %v7790 = vsub.s32 %v7787, %v7789
      %v7791 = vrot.slane %v7784, %v7790
      %v7793 = vunpack.c.l.s4 1966171168
      %v7794 = vunpack.c.0.s8 %v7793
      %v7795 = vlaneseq
      %v7796 = vshrl.u32 %v7795, 7
      %v7797 = vsub.s32 %v7794, %v7796
      %v7798 = vrot.slane %v7783, %v7797
      %v7799 = vcombine.low %v7791, %v7798
      %v7800 = vcombine.low %v5002, %v5004
      %v7801 = vcombine.low %v4987, %v5001
      %v7803 = vunpack.c.l.s4 1966171168
      %v7804 = vunpack.c.0.s8 %v7803
      %v7805 = vlaneseq
      %v7806 = vshrl.u32 %v7805, 7
      %v7807 = vsub.s32 %v7804, %v7806
      %v7808 = vrot.slane %v7800, %v7807
      %v7810 = vunpack.c.l.s4 1966171168
      %v7811 = vunpack.c.0.s8 %v7810
      %v7812 = vlaneseq
      %v7813 = vshrl.u32 %v7812, 7
      %v7814 = vsub.s32 %v7811, %v7813
      %v7815 = vrot.slane %v7801, %v7814
      %v7817 = vunpack.c.l.s4 1966171168
      %v7818 = vunpack.c.0.s8 %v7817
      %v7819 = vlaneseq
      %v7820 = vshrl.u32 %v7819, 7
      %v7821 = vsub.s32 %v7818, %v7820
      %v7822 = vrot.slane %v5003, %v7821
      %v7823 = vcombine.low %v7808, %v7815
      %v7825 = vunpack.c.l.s4 1966171168
      %v7826 = vunpack.c.0.s8 %v7825
      %v7827 = vlaneseq
      %v7828 = vshrl.u32 %v7827, 7
      %v7829 = vsub.s32 %v7826, %v7828
      %v7830 = vrot.slane %v7823, %v7829
      %v7832 = vunpack.c.l.s4 1966171168
      %v7833 = vunpack.c.0.s8 %v7832
      %v7834 = vlaneseq
      %v7835 = vshrl.u32 %v7834, 7
      %v7836 = vsub.s32 %v7833, %v7835
      %v7837 = vrot.slane %v7822, %v7836
      %v7838 = vcombine.low %v7830, %v7837
      %v7839 = vcombine.low %v5005, %v5020
      %v7840 = vcombine.low %v5027, %v5028
      %v7842 = vunpack.c.l.s4 1966171168
      %v7843 = vunpack.c.0.s8 %v7842
      %v7844 = vlaneseq
      %v7845 = vshrl.u32 %v7844, 7
      %v7846 = vsub.s32 %v7843, %v7845
      %v7847 = vrot.slane %v7839, %v7846
      %v7849 = vunpack.c.l.s4 1966171168
      %v7850 = vunpack.c.0.s8 %v7849
      %v7851 = vlaneseq
      %v7852 = vshrl.u32 %v7851, 7
      %v7853 = vsub.s32 %v7850, %v7852
      %v7854 = vrot.slane %v7840, %v7853
      %v7856 = vunpack.c.l.s4 1966171168
      %v7857 = vunpack.c.0.s8 %v7856
      %v7858 = vlaneseq
      %v7859 = vshrl.u32 %v7858, 7
      %v7860 = vsub.s32 %v7857, %v7859
      %v7861 = vrot.slane %v5029, %v7860
      %v7862 = vcombine.low %v7847, %v7854
      %v7864 = vunpack.c.l.s4 1966171168
      %v7865 = vunpack.c.0.s8 %v7864
      %v7866 = vlaneseq
      %v7867 = vshrl.u32 %v7866, 7
      %v7868 = vsub.s32 %v7865, %v7867
      %v7869 = vrot.slane %v7862, %v7868
      %v7871 = vunpack.c.l.s4 1966171168
      %v7872 = vunpack.c.0.s8 %v7871
      %v7873 = vlaneseq
      %v7874 = vshrl.u32 %v7873, 7
      %v7875 = vsub.s32 %v7872, %v7874
      %v7876 = vrot.slane %v7861, %v7875
      %v7877 = vcombine.low %v7869, %v7876
      %v7878 = vcombine.low %v5053, %v5067
      %v7879 = vcombine.low %v5075, %v5077
      %v7881 = vunpack.c.l.s4 1966171168
      %v7882 = vunpack.c.0.s8 %v7881
      %v7883 = vlaneseq
      %v7884 = vshrl.u32 %v7883, 7
      %v7885 = vsub.s32 %v7882, %v7884
      %v7886 = vrot.slane %v7878, %v7885
      %v7888 = vunpack.c.l.s4 1966171168
      %v7889 = vunpack.c.0.s8 %v7888
      %v7890 = vlaneseq
      %v7891 = vshrl.u32 %v7890, 7
      %v7892 = vsub.s32 %v7889, %v7891
      %v7893 = vrot.slane %v7879, %v7892
      %v7895 = vunpack.c.l.s4 1966171168
      %v7896 = vunpack.c.0.s8 %v7895
      %v7897 = vlaneseq
      %v7898 = vshrl.u32 %v7897, 7
      %v7899 = vsub.s32 %v7896, %v7898
      %v7900 = vrot.slane %v5060, %v7899
      %v7901 = vcombine.low %v7886, %v7893
      %v7903 = vunpack.c.l.s4 1966171168
      %v7904 = vunpack.c.0.s8 %v7903
      %v7905 = vlaneseq
      %v7906 = vshrl.u32 %v7905, 7
      %v7907 = vsub.s32 %v7904, %v7906
      %v7908 = vrot.slane %v7901, %v7907
      %v7910 = vunpack.c.l.s4 1966171168
      %v7911 = vunpack.c.0.s8 %v7910
      %v7912 = vlaneseq
      %v7913 = vshrl.u32 %v7912, 7
      %v7914 = vsub.s32 %v7911, %v7913
      %v7915 = vrot.slane %v7900, %v7914
      %v7916 = vcombine.low %v7908, %v7915
      %v7917 = vcombine.low %v5074, %v5076
      %v7918 = vcombine.low %v5078, %v5102
      %v7920 = vunpack.c.l.s4 1966171168
      %v7921 = vunpack.c.0.s8 %v7920
      %v7922 = vlaneseq
      %v7923 = vshrl.u32 %v7922, 7
      %v7924 = vsub.s32 %v7921, %v7923
      %v7925 = vrot.slane %v7917, %v7924
      %v7927 = vunpack.c.l.s4 1966171168
      %v7928 = vunpack.c.0.s8 %v7927
      %v7929 = vlaneseq
      %v7930 = vshrl.u32 %v7929, 7
      %v7931 = vsub.s32 %v7928, %v7930
      %v7932 = vrot.slane %v7918, %v7931
      %v7934 = vunpack.c.l.s4 1966171168
      %v7935 = vunpack.c.0.s8 %v7934
      %v7936 = vlaneseq
      %v7937 = vshrl.u32 %v7936, 7
      %v7938 = vsub.s32 %v7935, %v7937
      %v7939 = vrot.slane %v5116, %v7938
      %v7940 = vcombine.low %v7925, %v7932
      %v7942 = vunpack.c.l.s4 1966171168
      %v7943 = vunpack.c.0.s8 %v7942
      %v7944 = vlaneseq
      %v7945 = vshrl.u32 %v7944, 7
      %v7946 = vsub.s32 %v7943, %v7945
      %v7947 = vrot.slane %v7940, %v7946
      %v7949 = vunpack.c.l.s4 1966171168
      %v7950 = vunpack.c.0.s8 %v7949
      %v7951 = vlaneseq
      %v7952 = vshrl.u32 %v7951, 7
      %v7953 = vsub.s32 %v7950, %v7952
      %v7954 = vrot.slane %v7939, %v7953
      %v7955 = vcombine.low %v7947, %v7954
      %v7956 = vcombine.low %v5124, %v5126
      %v7957 = vcombine.low %v5109, %v5123
      %v7959 = vunpack.c.l.s4 1966171168
      %v7960 = vunpack.c.0.s8 %v7959
      %v7961 = vlaneseq
      %v7962 = vshrl.u32 %v7961, 7
      %v7963 = vsub.s32 %v7960, %v7962
      %v7964 = vrot.slane %v7956, %v7963
      %v7966 = vunpack.c.l.s4 1966171168
      %v7967 = vunpack.c.0.s8 %v7966
      %v7968 = vlaneseq
      %v7969 = vshrl.u32 %v7968, 7
      %v7970 = vsub.s32 %v7967, %v7969
      %v7971 = vrot.slane %v7957, %v7970
      %v7973 = vunpack.c.l.s4 1966171168
      %v7974 = vunpack.c.0.s8 %v7973
      %v7975 = vlaneseq
      %v7976 = vshrl.u32 %v7975, 7
      %v7977 = vsub.s32 %v7974, %v7976
      %v7978 = vrot.slane %v5125, %v7977
      %v7979 = vcombine.low %v7964, %v7971
      %v7981 = vunpack.c.l.s4 1966171168
      %v7982 = vunpack.c.0.s8 %v7981
      %v7983 = vlaneseq
      %v7984 = vshrl.u32 %v7983, 7
      %v7985 = vsub.s32 %v7982, %v7984
      %v7986 = vrot.slane %v7979, %v7985
      %v7988 = vunpack.c.l.s4 1966171168
      %v7989 = vunpack.c.0.s8 %v7988
      %v7990 = vlaneseq
      %v7991 = vshrl.u32 %v7990, 7
      %v7992 = vsub.s32 %v7989, %v7991
      %v7993 = vrot.slane %v7978, %v7992
      %v7994 = vcombine.low %v7986, %v7993
      %v7995 = vcombine.low %v5127, %v5142
      %v7996 = vcombine.low %v5149, %v5150
      %v7998 = vunpack.c.l.s4 1966171168
      %v7999 = vunpack.c.0.s8 %v7998
      %v8000 = vlaneseq
      %v8001 = vshrl.u32 %v8000, 7
      %v8002 = vsub.s32 %v7999, %v8001
      %v8003 = vrot.slane %v7995, %v8002
      %v8005 = vunpack.c.l.s4 1966171168
      %v8006 = vunpack.c.0.s8 %v8005
      %v8007 = vlaneseq
      %v8008 = vshrl.u32 %v8007, 7
      %v8009 = vsub.s32 %v8006, %v8008
      %v8010 = vrot.slane %v7996, %v8009
      %v8012 = vunpack.c.l.s4 1966171168
      %v8013 = vunpack.c.0.s8 %v8012
      %v8014 = vlaneseq
      %v8015 = vshrl.u32 %v8014, 7
      %v8016 = vsub.s32 %v8013, %v8015
      %v8017 = vrot.slane %v5151, %v8016
      %v8018 = vcombine.low %v8003, %v8010
      %v8020 = vunpack.c.l.s4 1966171168
      %v8021 = vunpack.c.0.s8 %v8020
      %v8022 = vlaneseq
      %v8023 = vshrl.u32 %v8022, 7
      %v8024 = vsub.s32 %v8021, %v8023
      %v8025 = vrot.slane %v8018, %v8024
      %v8027 = vunpack.c.l.s4 1966171168
      %v8028 = vunpack.c.0.s8 %v8027
      %v8029 = vlaneseq
      %v8030 = vshrl.u32 %v8029, 7
      %v8031 = vsub.s32 %v8028, %v8030
      %v8032 = vrot.slane %v8017, %v8031
      %v8033 = vcombine.low %v8025, %v8032
      %v8034 = vcombine.low %v5175, %v5189
      %v8035 = vcombine.low %v5197, %v5199
      %v8037 = vunpack.c.l.s4 1966171168
      %v8038 = vunpack.c.0.s8 %v8037
      %v8039 = vlaneseq
      %v8040 = vshrl.u32 %v8039, 7
      %v8041 = vsub.s32 %v8038, %v8040
      %v8042 = vrot.slane %v8034, %v8041
      %v8044 = vunpack.c.l.s4 1966171168
      %v8045 = vunpack.c.0.s8 %v8044
      %v8046 = vlaneseq
      %v8047 = vshrl.u32 %v8046, 7
      %v8048 = vsub.s32 %v8045, %v8047
      %v8049 = vrot.slane %v8035, %v8048
      %v8051 = vunpack.c.l.s4 1966171168
      %v8052 = vunpack.c.0.s8 %v8051
      %v8053 = vlaneseq
      %v8054 = vshrl.u32 %v8053, 7
      %v8055 = vsub.s32 %v8052, %v8054
      %v8056 = vrot.slane %v5182, %v8055
      %v8057 = vcombine.low %v8042, %v8049
      %v8059 = vunpack.c.l.s4 1966171168
      %v8060 = vunpack.c.0.s8 %v8059
      %v8061 = vlaneseq
      %v8062 = vshrl.u32 %v8061, 7
      %v8063 = vsub.s32 %v8060, %v8062
      %v8064 = vrot.slane %v8057, %v8063
      %v8066 = vunpack.c.l.s4 1966171168
      %v8067 = vunpack.c.0.s8 %v8066
      %v8068 = vlaneseq
      %v8069 = vshrl.u32 %v8068, 7
      %v8070 = vsub.s32 %v8067, %v8069
      %v8071 = vrot.slane %v8056, %v8070
      %v8072 = vcombine.low %v8064, %v8071
      %v8073 = vcombine.low %v5196, %v5198
      %v8074 = vcombine.low %v5200, %v5224
      %v8076 = vunpack.c.l.s4 1966171168
      %v8077 = vunpack.c.0.s8 %v8076
      %v8078 = vlaneseq
      %v8079 = vshrl.u32 %v8078, 7
      %v8080 = vsub.s32 %v8077, %v8079
      %v8081 = vrot.slane %v8073, %v8080
      %v8083 = vunpack.c.l.s4 1966171168
      %v8084 = vunpack.c.0.s8 %v8083
      %v8085 = vlaneseq
      %v8086 = vshrl.u32 %v8085, 7
      %v8087 = vsub.s32 %v8084, %v8086
      %v8088 = vrot.slane %v8074, %v8087
      %v8090 = vunpack.c.l.s4 1966171168
      %v8091 = vunpack.c.0.s8 %v8090
      %v8092 = vlaneseq
      %v8093 = vshrl.u32 %v8092, 7
      %v8094 = vsub.s32 %v8091, %v8093
      %v8095 = vrot.slane %v5238, %v8094
      %v8096 = vcombine.low %v8081, %v8088
      %v8098 = vunpack.c.l.s4 1966171168
      %v8099 = vunpack.c.0.s8 %v8098
      %v8100 = vlaneseq
      %v8101 = vshrl.u32 %v8100, 7
      %v8102 = vsub.s32 %v8099, %v8101
      %v8103 = vrot.slane %v8096, %v8102
      %v8105 = vunpack.c.l.s4 1966171168
      %v8106 = vunpack.c.0.s8 %v8105
      %v8107 = vlaneseq
      %v8108 = vshrl.u32 %v8107, 7
      %v8109 = vsub.s32 %v8106, %v8108
      %v8110 = vrot.slane %v8095, %v8109
      %v8111 = vcombine.low %v8103, %v8110
      %v8112 = vcombine.low %v5246, %v5248
      %v8113 = vcombine.low %v5231, %v5245
      %v8115 = vunpack.c.l.s4 1966171168
      %v8116 = vunpack.c.0.s8 %v8115
      %v8117 = vlaneseq
      %v8118 = vshrl.u32 %v8117, 7
      %v8119 = vsub.s32 %v8116, %v8118
      %v8120 = vrot.slane %v8112, %v8119
      %v8122 = vunpack.c.l.s4 1966171168
      %v8123 = vunpack.c.0.s8 %v8122
      %v8124 = vlaneseq
      %v8125 = vshrl.u32 %v8124, 7
      %v8126 = vsub.s32 %v8123, %v8125
      %v8127 = vrot.slane %v8113, %v8126
      %v8129 = vunpack.c.l.s4 1966171168
      %v8130 = vunpack.c.0.s8 %v8129
      %v8131 = vlaneseq
      %v8132 = vshrl.u32 %v8131, 7
      %v8133 = vsub.s32 %v8130, %v8132
      %v8134 = vrot.slane %v5247, %v8133
      %v8135 = vcombine.low %v8120, %v8127
      %v8137 = vunpack.c.l.s4 1966171168
      %v8138 = vunpack.c.0.s8 %v8137
      %v8139 = vlaneseq
      %v8140 = vshrl.u32 %v8139, 7
      %v8141 = vsub.s32 %v8138, %v8140
      %v8142 = vrot.slane %v8135, %v8141
      %v8144 = vunpack.c.l.s4 1966171168
      %v8145 = vunpack.c.0.s8 %v8144
      %v8146 = vlaneseq
      %v8147 = vshrl.u32 %v8146, 7
      %v8148 = vsub.s32 %v8145, %v8147
      %v8149 = vrot.slane %v8134, %v8148
      %v8150 = vcombine.low %v8142, %v8149
      %v8151 = vcombine.low %v5249, %v5264
      %v8152 = vcombine.low %v5271, %v5272
      %v8154 = vunpack.c.l.s4 1966171168
      %v8155 = vunpack.c.0.s8 %v8154
      %v8156 = vlaneseq
      %v8157 = vshrl.u32 %v8156, 7
      %v8158 = vsub.s32 %v8155, %v8157
      %v8159 = vrot.slane %v8151, %v8158
      %v8161 = vunpack.c.l.s4 1966171168
      %v8162 = vunpack.c.0.s8 %v8161
      %v8163 = vlaneseq
      %v8164 = vshrl.u32 %v8163, 7
      %v8165 = vsub.s32 %v8162, %v8164
      %v8166 = vrot.slane %v8152, %v8165
      %v8168 = vunpack.c.l.s4 1966171168
      %v8169 = vunpack.c.0.s8 %v8168
      %v8170 = vlaneseq
      %v8171 = vshrl.u32 %v8170, 7
      %v8172 = vsub.s32 %v8169, %v8171
      %v8173 = vrot.slane %v5273, %v8172
      %v8174 = vcombine.low %v8159, %v8166
      %v8176 = vunpack.c.l.s4 1966171168
      %v8177 = vunpack.c.0.s8 %v8176
      %v8178 = vlaneseq
      %v8179 = vshrl.u32 %v8178, 7
      %v8180 = vsub.s32 %v8177, %v8179
      %v8181 = vrot.slane %v8174, %v8180
      %v8183 = vunpack.c.l.s4 1966171168
      %v8184 = vunpack.c.0.s8 %v8183
      %v8185 = vlaneseq
      %v8186 = vshrl.u32 %v8185, 7
      %v8187 = vsub.s32 %v8184, %v8186
      %v8188 = vrot.slane %v8173, %v8187
      %v8189 = vcombine.low %v8181, %v8188
      %v8190 = vcombine.low %v5297, %v5311
      %v8191 = vcombine.low %v5319, %v5321
      %v8193 = vunpack.c.l.s4 1966171168
      %v8194 = vunpack.c.0.s8 %v8193
      %v8195 = vlaneseq
      %v8196 = vshrl.u32 %v8195, 7
      %v8197 = vsub.s32 %v8194, %v8196
      %v8198 = vrot.slane %v8190, %v8197
      %v8200 = vunpack.c.l.s4 1966171168
      %v8201 = vunpack.c.0.s8 %v8200
      %v8202 = vlaneseq
      %v8203 = vshrl.u32 %v8202, 7
      %v8204 = vsub.s32 %v8201, %v8203
      %v8205 = vrot.slane %v8191, %v8204
      %v8207 = vunpack.c.l.s4 1966171168
      %v8208 = vunpack.c.0.s8 %v8207
      %v8209 = vlaneseq
      %v8210 = vshrl.u32 %v8209, 7
      %v8211 = vsub.s32 %v8208, %v8210
      %v8212 = vrot.slane %v5304, %v8211
      %v8213 = vcombine.low %v8198, %v8205
      %v8215 = vunpack.c.l.s4 1966171168
      %v8216 = vunpack.c.0.s8 %v8215
      %v8217 = vlaneseq
      %v8218 = vshrl.u32 %v8217, 7
      %v8219 = vsub.s32 %v8216, %v8218
      %v8220 = vrot.slane %v8213, %v8219
      %v8222 = vunpack.c.l.s4 1966171168
      %v8223 = vunpack.c.0.s8 %v8222
      %v8224 = vlaneseq
      %v8225 = vshrl.u32 %v8224, 7
      %v8226 = vsub.s32 %v8223, %v8225
      %v8227 = vrot.slane %v8212, %v8226
      %v8228 = vcombine.low %v8220, %v8227
      %v8229 = vcombine.low %v5318, %v5320
      %v8230 = vcombine.low %v5322, %v5346
      %v8232 = vunpack.c.l.s4 1966171168
      %v8233 = vunpack.c.0.s8 %v8232
      %v8234 = vlaneseq
      %v8235 = vshrl.u32 %v8234, 7
      %v8236 = vsub.s32 %v8233, %v8235
      %v8237 = vrot.slane %v8229, %v8236
      %v8239 = vunpack.c.l.s4 1966171168
      %v8240 = vunpack.c.0.s8 %v8239
      %v8241 = vlaneseq
      %v8242 = vshrl.u32 %v8241, 7
      %v8243 = vsub.s32 %v8240, %v8242
      %v8244 = vrot.slane %v8230, %v8243
      %v8246 = vunpack.c.l.s4 1966171168
      %v8247 = vunpack.c.0.s8 %v8246
      %v8248 = vlaneseq
      %v8249 = vshrl.u32 %v8248, 7
      %v8250 = vsub.s32 %v8247, %v8249
      %v8251 = vrot.slane %v5360, %v8250
      %v8252 = vcombine.low %v8237, %v8244
      %v8254 = vunpack.c.l.s4 1966171168
      %v8255 = vunpack.c.0.s8 %v8254
      %v8256 = vlaneseq
      %v8257 = vshrl.u32 %v8256, 7
      %v8258 = vsub.s32 %v8255, %v8257
      %v8259 = vrot.slane %v8252, %v8258
      %v8261 = vunpack.c.l.s4 1966171168
      %v8262 = vunpack.c.0.s8 %v8261
      %v8263 = vlaneseq
      %v8264 = vshrl.u32 %v8263, 7
      %v8265 = vsub.s32 %v8262, %v8264
      %v8266 = vrot.slane %v8251, %v8265
      %v8267 = vcombine.low %v8259, %v8266
      %v8268 = vcombine.low %v5368, %v5370
      %v8269 = vcombine.low %v5353, %v5367
      %v8271 = vunpack.c.l.s4 1966171168
      %v8272 = vunpack.c.0.s8 %v8271
      %v8273 = vlaneseq
      %v8274 = vshrl.u32 %v8273, 7
      %v8275 = vsub.s32 %v8272, %v8274
      %v8276 = vrot.slane %v8268, %v8275
      %v8278 = vunpack.c.l.s4 1966171168
      %v8279 = vunpack.c.0.s8 %v8278
      %v8280 = vlaneseq
      %v8281 = vshrl.u32 %v8280, 7
      %v8282 = vsub.s32 %v8279, %v8281
      %v8283 = vrot.slane %v8269, %v8282
      %v8285 = vunpack.c.l.s4 1966171168
      %v8286 = vunpack.c.0.s8 %v8285
      %v8287 = vlaneseq
      %v8288 = vshrl.u32 %v8287, 7
      %v8289 = vsub.s32 %v8286, %v8288
      %v8290 = vrot.slane %v5369, %v8289
      %v8291 = vcombine.low %v8276, %v8283
      %v8293 = vunpack.c.l.s4 1966171168
      %v8294 = vunpack.c.0.s8 %v8293
      %v8295 = vlaneseq
      %v8296 = vshrl.u32 %v8295, 7
      %v8297 = vsub.s32 %v8294, %v8296
      %v8298 = vrot.slane %v8291, %v8297
      %v8300 = vunpack.c.l.s4 1966171168
      %v8301 = vunpack.c.0.s8 %v8300
      %v8302 = vlaneseq
      %v8303 = vshrl.u32 %v8302, 7
      %v8304 = vsub.s32 %v8301, %v8303
      %v8305 = vrot.slane %v8290, %v8304
      %v8306 = vcombine.low %v8298, %v8305
      %v8307 = vcombine.low %v5371, %v5386
      %v8308 = vcombine.low %v5393, %v5394
      %v8310 = vunpack.c.l.s4 1966171168
      %v8311 = vunpack.c.0.s8 %v8310
      %v8312 = vlaneseq
      %v8313 = vshrl.u32 %v8312, 7
      %v8314 = vsub.s32 %v8311, %v8313
      %v8315 = vrot.slane %v8307, %v8314
      %v8317 = vunpack.c.l.s4 1966171168
      %v8318 = vunpack.c.0.s8 %v8317
      %v8319 = vlaneseq
      %v8320 = vshrl.u32 %v8319, 7
      %v8321 = vsub.s32 %v8318, %v8320
      %v8322 = vrot.slane %v8308, %v8321
      %v8324 = vunpack.c.l.s4 1966171168
      %v8325 = vunpack.c.0.s8 %v8324
      %v8326 = vlaneseq
      %v8327 = vshrl.u32 %v8326, 7
      %v8328 = vsub.s32 %v8325, %v8327
      %v8329 = vrot.slane %v5395, %v8328
      %v8330 = vcombine.low %v8315, %v8322
      %v8332 = vunpack.c.l.s4 1966171168
      %v8333 = vunpack.c.0.s8 %v8332
      %v8334 = vlaneseq
      %v8335 = vshrl.u32 %v8334, 7
      %v8336 = vsub.s32 %v8333, %v8335
      %v8337 = vrot.slane %v8330, %v8336
      %v8339 = vunpack.c.l.s4 1966171168
      %v8340 = vunpack.c.0.s8 %v8339
      %v8341 = vlaneseq
      %v8342 = vshrl.u32 %v8341, 7
      %v8343 = vsub.s32 %v8340, %v8342
      %v8344 = vrot.slane %v8329, %v8343
      %v8345 = vcombine.low %v8337, %v8344
      %v8346 = vcombine.low %v5419, %v5433
      %v8347 = vcombine.low %v5441, %v5443
      %v8349 = vunpack.c.l.s4 1966171168
      %v8350 = vunpack.c.0.s8 %v8349
      %v8351 = vlaneseq
      %v8352 = vshrl.u32 %v8351, 7
      %v8353 = vsub.s32 %v8350, %v8352
      %v8354 = vrot.slane %v8346, %v8353
      %v8356 = vunpack.c.l.s4 1966171168
      %v8357 = vunpack.c.0.s8 %v8356
      %v8358 = vlaneseq
      %v8359 = vshrl.u32 %v8358, 7
      %v8360 = vsub.s32 %v8357, %v8359
      %v8361 = vrot.slane %v8347, %v8360
      %v8363 = vunpack.c.l.s4 1966171168
      %v8364 = vunpack.c.0.s8 %v8363
      %v8365 = vlaneseq
      %v8366 = vshrl.u32 %v8365, 7
      %v8367 = vsub.s32 %v8364, %v8366
      %v8368 = vrot.slane %v5426, %v8367
      %v8369 = vcombine.low %v8354, %v8361
      %v8371 = vunpack.c.l.s4 1966171168
      %v8372 = vunpack.c.0.s8 %v8371
      %v8373 = vlaneseq
      %v8374 = vshrl.u32 %v8373, 7
      %v8375 = vsub.s32 %v8372, %v8374
      %v8376 = vrot.slane %v8369, %v8375
      %v8378 = vunpack.c.l.s4 1966171168
      %v8379 = vunpack.c.0.s8 %v8378
      %v8380 = vlaneseq
      %v8381 = vshrl.u32 %v8380, 7
      %v8382 = vsub.s32 %v8379, %v8381
      %v8383 = vrot.slane %v8368, %v8382
      %v8384 = vcombine.low %v8376, %v8383
      %v8385 = vcombine.low %v5440, %v5442
      %v8386 = vcombine.low %v5444, %v5468
      %v8388 = vunpack.c.l.s4 1966171168
      %v8389 = vunpack.c.0.s8 %v8388
      %v8390 = vlaneseq
      %v8391 = vshrl.u32 %v8390, 7
      %v8392 = vsub.s32 %v8389, %v8391
      %v8393 = vrot.slane %v8385, %v8392
      %v8395 = vunpack.c.l.s4 1966171168
      %v8396 = vunpack.c.0.s8 %v8395
      %v8397 = vlaneseq
      %v8398 = vshrl.u32 %v8397, 7
      %v8399 = vsub.s32 %v8396, %v8398
      %v8400 = vrot.slane %v8386, %v8399
      %v8402 = vunpack.c.l.s4 1966171168
      %v8403 = vunpack.c.0.s8 %v8402
      %v8404 = vlaneseq
      %v8405 = vshrl.u32 %v8404, 7
      %v8406 = vsub.s32 %v8403, %v8405
      %v8407 = vrot.slane %v5482, %v8406
      %v8408 = vcombine.low %v8393, %v8400
      %v8410 = vunpack.c.l.s4 1966171168
      %v8411 = vunpack.c.0.s8 %v8410
      %v8412 = vlaneseq
      %v8413 = vshrl.u32 %v8412, 7
      %v8414 = vsub.s32 %v8411, %v8413
      %v8415 = vrot.slane %v8408, %v8414
      %v8417 = vunpack.c.l.s4 1966171168
      %v8418 = vunpack.c.0.s8 %v8417
      %v8419 = vlaneseq
      %v8420 = vshrl.u32 %v8419, 7
      %v8421 = vsub.s32 %v8418, %v8420
      %v8422 = vrot.slane %v8407, %v8421
      %v8423 = vcombine.low %v8415, %v8422
      %v8424 = vcombine.low %v5490, %v5492
      %v8425 = vcombine.low %v5475, %v5489
      %v8427 = vunpack.c.l.s4 1966171168
      %v8428 = vunpack.c.0.s8 %v8427
      %v8429 = vlaneseq
      %v8430 = vshrl.u32 %v8429, 7
      %v8431 = vsub.s32 %v8428, %v8430
      %v8432 = vrot.slane %v8424, %v8431
      %v8434 = vunpack.c.l.s4 1966171168
      %v8435 = vunpack.c.0.s8 %v8434
      %v8436 = vlaneseq
      %v8437 = vshrl.u32 %v8436, 7
      %v8438 = vsub.s32 %v8435, %v8437
      %v8439 = vrot.slane %v8425, %v8438
      %v8441 = vunpack.c.l.s4 1966171168
      %v8442 = vunpack.c.0.s8 %v8441
      %v8443 = vlaneseq
      %v8444 = vshrl.u32 %v8443, 7
      %v8445 = vsub.s32 %v8442, %v8444
      %v8446 = vrot.slane %v5491, %v8445
      %v8447 = vcombine.low %v8432, %v8439
      %v8449 = vunpack.c.l.s4 1966171168
      %v8450 = vunpack.c.0.s8 %v8449
      %v8451 = vlaneseq
      %v8452 = vshrl.u32 %v8451, 7
      %v8453 = vsub.s32 %v8450, %v8452
      %v8454 = vrot.slane %v8447, %v8453
      %v8456 = vunpack.c.l.s4 1966171168
      %v8457 = vunpack.c.0.s8 %v8456
      %v8458 = vlaneseq
      %v8459 = vshrl.u32 %v8458, 7
      %v8460 = vsub.s32 %v8457, %v8459
      %v8461 = vrot.slane %v8446, %v8460
      %v8462 = vcombine.low %v8454, %v8461
      %v8463 = vcombine.low %v5493, %v5508
      %v8464 = vcombine.low %v5515, %v5516
      %v8466 = vunpack.c.l.s4 1966171168
      %v8467 = vunpack.c.0.s8 %v8466
      %v8468 = vlaneseq
      %v8469 = vshrl.u32 %v8468, 7
      %v8470 = vsub.s32 %v8467, %v8469
      %v8471 = vrot.slane %v8463, %v8470
      %v8473 = vunpack.c.l.s4 1966171168
      %v8474 = vunpack.c.0.s8 %v8473
      %v8475 = vlaneseq
      %v8476 = vshrl.u32 %v8475, 7
      %v8477 = vsub.s32 %v8474, %v8476
      %v8478 = vrot.slane %v8464, %v8477
      %v8480 = vunpack.c.l.s4 1966171168
      %v8481 = vunpack.c.0.s8 %v8480
      %v8482 = vlaneseq
      %v8483 = vshrl.u32 %v8482, 7
      %v8484 = vsub.s32 %v8481, %v8483
      %v8485 = vrot.slane %v5517, %v8484
      %v8486 = vcombine.low %v8471, %v8478
      %v8488 = vunpack.c.l.s4 1966171168
      %v8489 = vunpack.c.0.s8 %v8488
      %v8490 = vlaneseq
      %v8491 = vshrl.u32 %v8490, 7
      %v8492 = vsub.s32 %v8489, %v8491
      %v8493 = vrot.slane %v8486, %v8492
      %v8495 = vunpack.c.l.s4 1966171168
      %v8496 = vunpack.c.0.s8 %v8495
      %v8497 = vlaneseq
      %v8498 = vshrl.u32 %v8497, 7
      %v8499 = vsub.s32 %v8496, %v8498
      %v8500 = vrot.slane %v8485, %v8499
      %v8501 = vcombine.low %v8493, %v8500
      %v8502 = vcombine.low %v5541, %v5555
      %v8503 = vcombine.low %v5563, %v5565
      %v8505 = vunpack.c.l.s4 1966171168
      %v8506 = vunpack.c.0.s8 %v8505
      %v8507 = vlaneseq
      %v8508 = vshrl.u32 %v8507, 7
      %v8509 = vsub.s32 %v8506, %v8508
      %v8510 = vrot.slane %v8502, %v8509
      %v8512 = vunpack.c.l.s4 1966171168
      %v8513 = vunpack.c.0.s8 %v8512
      %v8514 = vlaneseq
      %v8515 = vshrl.u32 %v8514, 7
      %v8516 = vsub.s32 %v8513, %v8515
      %v8517 = vrot.slane %v8503, %v8516
      %v8519 = vunpack.c.l.s4 1966171168
      %v8520 = vunpack.c.0.s8 %v8519
      %v8521 = vlaneseq
      %v8522 = vshrl.u32 %v8521, 7
      %v8523 = vsub.s32 %v8520, %v8522
      %v8524 = vrot.slane %v5548, %v8523
      %v8525 = vcombine.low %v8510, %v8517
      %v8527 = vunpack.c.l.s4 1966171168
      %v8528 = vunpack.c.0.s8 %v8527
      %v8529 = vlaneseq
      %v8530 = vshrl.u32 %v8529, 7
      %v8531 = vsub.s32 %v8528, %v8530
      %v8532 = vrot.slane %v8525, %v8531
      %v8534 = vunpack.c.l.s4 1966171168
      %v8535 = vunpack.c.0.s8 %v8534
      %v8536 = vlaneseq
      %v8537 = vshrl.u32 %v8536, 7
      %v8538 = vsub.s32 %v8535, %v8537
      %v8539 = vrot.slane %v8524, %v8538
      %v8540 = vcombine.low %v8532, %v8539
      %v8541 = vcombine.low %v5562, %v5564
      %v8542 = vcombine.low %v5566, %v5590
      %v8544 = vunpack.c.l.s4 1966171168
      %v8545 = vunpack.c.0.s8 %v8544
      %v8546 = vlaneseq
      %v8547 = vshrl.u32 %v8546, 7
      %v8548 = vsub.s32 %v8545, %v8547
      %v8549 = vrot.slane %v8541, %v8548
      %v8551 = vunpack.c.l.s4 1966171168
      %v8552 = vunpack.c.0.s8 %v8551
      %v8553 = vlaneseq
      %v8554 = vshrl.u32 %v8553, 7
      %v8555 = vsub.s32 %v8552, %v8554
      %v8556 = vrot.slane %v8542, %v8555
      %v8558 = vunpack.c.l.s4 1966171168
      %v8559 = vunpack.c.0.s8 %v8558
      %v8560 = vlaneseq
      %v8561 = vshrl.u32 %v8560, 7
      %v8562 = vsub.s32 %v8559, %v8561
      %v8563 = vrot.slane %v5604, %v8562
      %v8564 = vcombine.low %v8549, %v8556
      %v8566 = vunpack.c.l.s4 1966171168
      %v8567 = vunpack.c.0.s8 %v8566
      %v8568 = vlaneseq
      %v8569 = vshrl.u32 %v8568, 7
      %v8570 = vsub.s32 %v8567, %v8569
      %v8571 = vrot.slane %v8564, %v8570
      %v8573 = vunpack.c.l.s4 1966171168
      %v8574 = vunpack.c.0.s8 %v8573
      %v8575 = vlaneseq
      %v8576 = vshrl.u32 %v8575, 7
      %v8577 = vsub.s32 %v8574, %v8576
      %v8578 = vrot.slane %v8563, %v8577
      %v8579 = vcombine.low %v8571, %v8578
      %v8580 = vcombine.low %v5612, %v5614
      %v8581 = vcombine.low %v5597, %v5611
      %v8583 = vunpack.c.l.s4 1966171168
      %v8584 = vunpack.c.0.s8 %v8583
      %v8585 = vlaneseq
      %v8586 = vshrl.u32 %v8585, 7
      %v8587 = vsub.s32 %v8584, %v8586
      %v8588 = vrot.slane %v8580, %v8587
      %v8590 = vunpack.c.l.s4 1966171168
      %v8591 = vunpack.c.0.s8 %v8590
      %v8592 = vlaneseq
      %v8593 = vshrl.u32 %v8592, 7
      %v8594 = vsub.s32 %v8591, %v8593
      %v8595 = vrot.slane %v8581, %v8594
      %v8597 = vunpack.c.l.s4 1966171168
      %v8598 = vunpack.c.0.s8 %v8597
      %v8599 = vlaneseq
      %v8600 = vshrl.u32 %v8599, 7
      %v8601 = vsub.s32 %v8598, %v8600
      %v8602 = vrot.slane %v5613, %v8601
      %v8603 = vcombine.low %v8588, %v8595
      %v8605 = vunpack.c.l.s4 1966171168
      %v8606 = vunpack.c.0.s8 %v8605
      %v8607 = vlaneseq
      %v8608 = vshrl.u32 %v8607, 7
      %v8609 = vsub.s32 %v8606, %v8608
      %v8610 = vrot.slane %v8603, %v8609
      %v8612 = vunpack.c.l.s4 1966171168
      %v8613 = vunpack.c.0.s8 %v8612
      %v8614 = vlaneseq
      %v8615 = vshrl.u32 %v8614, 7
      %v8616 = vsub.s32 %v8613, %v8615
      %v8617 = vrot.slane %v8602, %v8616
      %v8618 = vcombine.low %v8610, %v8617
      %v8619 = vcombine.low %v5615, %v5630
      %v8620 = vcombine.low %v5637, %v5638
      %v8622 = vunpack.c.l.s4 1966171168
      %v8623 = vunpack.c.0.s8 %v8622
      %v8624 = vlaneseq
      %v8625 = vshrl.u32 %v8624, 7
      %v8626 = vsub.s32 %v8623, %v8625
      %v8627 = vrot.slane %v8619, %v8626
      %v8629 = vunpack.c.l.s4 1966171168
      %v8630 = vunpack.c.0.s8 %v8629
      %v8631 = vlaneseq
      %v8632 = vshrl.u32 %v8631, 7
      %v8633 = vsub.s32 %v8630, %v8632
      %v8634 = vrot.slane %v8620, %v8633
      %v8636 = vunpack.c.l.s4 1966171168
      %v8637 = vunpack.c.0.s8 %v8636
      %v8638 = vlaneseq
      %v8639 = vshrl.u32 %v8638, 7
      %v8640 = vsub.s32 %v8637, %v8639
      %v8641 = vrot.slane %v5639, %v8640
      %v8642 = vcombine.low %v8627, %v8634
      %v8644 = vunpack.c.l.s4 1966171168
      %v8645 = vunpack.c.0.s8 %v8644
      %v8646 = vlaneseq
      %v8647 = vshrl.u32 %v8646, 7
      %v8648 = vsub.s32 %v8645, %v8647
      %v8649 = vrot.slane %v8642, %v8648
      %v8651 = vunpack.c.l.s4 1966171168
      %v8652 = vunpack.c.0.s8 %v8651
      %v8653 = vlaneseq
      %v8654 = vshrl.u32 %v8653, 7
      %v8655 = vsub.s32 %v8652, %v8654
      %v8656 = vrot.slane %v8641, %v8655
      %v8657 = vcombine.low %v8649, %v8656
      %v8658 = vcombine.low %v5663, %v5677
      %v8659 = vcombine.low %v5685, %v5687
      %v8661 = vunpack.c.l.s4 1966171168
      %v8662 = vunpack.c.0.s8 %v8661
      %v8663 = vlaneseq
      %v8664 = vshrl.u32 %v8663, 7
      %v8665 = vsub.s32 %v8662, %v8664
      %v8666 = vrot.slane %v8658, %v8665
      %v8668 = vunpack.c.l.s4 1966171168
      %v8669 = vunpack.c.0.s8 %v8668
      %v8670 = vlaneseq
      %v8671 = vshrl.u32 %v8670, 7
      %v8672 = vsub.s32 %v8669, %v8671
      %v8673 = vrot.slane %v8659, %v8672
      %v8675 = vunpack.c.l.s4 1966171168
      %v8676 = vunpack.c.0.s8 %v8675
      %v8677 = vlaneseq
      %v8678 = vshrl.u32 %v8677, 7
      %v8679 = vsub.s32 %v8676, %v8678
      %v8680 = vrot.slane %v5670, %v8679
      %v8681 = vcombine.low %v8666, %v8673
      %v8683 = vunpack.c.l.s4 1966171168
      %v8684 = vunpack.c.0.s8 %v8683
      %v8685 = vlaneseq
      %v8686 = vshrl.u32 %v8685, 7
      %v8687 = vsub.s32 %v8684, %v8686
      %v8688 = vrot.slane %v8681, %v8687
      %v8690 = vunpack.c.l.s4 1966171168
      %v8691 = vunpack.c.0.s8 %v8690
      %v8692 = vlaneseq
      %v8693 = vshrl.u32 %v8692, 7
      %v8694 = vsub.s32 %v8691, %v8693
      %v8695 = vrot.slane %v8680, %v8694
      %v8696 = vcombine.low %v8688, %v8695
      %v8697 = vcombine.low %v5684, %v5686
      %v8698 = vcombine.low %v5688, %v5712
      %v8700 = vunpack.c.l.s4 1966171168
      %v8701 = vunpack.c.0.s8 %v8700
      %v8702 = vlaneseq
      %v8703 = vshrl.u32 %v8702, 7
      %v8704 = vsub.s32 %v8701, %v8703
      %v8705 = vrot.slane %v8697, %v8704
      %v8707 = vunpack.c.l.s4 1966171168
      %v8708 = vunpack.c.0.s8 %v8707
      %v8709 = vlaneseq
      %v8710 = vshrl.u32 %v8709, 7
      %v8711 = vsub.s32 %v8708, %v8710
      %v8712 = vrot.slane %v8698, %v8711
      %v8714 = vunpack.c.l.s4 1966171168
      %v8715 = vunpack.c.0.s8 %v8714
      %v8716 = vlaneseq
      %v8717 = vshrl.u32 %v8716, 7
      %v8718 = vsub.s32 %v8715, %v8717
      %v8719 = vrot.slane %v5726, %v8718
      %v8720 = vcombine.low %v8705, %v8712
      %v8722 = vunpack.c.l.s4 1966171168
      %v8723 = vunpack.c.0.s8 %v8722
      %v8724 = vlaneseq
      %v8725 = vshrl.u32 %v8724, 7
      %v8726 = vsub.s32 %v8723, %v8725
      %v8727 = vrot.slane %v8720, %v8726
      %v8729 = vunpack.c.l.s4 1966171168
      %v8730 = vunpack.c.0.s8 %v8729
      %v8731 = vlaneseq
      %v8732 = vshrl.u32 %v8731, 7
      %v8733 = vsub.s32 %v8730, %v8732
      %v8734 = vrot.slane %v8719, %v8733
      %v8735 = vcombine.low %v8727, %v8734
      %v8736 = vcombine.low %v5734, %v5736
      %v8737 = vcombine.low %v5719, %v5733
      %v8739 = vunpack.c.l.s4 1966171168
      %v8740 = vunpack.c.0.s8 %v8739
      %v8741 = vlaneseq
      %v8742 = vshrl.u32 %v8741, 7
      %v8743 = vsub.s32 %v8740, %v8742
      %v8744 = vrot.slane %v8736, %v8743
      %v8746 = vunpack.c.l.s4 1966171168
      %v8747 = vunpack.c.0.s8 %v8746
      %v8748 = vlaneseq
      %v8749 = vshrl.u32 %v8748, 7
      %v8750 = vsub.s32 %v8747, %v8749
      %v8751 = vrot.slane %v8737, %v8750
      %v8753 = vunpack.c.l.s4 1966171168
      %v8754 = vunpack.c.0.s8 %v8753
      %v8755 = vlaneseq
      %v8756 = vshrl.u32 %v8755, 7
      %v8757 = vsub.s32 %v8754, %v8756
      %v8758 = vrot.slane %v5735, %v8757
      %v8759 = vcombine.low %v8744, %v8751
      %v8761 = vunpack.c.l.s4 1966171168
      %v8762 = vunpack.c.0.s8 %v8761
      %v8763 = vlaneseq
      %v8764 = vshrl.u32 %v8763, 7
      %v8765 = vsub.s32 %v8762, %v8764
      %v8766 = vrot.slane %v8759, %v8765
      %v8768 = vunpack.c.l.s4 1966171168
      %v8769 = vunpack.c.0.s8 %v8768
      %v8770 = vlaneseq
      %v8771 = vshrl.u32 %v8770, 7
      %v8772 = vsub.s32 %v8769, %v8771
      %v8773 = vrot.slane %v8758, %v8772
      %v8774 = vcombine.low %v8766, %v8773
      %v8775 = vcombine.low %v5737, %v5752
      %v8776 = vcombine.low %v5759, %v5760
      %v8778 = vunpack.c.l.s4 1966171168
      %v8779 = vunpack.c.0.s8 %v8778
      %v8780 = vlaneseq
      %v8781 = vshrl.u32 %v8780, 7
      %v8782 = vsub.s32 %v8779, %v8781
      %v8783 = vrot.slane %v8775, %v8782
      %v8785 = vunpack.c.l.s4 1966171168
      %v8786 = vunpack.c.0.s8 %v8785
      %v8787 = vlaneseq
      %v8788 = vshrl.u32 %v8787, 7
      %v8789 = vsub.s32 %v8786, %v8788
      %v8790 = vrot.slane %v8776, %v8789
      %v8792 = vunpack.c.l.s4 1966171168
      %v8793 = vunpack.c.0.s8 %v8792
      %v8794 = vlaneseq
      %v8795 = vshrl.u32 %v8794, 7
      %v8796 = vsub.s32 %v8793, %v8795
      %v8797 = vrot.slane %v5761, %v8796
      %v8798 = vcombine.low %v8783, %v8790
      %v8800 = vunpack.c.l.s4 1966171168
      %v8801 = vunpack.c.0.s8 %v8800
      %v8802 = vlaneseq
      %v8803 = vshrl.u32 %v8802, 7
      %v8804 = vsub.s32 %v8801, %v8803
      %v8805 = vrot.slane %v8798, %v8804
      %v8807 = vunpack.c.l.s4 1966171168
      %v8808 = vunpack.c.0.s8 %v8807
      %v8809 = vlaneseq
      %v8810 = vshrl.u32 %v8809, 7
      %v8811 = vsub.s32 %v8808, %v8810
      %v8812 = vrot.slane %v8797, %v8811
      %v8813 = vcombine.low %v8805, %v8812
      %v8814 = vcombine.low %v5785, %v5799
      %v8815 = vcombine.low %v5807, %v5809
      %v8817 = vunpack.c.l.s4 1966171168
      %v8818 = vunpack.c.0.s8 %v8817
      %v8819 = vlaneseq
      %v8820 = vshrl.u32 %v8819, 7
      %v8821 = vsub.s32 %v8818, %v8820
      %v8822 = vrot.slane %v8814, %v8821
      %v8824 = vunpack.c.l.s4 1966171168
      %v8825 = vunpack.c.0.s8 %v8824
      %v8826 = vlaneseq
      %v8827 = vshrl.u32 %v8826, 7
      %v8828 = vsub.s32 %v8825, %v8827
      %v8829 = vrot.slane %v8815, %v8828
      %v8831 = vunpack.c.l.s4 1966171168
      %v8832 = vunpack.c.0.s8 %v8831
      %v8833 = vlaneseq
      %v8834 = vshrl.u32 %v8833, 7
      %v8835 = vsub.s32 %v8832, %v8834
      %v8836 = vrot.slane %v5792, %v8835
      %v8837 = vcombine.low %v8822, %v8829
      %v8839 = vunpack.c.l.s4 1966171168
      %v8840 = vunpack.c.0.s8 %v8839
      %v8841 = vlaneseq
      %v8842 = vshrl.u32 %v8841, 7
      %v8843 = vsub.s32 %v8840, %v8842
      %v8844 = vrot.slane %v8837, %v8843
      %v8846 = vunpack.c.l.s4 1966171168
      %v8847 = vunpack.c.0.s8 %v8846
      %v8848 = vlaneseq
      %v8849 = vshrl.u32 %v8848, 7
      %v8850 = vsub.s32 %v8847, %v8849
      %v8851 = vrot.slane %v8836, %v8850
      %v8852 = vcombine.low %v8844, %v8851
      %v8853 = vcombine.low %v5806, %v5808
      %v8854 = vcombine.low %v5810, %v5834
      %v8856 = vunpack.c.l.s4 1966171168
      %v8857 = vunpack.c.0.s8 %v8856
      %v8858 = vlaneseq
      %v8859 = vshrl.u32 %v8858, 7
      %v8860 = vsub.s32 %v8857, %v8859
      %v8861 = vrot.slane %v8853, %v8860
      %v8863 = vunpack.c.l.s4 1966171168
      %v8864 = vunpack.c.0.s8 %v8863
      %v8865 = vlaneseq
      %v8866 = vshrl.u32 %v8865, 7
      %v8867 = vsub.s32 %v8864, %v8866
      %v8868 = vrot.slane %v8854, %v8867
      %v8870 = vunpack.c.l.s4 1966171168
      %v8871 = vunpack.c.0.s8 %v8870
      %v8872 = vlaneseq
      %v8873 = vshrl.u32 %v8872, 7
      %v8874 = vsub.s32 %v8871, %v8873
      %v8875 = vrot.slane %v5848, %v8874
      %v8876 = vcombine.low %v8861, %v8868
      %v8878 = vunpack.c.l.s4 1966171168
      %v8879 = vunpack.c.0.s8 %v8878
      %v8880 = vlaneseq
      %v8881 = vshrl.u32 %v8880, 7
      %v8882 = vsub.s32 %v8879, %v8881
      %v8883 = vrot.slane %v8876, %v8882
      %v8885 = vunpack.c.l.s4 1966171168
      %v8886 = vunpack.c.0.s8 %v8885
      %v8887 = vlaneseq
      %v8888 = vshrl.u32 %v8887, 7
      %v8889 = vsub.s32 %v8886, %v8888
      %v8890 = vrot.slane %v8875, %v8889
      %v8891 = vcombine.low %v8883, %v8890
      %v8892 = vcombine.low %v5856, %v5858
      %v8893 = vcombine.low %v5841, %v5855
      %v8895 = vunpack.c.l.s4 1966171168
      %v8896 = vunpack.c.0.s8 %v8895
      %v8897 = vlaneseq
      %v8898 = vshrl.u32 %v8897, 7
      %v8899 = vsub.s32 %v8896, %v8898
      %v8900 = vrot.slane %v8892, %v8899
      %v8902 = vunpack.c.l.s4 1966171168
      %v8903 = vunpack.c.0.s8 %v8902
      %v8904 = vlaneseq
      %v8905 = vshrl.u32 %v8904, 7
      %v8906 = vsub.s32 %v8903, %v8905
      %v8907 = vrot.slane %v8893, %v8906
      %v8909 = vunpack.c.l.s4 1966171168
      %v8910 = vunpack.c.0.s8 %v8909
      %v8911 = vlaneseq
      %v8912 = vshrl.u32 %v8911, 7
      %v8913 = vsub.s32 %v8910, %v8912
      %v8914 = vrot.slane %v5857, %v8913
      %v8915 = vcombine.low %v8900, %v8907
      %v8917 = vunpack.c.l.s4 1966171168
      %v8918 = vunpack.c.0.s8 %v8917
      %v8919 = vlaneseq
      %v8920 = vshrl.u32 %v8919, 7
      %v8921 = vsub.s32 %v8918, %v8920
      %v8922 = vrot.slane %v8915, %v8921
      %v8924 = vunpack.c.l.s4 1966171168
      %v8925 = vunpack.c.0.s8 %v8924
      %v8926 = vlaneseq
      %v8927 = vshrl.u32 %v8926, 7
      %v8928 = vsub.s32 %v8925, %v8927
      %v8929 = vrot.slane %v8914, %v8928
      %v8930 = vcombine.low %v8922, %v8929
      %v8931 = vcombine.low %v5859, %v5874
      %v8932 = vcombine.low %v5881, %v5882
      %v8934 = vunpack.c.l.s4 1966171168
      %v8935 = vunpack.c.0.s8 %v8934
      %v8936 = vlaneseq
      %v8937 = vshrl.u32 %v8936, 7
      %v8938 = vsub.s32 %v8935, %v8937
      %v8939 = vrot.slane %v8931, %v8938
      %v8941 = vunpack.c.l.s4 1966171168
      %v8942 = vunpack.c.0.s8 %v8941
      %v8943 = vlaneseq
      %v8944 = vshrl.u32 %v8943, 7
      %v8945 = vsub.s32 %v8942, %v8944
      %v8946 = vrot.slane %v8932, %v8945
      %v8948 = vunpack.c.l.s4 1966171168
      %v8949 = vunpack.c.0.s8 %v8948
      %v8950 = vlaneseq
      %v8951 = vshrl.u32 %v8950, 7
      %v8952 = vsub.s32 %v8949, %v8951
      %v8953 = vrot.slane %v5883, %v8952
      %v8954 = vcombine.low %v8939, %v8946
      %v8956 = vunpack.c.l.s4 1966171168
      %v8957 = vunpack.c.0.s8 %v8956
      %v8958 = vlaneseq
      %v8959 = vshrl.u32 %v8958, 7
      %v8960 = vsub.s32 %v8957, %v8959
      %v8961 = vrot.slane %v8954, %v8960
      %v8963 = vunpack.c.l.s4 1966171168
      %v8964 = vunpack.c.0.s8 %v8963
      %v8965 = vlaneseq
      %v8966 = vshrl.u32 %v8965, 7
      %v8967 = vsub.s32 %v8964, %v8966
      %v8968 = vrot.slane %v8953, %v8967
      %v8969 = vcombine.low %v8961, %v8968
      %v8970 = vcombine.low %v5907, %v5921
      %v8971 = vcombine.low %v5929, %v5931
      %v8973 = vunpack.c.l.s4 1966171168
      %v8974 = vunpack.c.0.s8 %v8973
      %v8975 = vlaneseq
      %v8976 = vshrl.u32 %v8975, 7
      %v8977 = vsub.s32 %v8974, %v8976
      %v8978 = vrot.slane %v8970, %v8977
      %v8980 = vunpack.c.l.s4 1966171168
      %v8981 = vunpack.c.0.s8 %v8980
      %v8982 = vlaneseq
      %v8983 = vshrl.u32 %v8982, 7
      %v8984 = vsub.s32 %v8981, %v8983
      %v8985 = vrot.slane %v8971, %v8984
      %v8987 = vunpack.c.l.s4 1966171168
      %v8988 = vunpack.c.0.s8 %v8987
      %v8989 = vlaneseq
      %v8990 = vshrl.u32 %v8989, 7
      %v8991 = vsub.s32 %v8988, %v8990
      %v8992 = vrot.slane %v5914, %v8991
      %v8993 = vcombine.low %v8978, %v8985
      %v8995 = vunpack.c.l.s4 1966171168
      %v8996 = vunpack.c.0.s8 %v8995
      %v8997 = vlaneseq
      %v8998 = vshrl.u32 %v8997, 7
      %v8999 = vsub.s32 %v8996, %v8998
      %v9000 = vrot.slane %v8993, %v8999
      %v9002 = vunpack.c.l.s4 1966171168
      %v9003 = vunpack.c.0.s8 %v9002
      %v9004 = vlaneseq
      %v9005 = vshrl.u32 %v9004, 7
      %v9006 = vsub.s32 %v9003, %v9005
      %v9007 = vrot.slane %v8992, %v9006
      %v9008 = vcombine.low %v9000, %v9007
      %v9009 = vcombine.low %v5928, %v5930
      %v9010 = vcombine.low %v5932, %v5956
      %v9012 = vunpack.c.l.s4 1966171168
      %v9013 = vunpack.c.0.s8 %v9012
      %v9014 = vlaneseq
      %v9015 = vshrl.u32 %v9014, 7
      %v9016 = vsub.s32 %v9013, %v9015
      %v9017 = vrot.slane %v9009, %v9016
      %v9019 = vunpack.c.l.s4 1966171168
      %v9020 = vunpack.c.0.s8 %v9019
      %v9021 = vlaneseq
      %v9022 = vshrl.u32 %v9021, 7
      %v9023 = vsub.s32 %v9020, %v9022
      %v9024 = vrot.slane %v9010, %v9023
      %v9026 = vunpack.c.l.s4 1966171168
      %v9027 = vunpack.c.0.s8 %v9026
      %v9028 = vlaneseq
      %v9029 = vshrl.u32 %v9028, 7
      %v9030 = vsub.s32 %v9027, %v9029
      %v9031 = vrot.slane %v5970, %v9030
      %v9032 = vcombine.low %v9017, %v9024
      %v9034 = vunpack.c.l.s4 1966171168
      %v9035 = vunpack.c.0.s8 %v9034
      %v9036 = vlaneseq
      %v9037 = vshrl.u32 %v9036, 7
      %v9038 = vsub.s32 %v9035, %v9037
      %v9039 = vrot.slane %v9032, %v9038
      %v9041 = vunpack.c.l.s4 1966171168
      %v9042 = vunpack.c.0.s8 %v9041
      %v9043 = vlaneseq
      %v9044 = vshrl.u32 %v9043, 7
      %v9045 = vsub.s32 %v9042, %v9044
      %v9046 = vrot.slane %v9031, %v9045
      %v9047 = vcombine.low %v9039, %v9046
      %v9048 = vcombine.low %v5978, %v5980
      %v9049 = vcombine.low %v5963, %v5977
      %v9051 = vunpack.c.l.s4 1966171168
      %v9052 = vunpack.c.0.s8 %v9051
      %v9053 = vlaneseq
      %v9054 = vshrl.u32 %v9053, 7
      %v9055 = vsub.s32 %v9052, %v9054
      %v9056 = vrot.slane %v9048, %v9055
      %v9058 = vunpack.c.l.s4 1966171168
      %v9059 = vunpack.c.0.s8 %v9058
      %v9060 = vlaneseq
      %v9061 = vshrl.u32 %v9060, 7
      %v9062 = vsub.s32 %v9059, %v9061
      %v9063 = vrot.slane %v9049, %v9062
      %v9065 = vunpack.c.l.s4 1966171168
      %v9066 = vunpack.c.0.s8 %v9065
      %v9067 = vlaneseq
      %v9068 = vshrl.u32 %v9067, 7
      %v9069 = vsub.s32 %v9066, %v9068
      %v9070 = vrot.slane %v5979, %v9069
      %v9071 = vcombine.low %v9056, %v9063
      %v9073 = vunpack.c.l.s4 1966171168
      %v9074 = vunpack.c.0.s8 %v9073
      %v9075 = vlaneseq
      %v9076 = vshrl.u32 %v9075, 7
      %v9077 = vsub.s32 %v9074, %v9076
      %v9078 = vrot.slane %v9071, %v9077
      %v9080 = vunpack.c.l.s4 1966171168
      %v9081 = vunpack.c.0.s8 %v9080
      %v9082 = vlaneseq
      %v9083 = vshrl.u32 %v9082, 7
      %v9084 = vsub.s32 %v9081, %v9083
      %v9085 = vrot.slane %v9070, %v9084
      %v9086 = vcombine.low %v9078, %v9085
      %v9087 = vcombine.low %v5981, %v5996
      %v9088 = vcombine.low %v6003, %v6004
      %v9090 = vunpack.c.l.s4 1966171168
      %v9091 = vunpack.c.0.s8 %v9090
      %v9092 = vlaneseq
      %v9093 = vshrl.u32 %v9092, 7
      %v9094 = vsub.s32 %v9091, %v9093
      %v9095 = vrot.slane %v9087, %v9094
      %v9097 = vunpack.c.l.s4 1966171168
      %v9098 = vunpack.c.0.s8 %v9097
      %v9099 = vlaneseq
      %v9100 = vshrl.u32 %v9099, 7
      %v9101 = vsub.s32 %v9098, %v9100
      %v9102 = vrot.slane %v9088, %v9101
      %v9104 = vunpack.c.l.s4 1966171168
      %v9105 = vunpack.c.0.s8 %v9104
      %v9106 = vlaneseq
      %v9107 = vshrl.u32 %v9106, 7
      %v9108 = vsub.s32 %v9105, %v9107
      %v9109 = vrot.slane %v6005, %v9108
      %v9110 = vcombine.low %v9095, %v9102
      %v9112 = vunpack.c.l.s4 1966171168
      %v9113 = vunpack.c.0.s8 %v9112
      %v9114 = vlaneseq
      %v9115 = vshrl.u32 %v9114, 7
      %v9116 = vsub.s32 %v9113, %v9115
      %v9117 = vrot.slane %v9110, %v9116
      %v9119 = vunpack.c.l.s4 1966171168
      %v9120 = vunpack.c.0.s8 %v9119
      %v9121 = vlaneseq
      %v9122 = vshrl.u32 %v9121, 7
      %v9123 = vsub.s32 %v9120, %v9122
      %v9124 = vrot.slane %v9109, %v9123
      %v9125 = vcombine.low %v9117, %v9124
      %vm9206 = vcmask 258048
      %v9207 = vsel %vm9206, %v6044, -inf
      %v9208 = vrot.slane %v9207, 4
      %v9209 = vmax.f32 %v9207, %v9208
      %v9210 = vrot.slane %v9209, 2
      %v9211 = vmax.f32 %v9209, %v9210
      %v9212 = vrot.slane %v9211, 1
      %v9213 = vmax.f32 %v9211, %v9212
      %v9214 = vsel %vm9206, %v6083, -inf
      %v9215 = vrot.slane %v9214, 4
      %v9216 = vmax.f32 %v9214, %v9215
      %v9217 = vrot.slane %v9216, 2
      %v9218 = vmax.f32 %v9216, %v9217
      %v9219 = vrot.slane %v9218, 1
      %v9220 = vmax.f32 %v9218, %v9219
      %v9221 = vsel %vm9206, %v6122, -inf
      %v9222 = vrot.slane %v9221, 4
      %v9223 = vmax.f32 %v9221, %v9222
      %v9224 = vrot.slane %v9223, 2
      %v9225 = vmax.f32 %v9223, %v9224
      %v9226 = vrot.slane %v9225, 1
      %v9227 = vmax.f32 %v9225, %v9226
      %v9228 = vsel %vm9206, %v6161, -inf
      %v9229 = vrot.slane %v9228, 4
      %v9230 = vmax.f32 %v9228, %v9229
      %v9231 = vrot.slane %v9230, 2
      %v9232 = vmax.f32 %v9230, %v9231
      %v9233 = vrot.slane %v9232, 1
      %v9234 = vmax.f32 %v9232, %v9233
      %v9235 = vsel %vm9206, %v6200, -inf
      %v9236 = vrot.slane %v9235, 4
      %v9237 = vmax.f32 %v9235, %v9236
      %v9238 = vrot.slane %v9237, 2
      %v9239 = vmax.f32 %v9237, %v9238
      %v9240 = vrot.slane %v9239, 1
      %v9241 = vmax.f32 %v9239, %v9240
      %v9242 = vsel %vm9206, %v6239, -inf
      %v9243 = vrot.slane %v9242, 4
      %v9244 = vmax.f32 %v9242, %v9243
      %v9245 = vrot.slane %v9244, 2
      %v9246 = vmax.f32 %v9244, %v9245
      %v9247 = vrot.slane %v9246, 1
      %v9248 = vmax.f32 %v9246, %v9247
      %v9249 = vsel %vm9206, %v6278, -inf
      %v9250 = vrot.slane %v9249, 4
      %v9251 = vmax.f32 %v9249, %v9250
      %v9252 = vrot.slane %v9251, 2
      %v9253 = vmax.f32 %v9251, %v9252
      %v9254 = vrot.slane %v9253, 1
      %v9255 = vmax.f32 %v9253, %v9254
      %v9256 = vsel %vm9206, %v6317, -inf
      %v9257 = vrot.slane %v9256, 4
      %v9258 = vmax.f32 %v9256, %v9257
      %v9259 = vrot.slane %v9258, 2
      %v9260 = vmax.f32 %v9258, %v9259
      %v9261 = vrot.slane %v9260, 1
      %v9262 = vmax.f32 %v9260, %v9261
      %v9263 = vsel %vm9206, %v6356, -inf
      %v9264 = vrot.slane %v9263, 4
      %v9265 = vmax.f32 %v9263, %v9264
      %v9266 = vrot.slane %v9265, 2
      %v9267 = vmax.f32 %v9265, %v9266
      %v9268 = vrot.slane %v9267, 1
      %v9269 = vmax.f32 %v9267, %v9268
      %v9270 = vsel %vm9206, %v6395, -inf
      %v9271 = vrot.slane %v9270, 4
      %v9272 = vmax.f32 %v9270, %v9271
      %v9273 = vrot.slane %v9272, 2
      %v9274 = vmax.f32 %v9272, %v9273
      %v9275 = vrot.slane %v9274, 1
      %v9276 = vmax.f32 %v9274, %v9275
      %v9277 = vsel %vm9206, %v6434, -inf
      %v9278 = vrot.slane %v9277, 4
      %v9279 = vmax.f32 %v9277, %v9278
      %v9280 = vrot.slane %v9279, 2
      %v9281 = vmax.f32 %v9279, %v9280
      %v9282 = vrot.slane %v9281, 1
      %v9283 = vmax.f32 %v9281, %v9282
      %v9284 = vsel %vm9206, %v6473, -inf
      %v9285 = vrot.slane %v9284, 4
      %v9286 = vmax.f32 %v9284, %v9285
      %v9287 = vrot.slane %v9286, 2
      %v9288 = vmax.f32 %v9286, %v9287
      %v9289 = vrot.slane %v9288, 1
      %v9290 = vmax.f32 %v9288, %v9289
      %v9291 = vsel %vm9206, %v6512, -inf
      %v9292 = vrot.slane %v9291, 4
      %v9293 = vmax.f32 %v9291, %v9292
      %v9294 = vrot.slane %v9293, 2
      %v9295 = vmax.f32 %v9293, %v9294
      %v9296 = vrot.slane %v9295, 1
      %v9297 = vmax.f32 %v9295, %v9296
      %v9298 = vsel %vm9206, %v6551, -inf
      %v9299 = vrot.slane %v9298, 4
      %v9300 = vmax.f32 %v9298, %v9299
      %v9301 = vrot.slane %v9300, 2
      %v9302 = vmax.f32 %v9300, %v9301
      %v9303 = vrot.slane %v9302, 1
      %v9304 = vmax.f32 %v9302, %v9303
      %v9305 = vsel %vm9206, %v6590, -inf
      %v9306 = vrot.slane %v9305, 4
      %v9307 = vmax.f32 %v9305, %v9306
      %v9308 = vrot.slane %v9307, 2
      %v9309 = vmax.f32 %v9307, %v9308
      %v9310 = vrot.slane %v9309, 1
      %v9311 = vmax.f32 %v9309, %v9310
      %v9312 = vsel %vm9206, %v6629, -inf
      %v9313 = vrot.slane %v9312, 4
      %v9314 = vmax.f32 %v9312, %v9313
      %v9315 = vrot.slane %v9314, 2
      %v9316 = vmax.f32 %v9314, %v9315
      %v9317 = vrot.slane %v9316, 1
      %v9318 = vmax.f32 %v9316, %v9317
      %v9319 = vsel %vm9206, %v6668, -inf
      %v9320 = vrot.slane %v9319, 4
      %v9321 = vmax.f32 %v9319, %v9320
      %v9322 = vrot.slane %v9321, 2
      %v9323 = vmax.f32 %v9321, %v9322
      %v9324 = vrot.slane %v9323, 1
      %v9325 = vmax.f32 %v9323, %v9324
      %v9326 = vsel %vm9206, %v6707, -inf
      %v9327 = vrot.slane %v9326, 4
      %v9328 = vmax.f32 %v9326, %v9327
      %v9329 = vrot.slane %v9328, 2
      %v9330 = vmax.f32 %v9328, %v9329
      %v9331 = vrot.slane %v9330, 1
      %v9332 = vmax.f32 %v9330, %v9331
      %v9333 = vsel %vm9206, %v6746, -inf
      %v9334 = vrot.slane %v9333, 4
      %v9335 = vmax.f32 %v9333, %v9334
      %v9336 = vrot.slane %v9335, 2
      %v9337 = vmax.f32 %v9335, %v9336
      %v9338 = vrot.slane %v9337, 1
      %v9339 = vmax.f32 %v9337, %v9338
      %v9340 = vsel %vm9206, %v6785, -inf
      %v9341 = vrot.slane %v9340, 4
      %v9342 = vmax.f32 %v9340, %v9341
      %v9343 = vrot.slane %v9342, 2
      %v9344 = vmax.f32 %v9342, %v9343
      %v9345 = vrot.slane %v9344, 1
      %v9346 = vmax.f32 %v9344, %v9345
      %v9347 = vsel %vm9206, %v6824, -inf
      %v9348 = vrot.slane %v9347, 4
      %v9349 = vmax.f32 %v9347, %v9348
      %v9350 = vrot.slane %v9349, 2
      %v9351 = vmax.f32 %v9349, %v9350
      %v9352 = vrot.slane %v9351, 1
      %v9353 = vmax.f32 %v9351, %v9352
      %v9354 = vsel %vm9206, %v6863, -inf
      %v9355 = vrot.slane %v9354, 4
      %v9356 = vmax.f32 %v9354, %v9355
      %v9357 = vrot.slane %v9356, 2
      %v9358 = vmax.f32 %v9356, %v9357
      %v9359 = vrot.slane %v9358, 1
      %v9360 = vmax.f32 %v9358, %v9359
      %v9361 = vsel %vm9206, %v6902, -inf
      %v9362 = vrot.slane %v9361, 4
      %v9363 = vmax.f32 %v9361, %v9362
      %v9364 = vrot.slane %v9363, 2
      %v9365 = vmax.f32 %v9363, %v9364
      %v9366 = vrot.slane %v9365, 1
      %v9367 = vmax.f32 %v9365, %v9366
      %v9368 = vsel %vm9206, %v6941, -inf
      %v9369 = vrot.slane %v9368, 4
      %v9370 = vmax.f32 %v9368, %v9369
      %v9371 = vrot.slane %v9370, 2
      %v9372 = vmax.f32 %v9370, %v9371
      %v9373 = vrot.slane %v9372, 1
      %v9374 = vmax.f32 %v9372, %v9373
      %v9375 = vsel %vm9206, %v6980, -inf
      %v9376 = vrot.slane %v9375, 4
      %v9377 = vmax.f32 %v9375, %v9376
      %v9378 = vrot.slane %v9377, 2
      %v9379 = vmax.f32 %v9377, %v9378
      %v9380 = vrot.slane %v9379, 1
      %v9381 = vmax.f32 %v9379, %v9380
      %v9382 = vsel %vm9206, %v7019, -inf
      %v9383 = vrot.slane %v9382, 4
      %v9384 = vmax.f32 %v9382, %v9383
      %v9385 = vrot.slane %v9384, 2
      %v9386 = vmax.f32 %v9384, %v9385
      %v9387 = vrot.slane %v9386, 1
      %v9388 = vmax.f32 %v9386, %v9387
      %v9389 = vsel %vm9206, %v7058, -inf
      %v9390 = vrot.slane %v9389, 4
      %v9391 = vmax.f32 %v9389, %v9390
      %v9392 = vrot.slane %v9391, 2
      %v9393 = vmax.f32 %v9391, %v9392
      %v9394 = vrot.slane %v9393, 1
      %v9395 = vmax.f32 %v9393, %v9394
      %v9396 = vsel %vm9206, %v7097, -inf
      %v9397 = vrot.slane %v9396, 4
      %v9398 = vmax.f32 %v9396, %v9397
      %v9399 = vrot.slane %v9398, 2
      %v9400 = vmax.f32 %v9398, %v9399
      %v9401 = vrot.slane %v9400, 1
      %v9402 = vmax.f32 %v9400, %v9401
      %v9403 = vsel %vm9206, %v7136, -inf
      %v9404 = vrot.slane %v9403, 4
      %v9405 = vmax.f32 %v9403, %v9404
      %v9406 = vrot.slane %v9405, 2
      %v9407 = vmax.f32 %v9405, %v9406
      %v9408 = vrot.slane %v9407, 1
      %v9409 = vmax.f32 %v9407, %v9408
      %v9410 = vsel %vm9206, %v7175, -inf
      %v9411 = vrot.slane %v9410, 4
      %v9412 = vmax.f32 %v9410, %v9411
      %v9413 = vrot.slane %v9412, 2
      %v9414 = vmax.f32 %v9412, %v9413
      %v9415 = vrot.slane %v9414, 1
      %v9416 = vmax.f32 %v9414, %v9415
      %v9417 = vsel %vm9206, %v7214, -inf
      %v9418 = vrot.slane %v9417, 4
      %v9419 = vmax.f32 %v9417, %v9418
      %v9420 = vrot.slane %v9419, 2
      %v9421 = vmax.f32 %v9419, %v9420
      %v9422 = vrot.slane %v9421, 1
      %v9423 = vmax.f32 %v9421, %v9422
      %v9424 = vsel %vm9206, %v7253, -inf
      %v9425 = vrot.slane %v9424, 4
      %v9426 = vmax.f32 %v9424, %v9425
      %v9427 = vrot.slane %v9426, 2
      %v9428 = vmax.f32 %v9426, %v9427
      %v9429 = vrot.slane %v9428, 1
      %v9430 = vmax.f32 %v9428, %v9429
      %v9431 = vsel %vm9206, %v7292, -inf
      %v9432 = vrot.slane %v9431, 4
      %v9433 = vmax.f32 %v9431, %v9432
      %v9434 = vrot.slane %v9433, 2
      %v9435 = vmax.f32 %v9433, %v9434
      %v9436 = vrot.slane %v9435, 1
      %v9437 = vmax.f32 %v9435, %v9436
      %v9438 = vsel %vm9206, %v7331, -inf
      %v9439 = vrot.slane %v9438, 4
      %v9440 = vmax.f32 %v9438, %v9439
      %v9441 = vrot.slane %v9440, 2
      %v9442 = vmax.f32 %v9440, %v9441
      %v9443 = vrot.slane %v9442, 1
      %v9444 = vmax.f32 %v9442, %v9443
      %v9445 = vsel %vm9206, %v7370, -inf
      %v9446 = vrot.slane %v9445, 4
      %v9447 = vmax.f32 %v9445, %v9446
      %v9448 = vrot.slane %v9447, 2
      %v9449 = vmax.f32 %v9447, %v9448
      %v9450 = vrot.slane %v9449, 1
      %v9451 = vmax.f32 %v9449, %v9450
      %v9452 = vsel %vm9206, %v7409, -inf
      %v9453 = vrot.slane %v9452, 4
      %v9454 = vmax.f32 %v9452, %v9453
      %v9455 = vrot.slane %v9454, 2
      %v9456 = vmax.f32 %v9454, %v9455
      %v9457 = vrot.slane %v9456, 1
      %v9458 = vmax.f32 %v9456, %v9457
      %v9459 = vsel %vm9206, %v7448, -inf
      %v9460 = vrot.slane %v9459, 4
      %v9461 = vmax.f32 %v9459, %v9460
      %v9462 = vrot.slane %v9461, 2
      %v9463 = vmax.f32 %v9461, %v9462
      %v9464 = vrot.slane %v9463, 1
      %v9465 = vmax.f32 %v9463, %v9464
      %v9466 = vsel %vm9206, %v7487, -inf
      %v9467 = vrot.slane %v9466, 4
      %v9468 = vmax.f32 %v9466, %v9467
      %v9469 = vrot.slane %v9468, 2
      %v9470 = vmax.f32 %v9468, %v9469
      %v9471 = vrot.slane %v9470, 1
      %v9472 = vmax.f32 %v9470, %v9471
      %v9473 = vsel %vm9206, %v7526, -inf
      %v9474 = vrot.slane %v9473, 4
      %v9475 = vmax.f32 %v9473, %v9474
      %v9476 = vrot.slane %v9475, 2
      %v9477 = vmax.f32 %v9475, %v9476
      %v9478 = vrot.slane %v9477, 1
      %v9479 = vmax.f32 %v9477, %v9478
      %v9480 = vsel %vm9206, %v7565, -inf
      %v9481 = vrot.slane %v9480, 4
      %v9482 = vmax.f32 %v9480, %v9481
      %v9483 = vrot.slane %v9482, 2
      %v9484 = vmax.f32 %v9482, %v9483
      %v9485 = vrot.slane %v9484, 1
      %v9486 = vmax.f32 %v9484, %v9485
      %v9487 = vsel %vm9206, %v7604, -inf
      %v9488 = vrot.slane %v9487, 4
      %v9489 = vmax.f32 %v9487, %v9488
      %v9490 = vrot.slane %v9489, 2
      %v9491 = vmax.f32 %v9489, %v9490
      %v9492 = vrot.slane %v9491, 1
      %v9493 = vmax.f32 %v9491, %v9492
      %v9494 = vsel %vm9206, %v7643, -inf
      %v9495 = vrot.slane %v9494, 4
      %v9496 = vmax.f32 %v9494, %v9495
      %v9497 = vrot.slane %v9496, 2
      %v9498 = vmax.f32 %v9496, %v9497
      %v9499 = vrot.slane %v9498, 1
      %v9500 = vmax.f32 %v9498, %v9499
      %v9501 = vsel %vm9206, %v7682, -inf
      %v9502 = vrot.slane %v9501, 4
      %v9503 = vmax.f32 %v9501, %v9502
      %v9504 = vrot.slane %v9503, 2
      %v9505 = vmax.f32 %v9503, %v9504
      %v9506 = vrot.slane %v9505, 1
      %v9507 = vmax.f32 %v9505, %v9506
      %v9508 = vsel %vm9206, %v7721, -inf
      %v9509 = vrot.slane %v9508, 4
      %v9510 = vmax.f32 %v9508, %v9509
      %v9511 = vrot.slane %v9510, 2
      %v9512 = vmax.f32 %v9510, %v9511
      %v9513 = vrot.slane %v9512, 1
      %v9514 = vmax.f32 %v9512, %v9513
      %v9515 = vsel %vm9206, %v7760, -inf
      %v9516 = vrot.slane %v9515, 4
      %v9517 = vmax.f32 %v9515, %v9516
      %v9518 = vrot.slane %v9517, 2
      %v9519 = vmax.f32 %v9517, %v9518
      %v9520 = vrot.slane %v9519, 1
      %v9521 = vmax.f32 %v9519, %v9520
      %v9522 = vsel %vm9206, %v7799, -inf
      %v9523 = vrot.slane %v9522, 4
      %v9524 = vmax.f32 %v9522, %v9523
      %v9525 = vrot.slane %v9524, 2
      %v9526 = vmax.f32 %v9524, %v9525
      %v9527 = vrot.slane %v9526, 1
      %v9528 = vmax.f32 %v9526, %v9527
      %v9529 = vsel %vm9206, %v7838, -inf
      %v9530 = vrot.slane %v9529, 4
      %v9531 = vmax.f32 %v9529, %v9530
      %v9532 = vrot.slane %v9531, 2
      %v9533 = vmax.f32 %v9531, %v9532
      %v9534 = vrot.slane %v9533, 1
      %v9535 = vmax.f32 %v9533, %v9534
      %v9536 = vsel %vm9206, %v7877, -inf
      %v9537 = vrot.slane %v9536, 4
      %v9538 = vmax.f32 %v9536, %v9537
      %v9539 = vrot.slane %v9538, 2
      %v9540 = vmax.f32 %v9538, %v9539
      %v9541 = vrot.slane %v9540, 1
      %v9542 = vmax.f32 %v9540, %v9541
      %v9543 = vsel %vm9206, %v7916, -inf
      %v9544 = vrot.slane %v9543, 4
      %v9545 = vmax.f32 %v9543, %v9544
      %v9546 = vrot.slane %v9545, 2
      %v9547 = vmax.f32 %v9545, %v9546
      %v9548 = vrot.slane %v9547, 1
      %v9549 = vmax.f32 %v9547, %v9548
      %v9550 = vsel %vm9206, %v7955, -inf
      %v9551 = vrot.slane %v9550, 4
      %v9552 = vmax.f32 %v9550, %v9551
      %v9553 = vrot.slane %v9552, 2
      %v9554 = vmax.f32 %v9552, %v9553
      %v9555 = vrot.slane %v9554, 1
      %v9556 = vmax.f32 %v9554, %v9555
      %v9557 = vsel %vm9206, %v7994, -inf
      %v9558 = vrot.slane %v9557, 4
      %v9559 = vmax.f32 %v9557, %v9558
      %v9560 = vrot.slane %v9559, 2
      %v9561 = vmax.f32 %v9559, %v9560
      %v9562 = vrot.slane %v9561, 1
      %v9563 = vmax.f32 %v9561, %v9562
      %v9564 = vsel %vm9206, %v8033, -inf
      %v9565 = vrot.slane %v9564, 4
      %v9566 = vmax.f32 %v9564, %v9565
      %v9567 = vrot.slane %v9566, 2
      %v9568 = vmax.f32 %v9566, %v9567
      %v9569 = vrot.slane %v9568, 1
      %v9570 = vmax.f32 %v9568, %v9569
      %v9571 = vsel %vm9206, %v8072, -inf
      %v9572 = vrot.slane %v9571, 4
      %v9573 = vmax.f32 %v9571, %v9572
      %v9574 = vrot.slane %v9573, 2
      %v9575 = vmax.f32 %v9573, %v9574
      %v9576 = vrot.slane %v9575, 1
      %v9577 = vmax.f32 %v9575, %v9576
      %v9578 = vsel %vm9206, %v8111, -inf
      %v9579 = vrot.slane %v9578, 4
      %v9580 = vmax.f32 %v9578, %v9579
      %v9581 = vrot.slane %v9580, 2
      %v9582 = vmax.f32 %v9580, %v9581
      %v9583 = vrot.slane %v9582, 1
      %v9584 = vmax.f32 %v9582, %v9583
      %v9585 = vsel %vm9206, %v8150, -inf
      %v9586 = vrot.slane %v9585, 4
      %v9587 = vmax.f32 %v9585, %v9586
      %v9588 = vrot.slane %v9587, 2
      %v9589 = vmax.f32 %v9587, %v9588
      %v9590 = vrot.slane %v9589, 1
      %v9591 = vmax.f32 %v9589, %v9590
      %v9592 = vsel %vm9206, %v8189, -inf
      %v9593 = vrot.slane %v9592, 4
      %v9594 = vmax.f32 %v9592, %v9593
      %v9595 = vrot.slane %v9594, 2
      %v9596 = vmax.f32 %v9594, %v9595
      %v9597 = vrot.slane %v9596, 1
      %v9598 = vmax.f32 %v9596, %v9597
      %v9599 = vsel %vm9206, %v8228, -inf
      %v9600 = vrot.slane %v9599, 4
      %v9601 = vmax.f32 %v9599, %v9600
      %v9602 = vrot.slane %v9601, 2
      %v9603 = vmax.f32 %v9601, %v9602
      %v9604 = vrot.slane %v9603, 1
      %v9605 = vmax.f32 %v9603, %v9604
      %v9606 = vsel %vm9206, %v8267, -inf
      %v9607 = vrot.slane %v9606, 4
      %v9608 = vmax.f32 %v9606, %v9607
      %v9609 = vrot.slane %v9608, 2
      %v9610 = vmax.f32 %v9608, %v9609
      %v9611 = vrot.slane %v9610, 1
      %v9612 = vmax.f32 %v9610, %v9611
      %v9613 = vsel %vm9206, %v8306, -inf
      %v9614 = vrot.slane %v9613, 4
      %v9615 = vmax.f32 %v9613, %v9614
      %v9616 = vrot.slane %v9615, 2
      %v9617 = vmax.f32 %v9615, %v9616
      %v9618 = vrot.slane %v9617, 1
      %v9619 = vmax.f32 %v9617, %v9618
      %v9620 = vsel %vm9206, %v8345, -inf
      %v9621 = vrot.slane %v9620, 4
      %v9622 = vmax.f32 %v9620, %v9621
      %v9623 = vrot.slane %v9622, 2
      %v9624 = vmax.f32 %v9622, %v9623
      %v9625 = vrot.slane %v9624, 1
      %v9626 = vmax.f32 %v9624, %v9625
      %v9627 = vsel %vm9206, %v8384, -inf
      %v9628 = vrot.slane %v9627, 4
      %v9629 = vmax.f32 %v9627, %v9628
      %v9630 = vrot.slane %v9629, 2
      %v9631 = vmax.f32 %v9629, %v9630
      %v9632 = vrot.slane %v9631, 1
      %v9633 = vmax.f32 %v9631, %v9632
      %v9634 = vsel %vm9206, %v8423, -inf
      %v9635 = vrot.slane %v9634, 4
      %v9636 = vmax.f32 %v9634, %v9635
      %v9637 = vrot.slane %v9636, 2
      %v9638 = vmax.f32 %v9636, %v9637
      %v9639 = vrot.slane %v9638, 1
      %v9640 = vmax.f32 %v9638, %v9639
      %v9641 = vsel %vm9206, %v8462, -inf
      %v9642 = vrot.slane %v9641, 4
      %v9643 = vmax.f32 %v9641, %v9642
      %v9644 = vrot.slane %v9643, 2
      %v9645 = vmax.f32 %v9643, %v9644
      %v9646 = vrot.slane %v9645, 1
      %v9647 = vmax.f32 %v9645, %v9646
      %v9648 = vsel %vm9206, %v8501, -inf
      %v9649 = vrot.slane %v9648, 4
      %v9650 = vmax.f32 %v9648, %v9649
      %v9651 = vrot.slane %v9650, 2
      %v9652 = vmax.f32 %v9650, %v9651
      %v9653 = vrot.slane %v9652, 1
      %v9654 = vmax.f32 %v9652, %v9653
      %v9655 = vsel %vm9206, %v8540, -inf
      %v9656 = vrot.slane %v9655, 4
      %v9657 = vmax.f32 %v9655, %v9656
      %v9658 = vrot.slane %v9657, 2
      %v9659 = vmax.f32 %v9657, %v9658
      %v9660 = vrot.slane %v9659, 1
      %v9661 = vmax.f32 %v9659, %v9660
      %v9662 = vsel %vm9206, %v8579, -inf
      %v9663 = vrot.slane %v9662, 4
      %v9664 = vmax.f32 %v9662, %v9663
      %v9665 = vrot.slane %v9664, 2
      %v9666 = vmax.f32 %v9664, %v9665
      %v9667 = vrot.slane %v9666, 1
      %v9668 = vmax.f32 %v9666, %v9667
      %v9669 = vsel %vm9206, %v8618, -inf
      %v9670 = vrot.slane %v9669, 4
      %v9671 = vmax.f32 %v9669, %v9670
      %v9672 = vrot.slane %v9671, 2
      %v9673 = vmax.f32 %v9671, %v9672
      %v9674 = vrot.slane %v9673, 1
      %v9675 = vmax.f32 %v9673, %v9674
      %v9676 = vsel %vm9206, %v8657, -inf
      %v9677 = vrot.slane %v9676, 4
      %v9678 = vmax.f32 %v9676, %v9677
      %v9679 = vrot.slane %v9678, 2
      %v9680 = vmax.f32 %v9678, %v9679
      %v9681 = vrot.slane %v9680, 1
      %v9682 = vmax.f32 %v9680, %v9681
      %v9683 = vsel %vm9206, %v8696, -inf
      %v9684 = vrot.slane %v9683, 4
      %v9685 = vmax.f32 %v9683, %v9684
      %v9686 = vrot.slane %v9685, 2
      %v9687 = vmax.f32 %v9685, %v9686
      %v9688 = vrot.slane %v9687, 1
      %v9689 = vmax.f32 %v9687, %v9688
      %v9690 = vsel %vm9206, %v8735, -inf
      %v9691 = vrot.slane %v9690, 4
      %v9692 = vmax.f32 %v9690, %v9691
      %v9693 = vrot.slane %v9692, 2
      %v9694 = vmax.f32 %v9692, %v9693
      %v9695 = vrot.slane %v9694, 1
      %v9696 = vmax.f32 %v9694, %v9695
      %v9697 = vsel %vm9206, %v8774, -inf
      %v9698 = vrot.slane %v9697, 4
      %v9699 = vmax.f32 %v9697, %v9698
      %v9700 = vrot.slane %v9699, 2
      %v9701 = vmax.f32 %v9699, %v9700
      %v9702 = vrot.slane %v9701, 1
      %v9703 = vmax.f32 %v9701, %v9702
      %v9704 = vsel %vm9206, %v8813, -inf
      %v9705 = vrot.slane %v9704, 4
      %v9706 = vmax.f32 %v9704, %v9705
      %v9707 = vrot.slane %v9706, 2
      %v9708 = vmax.f32 %v9706, %v9707
      %v9709 = vrot.slane %v9708, 1
      %v9710 = vmax.f32 %v9708, %v9709
      %v9711 = vsel %vm9206, %v8852, -inf
      %v9712 = vrot.slane %v9711, 4
      %v9713 = vmax.f32 %v9711, %v9712
      %v9714 = vrot.slane %v9713, 2
      %v9715 = vmax.f32 %v9713, %v9714
      %v9716 = vrot.slane %v9715, 1
      %v9717 = vmax.f32 %v9715, %v9716
      %v9718 = vsel %vm9206, %v8891, -inf
      %v9719 = vrot.slane %v9718, 4
      %v9720 = vmax.f32 %v9718, %v9719
      %v9721 = vrot.slane %v9720, 2
      %v9722 = vmax.f32 %v9720, %v9721
      %v9723 = vrot.slane %v9722, 1
      %v9724 = vmax.f32 %v9722, %v9723
      %v9725 = vsel %vm9206, %v8930, -inf
      %v9726 = vrot.slane %v9725, 4
      %v9727 = vmax.f32 %v9725, %v9726
      %v9728 = vrot.slane %v9727, 2
      %v9729 = vmax.f32 %v9727, %v9728
      %v9730 = vrot.slane %v9729, 1
      %v9731 = vmax.f32 %v9729, %v9730
      %v9732 = vsel %vm9206, %v8969, -inf
      %v9733 = vrot.slane %v9732, 4
      %v9734 = vmax.f32 %v9732, %v9733
      %v9735 = vrot.slane %v9734, 2
      %v9736 = vmax.f32 %v9734, %v9735
      %v9737 = vrot.slane %v9736, 1
      %v9738 = vmax.f32 %v9736, %v9737
      %v9739 = vsel %vm9206, %v9008, -inf
      %v9740 = vrot.slane %v9739, 4
      %v9741 = vmax.f32 %v9739, %v9740
      %v9742 = vrot.slane %v9741, 2
      %v9743 = vmax.f32 %v9741, %v9742
      %v9744 = vrot.slane %v9743, 1
      %v9745 = vmax.f32 %v9743, %v9744
      %v9746 = vsel %vm9206, %v9047, -inf
      %v9747 = vrot.slane %v9746, 4
      %v9748 = vmax.f32 %v9746, %v9747
      %v9749 = vrot.slane %v9748, 2
      %v9750 = vmax.f32 %v9748, %v9749
      %v9751 = vrot.slane %v9750, 1
      %v9752 = vmax.f32 %v9750, %v9751
      %v9753 = vsel %vm9206, %v9086, -inf
      %v9754 = vrot.slane %v9753, 4
      %v9755 = vmax.f32 %v9753, %v9754
      %v9756 = vrot.slane %v9755, 2
      %v9757 = vmax.f32 %v9755, %v9756
      %v9758 = vrot.slane %v9757, 1
      %v9759 = vmax.f32 %v9757, %v9758
      %v9760 = vsel %vm9206, %v9125, -inf
      %v9761 = vrot.slane %v9760, 4
      %v9762 = vmax.f32 %v9760, %v9761
      %v9763 = vrot.slane %v9762, 2
      %v9764 = vmax.f32 %v9762, %v9763
      %v9765 = vrot.slane %v9764, 1
      %v9766 = vmax.f32 %v9764, %v9765
      %v9767 = vmax.f32 %v9213, %v9241
      %v9768 = vmax.f32 %v9220, %v9248
      %v9769 = vmax.f32 %v9227, %v9255
      %v9770 = vmax.f32 %v9234, %v9262
      %v9771 = vmax.f32 %v9353, %v9381
      %v9772 = vmax.f32 %v9360, %v9388
      %v9773 = vmax.f32 %v9367, %v9395
      %v9774 = vmax.f32 %v9374, %v9402
      %v9775 = vmax.f32 %v9493, %v9521
      %v9776 = vmax.f32 %v9500, %v9528
      %v9777 = vmax.f32 %v9507, %v9535
      %v9778 = vmax.f32 %v9514, %v9542
      %v9779 = vmax.f32 %v9633, %v9661
      %v9780 = vmax.f32 %v9640, %v9668
      %v9781 = vmax.f32 %v9647, %v9675
      %v9782 = vmax.f32 %v9654, %v9682
      %v9783 = vmax.f32 %v9767, %v9269
      %v9784 = vmax.f32 %v9768, %v9276
      %v9785 = vmax.f32 %v9769, %v9283
      %v9786 = vmax.f32 %v9770, %v9290
      %v9787 = vmax.f32 %v9771, %v9409
      %v9788 = vmax.f32 %v9772, %v9416
      %v9789 = vmax.f32 %v9773, %v9423
      %v9790 = vmax.f32 %v9774, %v9430
      %v9791 = vmax.f32 %v9775, %v9549
      %v9792 = vmax.f32 %v9776, %v9556
      %v9793 = vmax.f32 %v9777, %v9563
      %v9794 = vmax.f32 %v9778, %v9570
      %v9795 = vmax.f32 %v9779, %v9689
      %v9796 = vmax.f32 %v9780, %v9696
      %v9797 = vmax.f32 %v9781, %v9703
      %v9798 = vmax.f32 %v9782, %v9710
      %v9799 = vmax.f32 %v9783, %v9297
      %v9800 = vmax.f32 %v9784, %v9304
      %v9801 = vmax.f32 %v9785, %v9311
      %v9802 = vmax.f32 %v9786, %v9318
      %v9803 = vmax.f32 %v9787, %v9437
      %v9804 = vmax.f32 %v9788, %v9444
      %v9805 = vmax.f32 %v9789, %v9451
      %v9806 = vmax.f32 %v9790, %v9458
      %v9807 = vmax.f32 %v9791, %v9577
      %v9808 = vmax.f32 %v9792, %v9584
      %v9809 = vmax.f32 %v9793, %v9591
      %v9810 = vmax.f32 %v9794, %v9598
      %v9811 = vmax.f32 %v9795, %v9717
      %v9812 = vmax.f32 %v9796, %v9724
      %v9813 = vmax.f32 %v9797, %v9731
      %v9814 = vmax.f32 %v9798, %v9738
      %v9815 = vmax.f32 %v9799, %v9325
      %v9816 = vmax.f32 %v9800, %v9332
      %v9817 = vmax.f32 %v9801, %v9339
      %v9818 = vmax.f32 %v9802, %v9346
      %v9819 = vmax.f32 %v9803, %v9465
      %v9820 = vmax.f32 %v9804, %v9472
      %v9821 = vmax.f32 %v9805, %v9479
      %v9822 = vmax.f32 %v9806, %v9486
      %v9823 = vmax.f32 %v9807, %v9605
      %v9824 = vmax.f32 %v9808, %v9612
      %v9825 = vmax.f32 %v9809, %v9619
      %v9826 = vmax.f32 %v9810, %v9626
      %v9827 = vmax.f32 %v9811, %v9745
      %v9828 = vmax.f32 %v9812, %v9752
      %v9829 = vmax.f32 %v9813, %v9759
      %v9830 = vmax.f32 %v9814, %v9766
      %vm9847 = vcmask 1041409
      %v9848 = vsel %vm9847, %v9816, %v9815
      %vm9849 = vcmask 1042434
      %v9850 = vsel %vm9849, %v9817, %v9848
      %vm9851 = vcmask 1043459
      %v9852 = vsel %vm9851, %v9818, %v9850
      %v9853 = vsel %vm9847, %v9820, %v9819
      %v9854 = vsel %vm9849, %v9821, %v9853
      %v9855 = vsel %vm9851, %v9822, %v9854
      %v9856 = vsel %vm9847, %v9824, %v9823
      %v9857 = vsel %vm9849, %v9825, %v9856
      %v9858 = vsel %vm9851, %v9826, %v9857
      %v9859 = vsel %vm9847, %v9828, %v9827
      %v9860 = vsel %vm9849, %v9829, %v9859
      %v9861 = vsel %vm9851, %v9830, %v9860
      %v9862 = vrot.slane %v9852, 7
      %v9863 = vrot.slane %v9855, 7
      %v9864 = vrot.slane %v9858, 7
      %v9865 = vrot.slane %v9861, 7
      %v9870 = vsel %vm510, 0.0, %v9862
      %v9871 = vsel %vm510, 0.0, %v9863
      %v9872 = vsel %vm510, 0.0, %v9864
      %v9873 = vsel %vm510, 0.0, %v9865
      %v9874 = vsel %vm676, %v655, 0.0
      %v9875 = vsel %vm676, %v9870, 0.0
      %v9876 = vsel %vm676, %v9871, 0.0
      %v9877 = vsel %vm676, %v9872, 0.0
      %v9878 = vsel %vm676, %v9873, 0.0
      %v9883 = vrot.slane %v9874, 1
      %v9884 = vrot.slane %v9875, 1
      %v9885 = vrot.slane %v9876, 1
      %v9886 = vrot.slane %v9877, 1
      %9887 = vrot.lane.b32.xlu0 %v9883, 32
      %v9888 = vpop.permute.xlu0 %9887
      %9889 = vrot.lane.b32.xlu0 %v9884, 32
      %v9890 = vpop.permute.xlu0 %9889
      %9891 = vrot.lane.b32.xlu0 %v9885, 32
      %v9892 = vpop.permute.xlu0 %9891
      %9893 = vrot.lane.b32.xlu0 %v9886, 32
      %v9894 = vpop.permute.xlu0 %9893
      %v9899 = vrot.slane %v9874, 2
      %v9900 = vrot.slane %v9875, 2
      %v9901 = vrot.slane %v9876, 2
      %v9902 = vrot.slane %v9877, 2
      %9903 = vrot.lane.b32.xlu0 %v9899, 64
      %v9904 = vpop.permute.xlu0 %9903
      %9905 = vrot.lane.b32.xlu0 %v9900, 64
      %v9906 = vpop.permute.xlu0 %9905
      %9907 = vrot.lane.b32.xlu0 %v9901, 64
      %v9908 = vpop.permute.xlu0 %9907
      %9909 = vrot.lane.b32.xlu0 %v9902, 64
      %v9910 = vpop.permute.xlu0 %9909
      %9916 = vrot.lane.b32.xlu0 %v9875, 96
      %v9917 = vpop.permute.xlu0 %9916
      %9918 = vrot.lane.b32.xlu0 %v9876, 96
      %v9919 = vpop.permute.xlu0 %9918
      %9920 = vrot.lane.b32.xlu0 %v9877, 96
      %v9921 = vpop.permute.xlu0 %9920
      %9922 = vrot.lane.b32.xlu0 %v9878, 96
      %v9923 = vpop.permute.xlu0 %9922
      %v9928 = vrot.slane %v9878, 1
      %v9933 = vrot.slane %v9878, 2
      %9934 = vrot.lane.b32.xlu0 %v9900, 32
      %v9935 = vpop.permute.xlu0 %9934
      %9936 = vrot.lane.b32.xlu0 %v9901, 32
      %v9937 = vpop.permute.xlu0 %9936
      %9938 = vrot.lane.b32.xlu0 %v9902, 32
      %v9939 = vpop.permute.xlu0 %9938
      %9940 = vrot.lane.b32.xlu0 %v9933, 32
      %v9941 = vpop.permute.xlu0 %9940
      %9946 = vrot.lane.b32.xlu0 %v9876, 64
      %v9947 = vpop.permute.xlu0 %9946
      %9948 = vrot.lane.b32.xlu0 %v9877, 64
      %v9949 = vpop.permute.xlu0 %9948
      %9950 = vrot.lane.b32.xlu0 %v9878, 64
      %v9951 = vpop.permute.xlu0 %9950
      %9952 = vrot.lane.b32.xlu0 %v9874, 64
      %v9953 = vpop.permute.xlu0 %9952
      %9958 = vrot.lane.b32.xlu0 %v9885, 96
      %v9959 = vpop.permute.xlu0 %9958
      %9960 = vrot.lane.b32.xlu0 %v9886, 96
      %v9961 = vpop.permute.xlu0 %9960
      %9962 = vrot.lane.b32.xlu0 %v9928, 96
      %v9963 = vpop.permute.xlu0 %9962
      %9964 = vrot.lane.b32.xlu0 %v9883, 96
      %v9965 = vpop.permute.xlu0 %9964
      %vm9970 = vcmask 261120
      %v9971 = vsel %vm9970, %v9874, %v9888
      %v9972 = vsel %vm9970, %v9875, %v9890
      %v9973 = vsel %vm9970, %v9876, %v9892
      %v9974 = vsel %vm9970, %v9877, %v9894
      %vm9975 = vcmask 523264
      %v9976 = vsel %vm9975, %v9971, %v9904
      %v9977 = vsel %vm9975, %v9972, %v9906
      %v9978 = vsel %vm9975, %v9973, %v9908
      %v9979 = vsel %vm9975, %v9974, %v9910
      %vm9980 = vcmask 785408
      %v9981 = vsel %vm9980, %v9976, %v9917
      %v9982 = vsel %vm9980, %v9977, %v9919
      %v9983 = vsel %vm9980, %v9978, %v9921
      %v9984 = vsel %vm9980, %v9979, %v9923
      %v9985 = vsel %vm9970, %v9884, %v9935
      %v9986 = vsel %vm9970, %v9885, %v9937
      %v9987 = vsel %vm9970, %v9886, %v9939
      %v9988 = vsel %vm9970, %v9928, %v9941
      %v9989 = vsel %vm9975, %v9985, %v9947
      %v9990 = vsel %vm9975, %v9986, %v9949
      %v9991 = vsel %vm9975, %v9987, %v9951
      %v9992 = vsel %vm9975, %v9988, %v9953
      %v9993 = vsel %vm9980, %v9989, %v9959
      %v9994 = vsel %vm9980, %v9990, %v9961
      %v9995 = vsel %vm9980, %v9991, %v9963
      %v9996 = vsel %vm9980, %v9992, %v9965
      %v10005 = vcombine.low %v9981, %v9993
      %v10006 = vcombine.low %v9982, %v9994
      %v10007 = vcombine.low %v9983, %v9995
      %v10008 = vcombine.low %v9984, %v9996
      %v10009 = vld [vmem:[%s3] sm:$0xff]
      %v10010 = vld [vmem:[%s3 + $0x8] sm:$0xff]
      %v10011 = vld [vmem:[%s3 + $0x10] sm:$0xff]
      %v10012 = vld [vmem:[%s3 + $0x18] sm:$0xff]
      %v10013 = vld [vmem:[%s3 + $0x20] sm:$0xff]
      %v10014 = vld [vmem:[%s3 + $0x28] sm:$0xff]
      %v10015 = vld [vmem:[%s3 + $0x30] sm:$0xff]
      %v10016 = vld [vmem:[%s3 + $0x38] sm:$0xff]
      %v10017 = vld [vmem:[%s3 + $0x40] sm:$0xff]
      %v10018 = vld [vmem:[%s3 + $0x48] sm:$0xff]
      %v10019 = vld [vmem:[%s3 + $0x50] sm:$0xff]
      %v10020 = vld [vmem:[%s3 + $0x58] sm:$0xff]
      %v10021 = vld [vmem:[%s3 + $0x60] sm:$0xff]
      %v10022 = vld [vmem:[%s3 + $0x68] sm:$0xff]
      %v10023 = vld [vmem:[%s3 + $0x70] sm:$0xff]
      %v10024 = vld [vmem:[%s3 + $0x78] sm:$0xff]
      %v10025 = vld [vmem:[%s3 + $0x80] sm:$0xff]
      %v10026 = vld [vmem:[%s3 + $0x88] sm:$0xff]
      %v10027 = vld [vmem:[%s3 + $0x90] sm:$0xff]
      %v10028 = vld [vmem:[%s3 + $0x98] sm:$0xff]
      %v10029 = vld [vmem:[%s3 + $0xa0] sm:$0xff]
      %v10030 = vld [vmem:[%s3 + $0xa8] sm:$0xff]
      %v10031 = vld [vmem:[%s3 + $0xb0] sm:$0xff]
      %v10032 = vld [vmem:[%s3 + $0xb8] sm:$0xff]
      %v10033 = vld [vmem:[%s3 + $0xc0] sm:$0xff]
      %v10034 = vld [vmem:[%s3 + $0xc8] sm:$0xff]
      %v10035 = vld [vmem:[%s3 + $0xd0] sm:$0xff]
      %v10036 = vld [vmem:[%s3 + $0xd8] sm:$0xff]
      %v10037 = vld [vmem:[%s3 + $0xe0] sm:$0xff]
      %v10038 = vld [vmem:[%s3 + $0xe8] sm:$0xff]
      %v10039 = vld [vmem:[%s3 + $0xf0] sm:$0xff]
      %v10040 = vld [vmem:[%s3 + $0xf8] sm:$0xff]
      %v10041 = vld [vmem:[%s3 + $0x100] sm:$0xff]
      %v10042 = vld [vmem:[%s3 + $0x108] sm:$0xff]
      %v10043 = vld [vmem:[%s3 + $0x110] sm:$0xff]
      %v10044 = vld [vmem:[%s3 + $0x118] sm:$0xff]
      %v10045 = vld [vmem:[%s4] sm:$0x1]
      %v10047 = vlaneseq
      %v10048 = vshrl.u32 %v10047, 7
      %v10049 = vsub.s32 0, %v10048
      %v10050 = vrot.slane %v10045, %v10049
      %v10052 = vcombine.low %v10005, %v10006
      %v10053 = vcombine.high %v10005, %v10006
      %v10054 = vcombine.low %v9901, %v9902
      %v10055 = vcombine.low %v10007, %v10008
      %v10056 = vcombine.high %v10007, %v10008
      %v10057 = vcombine.low %v9933, %v9899
      %v10062 = vsel %vm9970, %v10054, 0
      %v10064 = vsel %vm9970, %v10057, 0
      %10066 = vmatprep.subr.mxu0 0.0
      %10067 = vmatpush1.msra.mxu0 %v10024
      %10068 = vmatprep.subr.mxu0 0.0
      %10069 = vmatpush1.msra.mxu0 %v10023
      %10070 = vmatprep.subr.mxu0 0.0
      %10071 = vmatpush1.msra.mxu0 %v10022
      %10072 = vmatprep.subr.mxu0 0.0
      %10073 = vmatpush1.msra.mxu0 %v10021
      %10074 = vmatprep.subr.mxu0 0.0
      %10075 = vmatpush1.msra.mxu0 %v10020
      %10076 = vmatprep.subr.mxu0 0.0
      %10077 = vmatpush1.msra.mxu0 %v10019
      %10078 = vmatprep.subr.mxu0 0.0
      %10079 = vmatpush1.msra.mxu0 %v10018
      %10080 = vmatprep.subr.mxu0 0.0
      %10081 = vmatpush1.msra.mxu0 %v10017
      %10082 = vmatprep.subr.mxu0 0.0
      %10083 = vmatpush1.msra.mxu0 %v10016
      %10084 = vmatprep.subr.mxu0 0.0
      %10085 = vmatpush1.msra.mxu0 %v10015
      %10086 = vmatprep.subr.mxu0 0.0
      %10087 = vmatpush1.msra.mxu0 %v10014
      %10088 = vmatprep.subr.mxu0 0.0
      %10089 = vmatpush1.msra.mxu0 %v10013
      %10090 = vmatprep.subr.mxu0 0.0
      %10091 = vmatpush1.msra.mxu0 %v10012
      %10092 = vmatprep.subr.mxu0 0.0
      %10093 = vmatpush1.msra.mxu0 %v10011
      %10094 = vmatprep.subr.mxu0 0.0
      %10095 = vmatpush1.msra.mxu0 %v10010
      %10096 = vmatprep.subr.mxu0 0.0
      %10097 = vmatpush1.msra.mxu0 %v10009
      %10098 = vmatprep.subr.mxu0 0.0
      %10099 = vmatpush2.msra.mxu0 %v10040
      %10100 = vmatprep.subr.mxu0 0.0
      %10101 = vmatpush2.msra.mxu0 %v10039
      %10102 = vmatprep.subr.mxu0 0.0
      %10103 = vmatpush2.msra.mxu0 %v10038
      %10104 = vmatprep.subr.mxu0 0.0
      %10105 = vmatpush2.msra.mxu0 %v10037
      %10106 = vmatprep.subr.mxu0 0.0
      %10107 = vmatpush2.msra.mxu0 %v10036
      %10108 = vmatprep.subr.mxu0 0.0
      %10109 = vmatpush2.msra.mxu0 %v10035
      %10110 = vmatprep.subr.mxu0 0.0
      %10111 = vmatpush2.msra.mxu0 %v10034
      %10112 = vmatprep.subr.mxu0 0.0
      %10113 = vmatpush2.msra.mxu0 %v10033
      %10114 = vmatprep.subr.mxu0 0.0
      %10115 = vmatpush2.msra.mxu0 %v10032
      %10116 = vmatprep.subr.mxu0 0.0
      %10117 = vmatpush2.msra.mxu0 %v10031
      %10118 = vmatprep.subr.mxu0 0.0
      %10119 = vmatpush2.msra.mxu0 %v10030
      %10120 = vmatprep.subr.mxu0 0.0
      %10121 = vmatpush2.msra.mxu0 %v10029
      %10122 = vmatprep.subr.mxu0 0.0
      %10123 = vmatpush2.msra.mxu0 %v10028
      %10124 = vmatprep.subr.mxu0 0.0
      %10125 = vmatpush2.msra.mxu0 %v10027
      %10126 = vmatprep.subr.mxu0 0.0
      %10127 = vmatpush2.msra.mxu0 %v10026
      %10128 = vmatprep.subr.mxu0 0.0
      %10129 = vmatpush2.msra.mxu0 %v10025
      %10130 = vmatprep.mubr.f32.mxu0 %v10053
      %10131 = vmatmul.mubr.f32.gmra.mxu0 %v10052
      %v10132 = vpop.f32.mrf.mxu0
      %v10133 = vadd.f32 %v10050, %v10132
      %v10134 = vpop.f32.mrf.mxu0
      %10135 = vmatprep.mubr.f32.mxu0 %v10056
      %10136 = vmatmul.mubr.f32.gmra.mxu0 %v10055
      %v10137 = vpop.f32.mrf.mxu0
      %v10138 = vadd.f32 %v10050, %v10137
      %v10139 = vpop.f32.mrf.mxu0
      %10140 = vdwg.mxu0
      %10141 = vmatprep.subr.mxu0 0.0
      %10142 = vmatpush1.msra.mxu0 0.0
      %10143 = vmatprep.subr.mxu0 0.0
      %10144 = vmatpush1.msra.mxu0 0.0
      %10145 = vmatprep.subr.mxu0 0.0
      %10146 = vmatpush1.msra.mxu0 0.0
      %10147 = vmatprep.subr.mxu0 0.0
      %10148 = vmatpush1.msra.mxu0 0.0
      %10149 = vmatprep.subr.mxu0 0.0
      %10150 = vmatpush1.msra.mxu0 0.0
      %10151 = vmatprep.subr.mxu0 0.0
      %10152 = vmatpush1.msra.mxu0 0.0
      %10153 = vmatprep.subr.mxu0 0.0
      %10154 = vmatpush1.msra.mxu0 0.0
      %10155 = vmatprep.subr.mxu0 0.0
      %10156 = vmatpush1.msra.mxu0 0.0
      %10157 = vmatprep.subr.mxu0 0.0
      %10158 = vmatpush1.msra.mxu0 0.0
      %10159 = vmatprep.subr.mxu0 0.0
      %10160 = vmatpush1.msra.mxu0 0.0
      %10161 = vmatprep.subr.mxu0 0.0
      %10162 = vmatpush1.msra.mxu0 0.0
      %10163 = vmatprep.subr.mxu0 0.0
      %10164 = vmatpush1.msra.mxu0 0.0
      %10165 = vmatprep.subr.mxu0 0.0
      %10166 = vmatpush1.msra.mxu0 %v10044
      %10167 = vmatprep.subr.mxu0 0.0
      %10168 = vmatpush1.msra.mxu0 %v10043
      %10169 = vmatprep.subr.mxu0 0.0
      %10170 = vmatpush1.msra.mxu0 %v10042
      %10171 = vmatprep.subr.mxu0 0.0
      %10172 = vmatpush1.msra.mxu0 %v10041
      %10173 = vmatprep.subr.mxu0 0.0
      %10174 = vmatpush2.msra.mxu0 0.0
      %10175 = vmatprep.subr.mxu0 0.0
      %10176 = vmatpush2.msra.mxu0 0.0
      %10177 = vmatprep.subr.mxu0 0.0
      %10178 = vmatpush2.msra.mxu0 0.0
      %10179 = vmatprep.subr.mxu0 0.0
      %10180 = vmatpush2.msra.mxu0 0.0
      %10181 = vmatprep.subr.mxu0 0.0
      %10182 = vmatpush2.msra.mxu0 0.0
      %10183 = vmatprep.subr.mxu0 0.0
      %10184 = vmatpush2.msra.mxu0 0.0
      %10185 = vmatprep.subr.mxu0 0.0
      %10186 = vmatpush2.msra.mxu0 0.0
      %10187 = vmatprep.subr.mxu0 0.0
      %10188 = vmatpush2.msra.mxu0 0.0
      %10189 = vmatprep.subr.mxu0 0.0
      %10190 = vmatpush2.msra.mxu0 0.0
      %10191 = vmatprep.subr.mxu0 0.0
      %10192 = vmatpush2.msra.mxu0 0.0
      %10193 = vmatprep.subr.mxu0 0.0
      %10194 = vmatpush2.msra.mxu0 0.0
      %10195 = vmatprep.subr.mxu0 0.0
      %10196 = vmatpush2.msra.mxu0 0.0
      %10197 = vmatprep.subr.mxu0 0.0
      %10198 = vmatpush2.msra.mxu0 0.0
      %10199 = vmatprep.subr.mxu0 0.0
      %10200 = vmatpush2.msra.mxu0 0.0
      %10201 = vmatprep.subr.mxu0 0.0
      %10202 = vmatpush2.msra.mxu0 0.0
      %10203 = vmatprep.subr.mxu0 0.0
      %10204 = vmatpush2.msra.mxu0 0.0
      %10205 = vmatprep.mubr.f32.mxu0 0.0
      %10206 = vmatmul.mubr.f32.gmra.mxu0 %v10062
      %v10207 = vpop.f32.mrf.mxu0
      %v10208 = vadd.f32 %v10133, %v10207
      %v10209 = vpop.f32.mrf.mxu0
      %10210 = vmatprep.mubr.f32.mxu0 0.0
      %10211 = vmatmul.mubr.f32.gmra.mxu0 %v10064
      %v10212 = vpop.f32.mrf.mxu0
      %v10213 = vadd.f32 %v10138, %v10212
      %v10214 = vpop.f32.mrf.mxu0
      %10215 = vdwg.mxu0
      %v10216 = vmax.f32 %v10208, 0.0
      %v10217 = vmax.f32 %v10213, 0.0
      %v10220 = vcombine.high %v10216, %v10216
      %v10222 = vunpack.c.l.s4 1983009808
      %v10223 = vunpack.c.0.s8 %v10222
      %v10224 = vlaneseq
      %v10225 = vshrl.u32 %v10224, 7
      %v10226 = vsub.s32 %v10223, %v10225
      %v10227 = vrot.slane %v10216, %v10226
      %v10229 = vunpack.c.l.s4 1983009808
      %v10230 = vunpack.c.0.s8 %v10229
      %v10231 = vlaneseq
      %v10232 = vshrl.u32 %v10231, 7
      %v10233 = vsub.s32 %v10230, %v10232
      %v10234 = vrot.slane %v10220, %v10233
      %v10235 = vcombine.high %v10227, %v10227
      %v10236 = vcombine.high %v10234, %v10234
      %v10237 = vcombine.high %v10217, %v10217
      %v10239 = vunpack.c.l.s4 1983009808
      %v10240 = vunpack.c.0.s8 %v10239
      %v10241 = vlaneseq
      %v10242 = vshrl.u32 %v10241, 7
      %v10243 = vsub.s32 %v10240, %v10242
      %v10244 = vrot.slane %v10217, %v10243
      %v10246 = vunpack.c.l.s4 1983009808
      %v10247 = vunpack.c.0.s8 %v10246
      %v10248 = vlaneseq
      %v10249 = vshrl.u32 %v10248, 7
      %v10250 = vsub.s32 %v10247, %v10249
      %v10251 = vrot.slane %v10237, %v10250
      %v10252 = vcombine.high %v10244, %v10244
      %v10253 = vcombine.high %v10251, %v10251
      %vm10262 = vcmask 123904
      %v10263 = vsel %vm10262, %v10227, -inf
      %v10264 = vrot.slane %v10263, 4
      %v10265 = vmax.f32 %v10263, %v10264
      %v10266 = vrot.slane %v10265, 2
      %v10267 = vmax.f32 %v10265, %v10266
      %v10268 = vrot.slane %v10267, 1
      %v10269 = vmax.f32 %v10267, %v10268
      %v10270 = vsel %vm10262, %v10235, -inf
      %v10271 = vrot.slane %v10270, 4
      %v10272 = vmax.f32 %v10270, %v10271
      %v10273 = vrot.slane %v10272, 2
      %v10274 = vmax.f32 %v10272, %v10273
      %v10275 = vrot.slane %v10274, 1
      %v10276 = vmax.f32 %v10274, %v10275
      %v10277 = vsel %vm10262, %v10234, -inf
      %v10278 = vrot.slane %v10277, 4
      %v10279 = vmax.f32 %v10277, %v10278
      %v10280 = vrot.slane %v10279, 2
      %v10281 = vmax.f32 %v10279, %v10280
      %v10282 = vrot.slane %v10281, 1
      %v10283 = vmax.f32 %v10281, %v10282
      %v10284 = vsel %vm10262, %v10236, -inf
      %v10285 = vrot.slane %v10284, 4
      %v10286 = vmax.f32 %v10284, %v10285
      %v10287 = vrot.slane %v10286, 2
      %v10288 = vmax.f32 %v10286, %v10287
      %v10289 = vrot.slane %v10288, 1
      %v10290 = vmax.f32 %v10288, %v10289
      %v10291 = vsel %vm10262, %v10244, -inf
      %v10292 = vrot.slane %v10291, 4
      %v10293 = vmax.f32 %v10291, %v10292
      %v10294 = vrot.slane %v10293, 2
      %v10295 = vmax.f32 %v10293, %v10294
      %v10296 = vrot.slane %v10295, 1
      %v10297 = vmax.f32 %v10295, %v10296
      %v10298 = vsel %vm10262, %v10252, -inf
      %v10299 = vrot.slane %v10298, 4
      %v10300 = vmax.f32 %v10298, %v10299
      %v10301 = vrot.slane %v10300, 2
      %v10302 = vmax.f32 %v10300, %v10301
      %v10303 = vrot.slane %v10302, 1
      %v10304 = vmax.f32 %v10302, %v10303
      %v10305 = vsel %vm10262, %v10251, -inf
      %v10306 = vrot.slane %v10305, 4
      %v10307 = vmax.f32 %v10305, %v10306
      %v10308 = vrot.slane %v10307, 2
      %v10309 = vmax.f32 %v10307, %v10308
      %v10310 = vrot.slane %v10309, 1
      %v10311 = vmax.f32 %v10309, %v10310
      %v10312 = vsel %vm10262, %v10253, -inf
      %v10313 = vrot.slane %v10312, 4
      %v10314 = vmax.f32 %v10312, %v10313
      %v10315 = vrot.slane %v10314, 2
      %v10316 = vmax.f32 %v10314, %v10315
      %v10317 = vrot.slane %v10316, 1
      %v10318 = vmax.f32 %v10316, %v10317
      %v10319 = vmax.f32 %v10269, %v10283
      %v10320 = vmax.f32 %v10276, %v10290
      %v10321 = vmax.f32 %v10297, %v10311
      %v10322 = vmax.f32 %v10304, %v10318
      %v10327 = vsel %vm9847, %v10320, %v10319
      %v10328 = vsel %vm9847, %v10322, %v10321
      %v10329 = vrot.slane %v10327, 7
      %v10330 = vrot.slane %v10328, 7
      %v10333 = vsel %vm510, 0.0, %v10329
      %v10334 = vsel %vm510, 0.0, %v10330
      %vm10335 = vcmask 1042432
      %v10336 = vsel %vm10335, %v655, 0.0
      %v10337 = vsel %vm10335, %v10333, 0.0
      %v10338 = vsel %vm10335, %v10334, 0.0
      %v10341 = vrot.slane %v10336, 1
      %v10342 = vrot.slane %v10337, 1
      %10343 = vrot.lane.b32.xlu0 %v10341, 16
      %v10344 = vpop.permute.xlu0 %10343
      %10345 = vrot.lane.b32.xlu0 %v10342, 16
      %v10346 = vpop.permute.xlu0 %10345
      %v10349 = vrot.slane %v10336, 2
      %v10350 = vrot.slane %v10337, 2
      %10351 = vrot.lane.b32.xlu0 %v10349, 32
      %v10352 = vpop.permute.xlu0 %10351
      %10353 = vrot.lane.b32.xlu0 %v10350, 32
      %v10354 = vpop.permute.xlu0 %10353
      %10358 = vrot.lane.b32.xlu0 %v10337, 48
      %v10359 = vpop.permute.xlu0 %10358
      %10360 = vrot.lane.b32.xlu0 %v10338, 48
      %v10361 = vpop.permute.xlu0 %10360
      %v10364 = vrot.slane %v10338, 1
      %10365 = vrot.lane.b32.xlu0 %v10342, 64
      %v10366 = vpop.permute.xlu0 %10365
      %10367 = vrot.lane.b32.xlu0 %v10364, 64
      %v10368 = vpop.permute.xlu0 %10367
      %v10371 = vrot.slane %v10338, 2
      %10372 = vrot.lane.b32.xlu0 %v10350, 80
      %v10373 = vpop.permute.xlu0 %10372
      %10374 = vrot.lane.b32.xlu0 %v10371, 80
      %v10375 = vpop.permute.xlu0 %10374
      %10378 = vrot.lane.b32.xlu0 %v10338, 96
      %v10379 = vpop.permute.xlu0 %10378
      %10380 = vrot.lane.b32.xlu0 %v10336, 96
      %v10381 = vpop.permute.xlu0 %10380
      %10384 = vrot.lane.b32.xlu0 %v10364, 112
      %v10385 = vpop.permute.xlu0 %10384
      %10386 = vrot.lane.b32.xlu0 %v10341, 112
      %v10387 = vpop.permute.xlu0 %10386
      %vm10390 = vcmask 130048
      %v10391 = vsel %vm10390, %v10336, %v10344
      %v10392 = vsel %vm10390, %v10337, %v10346
      %v10393 = vsel %vm9970, %v10391, %v10352
      %v10394 = vsel %vm9970, %v10392, %v10354
      %vm10395 = vcmask 392192
      %v10396 = vsel %vm10395, %v10393, %v10359
      %v10397 = vsel %vm10395, %v10394, %v10361
      %v10398 = vsel %vm9975, %v10396, %v10366
      %v10399 = vsel %vm9975, %v10397, %v10368
      %vm10400 = vcmask 654336
      %v10401 = vsel %vm10400, %v10398, %v10373
      %v10402 = vsel %vm10400, %v10399, %v10375
      %v10403 = vsel %vm9980, %v10401, %v10379
      %v10404 = vsel %vm9980, %v10402, %v10381
      %vm10405 = vcmask 916480
      %v10406 = vsel %vm10405, %v10403, %v10385
      %v10407 = vsel %vm10405, %v10404, %v10387
      %v10410 = vcombine.low %v10406, %v10371
      %v10412 = vunpack.c.l.s4 1983009808
      %v10413 = vunpack.c.0.s8 %v10412
      %v10414 = vlaneseq
      %v10415 = vshrl.u32 %v10414, 7
      %v10416 = vsub.s32 %v10413, %v10415
      %v10417 = vrot.slane %v10410, %v10416
      %v10418 = vcombine.low %v10407, %v10349
      %v10420 = vunpack.c.l.s4 1983009808
      %v10421 = vunpack.c.0.s8 %v10420
      %v10422 = vlaneseq
      %v10423 = vshrl.u32 %v10422, 7
      %v10424 = vsub.s32 %v10421, %v10423
      %v10425 = vrot.slane %v10418, %v10424
      %v10426 = vld [vmem:[%s5] sm:$0xff]
      %v10427 = vld [vmem:[%s5 + $0x8] sm:$0xff]
      %v10428 = vld [vmem:[%s5 + $0x10] sm:$0xff]
      %v10429 = vld [vmem:[%s5 + $0x18] sm:$0xff]
      %v10430 = vld [vmem:[%s5 + $0x20] sm:$0xff]
      %v10431 = vld [vmem:[%s5 + $0x28] sm:$0xff]
      %v10432 = vld [vmem:[%s5 + $0x30] sm:$0xff]
      %v10433 = vld [vmem:[%s5 + $0x38] sm:$0xff]
      %v10434 = vld [vmem:[%s5 + $0x40] sm:$0xff]
      %v10435 = vld [vmem:[%s5 + $0x48] sm:$0xff]
      %v10436 = vld [vmem:[%s5 + $0x50] sm:$0xff]
      %v10437 = vld [vmem:[%s5 + $0x58] sm:$0xff]
      %v10438 = vld [vmem:[%s5 + $0x60] sm:$0xff]
      %v10439 = vld [vmem:[%s5 + $0x68] sm:$0xff]
      %v10440 = vld [vmem:[%s5 + $0x70] sm:$0xff]
      %v10441 = vld [vmem:[%s5 + $0x78] sm:$0xff]
      %v10442 = vld [vmem:[%s5 + $0x80] sm:$0xff]
      %v10443 = vld [vmem:[%s5 + $0x88] sm:$0xff]
      %v10444 = vld [vmem:[%s6] sm:$0x1]
      %v10446 = vlaneseq
      %v10447 = vshrl.u32 %v10446, 7
      %v10448 = vsub.s32 0, %v10447
      %v10449 = vrot.slane %v10444, %v10448
      %v10451 = vcombine.low %v10417, %v10425
      %v10453 = vunpack.c.l.s4 1983009808
      %v10454 = vunpack.c.0.s8 %v10453
      %v10455 = vlaneseq
      %v10456 = vshrl.u32 %v10455, 7
      %v10457 = vsub.s32 %v10454, %v10456
      %v10458 = vrot.slane %v10451, %v10457
      %v10459 = vcombine.high %v10458, %v10458
      %v10461 = vsel %vm10390, %v10459, 0
      %10463 = vmatprep.subr.mxu0 0.0
      %10464 = vmatpush1.msra.mxu0 %v10441
      %10465 = vmatprep.subr.mxu0 0.0
      %10466 = vmatpush1.msra.mxu0 %v10440
      %10467 = vmatprep.subr.mxu0 0.0
      %10468 = vmatpush1.msra.mxu0 %v10439
      %10469 = vmatprep.subr.mxu0 0.0
      %10470 = vmatpush1.msra.mxu0 %v10438
      %10471 = vmatprep.subr.mxu0 0.0
      %10472 = vmatpush1.msra.mxu0 %v10437
      %10473 = vmatprep.subr.mxu0 0.0
      %10474 = vmatpush1.msra.mxu0 %v10436
      %10475 = vmatprep.subr.mxu0 0.0
      %10476 = vmatpush1.msra.mxu0 %v10435
      %10477 = vmatprep.subr.mxu0 0.0
      %10478 = vmatpush1.msra.mxu0 %v10434
      %10479 = vmatprep.subr.mxu0 0.0
      %10480 = vmatpush1.msra.mxu0 %v10433
      %10481 = vmatprep.subr.mxu0 0.0
      %10482 = vmatpush1.msra.mxu0 %v10432
      %10483 = vmatprep.subr.mxu0 0.0
      %10484 = vmatpush1.msra.mxu0 %v10431
      %10485 = vmatprep.subr.mxu0 0.0
      %10486 = vmatpush1.msra.mxu0 %v10430
      %10487 = vmatprep.subr.mxu0 0.0
      %10488 = vmatpush1.msra.mxu0 %v10429
      %10489 = vmatprep.subr.mxu0 0.0
      %10490 = vmatpush1.msra.mxu0 %v10428
      %10491 = vmatprep.subr.mxu0 0.0
      %10492 = vmatpush1.msra.mxu0 %v10427
      %10493 = vmatprep.subr.mxu0 0.0
      %10494 = vmatpush1.msra.mxu0 %v10426
      %10495 = vmatprep.subr.mxu0 0.0
      %10496 = vmatpush2.msra.mxu0 0.0
      %10497 = vmatprep.subr.mxu0 0.0
      %10498 = vmatpush2.msra.mxu0 0.0
      %10499 = vmatprep.subr.mxu0 0.0
      %10500 = vmatpush2.msra.mxu0 0.0
      %10501 = vmatprep.subr.mxu0 0.0
      %10502 = vmatpush2.msra.mxu0 0.0
      %10503 = vmatprep.subr.mxu0 0.0
      %10504 = vmatpush2.msra.mxu0 0.0
      %10505 = vmatprep.subr.mxu0 0.0
      %10506 = vmatpush2.msra.mxu0 0.0
      %10507 = vmatprep.subr.mxu0 0.0
      %10508 = vmatpush2.msra.mxu0 0.0
      %10509 = vmatprep.subr.mxu0 0.0
      %10510 = vmatpush2.msra.mxu0 0.0
      %10511 = vmatprep.subr.mxu0 0.0
      %10512 = vmatpush2.msra.mxu0 0.0
      %10513 = vmatprep.subr.mxu0 0.0
      %10514 = vmatpush2.msra.mxu0 0.0
      %10515 = vmatprep.subr.mxu0 0.0
      %10516 = vmatpush2.msra.mxu0 0.0
      %10517 = vmatprep.subr.mxu0 0.0
      %10518 = vmatpush2.msra.mxu0 0.0
      %10519 = vmatprep.subr.mxu0 0.0
      %10520 = vmatpush2.msra.mxu0 0.0
      %10521 = vmatprep.subr.mxu0 0.0
      %10522 = vmatpush2.msra.mxu0 0.0
      %10523 = vmatprep.subr.mxu0 0.0
      %10524 = vmatpush2.msra.mxu0 %v10443
      %10525 = vmatprep.subr.mxu0 0.0
      %10526 = vmatpush2.msra.mxu0 %v10442
      %10527 = vmatprep.mubr.f32.mxu0 %v10461
      %10528 = vmatmul.mubr.f32.gmra.mxu0 %v10458
      %v10529 = vpop.f32.mrf.mxu0
      %v10530 = vadd.f32 %v10449, %v10529
      %v10531 = vpop.f32.mrf.mxu0
      %10532 = vdwg.mxu0
      %v10533 = vmax.f32 %v10530, 0.0
      %v10536 = vunpack.c.l.s4 1983009808
      %v10537 = vunpack.c.0.s8 %v10536
      %v10538 = vlaneseq
      %v10539 = vshrl.u32 %v10538, 7
      %v10540 = vsub.s32 %v10537, %v10539
      %v10541 = vrot.slane %v10533, %v10540
      %v10542 = vcombine.high %v10541, %v10541
      %v10545 = vlaneseq
      %v10546 = vshrl.u32 %v10545, 7
      %v10547 = vsub.s32 0, %v10546
      %v10548 = vrot.slane %v10541, %v10547
      %v10549 = vlaneseq
      %v10550 = vshrl.u32 %v10549, 7
      %v10551 = vsub.s32 0, %v10550
      %v10552 = vrot.slane %v10542, %v10551
      %v10553 = vlaneseq
      %v10554 = vshrl.u32 %v10553, 7
      %v10555 = vsub.s32 1, %v10554
      %v10556 = vrot.slane %v10541, %v10555
      %v10557 = vlaneseq
      %v10558 = vshrl.u32 %v10557, 7
      %v10559 = vsub.s32 1, %v10558
      %v10560 = vrot.slane %v10542, %v10559
      %vm10561 = vcmask 1041408
      %v10562 = vsel %vm10561, %v10548, %v10556
      %v10563 = vsel %vm10561, %v10552, %v10560
      %v10566 = vrot.slane %v10562, 7
      %v10567 = vrot.slane %v10563, 7
      %v10570 = vsel %vm510, 0.0, %v10566
      %v10571 = vsel %vm510, 0.0, %v10567
      %v10572 = vsel %vm676, %v10570, 0.0
      %v10573 = vsel %vm676, %v10571, 0.0
      %v10576 = vrot.slane %v10572, 1
      %v10577 = vrot.slane %v10573, 1
      %10578 = vrot.lane.b32.xlu0 %v9883, 16
      %v10579 = vpop.permute.xlu0 %10578
      %10580 = vrot.lane.b32.xlu0 %v10576, 16
      %v10581 = vpop.permute.xlu0 %10580
      %10582 = vrot.lane.b32.xlu0 %v10577, 16
      %v10583 = vpop.permute.xlu0 %10582
      %v10587 = vrot.slane %v10572, 2
      %v10588 = vrot.slane %v10573, 2
      %10589 = vrot.lane.b32.xlu0 %v9899, 32
      %v10590 = vpop.permute.xlu0 %10589
      %10591 = vrot.lane.b32.xlu0 %v10587, 32
      %v10592 = vpop.permute.xlu0 %10591
      %10593 = vrot.lane.b32.xlu0 %v10588, 32
      %v10594 = vpop.permute.xlu0 %10593
      %10598 = vrot.lane.b32.xlu0 %v10572, 48
      %v10599 = vpop.permute.xlu0 %10598
      %10600 = vrot.lane.b32.xlu0 %v10573, 48
      %v10601 = vpop.permute.xlu0 %10600
      %10604 = vrot.lane.b32.xlu0 %v10576, 64
      %v10605 = vpop.permute.xlu0 %10604
      %10606 = vrot.lane.b32.xlu0 %v10577, 64
      %v10607 = vpop.permute.xlu0 %10606
      %10610 = vrot.lane.b32.xlu0 %v10587, 80
      %v10611 = vpop.permute.xlu0 %10610
      %10612 = vrot.lane.b32.xlu0 %v10588, 80
      %v10613 = vpop.permute.xlu0 %10612
      %10616 = vrot.lane.b32.xlu0 %v10572, 96
      %v10617 = vpop.permute.xlu0 %10616
      %10618 = vrot.lane.b32.xlu0 %v10573, 96
      %v10619 = vpop.permute.xlu0 %10618
      %10620 = vrot.lane.b32.xlu0 %v9874, 96
      %v10621 = vpop.permute.xlu0 %10620
      %10625 = vrot.lane.b32.xlu0 %v10576, 112
      %v10626 = vpop.permute.xlu0 %10625
      %10627 = vrot.lane.b32.xlu0 %v10577, 112
      %v10628 = vpop.permute.xlu0 %10627
      %10629 = vrot.lane.b32.xlu0 %v9883, 112
      %v10630 = vpop.permute.xlu0 %10629
      %v10634 = vsel %vm10390, %v9874, %v10579
      %v10635 = vsel %vm10390, %v10572, %v10581
      %v10636 = vsel %vm10390, %v10573, %v10583
      %v10637 = vsel %vm9970, %v10634, %v10590
      %v10638 = vsel %vm9970, %v10635, %v10592
      %v10639 = vsel %vm9970, %v10636, %v10594
      %v10640 = vsel %vm10395, %v10637, %v10599
      %v10641 = vsel %vm10395, %v10638, %v10599
      %v10642 = vsel %vm10395, %v10638, %v10601
      %v10643 = vsel %vm10395, %v10639, %v10601
      %v10644 = vsel %vm9975, %v10640, %v10605
      %v10645 = vsel %vm9975, %v10641, %v10605
      %v10646 = vsel %vm9975, %v10642, %v10607
      %v10647 = vsel %vm9975, %v10643, %v10607
      %v10648 = vsel %vm10400, %v10644, %v10611
      %v10649 = vsel %vm10400, %v10645, %v10611
      %v10650 = vsel %vm10400, %v10646, %v10613
      %v10651 = vsel %vm10400, %v10647, %v10613
      %v10652 = vsel %vm9980, %v10648, %v10617
      %v10653 = vsel %vm9980, %v10649, %v10619
      %v10654 = vsel %vm9980, %v10650, %v10619
      %v10655 = vsel %vm9980, %v10651, %v10621
      %v10656 = vsel %vm10405, %v10652, %v10626
      %v10657 = vsel %vm10405, %v10653, %v10628
      %v10658 = vsel %vm10405, %v10654, %v10628
      %v10659 = vsel %vm10405, %v10655, %v10630
      %v10664 = vcombine.low %v10656, %v10587
      %v10665 = vcombine.low %v10657, %v10588
      %v10666 = vcombine.low %v10658, %v10588
      %v10667 = vcombine.low %v10659, %v9899
      %v10668 = vld [vmem:[%s7] sm:$0xff]
      %v10669 = vld [vmem:[%s7 + $0x8] sm:$0xff]
      %v10670 = vld [vmem:[%s7 + $0x10] sm:$0xff]
      %v10671 = vld [vmem:[%s7 + $0x18] sm:$0xff]
      %v10672 = vld [vmem:[%s7 + $0x20] sm:$0xff]
      %v10673 = vld [vmem:[%s7 + $0x28] sm:$0xff]
      %v10674 = vld [vmem:[%s7 + $0x30] sm:$0xff]
      %v10675 = vld [vmem:[%s7 + $0x38] sm:$0xff]
      %v10676 = vld [vmem:[%s7 + $0x40] sm:$0xff]
      %v10677 = vld [vmem:[%s7 + $0x48] sm:$0xff]
      %v10678 = vld [vmem:[%s7 + $0x50] sm:$0xff]
      %v10679 = vld [vmem:[%s7 + $0x58] sm:$0xff]
      %v10680 = vld [vmem:[%s7 + $0x60] sm:$0xff]
      %v10681 = vld [vmem:[%s7 + $0x68] sm:$0xff]
      %v10682 = vld [vmem:[%s7 + $0x70] sm:$0xff]
      %v10683 = vld [vmem:[%s7 + $0x78] sm:$0xff]
      %v10684 = vld [vmem:[%s7 + $0x80] sm:$0xff]
      %v10685 = vld [vmem:[%s7 + $0x88] sm:$0xff]
      %v10686 = vld [vmem:[%s8] sm:$0x1]
      %v10688 = vlaneseq
      %v10689 = vshrl.u32 %v10688, 7
      %v10690 = vsub.s32 0, %v10689
      %v10691 = vrot.slane %v10686, %v10690
      %v10693 = vcombine.low %v10664, %v10665
      %v10694 = vcombine.high %v10664, %v10665
      %v10695 = vcombine.low %v10666, %v10667
      %v10696 = vcombine.high %v10666, %v10667
      %v10699 = vsel %vm10390, %v10694, 0
      %v10701 = vsel %vm10390, %v10696, 0
      %10703 = vmatprep.subr.mxu0 0.0
      %10704 = vmatpush1.msra.mxu0 %v10683
      %10705 = vmatprep.subr.mxu0 0.0
      %10706 = vmatpush1.msra.mxu0 %v10682
      %10707 = vmatprep.subr.mxu0 0.0
      %10708 = vmatpush1.msra.mxu0 %v10681
      %10709 = vmatprep.subr.mxu0 0.0
      %10710 = vmatpush1.msra.mxu0 %v10680
      %10711 = vmatprep.subr.mxu0 0.0
      %10712 = vmatpush1.msra.mxu0 %v10679
      %10713 = vmatprep.subr.mxu0 0.0
      %10714 = vmatpush1.msra.mxu0 %v10678
      %10715 = vmatprep.subr.mxu0 0.0
      %10716 = vmatpush1.msra.mxu0 %v10677
      %10717 = vmatprep.subr.mxu0 0.0
      %10718 = vmatpush1.msra.mxu0 %v10676
      %10719 = vmatprep.subr.mxu0 0.0
      %10720 = vmatpush1.msra.mxu0 %v10675
      %10721 = vmatprep.subr.mxu0 0.0
      %10722 = vmatpush1.msra.mxu0 %v10674
      %10723 = vmatprep.subr.mxu0 0.0
      %10724 = vmatpush1.msra.mxu0 %v10673
      %10725 = vmatprep.subr.mxu0 0.0
      %10726 = vmatpush1.msra.mxu0 %v10672
      %10727 = vmatprep.subr.mxu0 0.0
      %10728 = vmatpush1.msra.mxu0 %v10671
      %10729 = vmatprep.subr.mxu0 0.0
      %10730 = vmatpush1.msra.mxu0 %v10670
      %10731 = vmatprep.subr.mxu0 0.0
      %10732 = vmatpush1.msra.mxu0 %v10669
      %10733 = vmatprep.subr.mxu0 0.0
      %10734 = vmatpush1.msra.mxu0 %v10668
      %10735 = vmatprep.subr.mxu0 0.0
      %10736 = vmatpush2.msra.mxu0 0.0
      %10737 = vmatprep.subr.mxu0 0.0
      %10738 = vmatpush2.msra.mxu0 0.0
      %10739 = vmatprep.subr.mxu0 0.0
      %10740 = vmatpush2.msra.mxu0 0.0
      %10741 = vmatprep.subr.mxu0 0.0
      %10742 = vmatpush2.msra.mxu0 0.0
      %10743 = vmatprep.subr.mxu0 0.0
      %10744 = vmatpush2.msra.mxu0 0.0
      %10745 = vmatprep.subr.mxu0 0.0
      %10746 = vmatpush2.msra.mxu0 0.0
      %10747 = vmatprep.subr.mxu0 0.0
      %10748 = vmatpush2.msra.mxu0 0.0
      %10749 = vmatprep.subr.mxu0 0.0
      %10750 = vmatpush2.msra.mxu0 0.0
      %10751 = vmatprep.subr.mxu0 0.0
      %10752 = vmatpush2.msra.mxu0 0.0
      %10753 = vmatprep.subr.mxu0 0.0
      %10754 = vmatpush2.msra.mxu0 0.0
      %10755 = vmatprep.subr.mxu0 0.0
      %10756 = vmatpush2.msra.mxu0 0.0
      %10757 = vmatprep.subr.mxu0 0.0
      %10758 = vmatpush2.msra.mxu0 0.0
      %10759 = vmatprep.subr.mxu0 0.0
      %10760 = vmatpush2.msra.mxu0 0.0
      %10761 = vmatprep.subr.mxu0 0.0
      %10762 = vmatpush2.msra.mxu0 0.0
      %10763 = vmatprep.subr.mxu0 0.0
      %10764 = vmatpush2.msra.mxu0 %v10685
      %10765 = vmatprep.subr.mxu0 0.0
      %10766 = vmatpush2.msra.mxu0 %v10684
      %10767 = vmatprep.mubr.f32.mxu0 %v10699
      %10768 = vmatmul.mubr.f32.gmra.mxu0 %v10693
      %v10769 = vpop.f32.mrf.mxu0
      %v10770 = vadd.f32 %v10691, %v10769
      %v10771 = vpop.f32.mrf.mxu0
      %10772 = vmatprep.mubr.f32.mxu0 %v10701
      %10773 = vmatmul.mubr.f32.gmra.mxu0 %v10695
      %v10774 = vpop.f32.mrf.mxu0
      %v10775 = vadd.f32 %v10691, %v10774
      %v10776 = vpop.f32.mrf.mxu0
      %10777 = vdwg.mxu0
      %v10778 = vmax.f32 %v10770, 0.0
      %v10779 = vmax.f32 %v10775, 0.0
      %v10782 = vcombine.high %v10778, %v10778
      %v10783 = vcombine.high %v10779, %v10779
      %v10786 = vlaneseq
      %v10787 = vshrl.u32 %v10786, 7
      %v10788 = vsub.s32 0, %v10787
      %v10789 = vrot.slane %v10778, %v10788
      %v10790 = vlaneseq
      %v10791 = vshrl.u32 %v10790, 7
      %v10792 = vsub.s32 0, %v10791
      %v10793 = vrot.slane %v10782, %v10792
      %v10794 = vlaneseq
      %v10795 = vshrl.u32 %v10794, 7
      %v10796 = vsub.s32 0, %v10795
      %v10797 = vrot.slane %v10779, %v10796
      %v10798 = vlaneseq
      %v10799 = vshrl.u32 %v10798, 7
      %v10800 = vsub.s32 0, %v10799
      %v10801 = vrot.slane %v10783, %v10800
      %v10802 = vlaneseq
      %v10803 = vshrl.u32 %v10802, 7
      %v10804 = vsub.s32 1, %v10803
      %v10805 = vrot.slane %v10778, %v10804
      %v10806 = vlaneseq
      %v10807 = vshrl.u32 %v10806, 7
      %v10808 = vsub.s32 1, %v10807
      %v10809 = vrot.slane %v10782, %v10808
      %v10810 = vlaneseq
      %v10811 = vshrl.u32 %v10810, 7
      %v10812 = vsub.s32 1, %v10811
      %v10813 = vrot.slane %v10779, %v10812
      %v10814 = vlaneseq
      %v10815 = vshrl.u32 %v10814, 7
      %v10816 = vsub.s32 1, %v10815
      %v10817 = vrot.slane %v10783, %v10816
      %v10818 = vlaneseq
      %v10819 = vshrl.u32 %v10818, 7
      %v10820 = vsub.s32 2, %v10819
      %v10821 = vrot.slane %v10778, %v10820
      %v10822 = vlaneseq
      %v10823 = vshrl.u32 %v10822, 7
      %v10824 = vsub.s32 2, %v10823
      %v10825 = vrot.slane %v10782, %v10824
      %v10826 = vlaneseq
      %v10827 = vshrl.u32 %v10826, 7
      %v10828 = vsub.s32 2, %v10827
      %v10829 = vrot.slane %v10779, %v10828
      %v10830 = vlaneseq
      %v10831 = vshrl.u32 %v10830, 7
      %v10832 = vsub.s32 2, %v10831
      %v10833 = vrot.slane %v10783, %v10832
      %v10834 = vlaneseq
      %v10835 = vshrl.u32 %v10834, 7
      %v10836 = vsub.s32 3, %v10835
      %v10837 = vrot.slane %v10778, %v10836
      %v10838 = vlaneseq
      %v10839 = vshrl.u32 %v10838, 7
      %v10840 = vsub.s32 3, %v10839
      %v10841 = vrot.slane %v10782, %v10840
      %v10842 = vlaneseq
      %v10843 = vshrl.u32 %v10842, 7
      %v10844 = vsub.s32 3, %v10843
      %v10845 = vrot.slane %v10779, %v10844
      %v10846 = vlaneseq
      %v10847 = vshrl.u32 %v10846, 7
      %v10848 = vsub.s32 3, %v10847
      %v10849 = vrot.slane %v10783, %v10848
      %v10854 = vsel %vm676, %v10789, %v10805
      %v10855 = vsel %vm676, %v10793, %v10809
      %v10856 = vsel %vm676, %v10797, %v10813
      %v10857 = vsel %vm676, %v10801, %v10817
      %v10858 = vsel %vm10561, %v10805, %v10821
      %v10859 = vsel %vm10561, %v10809, %v10825
      %v10860 = vsel %vm10561, %v10813, %v10829
      %v10861 = vsel %vm10561, %v10817, %v10833
      %v10862 = vsel %vm1168, %v10858, %v10837
      %v10863 = vsel %vm1168, %v10859, %v10841
      %v10864 = vsel %vm1168, %v10860, %v10845
      %v10865 = vsel %vm1168, %v10861, %v10849
      %v10874 = vrot.slane %v10854, 7
      %v10875 = vrot.slane %v10862, 7
      %v10876 = vsel %vm510, %v10874, %v10875
      %v10877 = vrot.slane %v10837, 7
      %v10878 = vsel %vm510, %v10875, %v10877
      %v10879 = vrot.slane %v10855, 7
      %v10880 = vrot.slane %v10863, 7
      %v10881 = vsel %vm510, %v10879, %v10880
      %v10882 = vrot.slane %v10841, 7
      %v10883 = vsel %vm510, %v10880, %v10882
      %v10884 = vrot.slane %v10856, 7
      %v10885 = vrot.slane %v10864, 7
      %v10886 = vsel %vm510, %v10884, %v10885
      %v10887 = vrot.slane %v10845, 7
      %v10888 = vsel %vm510, %v10885, %v10887
      %v10889 = vrot.slane %v10857, 7
      %v10890 = vrot.slane %v10865, 7
      %v10891 = vsel %vm510, %v10889, %v10890
      %v10892 = vrot.slane %v10849, 7
      %v10893 = vsel %vm510, %v10890, %v10892
      %v10906 = vsel %vm510, 0.0, %v10874
      %v10907 = vsel %vm510, 0.0, %v10879
      %v10908 = vsel %vm510, 0.0, %v10884
      %v10909 = vsel %vm510, 0.0, %v10889
      %v10910 = vsel %vm676, %v10878, 0.0
      %v10911 = vsel %vm676, %v10883, 0.0
      %v10912 = vsel %vm676, %v10888, 0.0
      %v10913 = vsel %vm676, %v10893, 0.0
      %v10914 = vld [vmem:[%s9] sm:$0x1]
      %v10915 = vlaneseq
      %v10916 = vshrl.u32 %v10915, 7
      %v10917 = vsub.s32 0, %v10916
      %v10918 = vrot.slane %v10914, %v10917
      %v10919 = vmul.f32 %v655, %v10918
      %v10920 = vmul.f32 %v512, %v10918
      %v10921 = vmul.f32 %v677, %v10918
      %v10922 = vmul.f32 %v10906, %v10918
      %v10923 = vmul.f32 %v10876, %v10918
      %v10924 = vmul.f32 %v10910, %v10918
      %v10925 = vmul.f32 %v10907, %v10918
      %v10926 = vmul.f32 %v10881, %v10918
      %v10927 = vmul.f32 %v10911, %v10918
      %v10928 = vmul.f32 %v10908, %v10918
      %v10929 = vmul.f32 %v10886, %v10918
      %v10930 = vmul.f32 %v10912, %v10918
      %v10931 = vmul.f32 %v10909, %v10918
      %v10932 = vmul.f32 %v10891, %v10918
      %v10933 = vmul.f32 %v10913, %v10918
      %v10934 = vsel %vm9970, %v10919, 0.0
      %10935 = vadd.xlane.f32.xlu0 %v10934
      %v10936 = vpop.xlane.xlu0 %10935
      %v10937 = vsel %vm9970, %v10920, 0.0
      %10938 = vadd.xlane.f32.xlu0 %v10937
      %v10939 = vpop.xlane.xlu0 %10938
      %vm10940 = vcmask 257024
      %v10941 = vsel %vm10940, %v10921, 0.0
      %10942 = vadd.xlane.f32.xlu0 %v10941
      %v10943 = vpop.xlane.xlu0 %10942
      %v10944 = vsel %vm9970, %v10922, 0.0
      %10945 = vadd.xlane.f32.xlu0 %v10944
      %v10946 = vpop.xlane.xlu0 %10945
      %v10947 = vsel %vm9970, %v10923, 0.0
      %10948 = vadd.xlane.f32.xlu0 %v10947
      %v10949 = vpop.xlane.xlu0 %10948
      %v10950 = vsel %vm10940, %v10924, 0.0
      %10951 = vadd.xlane.f32.xlu0 %v10950
      %v10952 = vpop.xlane.xlu0 %10951
      %v10953 = vsel %vm9970, %v10925, 0.0
      %10954 = vadd.xlane.f32.xlu0 %v10953
      %v10955 = vpop.xlane.xlu0 %10954
      %v10956 = vsel %vm9970, %v10926, 0.0
      %10957 = vadd.xlane.f32.xlu0 %v10956
      %v10958 = vpop.xlane.xlu0 %10957
      %v10959 = vsel %vm10940, %v10927, 0.0
      %10960 = vadd.xlane.f32.xlu0 %v10959
      %v10961 = vpop.xlane.xlu0 %10960
      %v10962 = vsel %vm9970, %v10928, 0.0
      %10963 = vadd.xlane.f32.xlu0 %v10962
      %v10964 = vpop.xlane.xlu0 %10963
      %v10965 = vsel %vm9970, %v10929, 0.0
      %10966 = vadd.xlane.f32.xlu0 %v10965
      %v10967 = vpop.xlane.xlu0 %10966
      %v10968 = vsel %vm10940, %v10930, 0.0
      %10969 = vadd.xlane.f32.xlu0 %v10968
      %v10970 = vpop.xlane.xlu0 %10969
      %v10971 = vsel %vm9970, %v10931, 0.0
      %10972 = vadd.xlane.f32.xlu0 %v10971
      %v10973 = vpop.xlane.xlu0 %10972
      %v10974 = vsel %vm9970, %v10932, 0.0
      %10975 = vadd.xlane.f32.xlu0 %v10974
      %v10976 = vpop.xlane.xlu0 %10975
      %v10977 = vsel %vm10940, %v10933, 0.0
      %10978 = vadd.xlane.f32.xlu0 %v10977
      %v10979 = vpop.xlane.xlu0 %10978
      %v10980 = vadd.f32 %v10936, 0.0
      %v10981 = vadd.f32 %v10939, 0.0
      %v10982 = vadd.f32 %v10943, 0.0
      %v10983 = vadd.f32 %v10946, 0.0
      %v10984 = vadd.f32 %v10949, 0.0
      %v10985 = vadd.f32 %v10952, 0.0
      %v10986 = vadd.f32 %v10955, 0.0
      %v10987 = vadd.f32 %v10958, 0.0
      %v10988 = vadd.f32 %v10961, 0.0
      %v10989 = vadd.f32 %v10964, 0.0
      %v10990 = vadd.f32 %v10967, 0.0
      %v10991 = vadd.f32 %v10970, 0.0
      %v10992 = vadd.f32 %v10973, 0.0
      %v10993 = vadd.f32 %v10976, 0.0
      %v10994 = vadd.f32 %v10979, 0.0
      %v10995 = vld [vmem:[%s9 + $0x1] sm:$0x1]
      %v10996 = vlaneseq
      %v10997 = vshrl.u32 %v10996, 7
      %v10998 = vsub.s32 0, %v10997
      %v10999 = vrot.slane %v10995, %v10998
      %v11000 = vmul.f32 %v655, %v10999
      %v11001 = vmul.f32 %v512, %v10999
      %v11002 = vmul.f32 %v677, %v10999
      %v11003 = vmul.f32 %v10906, %v10999
      %v11004 = vmul.f32 %v10876, %v10999
      %v11005 = vmul.f32 %v10910, %v10999
      %v11006 = vmul.f32 %v10907, %v10999
      %v11007 = vmul.f32 %v10881, %v10999
      %v11008 = vmul.f32 %v10911, %v10999
      %v11009 = vmul.f32 %v10908, %v10999
      %v11010 = vmul.f32 %v10886, %v10999
      %v11011 = vmul.f32 %v10912, %v10999
      %v11012 = vmul.f32 %v10909, %v10999
      %v11013 = vmul.f32 %v10891, %v10999
      %v11014 = vmul.f32 %v10913, %v10999
      %vm11015 = vcmask 261121
      %v11016 = vsel %vm11015, %v11000, 0.0
      %11017 = vadd.xlane.f32.xlu0 %v11016
      %v11018 = vpop.xlane.xlu0 %11017
      %v11019 = vsel %vm9970, %v11001, 0.0
      %11020 = vadd.xlane.f32.xlu0 %v11019
      %v11021 = vpop.xlane.xlu0 %11020
      %v11022 = vsel %vm9206, %v11002, 0.0
      %11023 = vadd.xlane.f32.xlu0 %v11022
      %v11024 = vpop.xlane.xlu0 %11023
      %v11025 = vsel %vm11015, %v11003, 0.0
      %11026 = vadd.xlane.f32.xlu0 %v11025
      %v11027 = vpop.xlane.xlu0 %11026
      %v11028 = vsel %vm9970, %v11004, 0.0
      %11029 = vadd.xlane.f32.xlu0 %v11028
      %v11030 = vpop.xlane.xlu0 %11029
      %v11031 = vsel %vm9206, %v11005, 0.0
      %11032 = vadd.xlane.f32.xlu0 %v11031
      %v11033 = vpop.xlane.xlu0 %11032
      %v11034 = vsel %vm11015, %v11006, 0.0
      %11035 = vadd.xlane.f32.xlu0 %v11034
      %v11036 = vpop.xlane.xlu0 %11035
      %v11037 = vsel %vm9970, %v11007, 0.0
      %11038 = vadd.xlane.f32.xlu0 %v11037
      %v11039 = vpop.xlane.xlu0 %11038
      %v11040 = vsel %vm9206, %v11008, 0.0
      %11041 = vadd.xlane.f32.xlu0 %v11040
      %v11042 = vpop.xlane.xlu0 %11041
      %v11043 = vsel %vm11015, %v11009, 0.0
      %11044 = vadd.xlane.f32.xlu0 %v11043
      %v11045 = vpop.xlane.xlu0 %11044
      %v11046 = vsel %vm9970, %v11010, 0.0
      %11047 = vadd.xlane.f32.xlu0 %v11046
      %v11048 = vpop.xlane.xlu0 %11047
      %v11049 = vsel %vm9206, %v11011, 0.0
      %11050 = vadd.xlane.f32.xlu0 %v11049
      %v11051 = vpop.xlane.xlu0 %11050
      %v11052 = vsel %vm11015, %v11012, 0.0
      %11053 = vadd.xlane.f32.xlu0 %v11052
      %v11054 = vpop.xlane.xlu0 %11053
      %v11055 = vsel %vm9970, %v11013, 0.0
      %11056 = vadd.xlane.f32.xlu0 %v11055
      %v11057 = vpop.xlane.xlu0 %11056
      %v11058 = vsel %vm9206, %v11014, 0.0
      %11059 = vadd.xlane.f32.xlu0 %v11058
      %v11060 = vpop.xlane.xlu0 %11059
      %v11076 = vrot.slane %v11018, 1
      %v11077 = vrot.slane %v11021, 1
      %v11078 = vsel %vm1168, %v11076, %v11077
      %v11079 = vrot.slane %v11024, 1
      %v11080 = vsel %vm1168, %v11077, %v11079
      %v11081 = vrot.slane %v11027, 1
      %v11082 = vrot.slane %v11030, 1
      %v11083 = vsel %vm1168, %v11081, %v11082
      %v11084 = vrot.slane %v11033, 1
      %v11085 = vsel %vm1168, %v11082, %v11084
      %v11086 = vrot.slane %v11036, 1
      %v11087 = vrot.slane %v11039, 1
      %v11088 = vsel %vm1168, %v11086, %v11087
      %v11089 = vrot.slane %v11042, 1
      %v11090 = vsel %vm1168, %v11087, %v11089
      %v11091 = vrot.slane %v11045, 1
      %v11092 = vrot.slane %v11048, 1
      %v11093 = vsel %vm1168, %v11091, %v11092
      %v11094 = vrot.slane %v11051, 1
      %v11095 = vsel %vm1168, %v11092, %v11094
      %v11096 = vrot.slane %v11054, 1
      %v11097 = vrot.slane %v11057, 1
      %v11098 = vsel %vm1168, %v11096, %v11097
      %v11099 = vrot.slane %v11060, 1
      %v11100 = vsel %vm1168, %v11097, %v11099
      %v11116 = vadd.f32 %v10980, %v11078
      %v11117 = vadd.f32 %v10981, %v11080
      %v11118 = vadd.f32 %v10982, %v11079
      %v11119 = vadd.f32 %v10983, %v11083
      %v11120 = vadd.f32 %v10984, %v11085
      %v11121 = vadd.f32 %v10985, %v11084
      %v11122 = vadd.f32 %v10986, %v11088
      %v11123 = vadd.f32 %v10987, %v11090
      %v11124 = vadd.f32 %v10988, %v11089
      %v11125 = vadd.f32 %v10989, %v11093
      %v11126 = vadd.f32 %v10990, %v11095
      %v11127 = vadd.f32 %v10991, %v11094
      %v11128 = vadd.f32 %v10992, %v11098
      %v11129 = vadd.f32 %v10993, %v11100
      %v11130 = vadd.f32 %v10994, %v11099
      %v11131 = vld [vmem:[%s9 + $0x2] sm:$0x1]
      %v11132 = vlaneseq
      %v11133 = vshrl.u32 %v11132, 7
      %v11134 = vsub.s32 0, %v11133
      %v11135 = vrot.slane %v11131, %v11134
      %v11136 = vmul.f32 %v655, %v11135
      %v11137 = vmul.f32 %v512, %v11135
      %v11138 = vmul.f32 %v677, %v11135
      %v11139 = vmul.f32 %v10906, %v11135
      %v11140 = vmul.f32 %v10876, %v11135
      %v11141 = vmul.f32 %v10910, %v11135
      %v11142 = vmul.f32 %v10907, %v11135
      %v11143 = vmul.f32 %v10881, %v11135
      %v11144 = vmul.f32 %v10911, %v11135
      %v11145 = vmul.f32 %v10908, %v11135
      %v11146 = vmul.f32 %v10886, %v11135
      %v11147 = vmul.f32 %v10912, %v11135
      %v11148 = vmul.f32 %v10909, %v11135
      %v11149 = vmul.f32 %v10891, %v11135
      %v11150 = vmul.f32 %v10913, %v11135
      %vm11151 = vcmask 261122
      %v11152 = vsel %vm11151, %v11136, 0.0
      %11153 = vadd.xlane.f32.xlu0 %v11152
      %v11154 = vpop.xlane.xlu0 %11153
      %v11155 = vsel %vm9970, %v11137, 0.0
      %11156 = vadd.xlane.f32.xlu0 %v11155
      %v11157 = vpop.xlane.xlu0 %11156
      %vm11158 = vcmask 259072
      %v11159 = vsel %vm11158, %v11138, 0.0
      %11160 = vadd.xlane.f32.xlu0 %v11159
      %v11161 = vpop.xlane.xlu0 %11160
      %v11162 = vsel %vm11151, %v11139, 0.0
      %11163 = vadd.xlane.f32.xlu0 %v11162
      %v11164 = vpop.xlane.xlu0 %11163
      %v11165 = vsel %vm9970, %v11140, 0.0
      %11166 = vadd.xlane.f32.xlu0 %v11165
      %v11167 = vpop.xlane.xlu0 %11166
      %v11168 = vsel %vm11158, %v11141, 0.0
      %11169 = vadd.xlane.f32.xlu0 %v11168
      %v11170 = vpop.xlane.xlu0 %11169
      %v11171 = vsel %vm11151, %v11142, 0.0
      %11172 = vadd.xlane.f32.xlu0 %v11171
      %v11173 = vpop.xlane.xlu0 %11172
      %v11174 = vsel %vm9970, %v11143, 0.0
      %11175 = vadd.xlane.f32.xlu0 %v11174
      %v11176 = vpop.xlane.xlu0 %11175
      %v11177 = vsel %vm11158, %v11144, 0.0
      %11178 = vadd.xlane.f32.xlu0 %v11177
      %v11179 = vpop.xlane.xlu0 %11178
      %v11180 = vsel %vm11151, %v11145, 0.0
      %11181 = vadd.xlane.f32.xlu0 %v11180
      %v11182 = vpop.xlane.xlu0 %11181
      %v11183 = vsel %vm9970, %v11146, 0.0
      %11184 = vadd.xlane.f32.xlu0 %v11183
      %v11185 = vpop.xlane.xlu0 %11184
      %v11186 = vsel %vm11158, %v11147, 0.0
      %11187 = vadd.xlane.f32.xlu0 %v11186
      %v11188 = vpop.xlane.xlu0 %11187
      %v11189 = vsel %vm11151, %v11148, 0.0
      %11190 = vadd.xlane.f32.xlu0 %v11189
      %v11191 = vpop.xlane.xlu0 %11190
      %v11192 = vsel %vm9970, %v11149, 0.0
      %11193 = vadd.xlane.f32.xlu0 %v11192
      %v11194 = vpop.xlane.xlu0 %11193
      %v11195 = vsel %vm11158, %v11150, 0.0
      %11196 = vadd.xlane.f32.xlu0 %v11195
      %v11197 = vpop.xlane.xlu0 %11196
      %v11213 = vrot.slane %v11154, 2
      %v11214 = vrot.slane %v11157, 2
      %v11215 = vsel %vm1514, %v11213, %v11214
      %v11216 = vrot.slane %v11161, 2
      %v11217 = vsel %vm1514, %v11214, %v11216
      %v11218 = vrot.slane %v11164, 2
      %v11219 = vrot.slane %v11167, 2
      %v11220 = vsel %vm1514, %v11218, %v11219
      %v11221 = vrot.slane %v11170, 2
      %v11222 = vsel %vm1514, %v11219, %v11221
      %v11223 = vrot.slane %v11173, 2
      %v11224 = vrot.slane %v11176, 2
      %v11225 = vsel %vm1514, %v11223, %v11224
      %v11226 = vrot.slane %v11179, 2
      %v11227 = vsel %vm1514, %v11224, %v11226
      %v11228 = vrot.slane %v11182, 2
      %v11229 = vrot.slane %v11185, 2
      %v11230 = vsel %vm1514, %v11228, %v11229
      %v11231 = vrot.slane %v11188, 2
      %v11232 = vsel %vm1514, %v11229, %v11231
      %v11233 = vrot.slane %v11191, 2
      %v11234 = vrot.slane %v11194, 2
      %v11235 = vsel %vm1514, %v11233, %v11234
      %v11236 = vrot.slane %v11197, 2
      %v11237 = vsel %vm1514, %v11234, %v11236
      %v11253 = vadd.f32 %v11116, %v11215
      %v11254 = vadd.f32 %v11117, %v11217
      %v11255 = vadd.f32 %v11118, %v11216
      %v11256 = vadd.f32 %v11119, %v11220
      %v11257 = vadd.f32 %v11120, %v11222
      %v11258 = vadd.f32 %v11121, %v11221
      %v11259 = vadd.f32 %v11122, %v11225
      %v11260 = vadd.f32 %v11123, %v11227
      %v11261 = vadd.f32 %v11124, %v11226
      %v11262 = vadd.f32 %v11125, %v11230
      %v11263 = vadd.f32 %v11126, %v11232
      %v11264 = vadd.f32 %v11127, %v11231
      %v11265 = vadd.f32 %v11128, %v11235
      %v11266 = vadd.f32 %v11129, %v11237
      %v11267 = vadd.f32 %v11130, %v11236
      %v11268 = vld [vmem:[%s9 + $0x3] sm:$0x1]
      %v11269 = vlaneseq
      %v11270 = vshrl.u32 %v11269, 7
      %v11271 = vsub.s32 0, %v11270
      %v11272 = vrot.slane %v11268, %v11271
      %v11273 = vmul.f32 %v10906, %v11272
      %v11274 = vmul.f32 %v10876, %v11272
      %v11275 = vmul.f32 %v10910, %v11272
      %v11276 = vmul.f32 %v10907, %v11272
      %v11277 = vmul.f32 %v10881, %v11272
      %v11278 = vmul.f32 %v10911, %v11272
      %v11279 = vmul.f32 %v10908, %v11272
      %v11280 = vmul.f32 %v10886, %v11272
      %v11281 = vmul.f32 %v10912, %v11272
      %v11282 = vmul.f32 %v10909, %v11272
      %v11283 = vmul.f32 %v10891, %v11272
      %v11284 = vmul.f32 %v10913, %v11272
      %v11285 = vsel %vm9970, %v11273, 0.0
      %11286 = vadd.xlane.f32.xlu0 %v11285
      %v11287 = vpop.xlane.xlu0 %11286
      %v11288 = vsel %vm9970, %v11274, 0.0
      %11289 = vadd.xlane.f32.xlu0 %v11288
      %v11290 = vpop.xlane.xlu0 %11289
      %v11291 = vsel %vm10940, %v11275, 0.0
      %11292 = vadd.xlane.f32.xlu0 %v11291
      %v11293 = vpop.xlane.xlu0 %11292
      %v11294 = vsel %vm9970, %v11276, 0.0
      %11295 = vadd.xlane.f32.xlu0 %v11294
      %v11296 = vpop.xlane.xlu0 %11295
      %v11297 = vsel %vm9970, %v11277, 0.0
      %11298 = vadd.xlane.f32.xlu0 %v11297
      %v11299 = vpop.xlane.xlu0 %11298
      %v11300 = vsel %vm10940, %v11278, 0.0
      %11301 = vadd.xlane.f32.xlu0 %v11300
      %v11302 = vpop.xlane.xlu0 %11301
      %v11303 = vsel %vm9970, %v11279, 0.0
      %11304 = vadd.xlane.f32.xlu0 %v11303
      %v11305 = vpop.xlane.xlu0 %11304
      %v11306 = vsel %vm9970, %v11280, 0.0
      %11307 = vadd.xlane.f32.xlu0 %v11306
      %v11308 = vpop.xlane.xlu0 %11307
      %v11309 = vsel %vm10940, %v11281, 0.0
      %11310 = vadd.xlane.f32.xlu0 %v11309
      %v11311 = vpop.xlane.xlu0 %11310
      %v11312 = vsel %vm9970, %v11282, 0.0
      %11313 = vadd.xlane.f32.xlu0 %v11312
      %v11314 = vpop.xlane.xlu0 %11313
      %v11315 = vsel %vm9970, %v11283, 0.0
      %11316 = vadd.xlane.f32.xlu0 %v11315
      %v11317 = vpop.xlane.xlu0 %11316
      %v11318 = vsel %vm10940, %v11284, 0.0
      %11319 = vadd.xlane.f32.xlu0 %v11318
      %v11320 = vpop.xlane.xlu0 %11319
      %v11321 = vadd.f32 %v11253, %v11287
      %v11322 = vadd.f32 %v11254, %v11290
      %v11323 = vadd.f32 %v11255, %v11293
      %v11324 = vadd.f32 %v11256, %v11287
      %v11325 = vadd.f32 %v11257, %v11290
      %v11326 = vadd.f32 %v11258, %v11293
      %v11327 = vadd.f32 %v11256, %v11296
      %v11328 = vadd.f32 %v11257, %v11299
      %v11329 = vadd.f32 %v11258, %v11302
      %v11330 = vadd.f32 %v11259, %v11296
      %v11331 = vadd.f32 %v11260, %v11299
      %v11332 = vadd.f32 %v11261, %v11302
      %v11333 = vadd.f32 %v11259, %v11305
      %v11334 = vadd.f32 %v11260, %v11308
      %v11335 = vadd.f32 %v11261, %v11311
      %v11336 = vadd.f32 %v11262, %v11305
      %v11337 = vadd.f32 %v11263, %v11308
      %v11338 = vadd.f32 %v11264, %v11311
      %v11339 = vadd.f32 %v11262, %v11314
      %v11340 = vadd.f32 %v11263, %v11317
      %v11341 = vadd.f32 %v11264, %v11320
      %v11342 = vadd.f32 %v11265, %v11314
      %v11343 = vadd.f32 %v11266, %v11317
      %v11344 = vadd.f32 %v11267, %v11320
      %v11345 = vld [vmem:[%s9 + $0x4] sm:$0x1]
      %v11346 = vlaneseq
      %v11347 = vshrl.u32 %v11346, 7
      %v11348 = vsub.s32 0, %v11347
      %v11349 = vrot.slane %v11345, %v11348
      %v11350 = vmul.f32 %v10906, %v11349
      %v11351 = vmul.f32 %v10876, %v11349
      %v11352 = vmul.f32 %v10910, %v11349
      %v11353 = vmul.f32 %v10907, %v11349
      %v11354 = vmul.f32 %v10881, %v11349
      %v11355 = vmul.f32 %v10911, %v11349
      %v11356 = vmul.f32 %v10908, %v11349
      %v11357 = vmul.f32 %v10886, %v11349
      %v11358 = vmul.f32 %v10912, %v11349
      %v11359 = vmul.f32 %v10909, %v11349
      %v11360 = vmul.f32 %v10891, %v11349
      %v11361 = vmul.f32 %v10913, %v11349
      %v11362 = vsel %vm11015, %v11350, 0.0
      %11363 = vadd.xlane.f32.xlu0 %v11362
      %v11364 = vpop.xlane.xlu0 %11363
      %v11365 = vsel %vm9970, %v11351, 0.0
      %11366 = vadd.xlane.f32.xlu0 %v11365
      %v11367 = vpop.xlane.xlu0 %11366
      %v11368 = vsel %vm9206, %v11352, 0.0
      %11369 = vadd.xlane.f32.xlu0 %v11368
      %v11370 = vpop.xlane.xlu0 %11369
      %v11371 = vsel %vm11015, %v11353, 0.0
      %11372 = vadd.xlane.f32.xlu0 %v11371
      %v11373 = vpop.xlane.xlu0 %11372
      %v11374 = vsel %vm9970, %v11354, 0.0
      %11375 = vadd.xlane.f32.xlu0 %v11374
      %v11376 = vpop.xlane.xlu0 %11375
      %v11377 = vsel %vm9206, %v11355, 0.0
      %11378 = vadd.xlane.f32.xlu0 %v11377
      %v11379 = vpop.xlane.xlu0 %11378
      %v11380 = vsel %vm11015, %v11356, 0.0
      %11381 = vadd.xlane.f32.xlu0 %v11380
      %v11382 = vpop.xlane.xlu0 %11381
      %v11383 = vsel %vm9970, %v11357, 0.0
      %11384 = vadd.xlane.f32.xlu0 %v11383
      %v11385 = vpop.xlane.xlu0 %11384
      %v11386 = vsel %vm9206, %v11358, 0.0
      %11387 = vadd.xlane.f32.xlu0 %v11386
      %v11388 = vpop.xlane.xlu0 %11387
      %v11389 = vsel %vm11015, %v11359, 0.0
      %11390 = vadd.xlane.f32.xlu0 %v11389
      %v11391 = vpop.xlane.xlu0 %11390
      %v11392 = vsel %vm9970, %v11360, 0.0
      %11393 = vadd.xlane.f32.xlu0 %v11392
      %v11394 = vpop.xlane.xlu0 %11393
      %v11395 = vsel %vm9206, %v11361, 0.0
      %11396 = vadd.xlane.f32.xlu0 %v11395
      %v11397 = vpop.xlane.xlu0 %11396
      %v11410 = vrot.slane %v11364, 1
      %v11411 = vrot.slane %v11367, 1
      %v11412 = vsel %vm1168, %v11410, %v11411
      %v11413 = vrot.slane %v11370, 1
      %v11414 = vsel %vm1168, %v11411, %v11413
      %v11415 = vrot.slane %v11373, 1
      %v11416 = vrot.slane %v11376, 1
      %v11417 = vsel %vm1168, %v11415, %v11416
      %v11418 = vrot.slane %v11379, 1
      %v11419 = vsel %vm1168, %v11416, %v11418
      %v11420 = vrot.slane %v11382, 1
      %v11421 = vrot.slane %v11385, 1
      %v11422 = vsel %vm1168, %v11420, %v11421
      %v11423 = vrot.slane %v11388, 1
      %v11424 = vsel %vm1168, %v11421, %v11423
      %v11425 = vrot.slane %v11391, 1
      %v11426 = vrot.slane %v11394, 1
      %v11427 = vsel %vm1168, %v11425, %v11426
      %v11428 = vrot.slane %v11397, 1
      %v11429 = vsel %vm1168, %v11426, %v11428
      %v11442 = vadd.f32 %v11321, %v11412
      %v11443 = vadd.f32 %v11322, %v11414
      %v11444 = vadd.f32 %v11323, %v11413
      %v11445 = vadd.f32 %v11324, %v11412
      %v11446 = vadd.f32 %v11325, %v11414
      %v11447 = vadd.f32 %v11326, %v11413
      %v11448 = vadd.f32 %v11327, %v11417
      %v11449 = vadd.f32 %v11328, %v11419
      %v11450 = vadd.f32 %v11329, %v11418
      %v11451 = vadd.f32 %v11330, %v11417
      %v11452 = vadd.f32 %v11331, %v11419
      %v11453 = vadd.f32 %v11332, %v11418
      %v11454 = vadd.f32 %v11333, %v11422
      %v11455 = vadd.f32 %v11334, %v11424
      %v11456 = vadd.f32 %v11335, %v11423
      %v11457 = vadd.f32 %v11336, %v11422
      %v11458 = vadd.f32 %v11337, %v11424
      %v11459 = vadd.f32 %v11338, %v11423
      %v11460 = vadd.f32 %v11339, %v11427
      %v11461 = vadd.f32 %v11340, %v11429
      %v11462 = vadd.f32 %v11341, %v11428
      %v11463 = vadd.f32 %v11342, %v11427
      %v11464 = vadd.f32 %v11343, %v11429
      %v11465 = vadd.f32 %v11344, %v11428
      %v11466 = vld [vmem:[%s9 + $0x5] sm:$0x1]
      %v11467 = vlaneseq
      %v11468 = vshrl.u32 %v11467, 7
      %v11469 = vsub.s32 0, %v11468
      %v11470 = vrot.slane %v11466, %v11469
      %v11471 = vmul.f32 %v10906, %v11470
      %v11472 = vmul.f32 %v10876, %v11470
      %v11473 = vmul.f32 %v10910, %v11470
      %v11474 = vmul.f32 %v10907, %v11470
      %v11475 = vmul.f32 %v10881, %v11470
      %v11476 = vmul.f32 %v10911, %v11470
      %v11477 = vmul.f32 %v10908, %v11470
      %v11478 = vmul.f32 %v10886, %v11470
      %v11479 = vmul.f32 %v10912, %v11470
      %v11480 = vmul.f32 %v10909, %v11470
      %v11481 = vmul.f32 %v10891, %v11470
      %v11482 = vmul.f32 %v10913, %v11470
      %v11483 = vsel %vm11151, %v11471, 0.0
      %11484 = vadd.xlane.f32.xlu0 %v11483
      %v11485 = vpop.xlane.xlu0 %11484
      %v11486 = vsel %vm9970, %v11472, 0.0
      %11487 = vadd.xlane.f32.xlu0 %v11486
      %v11488 = vpop.xlane.xlu0 %11487
      %v11489 = vsel %vm11158, %v11473, 0.0
      %11490 = vadd.xlane.f32.xlu0 %v11489
      %v11491 = vpop.xlane.xlu0 %11490
      %v11492 = vsel %vm11151, %v11474, 0.0
      %11493 = vadd.xlane.f32.xlu0 %v11492
      %v11494 = vpop.xlane.xlu0 %11493
      %v11495 = vsel %vm9970, %v11475, 0.0
      %11496 = vadd.xlane.f32.xlu0 %v11495
      %v11497 = vpop.xlane.xlu0 %11496
      %v11498 = vsel %vm11158, %v11476, 0.0
      %11499 = vadd.xlane.f32.xlu0 %v11498
      %v11500 = vpop.xlane.xlu0 %11499
      %v11501 = vsel %vm11151, %v11477, 0.0
      %11502 = vadd.xlane.f32.xlu0 %v11501
      %v11503 = vpop.xlane.xlu0 %11502
      %v11504 = vsel %vm9970, %v11478, 0.0
      %11505 = vadd.xlane.f32.xlu0 %v11504
      %v11506 = vpop.xlane.xlu0 %11505
      %v11507 = vsel %vm11158, %v11479, 0.0
      %11508 = vadd.xlane.f32.xlu0 %v11507
      %v11509 = vpop.xlane.xlu0 %11508
      %v11510 = vsel %vm11151, %v11480, 0.0
      %11511 = vadd.xlane.f32.xlu0 %v11510
      %v11512 = vpop.xlane.xlu0 %11511
      %v11513 = vsel %vm9970, %v11481, 0.0
      %11514 = vadd.xlane.f32.xlu0 %v11513
      %v11515 = vpop.xlane.xlu0 %11514
      %v11516 = vsel %vm11158, %v11482, 0.0
      %11517 = vadd.xlane.f32.xlu0 %v11516
      %v11518 = vpop.xlane.xlu0 %11517
      %v11531 = vrot.slane %v11485, 2
      %v11532 = vrot.slane %v11488, 2
      %v11533 = vsel %vm1514, %v11531, %v11532
      %v11534 = vrot.slane %v11491, 2
      %v11535 = vsel %vm1514, %v11532, %v11534
      %v11536 = vrot.slane %v11494, 2
      %v11537 = vrot.slane %v11497, 2
      %v11538 = vsel %vm1514, %v11536, %v11537
      %v11539 = vrot.slane %v11500, 2
      %v11540 = vsel %vm1514, %v11537, %v11539
      %v11541 = vrot.slane %v11503, 2
      %v11542 = vrot.slane %v11506, 2
      %v11543 = vsel %vm1514, %v11541, %v11542
      %v11544 = vrot.slane %v11509, 2
      %v11545 = vsel %vm1514, %v11542, %v11544
      %v11546 = vrot.slane %v11512, 2
      %v11547 = vrot.slane %v11515, 2
      %v11548 = vsel %vm1514, %v11546, %v11547
      %v11549 = vrot.slane %v11518, 2
      %v11550 = vsel %vm1514, %v11547, %v11549
      %v11563 = vadd.f32 %v11442, %v11533
      %v11564 = vadd.f32 %v11443, %v11535
      %v11565 = vadd.f32 %v11444, %v11534
      %v11566 = vadd.f32 %v11445, %v11533
      %v11567 = vadd.f32 %v11446, %v11535
      %v11568 = vadd.f32 %v11447, %v11534
      %v11569 = vadd.f32 %v11448, %v11538
      %v11570 = vadd.f32 %v11449, %v11540
      %v11571 = vadd.f32 %v11450, %v11539
      %v11572 = vadd.f32 %v11451, %v11538
      %v11573 = vadd.f32 %v11452, %v11540
      %v11574 = vadd.f32 %v11453, %v11539
      %v11575 = vadd.f32 %v11454, %v11543
      %v11576 = vadd.f32 %v11455, %v11545
      %v11577 = vadd.f32 %v11456, %v11544
      %v11578 = vadd.f32 %v11457, %v11543
      %v11579 = vadd.f32 %v11458, %v11545
      %v11580 = vadd.f32 %v11459, %v11544
      %v11581 = vadd.f32 %v11460, %v11548
      %v11582 = vadd.f32 %v11461, %v11550
      %v11583 = vadd.f32 %v11462, %v11549
      %v11584 = vadd.f32 %v11463, %v11548
      %v11585 = vadd.f32 %v11464, %v11550
      %v11586 = vadd.f32 %v11465, %v11549
      %v11587 = vld [vmem:[%s9 + $0x6] sm:$0x1]
      %v11588 = vlaneseq
      %v11589 = vshrl.u32 %v11588, 7
      %v11590 = vsub.s32 0, %v11589
      %v11591 = vrot.slane %v11587, %v11590
      %v11592 = vmul.f32 %v10906, %v11591
      %v11593 = vmul.f32 %v10876, %v11591
      %v11594 = vmul.f32 %v10910, %v11591
      %v11595 = vmul.f32 %v10907, %v11591
      %v11596 = vmul.f32 %v10881, %v11591
      %v11597 = vmul.f32 %v10911, %v11591
      %v11598 = vmul.f32 %v10908, %v11591
      %v11599 = vmul.f32 %v10886, %v11591
      %v11600 = vmul.f32 %v10912, %v11591
      %v11601 = vmul.f32 %v10909, %v11591
      %v11602 = vmul.f32 %v10891, %v11591
      %v11603 = vmul.f32 %v10913, %v11591
      %v11604 = vmul.f32 %v655, %v11591
      %v11605 = vmul.f32 %v512, %v11591
      %v11606 = vmul.f32 %v677, %v11591
      %v11607 = vsel %vm9970, %v11592, 0.0
      %11608 = vadd.xlane.f32.xlu0 %v11607
      %v11609 = vpop.xlane.xlu0 %11608
      %v11610 = vsel %vm9970, %v11593, 0.0
      %11611 = vadd.xlane.f32.xlu0 %v11610
      %v11612 = vpop.xlane.xlu0 %11611
      %v11613 = vsel %vm10940, %v11594, 0.0
      %11614 = vadd.xlane.f32.xlu0 %v11613
      %v11615 = vpop.xlane.xlu0 %11614
      %v11616 = vsel %vm9970, %v11595, 0.0
      %11617 = vadd.xlane.f32.xlu0 %v11616
      %v11618 = vpop.xlane.xlu0 %11617
      %v11619 = vsel %vm9970, %v11596, 0.0
      %11620 = vadd.xlane.f32.xlu0 %v11619
      %v11621 = vpop.xlane.xlu0 %11620
      %v11622 = vsel %vm10940, %v11597, 0.0
      %11623 = vadd.xlane.f32.xlu0 %v11622
      %v11624 = vpop.xlane.xlu0 %11623
      %v11625 = vsel %vm9970, %v11598, 0.0
      %11626 = vadd.xlane.f32.xlu0 %v11625
      %v11627 = vpop.xlane.xlu0 %11626
      %v11628 = vsel %vm9970, %v11599, 0.0
      %11629 = vadd.xlane.f32.xlu0 %v11628
      %v11630 = vpop.xlane.xlu0 %11629
      %v11631 = vsel %vm10940, %v11600, 0.0
      %11632 = vadd.xlane.f32.xlu0 %v11631
      %v11633 = vpop.xlane.xlu0 %11632
      %v11634 = vsel %vm9970, %v11601, 0.0
      %11635 = vadd.xlane.f32.xlu0 %v11634
      %v11636 = vpop.xlane.xlu0 %11635
      %v11637 = vsel %vm9970, %v11602, 0.0
      %11638 = vadd.xlane.f32.xlu0 %v11637
      %v11639 = vpop.xlane.xlu0 %11638
      %v11640 = vsel %vm10940, %v11603, 0.0
      %11641 = vadd.xlane.f32.xlu0 %v11640
      %v11642 = vpop.xlane.xlu0 %11641
      %v11643 = vsel %vm9970, %v11604, 0.0
      %11644 = vadd.xlane.f32.xlu0 %v11643
      %v11645 = vpop.xlane.xlu0 %11644
      %v11646 = vsel %vm9970, %v11605, 0.0
      %11647 = vadd.xlane.f32.xlu0 %v11646
      %v11648 = vpop.xlane.xlu0 %11647
      %v11649 = vsel %vm10940, %v11606, 0.0
      %11650 = vadd.xlane.f32.xlu0 %v11649
      %v11651 = vpop.xlane.xlu0 %11650
      %v11652 = vadd.f32 %v11563, %v11609
      %v11653 = vadd.f32 %v11564, %v11612
      %v11654 = vadd.f32 %v11565, %v11615
      %v11655 = vadd.f32 %v11566, %v11609
      %v11656 = vadd.f32 %v11567, %v11612
      %v11657 = vadd.f32 %v11568, %v11615
      %v11658 = vadd.f32 %v11566, %v11618
      %v11659 = vadd.f32 %v11567, %v11621
      %v11660 = vadd.f32 %v11568, %v11624
      %v11661 = vadd.f32 %v11569, %v11618
      %v11662 = vadd.f32 %v11570, %v11621
      %v11663 = vadd.f32 %v11571, %v11624
      %v11664 = vadd.f32 %v11572, %v11618
      %v11665 = vadd.f32 %v11573, %v11621
      %v11666 = vadd.f32 %v11574, %v11624
      %v11667 = vadd.f32 %v11572, %v11627
      %v11668 = vadd.f32 %v11573, %v11630
      %v11669 = vadd.f32 %v11574, %v11633
      %v11670 = vadd.f32 %v11575, %v11627
      %v11671 = vadd.f32 %v11576, %v11630
      %v11672 = vadd.f32 %v11577, %v11633
      %v11673 = vadd.f32 %v11578, %v11627
      %v11674 = vadd.f32 %v11579, %v11630
      %v11675 = vadd.f32 %v11580, %v11633
      %v11676 = vadd.f32 %v11578, %v11636
      %v11677 = vadd.f32 %v11579, %v11639
      %v11678 = vadd.f32 %v11580, %v11642
      %v11679 = vadd.f32 %v11581, %v11636
      %v11680 = vadd.f32 %v11582, %v11639
      %v11681 = vadd.f32 %v11583, %v11642
      %v11682 = vadd.f32 %v11584, %v11636
      %v11683 = vadd.f32 %v11585, %v11639
      %v11684 = vadd.f32 %v11586, %v11642
      %v11685 = vadd.f32 %v11584, %v11645
      %v11686 = vadd.f32 %v11585, %v11648
      %v11687 = vadd.f32 %v11586, %v11651
      %v11688 = vld [vmem:[%s9 + $0x7] sm:$0x1]
      %v11689 = vlaneseq
      %v11690 = vshrl.u32 %v11689, 7
      %v11691 = vsub.s32 0, %v11690
      %v11692 = vrot.slane %v11688, %v11691
      %v11693 = vmul.f32 %v10906, %v11692
      %v11694 = vmul.f32 %v10876, %v11692
      %v11695 = vmul.f32 %v10910, %v11692
      %v11696 = vmul.f32 %v10907, %v11692
      %v11697 = vmul.f32 %v10881, %v11692
      %v11698 = vmul.f32 %v10911, %v11692
      %v11699 = vmul.f32 %v10908, %v11692
      %v11700 = vmul.f32 %v10886, %v11692
      %v11701 = vmul.f32 %v10912, %v11692
      %v11702 = vmul.f32 %v10909, %v11692
      %v11703 = vmul.f32 %v10891, %v11692
      %v11704 = vmul.f32 %v10913, %v11692
      %v11705 = vmul.f32 %v655, %v11692
      %v11706 = vmul.f32 %v512, %v11692
      %v11707 = vmul.f32 %v677, %v11692
      %v11708 = vsel %vm11015, %v11693, 0.0
      %11709 = vadd.xlane.f32.xlu0 %v11708
      %v11710 = vpop.xlane.xlu0 %11709
      %v11711 = vsel %vm9970, %v11694, 0.0
      %11712 = vadd.xlane.f32.xlu0 %v11711
      %v11713 = vpop.xlane.xlu0 %11712
      %v11714 = vsel %vm9206, %v11695, 0.0
      %11715 = vadd.xlane.f32.xlu0 %v11714
      %v11716 = vpop.xlane.xlu0 %11715
      %v11717 = vsel %vm11015, %v11696, 0.0
      %11718 = vadd.xlane.f32.xlu0 %v11717
      %v11719 = vpop.xlane.xlu0 %11718
      %v11720 = vsel %vm9970, %v11697, 0.0
      %11721 = vadd.xlane.f32.xlu0 %v11720
      %v11722 = vpop.xlane.xlu0 %11721
      %v11723 = vsel %vm9206, %v11698, 0.0
      %11724 = vadd.xlane.f32.xlu0 %v11723
      %v11725 = vpop.xlane.xlu0 %11724
      %v11726 = vsel %vm11015, %v11699, 0.0
      %11727 = vadd.xlane.f32.xlu0 %v11726
      %v11728 = vpop.xlane.xlu0 %11727
      %v11729 = vsel %vm9970, %v11700, 0.0
      %11730 = vadd.xlane.f32.xlu0 %v11729
      %v11731 = vpop.xlane.xlu0 %11730
      %v11732 = vsel %vm9206, %v11701, 0.0
      %11733 = vadd.xlane.f32.xlu0 %v11732
      %v11734 = vpop.xlane.xlu0 %11733
      %v11735 = vsel %vm11015, %v11702, 0.0
      %11736 = vadd.xlane.f32.xlu0 %v11735
      %v11737 = vpop.xlane.xlu0 %11736
      %v11738 = vsel %vm9970, %v11703, 0.0
      %11739 = vadd.xlane.f32.xlu0 %v11738
      %v11740 = vpop.xlane.xlu0 %11739
      %v11741 = vsel %vm9206, %v11704, 0.0
      %11742 = vadd.xlane.f32.xlu0 %v11741
      %v11743 = vpop.xlane.xlu0 %11742
      %v11744 = vsel %vm11015, %v11705, 0.0
      %11745 = vadd.xlane.f32.xlu0 %v11744
      %v11746 = vpop.xlane.xlu0 %11745
      %v11747 = vsel %vm9970, %v11706, 0.0
      %11748 = vadd.xlane.f32.xlu0 %v11747
      %v11749 = vpop.xlane.xlu0 %11748
      %v11750 = vsel %vm9206, %v11707, 0.0
      %11751 = vadd.xlane.f32.xlu0 %v11750
      %v11752 = vpop.xlane.xlu0 %11751
      %v11768 = vrot.slane %v11710, 1
      %v11769 = vrot.slane %v11713, 1
      %v11770 = vsel %vm1168, %v11768, %v11769
      %v11771 = vrot.slane %v11716, 1
      %v11772 = vsel %vm1168, %v11769, %v11771
      %v11773 = vrot.slane %v11719, 1
      %v11774 = vrot.slane %v11722, 1
      %v11775 = vsel %vm1168, %v11773, %v11774
      %v11776 = vrot.slane %v11725, 1
      %v11777 = vsel %vm1168, %v11774, %v11776
      %v11778 = vrot.slane %v11728, 1
      %v11779 = vrot.slane %v11731, 1
      %v11780 = vsel %vm1168, %v11778, %v11779
      %v11781 = vrot.slane %v11734, 1
      %v11782 = vsel %vm1168, %v11779, %v11781
      %v11783 = vrot.slane %v11737, 1
      %v11784 = vrot.slane %v11740, 1
      %v11785 = vsel %vm1168, %v11783, %v11784
      %v11786 = vrot.slane %v11743, 1
      %v11787 = vsel %vm1168, %v11784, %v11786
      %v11788 = vrot.slane %v11746, 1
      %v11789 = vrot.slane %v11749, 1
      %v11790 = vsel %vm1168, %v11788, %v11789
      %v11791 = vrot.slane %v11752, 1
      %v11792 = vsel %vm1168, %v11789, %v11791
      %v11808 = vadd.f32 %v11652, %v11770
      %v11809 = vadd.f32 %v11653, %v11772
      %v11810 = vadd.f32 %v11654, %v11771
      %v11811 = vadd.f32 %v11655, %v11770
      %v11812 = vadd.f32 %v11656, %v11772
      %v11813 = vadd.f32 %v11657, %v11771
      %v11814 = vadd.f32 %v11658, %v11775
      %v11815 = vadd.f32 %v11659, %v11777
      %v11816 = vadd.f32 %v11660, %v11776
      %v11817 = vadd.f32 %v11661, %v11775
      %v11818 = vadd.f32 %v11662, %v11777
      %v11819 = vadd.f32 %v11663, %v11776
      %v11820 = vadd.f32 %v11664, %v11775
      %v11821 = vadd.f32 %v11665, %v11777
      %v11822 = vadd.f32 %v11666, %v11776
      %v11823 = vadd.f32 %v11667, %v11780
      %v11824 = vadd.f32 %v11668, %v11782
      %v11825 = vadd.f32 %v11669, %v11781
      %v11826 = vadd.f32 %v11670, %v11780
      %v11827 = vadd.f32 %v11671, %v11782
      %v11828 = vadd.f32 %v11672, %v11781
      %v11829 = vadd.f32 %v11673, %v11780
      %v11830 = vadd.f32 %v11674, %v11782
      %v11831 = vadd.f32 %v11675, %v11781
      %v11832 = vadd.f32 %v11676, %v11785
      %v11833 = vadd.f32 %v11677, %v11787
      %v11834 = vadd.f32 %v11678, %v11786
      %v11835 = vadd.f32 %v11679, %v11785
      %v11836 = vadd.f32 %v11680, %v11787
      %v11837 = vadd.f32 %v11681, %v11786
      %v11838 = vadd.f32 %v11682, %v11785
      %v11839 = vadd.f32 %v11683, %v11787
      %v11840 = vadd.f32 %v11684, %v11786
      %v11841 = vadd.f32 %v11685, %v11790
      %v11842 = vadd.f32 %v11686, %v11792
      %v11843 = vadd.f32 %v11687, %v11791
      %v11844 = vld [vmem:[%s9 + $0x8] sm:$0x1]
      %v11845 = vlaneseq
      %v11846 = vshrl.u32 %v11845, 7
      %v11847 = vsub.s32 0, %v11846
      %v11848 = vrot.slane %v11844, %v11847
      %v11849 = vmul.f32 %v10906, %v11848
      %v11850 = vmul.f32 %v10876, %v11848
      %v11851 = vmul.f32 %v10910, %v11848
      %v11852 = vmul.f32 %v10907, %v11848
      %v11853 = vmul.f32 %v10881, %v11848
      %v11854 = vmul.f32 %v10911, %v11848
      %v11855 = vmul.f32 %v10908, %v11848
      %v11856 = vmul.f32 %v10886, %v11848
      %v11857 = vmul.f32 %v10912, %v11848
      %v11858 = vmul.f32 %v10909, %v11848
      %v11859 = vmul.f32 %v10891, %v11848
      %v11860 = vmul.f32 %v10913, %v11848
      %v11861 = vmul.f32 %v655, %v11848
      %v11862 = vmul.f32 %v512, %v11848
      %v11863 = vmul.f32 %v677, %v11848
      %v11864 = vsel %vm11151, %v11849, 0.0
      %11865 = vadd.xlane.f32.xlu0 %v11864
      %v11866 = vpop.xlane.xlu0 %11865
      %v11867 = vsel %vm9970, %v11850, 0.0
      %11868 = vadd.xlane.f32.xlu0 %v11867
      %v11869 = vpop.xlane.xlu0 %11868
      %v11870 = vsel %vm11158, %v11851, 0.0
      %11871 = vadd.xlane.f32.xlu0 %v11870
      %v11872 = vpop.xlane.xlu0 %11871
      %v11873 = vsel %vm11151, %v11852, 0.0
      %11874 = vadd.xlane.f32.xlu0 %v11873
      %v11875 = vpop.xlane.xlu0 %11874
      %v11876 = vsel %vm9970, %v11853, 0.0
      %11877 = vadd.xlane.f32.xlu0 %v11876
      %v11878 = vpop.xlane.xlu0 %11877
      %v11879 = vsel %vm11158, %v11854, 0.0
      %11880 = vadd.xlane.f32.xlu0 %v11879
      %v11881 = vpop.xlane.xlu0 %11880
      %v11882 = vsel %vm11151, %v11855, 0.0
      %11883 = vadd.xlane.f32.xlu0 %v11882
      %v11884 = vpop.xlane.xlu0 %11883
      %v11885 = vsel %vm9970, %v11856, 0.0
      %11886 = vadd.xlane.f32.xlu0 %v11885
      %v11887 = vpop.xlane.xlu0 %11886
      %v11888 = vsel %vm11158, %v11857, 0.0
      %11889 = vadd.xlane.f32.xlu0 %v11888
      %v11890 = vpop.xlane.xlu0 %11889
      %v11891 = vsel %vm11151, %v11858, 0.0
      %11892 = vadd.xlane.f32.xlu0 %v11891
      %v11893 = vpop.xlane.xlu0 %11892
      %v11894 = vsel %vm9970, %v11859, 0.0
      %11895 = vadd.xlane.f32.xlu0 %v11894
      %v11896 = vpop.xlane.xlu0 %11895
      %v11897 = vsel %vm11158, %v11860, 0.0
      %11898 = vadd.xlane.f32.xlu0 %v11897
      %v11899 = vpop.xlane.xlu0 %11898
      %v11900 = vsel %vm11151, %v11861, 0.0
      %11901 = vadd.xlane.f32.xlu0 %v11900
      %v11902 = vpop.xlane.xlu0 %11901
      %v11903 = vsel %vm9970, %v11862, 0.0
      %11904 = vadd.xlane.f32.xlu0 %v11903
      %v11905 = vpop.xlane.xlu0 %11904
      %v11906 = vsel %vm11158, %v11863, 0.0
      %11907 = vadd.xlane.f32.xlu0 %v11906
      %v11908 = vpop.xlane.xlu0 %11907
      %v11924 = vrot.slane %v11866, 2
      %v11925 = vrot.slane %v11869, 2
      %v11926 = vsel %vm1514, %v11924, %v11925
      %v11927 = vrot.slane %v11872, 2
      %v11928 = vsel %vm1514, %v11925, %v11927
      %v11929 = vrot.slane %v11875, 2
      %v11930 = vrot.slane %v11878, 2
      %v11931 = vsel %vm1514, %v11929, %v11930
      %v11932 = vrot.slane %v11881, 2
      %v11933 = vsel %vm1514, %v11930, %v11932
      %v11934 = vrot.slane %v11884, 2
      %v11935 = vrot.slane %v11887, 2
      %v11936 = vsel %vm1514, %v11934, %v11935
      %v11937 = vrot.slane %v11890, 2
      %v11938 = vsel %vm1514, %v11935, %v11937
      %v11939 = vrot.slane %v11893, 2
      %v11940 = vrot.slane %v11896, 2
      %v11941 = vsel %vm1514, %v11939, %v11940
      %v11942 = vrot.slane %v11899, 2
      %v11943 = vsel %vm1514, %v11940, %v11942
      %v11944 = vrot.slane %v11902, 2
      %v11945 = vrot.slane %v11905, 2
      %v11946 = vsel %vm1514, %v11944, %v11945
      %v11947 = vrot.slane %v11908, 2
      %v11948 = vsel %vm1514, %v11945, %v11947
      %v11964 = vadd.f32 %v11808, %v11926
      %v11965 = vadd.f32 %v11809, %v11928
      %v11966 = vadd.f32 %v11810, %v11927
      %v11967 = vadd.f32 %v11811, %v11926
      %v11968 = vadd.f32 %v11812, %v11928
      %v11969 = vadd.f32 %v11813, %v11927
      %v11970 = vadd.f32 %v11814, %v11931
      %v11971 = vadd.f32 %v11815, %v11933
      %v11972 = vadd.f32 %v11816, %v11932
      %v11973 = vadd.f32 %v11817, %v11931
      %v11974 = vadd.f32 %v11818, %v11933
      %v11975 = vadd.f32 %v11819, %v11932
      %v11976 = vadd.f32 %v11820, %v11931
      %v11977 = vadd.f32 %v11821, %v11933
      %v11978 = vadd.f32 %v11822, %v11932
      %v11979 = vadd.f32 %v11823, %v11936
      %v11980 = vadd.f32 %v11824, %v11938
      %v11981 = vadd.f32 %v11825, %v11937
      %v11982 = vadd.f32 %v11826, %v11936
      %v11983 = vadd.f32 %v11827, %v11938
      %v11984 = vadd.f32 %v11828, %v11937
      %v11985 = vadd.f32 %v11829, %v11936
      %v11986 = vadd.f32 %v11830, %v11938
      %v11987 = vadd.f32 %v11831, %v11937
      %v11988 = vadd.f32 %v11832, %v11941
      %v11989 = vadd.f32 %v11833, %v11943
      %v11990 = vadd.f32 %v11834, %v11942
      %v11991 = vadd.f32 %v11835, %v11941
      %v11992 = vadd.f32 %v11836, %v11943
      %v11993 = vadd.f32 %v11837, %v11942
      %v11994 = vadd.f32 %v11838, %v11941
      %v11995 = vadd.f32 %v11839, %v11943
      %v11996 = vadd.f32 %v11840, %v11942
      %v11997 = vadd.f32 %v11841, %v11946
      %v11998 = vadd.f32 %v11842, %v11948
      %v11999 = vadd.f32 %v11843, %v11947
      %v12000 = vld [vmem:[#allocation2] sm:$0x1]
      %v12002 = vlaneseq
      %v12003 = vshrl.u32 %v12002, 7
      %v12004 = vsub.s32 0, %v12003
      %v12005 = vrot.slane %v12000, %v12004
      %12006 = vset.pattern.permute.xlu0 0
      %12007 = vperm.xlu0 %12006, %v12005
      %v12008 = vpop.permute.xlu0 %12007
      %v12010 = vadd.f32 %v11964, %v12008
      %v12011 = vadd.f32 %v11965, %v12008
      %v12012 = vadd.f32 %v11966, %v12008
      %v12013 = vadd.f32 %v11967, %v12008
      %v12014 = vadd.f32 %v11968, %v12008
      %v12015 = vadd.f32 %v11969, %v12008
      %v12016 = vadd.f32 %v11970, %v12008
      %v12017 = vadd.f32 %v11971, %v12008
      %v12018 = vadd.f32 %v11972, %v12008
      %v12019 = vadd.f32 %v11973, %v12008
      %v12020 = vadd.f32 %v11974, %v12008
      %v12021 = vadd.f32 %v11975, %v12008
      %v12022 = vadd.f32 %v11976, %v12008
      %v12023 = vadd.f32 %v11977, %v12008
      %v12024 = vadd.f32 %v11978, %v12008
      %v12025 = vadd.f32 %v11979, %v12008
      %v12026 = vadd.f32 %v11980, %v12008
      %v12027 = vadd.f32 %v11981, %v12008
      %v12028 = vadd.f32 %v11982, %v12008
      %v12029 = vadd.f32 %v11983, %v12008
      %v12030 = vadd.f32 %v11984, %v12008
      %v12031 = vadd.f32 %v11985, %v12008
      %v12032 = vadd.f32 %v11986, %v12008
      %v12033 = vadd.f32 %v11987, %v12008
      %v12034 = vadd.f32 %v11988, %v12008
      %v12035 = vadd.f32 %v11989, %v12008
      %v12036 = vadd.f32 %v11990, %v12008
      %v12037 = vadd.f32 %v11991, %v12008
      %v12038 = vadd.f32 %v11992, %v12008
      %v12039 = vadd.f32 %v11993, %v12008
      %v12040 = vadd.f32 %v11994, %v12008
      %v12041 = vadd.f32 %v11995, %v12008
      %v12042 = vadd.f32 %v11996, %v12008
      %v12043 = vadd.f32 %v11997, %v12008
      %v12044 = vadd.f32 %v11998, %v12008
      %v12045 = vadd.f32 %v11999, %v12008
      %v12046 = vxor.u32 %v12010, 2147483648
      %v12047 = vxor.u32 %v12011, 2147483648
      %v12048 = vxor.u32 %v12012, 2147483648
      %v12049 = vxor.u32 %v12013, 2147483648
      %v12050 = vxor.u32 %v12014, 2147483648
      %v12051 = vxor.u32 %v12015, 2147483648
      %v12052 = vxor.u32 %v12016, 2147483648
      %v12053 = vxor.u32 %v12017, 2147483648
      %v12054 = vxor.u32 %v12018, 2147483648
      %v12055 = vxor.u32 %v12019, 2147483648
      %v12056 = vxor.u32 %v12020, 2147483648
      %v12057 = vxor.u32 %v12021, 2147483648
      %v12058 = vxor.u32 %v12022, 2147483648
      %v12059 = vxor.u32 %v12023, 2147483648
      %v12060 = vxor.u32 %v12024, 2147483648
      %v12061 = vxor.u32 %v12025, 2147483648
      %v12062 = vxor.u32 %v12026, 2147483648
      %v12063 = vxor.u32 %v12027, 2147483648
      %v12064 = vxor.u32 %v12028, 2147483648
      %v12065 = vxor.u32 %v12029, 2147483648
      %v12066 = vxor.u32 %v12030, 2147483648
      %v12067 = vxor.u32 %v12031, 2147483648
      %v12068 = vxor.u32 %v12032, 2147483648
      %v12069 = vxor.u32 %v12033, 2147483648
      %v12070 = vxor.u32 %v12034, 2147483648
      %v12071 = vxor.u32 %v12035, 2147483648
      %v12072 = vxor.u32 %v12036, 2147483648
      %v12073 = vxor.u32 %v12037, 2147483648
      %v12074 = vxor.u32 %v12038, 2147483648
      %v12075 = vxor.u32 %v12039, 2147483648
      %v12076 = vxor.u32 %v12040, 2147483648
      %v12077 = vxor.u32 %v12041, 2147483648
      %v12078 = vxor.u32 %v12042, 2147483648
      %v12079 = vxor.u32 %v12043, 2147483648
      %v12080 = vxor.u32 %v12044, 2147483648
      %v12081 = vxor.u32 %v12045, 2147483648
      %v12082 = vmul.f32 %v12046, 1.442695
      %v12083 = vpow.pop %v12082
      %v12084 = vmul.f32 %v12047, 1.442695
      %v12085 = vpow.pop %v12084
      %v12086 = vmul.f32 %v12048, 1.442695
      %v12087 = vpow.pop %v12086
      %v12088 = vmul.f32 %v12049, 1.442695
      %v12089 = vpow.pop %v12088
      %v12090 = vmul.f32 %v12050, 1.442695
      %v12091 = vpow.pop %v12090
      %v12092 = vmul.f32 %v12051, 1.442695
      %v12093 = vpow.pop %v12092
      %v12094 = vmul.f32 %v12052, 1.442695
      %v12095 = vpow.pop %v12094
      %v12096 = vmul.f32 %v12053, 1.442695
      %v12097 = vpow.pop %v12096
      %v12098 = vmul.f32 %v12054, 1.442695
      %v12099 = vpow.pop %v12098
      %v12100 = vmul.f32 %v12055, 1.442695
      %v12101 = vpow.pop %v12100
      %v12102 = vmul.f32 %v12056, 1.442695
      %v12103 = vpow.pop %v12102
      %v12104 = vmul.f32 %v12057, 1.442695
      %v12105 = vpow.pop %v12104
      %v12106 = vmul.f32 %v12058, 1.442695
      %v12107 = vpow.pop %v12106
      %v12108 = vmul.f32 %v12059, 1.442695
      %v12109 = vpow.pop %v12108
      %v12110 = vmul.f32 %v12060, 1.442695
      %v12111 = vpow.pop %v12110
      %v12112 = vmul.f32 %v12061, 1.442695
      %v12113 = vpow.pop %v12112
      %v12114 = vmul.f32 %v12062, 1.442695
      %v12115 = vpow.pop %v12114
      %v12116 = vmul.f32 %v12063, 1.442695
      %v12117 = vpow.pop %v12116
      %v12118 = vmul.f32 %v12064, 1.442695
      %v12119 = vpow.pop %v12118
      %v12120 = vmul.f32 %v12065, 1.442695
      %v12121 = vpow.pop %v12120
      %v12122 = vmul.f32 %v12066, 1.442695
      %v12123 = vpow.pop %v12122
      %v12124 = vmul.f32 %v12067, 1.442695
      %v12125 = vpow.pop %v12124
      %v12126 = vmul.f32 %v12068, 1.442695
      %v12127 = vpow.pop %v12126
      %v12128 = vmul.f32 %v12069, 1.442695
      %v12129 = vpow.pop %v12128
      %v12130 = vmul.f32 %v12070, 1.442695
      %v12131 = vpow.pop %v12130
      %v12132 = vmul.f32 %v12071, 1.442695
      %v12133 = vpow.pop %v12132
      %v12134 = vmul.f32 %v12072, 1.442695
      %v12135 = vpow.pop %v12134
      %v12136 = vmul.f32 %v12073, 1.442695
      %v12137 = vpow.pop %v12136
      %v12138 = vmul.f32 %v12074, 1.442695
      %v12139 = vpow.pop %v12138
      %v12140 = vmul.f32 %v12075, 1.442695
      %v12141 = vpow.pop %v12140
      %v12142 = vmul.f32 %v12076, 1.442695
      %v12143 = vpow.pop %v12142
      %v12144 = vmul.f32 %v12077, 1.442695
      %v12145 = vpow.pop %v12144
      %v12146 = vmul.f32 %v12078, 1.442695
      %v12147 = vpow.pop %v12146
      %v12148 = vmul.f32 %v12079, 1.442695
      %v12149 = vpow.pop %v12148
      %v12150 = vmul.f32 %v12080, 1.442695
      %v12151 = vpow.pop %v12150
      %v12152 = vmul.f32 %v12081, 1.442695
      %v12153 = vpow.pop %v12152
      %v12154 = vadd.f32 %v12083, 1.0
      %v12155 = vadd.f32 %v12085, 1.0
      %v12156 = vadd.f32 %v12087, 1.0
      %v12157 = vadd.f32 %v12089, 1.0
      %v12158 = vadd.f32 %v12091, 1.0
      %v12159 = vadd.f32 %v12093, 1.0
      %v12160 = vadd.f32 %v12095, 1.0
      %v12161 = vadd.f32 %v12097, 1.0
      %v12162 = vadd.f32 %v12099, 1.0
      %v12163 = vadd.f32 %v12101, 1.0
      %v12164 = vadd.f32 %v12103, 1.0
      %v12165 = vadd.f32 %v12105, 1.0
      %v12166 = vadd.f32 %v12107, 1.0
      %v12167 = vadd.f32 %v12109, 1.0
      %v12168 = vadd.f32 %v12111, 1.0
      %v12169 = vadd.f32 %v12113, 1.0
      %v12170 = vadd.f32 %v12115, 1.0
      %v12171 = vadd.f32 %v12117, 1.0
      %v12172 = vadd.f32 %v12119, 1.0
      %v12173 = vadd.f32 %v12121, 1.0
      %v12174 = vadd.f32 %v12123, 1.0
      %v12175 = vadd.f32 %v12125, 1.0
      %v12176 = vadd.f32 %v12127, 1.0
      %v12177 = vadd.f32 %v12129, 1.0
      %v12178 = vadd.f32 %v12131, 1.0
      %v12179 = vadd.f32 %v12133, 1.0
      %v12180 = vadd.f32 %v12135, 1.0
      %v12181 = vadd.f32 %v12137, 1.0
      %v12182 = vadd.f32 %v12139, 1.0
      %v12183 = vadd.f32 %v12141, 1.0
      %v12184 = vadd.f32 %v12143, 1.0
      %v12185 = vadd.f32 %v12145, 1.0
      %v12186 = vadd.f32 %v12147, 1.0
      %v12187 = vadd.f32 %v12149, 1.0
      %v12188 = vadd.f32 %v12151, 1.0
      %v12189 = vadd.f32 %v12153, 1.0
      %v12190 = vrcp.pop %v12154
      %v12191 = vmul.f32 1.0, %v12190
      %v12192 = vrcp.pop %v12155
      %v12193 = vmul.f32 1.0, %v12192
      %v12194 = vrcp.pop %v12156
      %v12195 = vmul.f32 1.0, %v12194
      %v12196 = vrcp.pop %v12157
      %v12197 = vmul.f32 1.0, %v12196
      %v12198 = vrcp.pop %v12158
      %v12199 = vmul.f32 1.0, %v12198
      %v12200 = vrcp.pop %v12159
      %v12201 = vmul.f32 1.0, %v12200
      %v12202 = vrcp.pop %v12160
      %v12203 = vmul.f32 1.0, %v12202
      %v12204 = vrcp.pop %v12161
      %v12205 = vmul.f32 1.0, %v12204
      %v12206 = vrcp.pop %v12162
      %v12207 = vmul.f32 1.0, %v12206
      %v12208 = vrcp.pop %v12163
      %v12209 = vmul.f32 1.0, %v12208
      %v12210 = vrcp.pop %v12164
      %v12211 = vmul.f32 1.0, %v12210
      %v12212 = vrcp.pop %v12165
      %v12213 = vmul.f32 1.0, %v12212
      %v12214 = vrcp.pop %v12166
      %v12215 = vmul.f32 1.0, %v12214
      %v12216 = vrcp.pop %v12167
      %v12217 = vmul.f32 1.0, %v12216
      %v12218 = vrcp.pop %v12168
      %v12219 = vmul.f32 1.0, %v12218
      %v12220 = vrcp.pop %v12169
      %v12221 = vmul.f32 1.0, %v12220
      %v12222 = vrcp.pop %v12170
      %v12223 = vmul.f32 1.0, %v12222
      %v12224 = vrcp.pop %v12171
      %v12225 = vmul.f32 1.0, %v12224
      %v12226 = vrcp.pop %v12172
      %v12227 = vmul.f32 1.0, %v12226
      %v12228 = vrcp.pop %v12173
      %v12229 = vmul.f32 1.0, %v12228
      %v12230 = vrcp.pop %v12174
      %v12231 = vmul.f32 1.0, %v12230
      %v12232 = vrcp.pop %v12175
      %v12233 = vmul.f32 1.0, %v12232
      %v12234 = vrcp.pop %v12176
      %v12235 = vmul.f32 1.0, %v12234
      %v12236 = vrcp.pop %v12177
      %v12237 = vmul.f32 1.0, %v12236
      %v12238 = vrcp.pop %v12178
      %v12239 = vmul.f32 1.0, %v12238
      %v12240 = vrcp.pop %v12179
      %v12241 = vmul.f32 1.0, %v12240
      %v12242 = vrcp.pop %v12180
      %v12243 = vmul.f32 1.0, %v12242
      %v12244 = vrcp.pop %v12181
      %v12245 = vmul.f32 1.0, %v12244
      %v12246 = vrcp.pop %v12182
      %v12247 = vmul.f32 1.0, %v12246
      %v12248 = vrcp.pop %v12183
      %v12249 = vmul.f32 1.0, %v12248
      %v12250 = vrcp.pop %v12184
      %v12251 = vmul.f32 1.0, %v12250
      %v12252 = vrcp.pop %v12185
      %v12253 = vmul.f32 1.0, %v12252
      %v12254 = vrcp.pop %v12186
      %v12255 = vmul.f32 1.0, %v12254
      %v12256 = vrcp.pop %v12187
      %v12257 = vmul.f32 1.0, %v12256
      %v12258 = vrcp.pop %v12188
      %v12259 = vmul.f32 1.0, %v12258
      %v12260 = vrcp.pop %v12189
      %v12261 = vmul.f32 1.0, %v12260
      %12298 = vset.pattern.permute.xlu0 0
      %12299 = vperm.xlu0 %12298, %v12191
      %v12300 = vpop.permute.xlu0 %12299
      %12301 = vset.pattern.permute.xlu0 0
      %12302 = vperm.xlu0 %12301, %v12193
      %v12303 = vpop.permute.xlu0 %12302
      %12304 = vset.pattern.permute.xlu0 0
      %12305 = vperm.xlu0 %12304, %v12195
      %v12306 = vpop.permute.xlu0 %12305
      %12307 = vset.pattern.permute.xlu0 0
      %12308 = vperm.xlu0 %12307, %v12197
      %v12309 = vpop.permute.xlu0 %12308
      %12310 = vset.pattern.permute.xlu0 0
      %12311 = vperm.xlu0 %12310, %v12199
      %v12312 = vpop.permute.xlu0 %12311
      %12313 = vset.pattern.permute.xlu0 0
      %12314 = vperm.xlu0 %12313, %v12201
      %v12315 = vpop.permute.xlu0 %12314
      %12316 = vset.pattern.permute.xlu0 0
      %12317 = vperm.xlu0 %12316, %v12203
      %v12318 = vpop.permute.xlu0 %12317
      %12319 = vset.pattern.permute.xlu0 0
      %12320 = vperm.xlu0 %12319, %v12205
      %v12321 = vpop.permute.xlu0 %12320
      %12322 = vset.pattern.permute.xlu0 0
      %12323 = vperm.xlu0 %12322, %v12207
      %v12324 = vpop.permute.xlu0 %12323
      %12325 = vset.pattern.permute.xlu0 0
      %12326 = vperm.xlu0 %12325, %v12209
      %v12327 = vpop.permute.xlu0 %12326
      %12328 = vset.pattern.permute.xlu0 0
      %12329 = vperm.xlu0 %12328, %v12211
      %v12330 = vpop.permute.xlu0 %12329
      %12331 = vset.pattern.permute.xlu0 0
      %12332 = vperm.xlu0 %12331, %v12213
      %v12333 = vpop.permute.xlu0 %12332
      %12334 = vset.pattern.permute.xlu0 0
      %12335 = vperm.xlu0 %12334, %v12215
      %v12336 = vpop.permute.xlu0 %12335
      %12337 = vset.pattern.permute.xlu0 0
      %12338 = vperm.xlu0 %12337, %v12217
      %v12339 = vpop.permute.xlu0 %12338
      %12340 = vset.pattern.permute.xlu0 0
      %12341 = vperm.xlu0 %12340, %v12219
      %v12342 = vpop.permute.xlu0 %12341
      %12343 = vset.pattern.permute.xlu0 0
      %12344 = vperm.xlu0 %12343, %v12221
      %v12345 = vpop.permute.xlu0 %12344
      %12346 = vset.pattern.permute.xlu0 0
      %12347 = vperm.xlu0 %12346, %v12223
      %v12348 = vpop.permute.xlu0 %12347
      %12349 = vset.pattern.permute.xlu0 0
      %12350 = vperm.xlu0 %12349, %v12225
      %v12351 = vpop.permute.xlu0 %12350
      %12352 = vset.pattern.permute.xlu0 0
      %12353 = vperm.xlu0 %12352, %v12227
      %v12354 = vpop.permute.xlu0 %12353
      %12355 = vset.pattern.permute.xlu0 0
      %12356 = vperm.xlu0 %12355, %v12229
      %v12357 = vpop.permute.xlu0 %12356
      %12358 = vset.pattern.permute.xlu0 0
      %12359 = vperm.xlu0 %12358, %v12231
      %v12360 = vpop.permute.xlu0 %12359
      %12361 = vset.pattern.permute.xlu0 0
      %12362 = vperm.xlu0 %12361, %v12233
      %v12363 = vpop.permute.xlu0 %12362
      %12364 = vset.pattern.permute.xlu0 0
      %12365 = vperm.xlu0 %12364, %v12235
      %v12366 = vpop.permute.xlu0 %12365
      %12367 = vset.pattern.permute.xlu0 0
      %12368 = vperm.xlu0 %12367, %v12237
      %v12369 = vpop.permute.xlu0 %12368
      %12370 = vset.pattern.permute.xlu0 0
      %12371 = vperm.xlu0 %12370, %v12239
      %v12372 = vpop.permute.xlu0 %12371
      %12373 = vset.pattern.permute.xlu0 0
      %12374 = vperm.xlu0 %12373, %v12241
      %v12375 = vpop.permute.xlu0 %12374
      %12376 = vset.pattern.permute.xlu0 0
      %12377 = vperm.xlu0 %12376, %v12243
      %v12378 = vpop.permute.xlu0 %12377
      %12379 = vset.pattern.permute.xlu0 0
      %12380 = vperm.xlu0 %12379, %v12245
      %v12381 = vpop.permute.xlu0 %12380
      %12382 = vset.pattern.permute.xlu0 0
      %12383 = vperm.xlu0 %12382, %v12247
      %v12384 = vpop.permute.xlu0 %12383
      %12385 = vset.pattern.permute.xlu0 0
      %12386 = vperm.xlu0 %12385, %v12249
      %v12387 = vpop.permute.xlu0 %12386
      %12388 = vset.pattern.permute.xlu0 0
      %12389 = vperm.xlu0 %12388, %v12251
      %v12390 = vpop.permute.xlu0 %12389
      %12391 = vset.pattern.permute.xlu0 0
      %12392 = vperm.xlu0 %12391, %v12253
      %v12393 = vpop.permute.xlu0 %12392
      %12394 = vset.pattern.permute.xlu0 0
      %12395 = vperm.xlu0 %12394, %v12255
      %v12396 = vpop.permute.xlu0 %12395
      %12397 = vset.pattern.permute.xlu0 0
      %12398 = vperm.xlu0 %12397, %v12257
      %v12399 = vpop.permute.xlu0 %12398
      %12400 = vset.pattern.permute.xlu0 0
      %12401 = vperm.xlu0 %12400, %v12259
      %v12402 = vpop.permute.xlu0 %12401
      %12403 = vset.pattern.permute.xlu0 0
      %12404 = vperm.xlu0 %12403, %v12261
      %v12405 = vpop.permute.xlu0 %12404
      %v12406 = vlaneseq
      %v12407 = vand.u32 %v12406, 127
      %v12408 = vlaneseq
      %v12409 = vshrl.u32 %v12408, 7
      %v12410 = vsub.s32 %v12407, %v12409
      %v12411 = vrot.slane %v12300, %v12410
      %v12412 = vadd.s32 %v12407, 4294967288
      %v12413 = vlaneseq
      %v12414 = vshrl.u32 %v12413, 7
      %v12415 = vsub.s32 %v12412, %v12414
      %v12416 = vrot.slane %v12303, %v12415
      %vm12417 = vcmask 130112
      %v12418 = vsel %vm12417, %v12416, %v12411
      %v12419 = vadd.s32 %v12407, 4294967280
      %v12420 = vlaneseq
      %v12421 = vshrl.u32 %v12420, 7
      %v12422 = vsub.s32 %v12419, %v12421
      %v12423 = vrot.slane %v12306, %v12422
      %vm12424 = vcmask 195712
      %v12425 = vsel %vm12424, %v12423, %v12418
      %v12426 = vlaneseq
      %v12427 = vshrl.u32 %v12426, 7
      %v12428 = vsub.s32 %v12407, %v12427
      %v12429 = vrot.slane %v12309, %v12428
      %v12430 = vlaneseq
      %v12431 = vshrl.u32 %v12430, 7
      %v12432 = vsub.s32 %v12412, %v12431
      %v12433 = vrot.slane %v12312, %v12432
      %v12434 = vsel %vm12417, %v12433, %v12429
      %v12435 = vlaneseq
      %v12436 = vshrl.u32 %v12435, 7
      %v12437 = vsub.s32 %v12419, %v12436
      %v12438 = vrot.slane %v12315, %v12437
      %v12439 = vsel %vm12424, %v12438, %v12434
      %v12440 = vlaneseq
      %v12441 = vshrl.u32 %v12440, 7
      %v12442 = vsub.s32 %v12407, %v12441
      %v12443 = vrot.slane %v12318, %v12442
      %v12444 = vlaneseq
      %v12445 = vshrl.u32 %v12444, 7
      %v12446 = vsub.s32 %v12412, %v12445
      %v12447 = vrot.slane %v12321, %v12446
      %v12448 = vsel %vm12417, %v12447, %v12443
      %v12449 = vlaneseq
      %v12450 = vshrl.u32 %v12449, 7
      %v12451 = vsub.s32 %v12419, %v12450
      %v12452 = vrot.slane %v12324, %v12451
      %v12453 = vsel %vm12424, %v12452, %v12448
      %v12454 = vlaneseq
      %v12455 = vshrl.u32 %v12454, 7
      %v12456 = vsub.s32 %v12407, %v12455
      %v12457 = vrot.slane %v12327, %v12456
      %v12458 = vlaneseq
      %v12459 = vshrl.u32 %v12458, 7
      %v12460 = vsub.s32 %v12412, %v12459
      %v12461 = vrot.slane %v12330, %v12460
      %v12462 = vsel %vm12417, %v12461, %v12457
      %v12463 = vlaneseq
      %v12464 = vshrl.u32 %v12463, 7
      %v12465 = vsub.s32 %v12419, %v12464
      %v12466 = vrot.slane %v12333, %v12465
      %v12467 = vsel %vm12424, %v12466, %v12462
      %v12468 = vlaneseq
      %v12469 = vshrl.u32 %v12468, 7
      %v12470 = vsub.s32 %v12407, %v12469
      %v12471 = vrot.slane %v12336, %v12470
      %v12472 = vlaneseq
      %v12473 = vshrl.u32 %v12472, 7
      %v12474 = vsub.s32 %v12412, %v12473
      %v12475 = vrot.slane %v12339, %v12474
      %v12476 = vsel %vm12417, %v12475, %v12471
      %v12477 = vlaneseq
      %v12478 = vshrl.u32 %v12477, 7
      %v12479 = vsub.s32 %v12419, %v12478
      %v12480 = vrot.slane %v12342, %v12479
      %v12481 = vsel %vm12424, %v12480, %v12476
      %v12482 = vlaneseq
      %v12483 = vshrl.u32 %v12482, 7
      %v12484 = vsub.s32 %v12407, %v12483
      %v12485 = vrot.slane %v12345, %v12484
      %v12486 = vlaneseq
      %v12487 = vshrl.u32 %v12486, 7
      %v12488 = vsub.s32 %v12412, %v12487
      %v12489 = vrot.slane %v12348, %v12488
      %v12490 = vsel %vm12417, %v12489, %v12485
      %v12491 = vlaneseq
      %v12492 = vshrl.u32 %v12491, 7
      %v12493 = vsub.s32 %v12419, %v12492
      %v12494 = vrot.slane %v12351, %v12493
      %v12495 = vsel %vm12424, %v12494, %v12490
      %v12496 = vlaneseq
      %v12497 = vshrl.u32 %v12496, 7
      %v12498 = vsub.s32 %v12407, %v12497
      %v12499 = vrot.slane %v12354, %v12498
      %v12500 = vlaneseq
      %v12501 = vshrl.u32 %v12500, 7
      %v12502 = vsub.s32 %v12412, %v12501
      %v12503 = vrot.slane %v12357, %v12502
      %v12504 = vsel %vm12417, %v12503, %v12499
      %v12505 = vlaneseq
      %v12506 = vshrl.u32 %v12505, 7
      %v12507 = vsub.s32 %v12419, %v12506
      %v12508 = vrot.slane %v12360, %v12507
      %v12509 = vsel %vm12424, %v12508, %v12504
      %v12510 = vlaneseq
      %v12511 = vshrl.u32 %v12510, 7
      %v12512 = vsub.s32 %v12407, %v12511
      %v12513 = vrot.slane %v12363, %v12512
      %v12514 = vlaneseq
      %v12515 = vshrl.u32 %v12514, 7
      %v12516 = vsub.s32 %v12412, %v12515
      %v12517 = vrot.slane %v12366, %v12516
      %v12518 = vsel %vm12417, %v12517, %v12513
      %v12519 = vlaneseq
      %v12520 = vshrl.u32 %v12519, 7
      %v12521 = vsub.s32 %v12419, %v12520
      %v12522 = vrot.slane %v12369, %v12521
      %v12523 = vsel %vm12424, %v12522, %v12518
      %v12524 = vlaneseq
      %v12525 = vshrl.u32 %v12524, 7
      %v12526 = vsub.s32 %v12407, %v12525
      %v12527 = vrot.slane %v12372, %v12526
      %v12528 = vlaneseq
      %v12529 = vshrl.u32 %v12528, 7
      %v12530 = vsub.s32 %v12412, %v12529
      %v12531 = vrot.slane %v12375, %v12530
      %v12532 = vsel %vm12417, %v12531, %v12527
      %v12533 = vlaneseq
      %v12534 = vshrl.u32 %v12533, 7
      %v12535 = vsub.s32 %v12419, %v12534
      %v12536 = vrot.slane %v12378, %v12535
      %v12537 = vsel %vm12424, %v12536, %v12532
      %v12538 = vlaneseq
      %v12539 = vshrl.u32 %v12538, 7
      %v12540 = vsub.s32 %v12407, %v12539
      %v12541 = vrot.slane %v12381, %v12540
      %v12542 = vlaneseq
      %v12543 = vshrl.u32 %v12542, 7
      %v12544 = vsub.s32 %v12412, %v12543
      %v12545 = vrot.slane %v12384, %v12544
      %v12546 = vsel %vm12417, %v12545, %v12541
      %v12547 = vlaneseq
      %v12548 = vshrl.u32 %v12547, 7
      %v12549 = vsub.s32 %v12419, %v12548
      %v12550 = vrot.slane %v12387, %v12549
      %v12551 = vsel %vm12424, %v12550, %v12546
      %v12552 = vlaneseq
      %v12553 = vshrl.u32 %v12552, 7
      %v12554 = vsub.s32 %v12407, %v12553
      %v12555 = vrot.slane %v12390, %v12554
      %v12556 = vlaneseq
      %v12557 = vshrl.u32 %v12556, 7
      %v12558 = vsub.s32 %v12412, %v12557
      %v12559 = vrot.slane %v12393, %v12558
      %v12560 = vsel %vm12417, %v12559, %v12555
      %v12561 = vlaneseq
      %v12562 = vshrl.u32 %v12561, 7
      %v12563 = vsub.s32 %v12419, %v12562
      %v12564 = vrot.slane %v12396, %v12563
      %v12565 = vsel %vm12424, %v12564, %v12560
      %v12566 = vlaneseq
      %v12567 = vshrl.u32 %v12566, 7
      %v12568 = vsub.s32 %v12407, %v12567
      %v12569 = vrot.slane %v12399, %v12568
      %v12570 = vlaneseq
      %v12571 = vshrl.u32 %v12570, 7
      %v12572 = vsub.s32 %v12412, %v12571
      %v12573 = vrot.slane %v12402, %v12572
      %v12574 = vsel %vm12417, %v12573, %v12569
      %v12575 = vlaneseq
      %v12576 = vshrl.u32 %v12575, 7
      %v12577 = vsub.s32 %v12419, %v12576
      %v12578 = vrot.slane %v12405, %v12577
      %v12579 = vsel %vm12424, %v12578, %v12574
      %v12580 = vsel %vm9847, %v12439, %v12425
      %v12581 = vsel %vm9849, %v12439, %v12580
      %v12582 = vsel %vm9851, %v12439, %v12581
      %vm12583 = vcmask 1044484
      %v12584 = vsel %vm12583, %v12453, %v12582
      %vm12585 = vcmask 1045509
      %v12586 = vsel %vm12585, %v12467, %v12584
      %vm12587 = vcmask 1046534
      %v12588 = vsel %vm12587, %v12481, %v12586
      %vm12589 = vcmask 1047559
      %v12590 = vsel %vm12589, %v12481, %v12588
      %v12591 = vsel %vm9847, %v12495, %v12481
      %v12592 = vsel %vm9849, %v12509, %v12591
      %v12593 = vsel %vm9851, %v12523, %v12592
      %v12594 = vsel %vm12583, %v12523, %v12593
      %v12595 = vsel %vm12585, %v12523, %v12594
      %v12596 = vsel %vm12587, %v12537, %v12595
      %v12597 = vsel %vm12589, %v12551, %v12596
      %v12598 = vsel %vm9849, %v12565, %v12565
      %v12599 = vsel %vm9851, %v12579, %v12598
      %vm12603 = vcmask 162816
      %12604 = vst.msk [vmem:[%s388] sm:$0xff] %vm12603, %v12590
      %12605 = vst.msk [vmem:[%s388 + $0x8] sm:$0xff] %vm12603, %v12597
      %vm12606 = vcmask 158720
      %12607 = vst.msk [vmem:[%s388 + $0x10] sm:$0xf] %vm12606, %v12599
      %p12608 = scmp.lt.s32.totalorder %s24, 1
      %s12609 = scalar_select %p12608, %s24, 1
      %s12610 = smul.addr %s12609, 3
      %s12611 = smul.addr %s12610, 8
      %s12612 = scalar_lea.vmem %s11, %s12611
      // Predicated region
      $region65: #{autoencoder_forward.1} parent=63 // pred_check
        %p12613 = pneg %p278
      $region66: #{autoencoder_forward.1} parent=63 // pred_check_branch
        %12615 = sbr.rel (%p12613) target = $region68
      $region67: #{autoencoder_forward.1} parent=63 // pred_region
        _
      $region68: #{autoencoder_forward.1} parent=63 // pred_fallthru
        _
    $region64: #{autoencoder_forward.1} parent=5 // pred_fallthru
      _
    %p12616 = scmp.le.s32.totalorder 2, %s19
    // Predicated region
    $region69: #{autoencoder_forward.1} parent=5 // pred_check
      %p12617 = pneg %p12616
    $region70: #{autoencoder_forward.1} parent=5 // pred_check_branch
      %12619 = sbr.rel (%p12617) target = $region72
    $region71: #{autoencoder_forward.1} parent=5 // pred_region
      %s12620 = ssub.s32 %s19, 2
      // Predicated region
      $region73: #{autoencoder_forward.1} parent=71 // pred_check
        %p12621 = pneg %p284
      $region74: #{autoencoder_forward.1} parent=71 // pred_check_branch
        %12623 = sbr.rel (%p12621) target = $region76
      $region75: #{autoencoder_forward.1} parent=71 // pred_region
        %p12624 = scmp.lt.s32.totalorder %s25, 1
        %s12625 = scalar_select %p12624, %s25, 1
        %s12626 = smul.addr %s12625, 3
        %s12627 = smul.addr %s12626, 8
        %s12628 = scalar_lea.vmem %s11, %s12627
      $region76: #{autoencoder_forward.1} parent=71 // pred_fallthru
        _
    $region72: #{autoencoder_forward.1} parent=5 // pred_fallthru
      _
  $region6: #{autoencoder_forward.1} parent=0 // loop_footer
    %s23 = sadd.s32 1, %s19
  $region7: #{autoencoder_forward.1} parent=0 // loop_footer_branch
    %18 = sbr.rel target = $region3
  $region8: #{autoencoder_forward.1} parent=0 // loop_exit
    _

</llo_original>
